<compile_context>
chip_gen: v7x
topology: tpu7x:2x2x1
jax: 0.10.0
libtpu: 0.0.40
codegen_flags: <defaults>
</compile_context>

<pallas_src>
import jax
import jax.numpy as jnp
from jax import lax
from jax.experimental import pallas as pl
from jax.experimental.pallas import tpu as pltpu

HIDDEN = 768
INTER = 3072
SEQ = 384
TN = 768                      # INTER tile -> INTER // TN = 4 streamed weight blocks
EPS = 1e-12                   # LayerNorm((768,), eps=1e-12)
INV_SQRT2 = 0.7071067811865476


def _fused_kernel(x_ref, gamma_ref, beta_ref, w1_ref, b1_ref, w2_ref, b2_ref,
                  o_ref, y_sc, acc_sc):
    j = pl.program_id(1)

    # ---- LayerNorm once per sequence tile; cache bf16 y for all INTER tiles ----
    @pl.when(j == 0)
    def _():
        x = x_ref[...]                                    # (TS, H) f32
        mean = jnp.mean(x, axis=-1, keepdims=True)
        xc = x - mean
        var = jnp.mean(xc * xc, axis=-1, keepdims=True)
        y = (xc * lax.rsqrt(var + EPS)) * gamma_ref[...] + beta_ref[...]
        y_sc[...] = y.astype(jnp.bfloat16)                # fed identically to every j
        acc_sc[...] = jnp.zeros_like(acc_sc)

    # ---- Linear1 block: (TS, H) @ (H, TN) -> f32; +bias; exact erf GELU (f32) ----
    h = jnp.dot(y_sc[...], w1_ref[...], preferred_element_type=jnp.float32)
    h = h + b1_ref[...]
    g = 0.5 * h * (1.0 + lax.erf(h * INV_SQRT2))

    # ---- Linear2 partial: (TS, TN) @ (TN, H), accumulated in f32 ----------------
    acc_sc[...] += jnp.dot(g.astype(jnp.bfloat16), w2_ref[...],
                           preferred_element_type=jnp.float32)

    # ---- finalize at the last INTER tile ----------------------------------------
    @pl.when(j == pl.num_programs(1) - 1)
    def _():
        o_ref[...] = (acc_sc[...] + b2_ref[...]).astype(o_ref.dtype)


def prepare_weights(w1, w2):
    """One-time param prep: transpose torch-layout weights to (K, N) and cast bf16.

    w1 (INTER, HIDDEN) -> w1_t (HIDDEN, INTER); w2 (HIDDEN, INTER) -> w2_t (INTER, HIDDEN).
    Done once at init, so the kernel sees canonical (M,K)x(K,N) MXU matmuls.
    """
    w1_t = jnp.asarray(w1.T, dtype=jnp.bfloat16)
    w2_t = jnp.asarray(w2.T, dtype=jnp.bfloat16)
    return w1_t, w2_t


def _default_seq_tile():
    """384 (one tile) on single-TC chips; 192 on multi-TC chips (megacore)."""
    try:
        kind = jax.devices()[0].device_kind.lower()
    except Exception:
        return 192
    if any(t in kind for t in ("v5e", "v5 lite", "v5lite", "v6e", "v6 lite", "v6lite")):
        return 384
    return 192


def layernorm_linear_gelu_linear(x, gamma, beta, w1_t, b1, w2_t, b2,
                                 *, seq_tile=None, tn=TN):
    """x: (B, S, H) f32.  w1_t: (H, INTER) bf16, w2_t: (INTER, H) bf16
    (pre-transposed + pre-cast once via prepare_weights)."""
    B, S, H = x.shape
    if seq_tile is None:
        seq_tile = _default_seq_tile()
    BS = B * S
    assert H == HIDDEN and BS % seq_tile == 0 and INTER % tn == 0

    x2d = x.reshape(BS, H)
    gamma2 = gamma.reshape(1, H)
    beta2 = beta.reshape(1, H)
    b1_2 = b1.reshape(1, INTER)
    b2_2 = b2.reshape(1, H)

    n_seq = BS // seq_tile
    n_inter = INTER // tn
    grid = (n_seq, n_inter)

    cost = pl.CostEstimate(
        flops=2 * BS * HIDDEN * INTER * 2,          # two matmuls
        transcendentals=BS * INTER,                 # erf per GELU element
        bytes_accessed=(w1_t.size + w2_t.size) * 2  # bf16 weights
                       + 2 * BS * H * 4             # x + out (f32)
                       + (INTER + 3 * H) * 4,       # biases + gamma/beta
    )

    out = pl.pallas_call(
        _fused_kernel,
        out_shape=jax.ShapeDtypeStruct((BS, H), x.dtype),
        grid=grid,
        in_specs=[
            pl.BlockSpec((seq_tile, H), lambda i, j: (i, 0)),   # x tile (re-used across j)
            pl.BlockSpec((1, H), lambda i, j: (0, 0)),          # gamma
            pl.BlockSpec((1, H), lambda i, j: (0, 0)),          # beta
            pl.BlockSpec((H, tn), lambda i, j: (0, j)),         # W1_t block (K, TN) bf16
            pl.BlockSpec((1, tn), lambda i, j: (0, j)),         # b1 block
            pl.BlockSpec((tn, H), lambda i, j: (j, 0)),         # W2_t block (TN, K) bf16
            pl.BlockSpec((1, H), lambda i, j: (0, 0)),          # b2
        ],
        out_specs=pl.BlockSpec((seq_tile, H), lambda i, j: (i, 0)),
        scratch_shapes=[
            pltpu.VMEM((seq_tile, H), jnp.bfloat16),            # cached LN output
            pltpu.VMEM((seq_tile, H), jnp.float32),             # second-matmul accumulator
        ],
        compiler_params=pltpu.CompilerParams(
            dimension_semantics=("parallel", "arbitrary"),      # seq parallel, INTER reduction
            vmem_limit_bytes=32 * 1024 * 1024,
        ),
        cost_estimate=cost,
    )(x2d, gamma2, beta2, w1_t, b1_2, w2_t, b2_2)
    return out.reshape(B, S, H)


def _reference(x, gamma, beta, w1, b1, w2, b2):
    mean = jnp.mean(x, axis=-1, keepdims=True)
    xc = x - mean
    var = jnp.mean(xc * xc, axis=-1, keepdims=True)
    y = xc * lax.rsqrt(var + EPS) * gamma + beta
    h = y @ w1.T + b1
    g = 0.5 * h * (1.0 + lax.erf(h * INV_SQRT2))
    return g @ w2.T + b2


if __name__ == "__main__":
    key = jax.random.PRNGKey(0)
    k_x, k_g, k_b, k_w1, k_b1, k_w2, k_b2 = jax.random.split(key, 7)

    # deterministic synthetic parameters (shapes from the module __init__)
    x = jax.random.normal(k_x, (1, SEQ, HIDDEN), dtype=jnp.float32)
    gamma = 1.0 + 0.1 * jax.random.normal(k_g, (HIDDEN,), dtype=jnp.float32)
    beta = 0.1 * jax.random.normal(k_b, (HIDDEN,), dtype=jnp.float32)
    w1 = jax.random.normal(k_w1, (INTER, HIDDEN), dtype=jnp.float32) * 0.02
    b1 = jax.random.normal(k_b1, (INTER,), dtype=jnp.float32) * 0.02
    w2 = jax.random.normal(k_w2, (HIDDEN, INTER), dtype=jnp.float32) * 0.02
    b2 = jax.random.normal(k_b2, (HIDDEN,), dtype=jnp.float32) * 0.02

    # one-time parameter prep (transpose to (K, N) + bf16 cast)
    w1_t, w2_t = prepare_weights(w1, w2)

    out = layernorm_linear_gelu_linear(x, gamma, beta, w1_t, b1, w2_t, b2)
    jax.block_until_ready(out)
    assert out.shape == (1, SEQ, HIDDEN) and out.dtype == jnp.float32

    # loose sanity check vs a pure-JAX f32 reference (bf16 MXU operands ->
    # ~1e-2-level abs differences are expected; catches layout/contraction bugs)
    ref = _reference(x, gamma, beta, w1, b1, w2, b2)
    max_err = float(jnp.max(jnp.abs(out - ref)))
    assert jnp.all(jnp.isfinite(out)) and max_err < 0.5, max_err

    print("KERNEL_OK")
</pallas_src>

<mosaic_0001>
module attributes {stable_mosaic.version = 11 : i64} {
  func.func @_fused_kernel(%arg0: i32, %arg1: i32, %arg2: memref<192x768xf32, #tpu.memory_space<vmem>>, %arg3: memref<1x768xf32, #tpu.memory_space<vmem>>, %arg4: memref<1x768xf32, #tpu.memory_space<vmem>>, %arg5: memref<768x768xbf16, #tpu.memory_space<vmem>>, %arg6: memref<1x768xf32, #tpu.memory_space<vmem>>, %arg7: memref<768x768xbf16, #tpu.memory_space<vmem>>, %arg8: memref<1x768xf32, #tpu.memory_space<vmem>>, %arg9: memref<192x768xf32, #tpu.memory_space<vmem>>, %arg10: memref<192x768xbf16, #tpu.memory_space<vmem>>, %arg11: memref<192x768xf32, #tpu.memory_space<vmem>>) attributes {dimension_semantics = [#tpu.dimension_semantics<parallel>, #tpu.dimension_semantics<arbitrary>], iteration_bounds = array<i64: 2, 4>, scalar_prefetch = 0 : i64, scratch_operands = 2 : i64, tpu.core_type = #tpu.core_type<tc>, window_params = [{transform_indices = @transform_0, window_bounds = array<i64: 192, 768>}, {pipeline_mode = #tpu.pipeline_mode<synchronous>, transform_indices = @transform_1, window_bounds = array<i64: 1, 768>}, {pipeline_mode = #tpu.pipeline_mode<synchronous>, transform_indices = @transform_2, window_bounds = array<i64: 1, 768>}, {transform_indices = @transform_3, window_bounds = array<i64: 768, 768>}, {transform_indices = @transform_4, window_bounds = array<i64: 1, 768>}, {transform_indices = @transform_5, window_bounds = array<i64: 768, 768>}, {pipeline_mode = #tpu.pipeline_mode<synchronous>, transform_indices = @transform_6, window_bounds = array<i64: 1, 768>}, {transform_indices = @transform_7, window_bounds = array<i64: 192, 768>}]} {
    %c0_i32 = arith.constant 0 : i32
    %0 = arith.cmpi eq, %arg1, %c0_i32 : i32
    %1 = arith.extui %0 : i1 to i32
    %c0_i32_0 = arith.constant 0 : i32
    %2 = arith.cmpi ne, %1, %c0_i32_0 : i32
    scf.if %2 {
      %c0_17 = arith.constant 0 : index
      %c0_18 = arith.constant 0 : index
      %26 = vector.load %arg2[%c0_17, %c0_18] : memref<192x768xf32, #tpu.memory_space<vmem>>, vector<192x768xf32>
      %cst_19 = arith.constant dense<0.000000e+00> : vector<192xf32>
      %27 = vector.multi_reduction <add>, %26, %cst_19 [1] : vector<192x768xf32> to vector<192xf32>
      %28 = vector.shape_cast %27 : vector<192xf32> to vector<192x1xf32>
      %cst_20 = arith.constant 7.680000e+02 : f32
      %29 = vector.broadcast %cst_20 : f32 to vector<192x1xf32>
      %30 = arith.divf %28, %29 : vector<192x1xf32>
      %31 = vector.broadcast %30 : vector<192x1xf32> to vector<192x768xf32>
      %32 = arith.subf %26, %31 : vector<192x768xf32>
      %33 = arith.mulf %32, %32 : vector<192x768xf32>
      %cst_21 = arith.constant dense<0.000000e+00> : vector<192xf32>
      %34 = vector.multi_reduction <add>, %33, %cst_21 [1] : vector<192x768xf32> to vector<192xf32>
      %35 = vector.shape_cast %34 : vector<192xf32> to vector<192x1xf32>
      %cst_22 = arith.constant 7.680000e+02 : f32
      %36 = vector.broadcast %cst_22 : f32 to vector<192x1xf32>
      %37 = arith.divf %35, %36 : vector<192x1xf32>
      %cst_23 = arith.constant 9.99999996E-13 : f32
      %38 = vector.broadcast %cst_23 : f32 to vector<192x1xf32>
      %39 = arith.addf %37, %38 : vector<192x1xf32>
      %40 = math.rsqrt %39 : vector<192x1xf32>
      %41 = vector.broadcast %40 : vector<192x1xf32> to vector<192x768xf32>
      %42 = arith.mulf %32, %41 : vector<192x768xf32>
      %c0_24 = arith.constant 0 : index
      %c0_25 = arith.constant 0 : index
      %43 = vector.load %arg3[%c0_24, %c0_25] : memref<1x768xf32, #tpu.memory_space<vmem>>, vector<1x768xf32>
      %44 = vector.broadcast %43 : vector<1x768xf32> to vector<192x768xf32>
      %45 = arith.mulf %42, %44 : vector<192x768xf32>
      %c0_26 = arith.constant 0 : index
      %c0_27 = arith.constant 0 : index
      %46 = vector.load %arg4[%c0_26, %c0_27] : memref<1x768xf32, #tpu.memory_space<vmem>>, vector<1x768xf32>
      %47 = vector.broadcast %46 : vector<1x768xf32> to vector<192x768xf32>
      %48 = arith.addf %45, %47 : vector<192x768xf32>
      %49 = arith.truncf %48 : vector<192x768xf32> to vector<192x768xbf16>
      %c0_28 = arith.constant 0 : index
      %c0_29 = arith.constant 0 : index
      %50 = vector.load %arg10[%c0_28, %c0_29] : memref<192x768xbf16, #tpu.memory_space<vmem>>, vector<192x768xbf16>
      tpu.vector_store %arg10[%c0_28, %c0_29], %49 {strides = array<i32>} : memref<192x768xbf16, #tpu.memory_space<vmem>>, vector<192x768xbf16>,
      %cst_30 = arith.constant 0.000000e+00 : f32
      %51 = vector.broadcast %cst_30 : f32 to vector<192x768xf32>
      %c0_31 = arith.constant 0 : index
      %c0_32 = arith.constant 0 : index
      %52 = vector.load %arg11[%c0_31, %c0_32] : memref<192x768xf32, #tpu.memory_space<vmem>>, vector<192x768xf32>
      tpu.vector_store %arg11[%c0_31, %c0_32], %51 {strides = array<i32>} : memref<192x768xf32, #tpu.memory_space<vmem>>, vector<192x768xf32>,
    } else {
    }
    %c0 = arith.constant 0 : index
    %c0_1 = arith.constant 0 : index
    %3 = vector.load %arg10[%c0, %c0_1] : memref<192x768xbf16, #tpu.memory_space<vmem>>, vector<192x768xbf16>
    %c0_2 = arith.constant 0 : index
    %c0_3 = arith.constant 0 : index
    %4 = vector.load %arg5[%c0_2, %c0_3] : memref<768x768xbf16, #tpu.memory_space<vmem>>, vector<768x768xbf16>
    %cst = arith.constant dense<0.000000e+00> : vector<192x768xf32>
    %5 = tpu.matmul %3, %4, %cst {dimension_numbers = #tpu.dot_dimension_numbers<[1], [0], [0], [1], [0, 0, 1, 1], [], []>} : vector<192x768xbf16>, vector<768x768xbf16>, vector<192x768xf32> -> vector<192x768xf32>
    %c0_4 = arith.constant 0 : index
    %c0_5 = arith.constant 0 : index
    %6 = vector.load %arg6[%c0_4, %c0_5] : memref<1x768xf32, #tpu.memory_space<vmem>>, vector<1x768xf32>
    %7 = vector.broadcast %6 : vector<1x768xf32> to vector<192x768xf32>
    %8 = arith.addf %5, %7 : vector<192x768xf32>
    %cst_6 = arith.constant 5.000000e-01 : f32
    %9 = vector.broadcast %cst_6 : f32 to vector<192x768xf32>
    %10 = arith.mulf %9, %8 : vector<192x768xf32>
    %cst_7 = arith.constant 0.707106769 : f32
    %11 = vector.broadcast %cst_7 : f32 to vector<192x768xf32>
    %12 = arith.mulf %8, %11 : vector<192x768xf32>
    %13 = math.erf %12 : vector<192x768xf32>
    %cst_8 = arith.constant 1.000000e+00 : f32
    %14 = vector.broadcast %cst_8 : f32 to vector<192x768xf32>
    %15 = arith.addf %14, %13 : vector<192x768xf32>
    %16 = arith.mulf %10, %15 : vector<192x768xf32>
    %c0_9 = arith.constant 0 : index
    %c0_10 = arith.constant 0 : index
    %17 = vector.load %arg11[%c0_9, %c0_10] : memref<192x768xf32, #tpu.memory_space<vmem>>, vector<192x768xf32>
    %18 = arith.truncf %16 : vector<192x768xf32> to vector<192x768xbf16>
    %c0_11 = arith.constant 0 : index
    %c0_12 = arith.constant 0 : index
    %19 = vector.load %arg7[%c0_11, %c0_12] : memref<768x768xbf16, #tpu.memory_space<vmem>>, vector<768x768xbf16>
    %cst_13 = arith.constant dense<0.000000e+00> : vector<192x768xf32>
    %20 = tpu.matmul %18, %19, %cst_13 {dimension_numbers = #tpu.dot_dimension_numbers<[1], [0], [0], [1], [0, 0, 1, 1], [], []>} : vector<192x768xbf16>, vector<768x768xbf16>, vector<192x768xf32> -> vector<192x768xf32>
    %21 = arith.addf %17, %20 : vector<192x768xf32>
    %c0_14 = arith.constant 0 : index
    %c0_15 = arith.constant 0 : index
    %22 = vector.load %arg11[%c0_14, %c0_15] : memref<192x768xf32, #tpu.memory_space<vmem>>, vector<192x768xf32>
    tpu.vector_store %arg11[%c0_14, %c0_15], %21 {strides = array<i32>} : memref<192x768xf32, #tpu.memory_space<vmem>>, vector<192x768xf32>,
    %c3_i32 = arith.constant 3 : i32
    %23 = arith.cmpi eq, %arg1, %c3_i32 : i32
    %24 = arith.extui %23 : i1 to i32
    %c0_i32_16 = arith.constant 0 : i32
    %25 = arith.cmpi ne, %24, %c0_i32_16 : i32
    scf.if %25 {
      %c0_17 = arith.constant 0 : index
      %c0_18 = arith.constant 0 : index
      %26 = vector.load %arg11[%c0_17, %c0_18] : memref<192x768xf32, #tpu.memory_space<vmem>>, vector<192x768xf32>
      %c0_19 = arith.constant 0 : index
      %c0_20 = arith.constant 0 : index
      %27 = vector.load %arg8[%c0_19, %c0_20] : memref<1x768xf32, #tpu.memory_space<vmem>>, vector<1x768xf32>
      %28 = vector.broadcast %27 : vector<1x768xf32> to vector<192x768xf32>
      %29 = arith.addf %26, %28 : vector<192x768xf32>
      %c0_21 = arith.constant 0 : index
      %c0_22 = arith.constant 0 : index
      %30 = vector.load %arg9[%c0_21, %c0_22] : memref<192x768xf32, #tpu.memory_space<vmem>>, vector<192x768xf32>
      tpu.vector_store %arg9[%c0_21, %c0_22], %29 {strides = array<i32>} : memref<192x768xf32, #tpu.memory_space<vmem>>, vector<192x768xf32>,
    } else {
    }
    return
  }
  func.func @transform_0(%arg0: i32, %arg1: i32) -> (i32, i32) {
    %c0_i32 = arith.constant 0 : i32
    %c0_i32_0 = arith.constant 0 : i32
    return %arg0, %c0_i32 : i32, i32
  }
  func.func @transform_1(%arg0: i32, %arg1: i32) -> (i32, i32) {
    %c0_i32 = arith.constant 0 : i32
    %c0_i32_0 = arith.constant 0 : i32
    %c0_i32_1 = arith.constant 0 : i32
    return %c0_i32, %c0_i32_0 : i32, i32
  }
  func.func @transform_2(%arg0: i32, %arg1: i32) -> (i32, i32) {
    %c0_i32 = arith.constant 0 : i32
    %c0_i32_0 = arith.constant 0 : i32
    %c0_i32_1 = arith.constant 0 : i32
    return %c0_i32, %c0_i32_0 : i32, i32
  }
  func.func @transform_3(%arg0: i32, %arg1: i32) -> (i32, i32) {
    %c0_i32 = arith.constant 0 : i32
    %c0_i32_0 = arith.constant 0 : i32
    return %c0_i32, %arg1 : i32, i32
  }
  func.func @transform_4(%arg0: i32, %arg1: i32) -> (i32, i32) {
    %c0_i32 = arith.constant 0 : i32
    %c0_i32_0 = arith.constant 0 : i32
    return %c0_i32, %arg1 : i32, i32
  }
  func.func @transform_5(%arg0: i32, %arg1: i32) -> (i32, i32) {
    %c0_i32 = arith.constant 0 : i32
    %c0_i32_0 = arith.constant 0 : i32
    return %arg1, %c0_i32 : i32, i32
  }
  func.func @transform_6(%arg0: i32, %arg1: i32) -> (i32, i32) {
    %c0_i32 = arith.constant 0 : i32
    %c0_i32_0 = arith.constant 0 : i32
    %c0_i32_1 = arith.constant 0 : i32
    return %c0_i32, %c0_i32_0 : i32, i32
  }
  func.func @transform_7(%arg0: i32, %arg1: i32) -> (i32, i32) {
    %c0_i32 = arith.constant 0 : i32
    %c0_i32_0 = arith.constant 0 : i32
    return %arg0, %c0_i32 : i32, i32
  }
}

</mosaic_0001>

<llo_original>
// kernel: tpu_custom_call.1
$region0: #{tpu_custom_call.1}
  #allocation0 [shape = 'u32[]', space=smem, size = 0x4, offset = 0x4, fixed_abs, tag = 'smem constant byte address 0x4 - core index']
  #allocation1 [shape = 'u32[144,128]{1,0:T(1,128)}', space=vmem, size = 0x12000, scoped, tag = 'internal scratch']
  #allocation2 [shape = 'bf16[192,768]{1,0:T(16,128)(2,1)}', space=vmem, size = 0x48000, scoped, tag = 'scratch operand']
  #allocation3 [shape = 'f32[192,768]{1,0:T(8,128)}', space=vmem, size = 0x90000, scoped, tag = 'scratch operand']
  %s0 = inlined_call_operand.hbm [shape: f32[384,768], index: 0, kind: input, shape index: {}]
  %s1 = inlined_call_operand.hbm [shape: f32[1,768], index: 1, kind: input, shape index: {}]
  %s2 = inlined_call_operand.hbm [shape: f32[1,768], index: 2, kind: input, shape index: {}]
  %s3 = inlined_call_operand.hbm [shape: bf16[768,3072], index: 3, kind: input, shape index: {}]
  %s4 = inlined_call_operand.hbm [shape: f32[1,3072], index: 4, kind: input, shape index: {}]
  %s5 = inlined_call_operand.hbm [shape: bf16[3072,768], index: 5, kind: input, shape index: {}]
  %s6 = inlined_call_operand.hbm [shape: f32[1,768], index: 6, kind: input, shape index: {}]
  %s7 = inlined_call_operand.hbm [shape: f32[384,768], index: 7, kind: output, shape index: {}]
  %s8 = sld [smem:[#allocation0]]
  $region97: #{tpu_custom_call.1} parent=0
    _
  %s10 = ssub.s32 1, %s8
  %s11 = scalar_select 0, %s10, %s8
  $region1: #{tpu_custom_call.1} parent=0
    #allocation4 [shape = 'u8[1179648]{0}', space=vmem, size = 0x120000, scoped, tag = 'input window, operand 0']
    #allocation5 [shape = 's32[2]{0}', space=sflag, size = 0x8, scoped, tag = 'scoped memory for tpu_custom_call.1']
    #allocation6 [shape = 's32[2]{0}', space=sflag, size = 0x8, scoped, tag = 'scoped memory for tpu_custom_call.1']
    #allocation7 [shape = 'u8[3072]{0}', space=vmem, size = 0xc00, scoped, tag = 'input window, operand 1, single buffered']
    #allocation8 [shape = 's32[1]{0}', space=sflag, size = 0x4, scoped, tag = 'scoped memory for tpu_custom_call.1']
    #allocation9 [shape = 'u8[3072]{0}', space=vmem, size = 0xc00, scoped, tag = 'input window, operand 2, single buffered']
    #allocation10 [shape = 'u8[2359296]{0}', space=vmem, size = 0x240000, scoped, tag = 'input window, operand 3']
    #allocation11 [shape = 's32[2]{0}', space=sflag, size = 0x8, scoped, tag = 'scoped memory for tpu_custom_call.1']
    #allocation12 [shape = 'u8[6144]{0}', space=vmem, size = 0x1800, scoped, tag = 'input window, operand 4']
    #allocation13 [shape = 'u8[2359296]{0}', space=vmem, size = 0x240000, scoped, tag = 'input window, operand 5']
    #allocation14 [shape = 's32[2]{0}', space=sflag, size = 0x8, scoped, tag = 'scoped memory for tpu_custom_call.1']
    #allocation15 [shape = 'u8[3072]{0}', space=vmem, size = 0xc00, scoped, tag = 'input window, operand 6, single buffered']
    #allocation16 [shape = 'u8[1179648]{0}', space=vmem, size = 0x120000, scoped, tag = 'output window, operand 0']
    %12 = vsyncpa [#allocation5], 0
    %s13 = scalar_lea.sflag [#allocation5], 1
    %14 = vsyncpa %s13, 0
    %15 = vsyncpa [#allocation8], 0
    %16 = vsyncpa [#allocation11], 0
    %s17 = scalar_lea.sflag [#allocation11], 1
    %18 = vsyncpa %s17, 0
    %19 = vsyncpa [#allocation14], 0
    %s20 = scalar_lea.sflag [#allocation14], 1
    %21 = vsyncpa %s20, 0
    %22 = vsyncpa [#allocation6], 0
    %s23 = scalar_lea.sflag [#allocation6], 1
    %24 = vsyncpa %s23, 0
    loop: start=0, step=1, limit=10
    $region2: #{tpu_custom_call.1} parent=1 // loop_pre_header
      _
    $region3: #{tpu_custom_call.1} parent=1 // loop_header
      %s26 = sphi 0, %s30
      %p27 = scmp.ge.s32.totalorder %s26, 10
      %s33 = sphi 0, %s45
      %s34 = sphi 0, %s41
      %s35 = sphi 0, %s33
      %s36 = sphi 0, %s34
      %s37 = sphi 0, %s35
      %s38 = sphi 0, %s36
      %s48 = sphi 0, %s50
      %s51 = sphi 0, %s48
      %s52 = sphi 0, %s51
      %s68 = sphi 0, %s52
      %s72 = sphi 0, %s72
      %s74 = sphi 0, %s72
      %s75 = sphi 0, %s74
      %s89 = sphi 0, %s75
      %s93 = sphi 0, %s93
      %s95 = sphi 0, %s93
      %s96 = sphi 0, %s95
      %s110 = sphi 0, %s96
      %s116 = sphi 0, %s118
      %s119 = sphi 0, %s116
      %s120 = sphi 0, %s119
      %s136 = sphi 0, %s120
      %s142 = sphi 0, %s144
      %s145 = sphi 0, %s142
      %s146 = sphi 0, %s145
      %s162 = sphi 0, %s146
      %s168 = sphi 0, %s170
      %s171 = sphi 0, %s168
      %s172 = sphi 0, %s171
      %s188 = sphi 0, %s172
      %s192 = sphi 0, %s192
      %s194 = sphi 0, %s192
      %s195 = sphi 0, %s194
      %s209 = sphi 0, %s195
      %s215 = sphi 0, %s217
      %s218 = sphi 0, %s215
      %s219 = sphi 0, %s218
      %s235 = sphi 0, %s219
    $region4: #{tpu_custom_call.1} parent=1 // loop_header_branch
      %29 = sbr.rel (%p27) target = $region8
    $region5: #{tpu_custom_call.1} parent=1 // loop_body
      %s31 = ssub.s32 %s26, 1
      %s32 = ssub.s32 %s26, 2
      %s39 = sadd.s32 1, %s34
      %p40 = scmp.ge.s32.totalorder %s39, 4
      %s41 = scalar_select %p40, 0, %s39
      %s42 = sadd.s32 1, %s33
      %s43 = scalar_select %p40, %s42, %s33
      %p44 = scmp.ge.s32.totalorder %s43, 2
      %s45 = scalar_select %p44, 0, %s43
      %s46 = ssub.s32 %s33, %s45
      %p47 = scmp.eq.s32.totalorder %s46, 0
      %s49 = sadd.s32 %s48, 1
      %s50 = scalar_select %p47, %s48, %s49
      %p53 = pneg %p47
      %p54 = scmp.eq.s32.totalorder %s26, 7
      %p55 = por %p53, %p54
      %p56 = scmp.ne.s32.totalorder %s48, %s51
      %p57 = scmp.eq.s32.totalorder %s26, 0
      %p58 = por %p56, %p57
      %p59 = scmp.ne.s32.totalorder %s48, %s51
      %p60 = scmp.eq.s32.totalorder %s31, 7
      %p61 = por %p59, %p60
      %p62 = scmp.ne.s32.totalorder %s51, %s52
      %p63 = scmp.eq.s32.totalorder %s31, 0
      %p64 = por %p62, %p63
      %p65 = scmp.ne.s32.totalorder %s51, %s52
      %p66 = scmp.eq.s32.totalorder %s32, 7
      %p67 = por %p65, %p66
      %p69 = scmp.ne.s32.totalorder %s52, %s68
      %p70 = scmp.eq.s32.totalorder %s32, 0
      %p71 = por %p69, %p70
      %s73 = sadd.s32 %s72, 1
      %p76 = scmp.eq.s32.totalorder %s26, 7
      %p77 = scmp.ne.s32.totalorder %s72, %s74
      %p78 = scmp.eq.s32.totalorder %s26, 0
      %p79 = por %p77, %p78
      %p80 = scmp.ne.s32.totalorder %s72, %s74
      %p81 = scmp.eq.s32.totalorder %s31, 7
      %p82 = por %p80, %p81
      %p83 = scmp.ne.s32.totalorder %s74, %s75
      %p84 = scmp.eq.s32.totalorder %s31, 0
      %p85 = por %p83, %p84
      %p86 = scmp.ne.s32.totalorder %s74, %s75
      %p87 = scmp.eq.s32.totalorder %s32, 7
      %p88 = por %p86, %p87
      %p90 = scmp.ne.s32.totalorder %s75, %s89
      %p91 = scmp.eq.s32.totalorder %s32, 0
      %p92 = por %p90, %p91
      %s94 = sadd.s32 %s93, 1
      %p97 = scmp.eq.s32.totalorder %s26, 7
      %p98 = scmp.ne.s32.totalorder %s93, %s95
      %p99 = scmp.eq.s32.totalorder %s26, 0
      %p100 = por %p98, %p99
      %p101 = scmp.ne.s32.totalorder %s93, %s95
      %p102 = scmp.eq.s32.totalorder %s31, 7
      %p103 = por %p101, %p102
      %p104 = scmp.ne.s32.totalorder %s95, %s96
      %p105 = scmp.eq.s32.totalorder %s31, 0
      %p106 = por %p104, %p105
      %p107 = scmp.ne.s32.totalorder %s95, %s96
      %p108 = scmp.eq.s32.totalorder %s32, 7
      %p109 = por %p107, %p108
      %p111 = scmp.ne.s32.totalorder %s96, %s110
      %p112 = scmp.eq.s32.totalorder %s32, 0
      %p113 = por %p111, %p112
      %s114 = ssub.s32 %s34, %s41
      %p115 = scmp.eq.s32.totalorder %s114, 0
      %s117 = sadd.s32 %s116, 1
      %s118 = scalar_select %p115, %s116, %s117
      %p121 = pneg %p115
      %p122 = scmp.eq.s32.totalorder %s26, 7
      %p123 = por %p121, %p122
      %p124 = scmp.ne.s32.totalorder %s116, %s119
      %p125 = scmp.eq.s32.totalorder %s26, 0
      %p126 = por %p124, %p125
      %p127 = scmp.ne.s32.totalorder %s116, %s119
      %p128 = scmp.eq.s32.totalorder %s31, 7
      %p129 = por %p127, %p128
      %p130 = scmp.ne.s32.totalorder %s119, %s120
      %p131 = scmp.eq.s32.totalorder %s31, 0
      %p132 = por %p130, %p131
      %p133 = scmp.ne.s32.totalorder %s119, %s120
      %p134 = scmp.eq.s32.totalorder %s32, 7
      %p135 = por %p133, %p134
      %p137 = scmp.ne.s32.totalorder %s120, %s136
      %p138 = scmp.eq.s32.totalorder %s32, 0
      %p139 = por %p137, %p138
      %s140 = ssub.s32 %s34, %s41
      %p141 = scmp.eq.s32.totalorder %s140, 0
      %s143 = sadd.s32 %s142, 1
      %s144 = scalar_select %p141, %s142, %s143
      %p147 = pneg %p141
      %p148 = scmp.eq.s32.totalorder %s26, 7
      %p149 = por %p147, %p148
      %p150 = scmp.ne.s32.totalorder %s142, %s145
      %p151 = scmp.eq.s32.totalorder %s26, 0
      %p152 = por %p150, %p151
      %p153 = scmp.ne.s32.totalorder %s142, %s145
      %p154 = scmp.eq.s32.totalorder %s31, 7
      %p155 = por %p153, %p154
      %p156 = scmp.ne.s32.totalorder %s145, %s146
      %p157 = scmp.eq.s32.totalorder %s31, 0
      %p158 = por %p156, %p157
      %p159 = scmp.ne.s32.totalorder %s145, %s146
      %p160 = scmp.eq.s32.totalorder %s32, 7
      %p161 = por %p159, %p160
      %p163 = scmp.ne.s32.totalorder %s146, %s162
      %p164 = scmp.eq.s32.totalorder %s32, 0
      %p165 = por %p163, %p164
      %s166 = ssub.s32 %s34, %s41
      %p167 = scmp.eq.s32.totalorder %s166, 0
      %s169 = sadd.s32 %s168, 1
      %s170 = scalar_select %p167, %s168, %s169
      %p173 = pneg %p167
      %p174 = scmp.eq.s32.totalorder %s26, 7
      %p175 = por %p173, %p174
      %p176 = scmp.ne.s32.totalorder %s168, %s171
      %p177 = scmp.eq.s32.totalorder %s26, 0
      %p178 = por %p176, %p177
      %p179 = scmp.ne.s32.totalorder %s168, %s171
      %p180 = scmp.eq.s32.totalorder %s31, 7
      %p181 = por %p179, %p180
      %p182 = scmp.ne.s32.totalorder %s171, %s172
      %p183 = scmp.eq.s32.totalorder %s31, 0
      %p184 = por %p182, %p183
      %p185 = scmp.ne.s32.totalorder %s171, %s172
      %p186 = scmp.eq.s32.totalorder %s32, 7
      %p187 = por %p185, %p186
      %p189 = scmp.ne.s32.totalorder %s172, %s188
      %p190 = scmp.eq.s32.totalorder %s32, 0
      %p191 = por %p189, %p190
      %s193 = sadd.s32 %s192, 1
      %p196 = scmp.eq.s32.totalorder %s26, 7
      %p197 = scmp.ne.s32.totalorder %s192, %s194
      %p198 = scmp.eq.s32.totalorder %s26, 0
      %p199 = por %p197, %p198
      %p200 = scmp.ne.s32.totalorder %s192, %s194
      %p201 = scmp.eq.s32.totalorder %s31, 7
      %p202 = por %p200, %p201
      %p203 = scmp.ne.s32.totalorder %s194, %s195
      %p204 = scmp.eq.s32.totalorder %s31, 0
      %p205 = por %p203, %p204
      %p206 = scmp.ne.s32.totalorder %s194, %s195
      %p207 = scmp.eq.s32.totalorder %s32, 7
      %p208 = por %p206, %p207
      %p210 = scmp.ne.s32.totalorder %s195, %s209
      %p211 = scmp.eq.s32.totalorder %s32, 0
      %p212 = por %p210, %p211
      %s213 = ssub.s32 %s33, %s45
      %p214 = scmp.eq.s32.totalorder %s213, 0
      %s216 = sadd.s32 %s215, 1
      %s217 = scalar_select %p214, %s215, %s216
      %p220 = pneg %p214
      %p221 = scmp.eq.s32.totalorder %s26, 7
      %p222 = por %p220, %p221
      %p223 = scmp.ne.s32.totalorder %s215, %s218
      %p224 = scmp.eq.s32.totalorder %s26, 0
      %p225 = por %p223, %p224
      %p226 = scmp.ne.s32.totalorder %s215, %s218
      %p227 = scmp.eq.s32.totalorder %s31, 7
      %p228 = por %p226, %p227
      %p229 = scmp.ne.s32.totalorder %s218, %s219
      %p230 = scmp.eq.s32.totalorder %s31, 0
      %p231 = por %p229, %p230
      %p232 = scmp.ne.s32.totalorder %s218, %s219
      %p233 = scmp.eq.s32.totalorder %s32, 7
      %p234 = por %p232, %p233
      %p236 = scmp.ne.s32.totalorder %s219, %s235
      %p237 = scmp.eq.s32.totalorder %s32, 0
      %p238 = por %p236, %p237
      %p239 = scmp.le.s32.totalorder 1, %s26
      %p240 = scmp.lt.s32.totalorder %s26, 9
      %p241 = pnand %p239, %p240
      %p242 = pneg %p241
      // Predicated region
      $region9: #{tpu_custom_call.1} parent=5 // pred_check
        _
      $region10: #{tpu_custom_call.1} parent=5 // pred_check_branch
        %244 = sbr.rel (%p241) target = $region12
      $region11: #{tpu_custom_call.1} parent=5 // pred_region
        %s245 = ssub.s32 %s26, 1
        // Predicated region
        $region13: #{tpu_custom_call.1} parent=11 // pred_check
          %p246 = pneg %p85
        $region14: #{tpu_custom_call.1} parent=11 // pred_check_branch
          %248 = sbr.rel (%p246) target = $region16
        $region15: #{tpu_custom_call.1} parent=11 // pred_region
          %s250 = ssub.s32 96, 96
          %251 = vsyncadd [#allocation8], %s250
          %s253 = sshll.u32 [#allocation7], 4
          %s254 = int_to_ptr.vmem [resolvable:$true] %s253
          %256 = dma.hbm_to_vmem [thread:$0]  %s1, 96, %s254, [#allocation8]
        $region16: #{tpu_custom_call.1} parent=11 // pred_fallthru
          _
        // Predicated region
        $region17: #{tpu_custom_call.1} parent=11 // pred_check
          %p257 = pneg %p106
        $region18: #{tpu_custom_call.1} parent=11 // pred_check_branch
          %259 = sbr.rel (%p257) target = $region20
        $region19: #{tpu_custom_call.1} parent=11 // pred_region
          %s261 = ssub.s32 96, 96
          %262 = vsyncadd [#allocation8], %s261
          %s264 = sshll.u32 [#allocation9], 4
          %s265 = int_to_ptr.vmem [resolvable:$true] %s264
          %267 = dma.hbm_to_vmem [thread:$0]  %s2, 96, %s265, [#allocation8]
        $region20: #{tpu_custom_call.1} parent=11 // pred_fallthru
          _
        // Predicated region
        $region21: #{tpu_custom_call.1} parent=11 // pred_check
          %p268 = pneg %p205
        $region22: #{tpu_custom_call.1} parent=11 // pred_check_branch
          %270 = sbr.rel (%p268) target = $region24
        $region23: #{tpu_custom_call.1} parent=11 // pred_region
          %s272 = ssub.s32 96, 96
          %273 = vsyncadd [#allocation14], %s272
          %s275 = sshll.u32 [#allocation15], 4
          %s276 = int_to_ptr.vmem [resolvable:$true] %s275
          %278 = dma.hbm_to_vmem [thread:$0]  %s6, 96, %s276, [#allocation14]
        $region24: #{tpu_custom_call.1} parent=11 // pred_fallthru
          _
      $region12: #{tpu_custom_call.1} parent=5 // pred_fallthru
        _
      %p279 = scmp.lt.s32.totalorder %s26, 8
      // Predicated region
      $region25: #{tpu_custom_call.1} parent=5 // pred_check
        %p280 = pneg %p279
      $region26: #{tpu_custom_call.1} parent=5 // pred_check_branch
        %282 = sbr.rel (%p280) target = $region28
      $region27: #{tpu_custom_call.1} parent=5 // pred_region
        // Predicated region
        $region29: #{tpu_custom_call.1} parent=27 // pred_check
          %p283 = pneg %p58
        $region30: #{tpu_custom_call.1} parent=27 // pred_check_branch
          %285 = sbr.rel (%p283) target = $region32
        $region31: #{tpu_custom_call.1} parent=27 // pred_region
          %s286 = sand.u32 %s48, 1
          %s287 = scalar_lea.sflag [#allocation5], %s286
          %s288 = sand.u32 %s48, 1
          %s289 = smul.addr %s288, 1152
          %s290 = scalar_lea.vmem [#allocation4], %s289
          %s291 = smul.u32 24, %s33
          %s293 = ssub.s32 18432, 18432
          %294 = vsyncadd %s287, %s293
          %s295 = smul.addr %s291, 6
          %s296 = smul.addr %s295, 128
          %s297 = scalar_lea.hbm %s0, %s296
          %s298 = sshll.u32 %s290, 4
          %s299 = int_to_ptr.vmem [resolvable:$true] %s298
          %304 = dma.hbm_to_vmem [thread:$0]  %s297, 18432, %s299, %s287, 768, 768, 48
        $region32: #{tpu_custom_call.1} parent=27 // pred_fallthru
          _
        // Predicated region
        $region33: #{tpu_custom_call.1} parent=27 // pred_check
          %p305 = pneg %p126
        $region34: #{tpu_custom_call.1} parent=27 // pred_check_branch
          %307 = sbr.rel (%p305) target = $region36
        $region35: #{tpu_custom_call.1} parent=27 // pred_region
          %s308 = sand.u32 %s26, 1
          %s309 = scalar_lea.sflag [#allocation11], %s308
          %s310 = sand.u32 %s116, 1
          %s311 = smul.addr %s310, 2304
          %s312 = scalar_lea.vmem [#allocation10], %s311
          %s313 = smul.u32 6, %s34
          %s315 = ssub.s32 36864, 36864
          %316 = vsyncadd %s309, %s315
          %s317 = smul.addr %s313, 64
          %s318 = scalar_lea.hbm %s3, %s317
          %s319 = sshll.u32 %s312, 4
          %s320 = int_to_ptr.vmem [resolvable:$true] %s319
          %325 = dma.hbm_to_vmem [thread:$0]  %s318, 36864, %s320, %s309, 1536, 384, 24
        $region36: #{tpu_custom_call.1} parent=27 // pred_fallthru
          _
        // Predicated region
        $region37: #{tpu_custom_call.1} parent=27 // pred_check
          %p326 = pneg %p152
        $region38: #{tpu_custom_call.1} parent=27 // pred_check_branch
          %328 = sbr.rel (%p326) target = $region40
        $region39: #{tpu_custom_call.1} parent=27 // pred_region
          %s329 = sand.u32 %s26, 1
          %s330 = scalar_lea.sflag [#allocation11], %s329
          %s331 = sand.u32 %s142, 1
          %s332 = smul.addr %s331, 6
          %s333 = scalar_lea.vmem [#allocation12], %s332
          %s334 = smul.u32 6, %s34
          %s336 = ssub.s32 96, 96
          %337 = vsyncadd %s330, %s336
          %s338 = smul.addr %s334, 16
          %s339 = scalar_lea.hbm %s4, %s338
          %s341 = sshll.u32 %s333, 4
          %s342 = int_to_ptr.vmem [resolvable:$true] %s341
          %344 = dma.hbm_to_vmem [thread:$0]  %s339, 96, %s342, %s330
        $region40: #{tpu_custom_call.1} parent=27 // pred_fallthru
          _
        // Predicated region
        $region41: #{tpu_custom_call.1} parent=27 // pred_check
          %p345 = pneg %p178
        $region42: #{tpu_custom_call.1} parent=27 // pred_check_branch
          %347 = sbr.rel (%p345) target = $region44
        $region43: #{tpu_custom_call.1} parent=27 // pred_region
          %s348 = sand.u32 %s26, 1
          %s349 = scalar_lea.sflag [#allocation14], %s348
          %s350 = sand.u32 %s168, 1
          %s351 = smul.addr %s350, 2304
          %s352 = scalar_lea.vmem [#allocation13], %s351
          %s353 = smul.u32 96, %s34
          %s355 = ssub.s32 36864, 36864
          %356 = vsyncadd %s349, %s355
          %s357 = smul.addr %s353, 6
          %s358 = smul.addr %s357, 64
          %s359 = scalar_lea.hbm %s5, %s358
          %s360 = sshll.u32 %s352, 4
          %s361 = int_to_ptr.vmem [resolvable:$true] %s360
          %366 = dma.hbm_to_vmem [thread:$0]  %s359, 36864, %s361, %s349, 384, 384, 24
        $region44: #{tpu_custom_call.1} parent=27 // pred_fallthru
          _
      $region28: #{tpu_custom_call.1} parent=5 // pred_fallthru
        _
      %p367 = scmp.le.s32.totalorder 1, %s26
      %p368 = scmp.lt.s32.totalorder %s26, 9
      %p369 = pnand %p367, %p368
      %p370 = pneg %p369
      // Predicated region
      $region45: #{tpu_custom_call.1} parent=5 // pred_check
        _
      $region46: #{tpu_custom_call.1} parent=5 // pred_check_branch
        %372 = sbr.rel (%p369) target = $region48
      $region47: #{tpu_custom_call.1} parent=5 // pred_region
        %s373 = ssub.s32 %s26, 1
        %s374 = sand.u32 %s51, 1
        %s375 = scalar_lea.sflag [#allocation5], %s374
        %s376 = sand.u32 %s51, 1
        %s377 = smul.addr %s376, 1152
        %s378 = scalar_lea.vmem [#allocation4], %s377
        // Predicated region
        $region49: #{tpu_custom_call.1} parent=47 // pred_check
          %p379 = pneg %p64
        $region50: #{tpu_custom_call.1} parent=47 // pred_check_branch
          %381 = sbr.rel (%p379) target = $region52
        $region51: #{tpu_custom_call.1} parent=47 // pred_region
          %382 = dma.done %s375, 18432
        $region52: #{tpu_custom_call.1} parent=47 // pred_fallthru
          _
        // Predicated region
        $region53: #{tpu_custom_call.1} parent=47 // pred_check
          %p383 = pneg %p85
        $region54: #{tpu_custom_call.1} parent=47 // pred_check_branch
          %385 = sbr.rel (%p383) target = $region56
        $region55: #{tpu_custom_call.1} parent=47 // pred_region
          %386 = dma.done [#allocation8], 96
        $region56: #{tpu_custom_call.1} parent=47 // pred_fallthru
          _
        // Predicated region
        $region57: #{tpu_custom_call.1} parent=47 // pred_check
          %p387 = pneg %p106
        $region58: #{tpu_custom_call.1} parent=47 // pred_check_branch
          %389 = sbr.rel (%p387) target = $region60
        $region59: #{tpu_custom_call.1} parent=47 // pred_region
          %390 = dma.done [#allocation8], 96
        $region60: #{tpu_custom_call.1} parent=47 // pred_fallthru
          _
        %s391 = sand.u32 %s31, 1
        %s392 = scalar_lea.sflag [#allocation11], %s391
        %s393 = sand.u32 %s119, 1
        %s394 = smul.addr %s393, 2304
        %s395 = scalar_lea.vmem [#allocation10], %s394
        // Predicated region
        $region61: #{tpu_custom_call.1} parent=47 // pred_check
          %p396 = pneg %p132
        $region62: #{tpu_custom_call.1} parent=47 // pred_check_branch
          %398 = sbr.rel (%p396) target = $region64
        $region63: #{tpu_custom_call.1} parent=47 // pred_region
          %399 = dma.done %s392, 36864
        $region64: #{tpu_custom_call.1} parent=47 // pred_fallthru
          _
        %s400 = sand.u32 %s31, 1
        %s401 = scalar_lea.sflag [#allocation11], %s400
        %s402 = sand.u32 %s145, 1
        %s403 = smul.addr %s402, 6
        %s404 = scalar_lea.vmem [#allocation12], %s403
        // Predicated region
        $region65: #{tpu_custom_call.1} parent=47 // pred_check
          %p405 = pneg %p158
        $region66: #{tpu_custom_call.1} parent=47 // pred_check_branch
          %407 = sbr.rel (%p405) target = $region68
        $region67: #{tpu_custom_call.1} parent=47 // pred_region
          %408 = dma.done %s401, 96
        $region68: #{tpu_custom_call.1} parent=47 // pred_fallthru
          _
        %s409 = sand.u32 %s31, 1
        %s410 = scalar_lea.sflag [#allocation14], %s409
        %s411 = sand.u32 %s171, 1
        %s412 = smul.addr %s411, 2304
        %s413 = scalar_lea.vmem [#allocation13], %s412
        // Predicated region
        $region69: #{tpu_custom_call.1} parent=47 // pred_check
          %p414 = pneg %p184
        $region70: #{tpu_custom_call.1} parent=47 // pred_check_branch
          %416 = sbr.rel (%p414) target = $region72
        $region71: #{tpu_custom_call.1} parent=47 // pred_region
          %417 = dma.done %s410, 36864
        $region72: #{tpu_custom_call.1} parent=47 // pred_fallthru
          _
        // Predicated region
        $region73: #{tpu_custom_call.1} parent=47 // pred_check
          %p418 = pneg %p205
        $region74: #{tpu_custom_call.1} parent=47 // pred_check_branch
          %420 = sbr.rel (%p418) target = $region76
        $region75: #{tpu_custom_call.1} parent=47 // pred_region
          %421 = dma.done [#allocation14], 96
        $region76: #{tpu_custom_call.1} parent=47 // pred_fallthru
          _
        %s422 = sand.u32 %s51, 1
        %s423 = scalar_lea.sflag [#allocation5], %s422
        %s424 = sand.u32 %s51, 1
        %s425 = smul.addr %s424, 1152
        %s426 = scalar_lea.vmem [#allocation4], %s425
        %p427 = pneg %p64
        %p428 = pneg %p61
        %p429 = pneg %p85
        %p430 = pneg %p82
        %p431 = pneg %p106
        %p432 = pneg %p103
        %s433 = sand.u32 %s31, 1
        %s434 = scalar_lea.sflag [#allocation11], %s433
        %s435 = sand.u32 %s119, 1
        %s436 = smul.addr %s435, 2304
        %s437 = scalar_lea.vmem [#allocation10], %s436
        %p438 = pneg %p132
        %p439 = pneg %p129
        %s440 = sand.u32 %s31, 1
        %s441 = scalar_lea.sflag [#allocation11], %s440
        %s442 = sand.u32 %s145, 1
        %s443 = smul.addr %s442, 6
        %s444 = scalar_lea.vmem [#allocation12], %s443
        %p445 = pneg %p158
        %p446 = pneg %p155
        %s447 = sand.u32 %s31, 1
        %s448 = scalar_lea.sflag [#allocation14], %s447
        %s449 = sand.u32 %s171, 1
        %s450 = smul.addr %s449, 2304
        %s451 = scalar_lea.vmem [#allocation13], %s450
        %p452 = pneg %p184
        %p453 = pneg %p181
        %p454 = pneg %p205
        %p455 = pneg %p202
        %p456 = pneg %p231
        %p457 = pneg %p228
        %s458 = sand.u32 %s218, 1
        %s459 = scalar_lea.sflag [#allocation6], %s458
        %s460 = sand.u32 %s218, 1
        %s461 = smul.addr %s460, 1152
        %s462 = scalar_lea.vmem [#allocation16], %s461
        %s463 = smul.u32 24, %s35
        %s464 = smul.u32 6, %s36
        %s465 = smul.u32 6, %s36
        %s466 = smul.u32 96, %s36
        %s467 = smul.u32 24, %s35
        %p468 = scmp.eq.s32.totalorder %s36, 0
        // Predicated region
        $region77: #{tpu_custom_call.1} parent=47 // pred_check
          %p469 = pneg %p468
        $region78: #{tpu_custom_call.1} parent=47 // pred_check_branch
          %471 = sbr.rel (%p469) target = $region80
        $region79: #{tpu_custom_call.1} parent=47 // pred_region
          %v472 = vld [vmem:[%s378] sm:$0xff]
          %v473 = vld [vmem:[%s378 + $0x8] sm:$0xff]
          %v474 = vld [vmem:[%s378 + $0x10] sm:$0xff]
          %v475 = vld [vmem:[%s378 + $0x18] sm:$0xff]
          %v476 = vld [vmem:[%s378 + $0x20] sm:$0xff]
          %v477 = vld [vmem:[%s378 + $0x28] sm:$0xff]
          %v478 = vld [vmem:[%s378 + $0x30] sm:$0xff]
          %v479 = vld [vmem:[%s378 + $0x38] sm:$0xff]
          %v480 = vld [vmem:[%s378 + $0x40] sm:$0xff]
          %v481 = vld [vmem:[%s378 + $0x48] sm:$0xff]
          %v482 = vld [vmem:[%s378 + $0x50] sm:$0xff]
          %v483 = vld [vmem:[%s378 + $0x58] sm:$0xff]
          %v484 = vld [vmem:[%s378 + $0x60] sm:$0xff]
          %v485 = vld [vmem:[%s378 + $0x68] sm:$0xff]
          %v486 = vld [vmem:[%s378 + $0x70] sm:$0xff]
          %v487 = vld [vmem:[%s378 + $0x78] sm:$0xff]
          %v488 = vld [vmem:[%s378 + $0x80] sm:$0xff]
          %v489 = vld [vmem:[%s378 + $0x88] sm:$0xff]
          %v490 = vld [vmem:[%s378 + $0x90] sm:$0xff]
          %v491 = vld [vmem:[%s378 + $0x98] sm:$0xff]
          %v492 = vld [vmem:[%s378 + $0xa0] sm:$0xff]
          %v493 = vld [vmem:[%s378 + $0xa8] sm:$0xff]
          %v494 = vld [vmem:[%s378 + $0xb0] sm:$0xff]
          %v495 = vld [vmem:[%s378 + $0xb8] sm:$0xff]
          %v496 = vld [vmem:[%s378 + $0xc0] sm:$0xff]
          %v497 = vld [vmem:[%s378 + $0xc8] sm:$0xff]
          %v498 = vld [vmem:[%s378 + $0xd0] sm:$0xff]
          %v499 = vld [vmem:[%s378 + $0xd8] sm:$0xff]
          %v500 = vld [vmem:[%s378 + $0xe0] sm:$0xff]
          %v501 = vld [vmem:[%s378 + $0xe8] sm:$0xff]
          %v502 = vld [vmem:[%s378 + $0xf0] sm:$0xff]
          %v503 = vld [vmem:[%s378 + $0xf8] sm:$0xff]
          %v504 = vld [vmem:[%s378 + $0x100] sm:$0xff]
          %v505 = vld [vmem:[%s378 + $0x108] sm:$0xff]
          %v506 = vld [vmem:[%s378 + $0x110] sm:$0xff]
          %v507 = vld [vmem:[%s378 + $0x118] sm:$0xff]
          %v508 = vld [vmem:[%s378 + $0x120] sm:$0xff]
          %v509 = vld [vmem:[%s378 + $0x128] sm:$0xff]
          %v510 = vld [vmem:[%s378 + $0x130] sm:$0xff]
          %v511 = vld [vmem:[%s378 + $0x138] sm:$0xff]
          %v512 = vld [vmem:[%s378 + $0x140] sm:$0xff]
          %v513 = vld [vmem:[%s378 + $0x148] sm:$0xff]
          %v514 = vld [vmem:[%s378 + $0x150] sm:$0xff]
          %v515 = vld [vmem:[%s378 + $0x158] sm:$0xff]
          %v516 = vld [vmem:[%s378 + $0x160] sm:$0xff]
          %v517 = vld [vmem:[%s378 + $0x168] sm:$0xff]
          %v518 = vld [vmem:[%s378 + $0x170] sm:$0xff]
          %v519 = vld [vmem:[%s378 + $0x178] sm:$0xff]
          %v520 = vld [vmem:[%s378 + $0x180] sm:$0xff]
          %v521 = vld [vmem:[%s378 + $0x188] sm:$0xff]
          %v522 = vld [vmem:[%s378 + $0x190] sm:$0xff]
          %v523 = vld [vmem:[%s378 + $0x198] sm:$0xff]
          %v524 = vld [vmem:[%s378 + $0x1a0] sm:$0xff]
          %v525 = vld [vmem:[%s378 + $0x1a8] sm:$0xff]
          %v526 = vld [vmem:[%s378 + $0x1b0] sm:$0xff]
          %v527 = vld [vmem:[%s378 + $0x1b8] sm:$0xff]
          %v528 = vld [vmem:[%s378 + $0x1c0] sm:$0xff]
          %v529 = vld [vmem:[%s378 + $0x1c8] sm:$0xff]
          %v530 = vld [vmem:[%s378 + $0x1d0] sm:$0xff]
          %v531 = vld [vmem:[%s378 + $0x1d8] sm:$0xff]
          %v532 = vld [vmem:[%s378 + $0x1e0] sm:$0xff]
          %v533 = vld [vmem:[%s378 + $0x1e8] sm:$0xff]
          %v534 = vld [vmem:[%s378 + $0x1f0] sm:$0xff]
          %v535 = vld [vmem:[%s378 + $0x1f8] sm:$0xff]
          %v536 = vld [vmem:[%s378 + $0x200] sm:$0xff]
          %v537 = vld [vmem:[%s378 + $0x208] sm:$0xff]
          %v538 = vld [vmem:[%s378 + $0x210] sm:$0xff]
          %v539 = vld [vmem:[%s378 + $0x218] sm:$0xff]
          %v540 = vld [vmem:[%s378 + $0x220] sm:$0xff]
          %v541 = vld [vmem:[%s378 + $0x228] sm:$0xff]
          %v542 = vld [vmem:[%s378 + $0x230] sm:$0xff]
          %v543 = vld [vmem:[%s378 + $0x238] sm:$0xff]
          %v544 = vld [vmem:[%s378 + $0x240] sm:$0xff]
          %v545 = vld [vmem:[%s378 + $0x248] sm:$0xff]
          %v546 = vld [vmem:[%s378 + $0x250] sm:$0xff]
          %v547 = vld [vmem:[%s378 + $0x258] sm:$0xff]
          %v548 = vld [vmem:[%s378 + $0x260] sm:$0xff]
          %v549 = vld [vmem:[%s378 + $0x268] sm:$0xff]
          %v550 = vld [vmem:[%s378 + $0x270] sm:$0xff]
          %v551 = vld [vmem:[%s378 + $0x278] sm:$0xff]
          %v552 = vld [vmem:[%s378 + $0x280] sm:$0xff]
          %v553 = vld [vmem:[%s378 + $0x288] sm:$0xff]
          %v554 = vld [vmem:[%s378 + $0x290] sm:$0xff]
          %v555 = vld [vmem:[%s378 + $0x298] sm:$0xff]
          %v556 = vld [vmem:[%s378 + $0x2a0] sm:$0xff]
          %v557 = vld [vmem:[%s378 + $0x2a8] sm:$0xff]
          %v558 = vld [vmem:[%s378 + $0x2b0] sm:$0xff]
          %v559 = vld [vmem:[%s378 + $0x2b8] sm:$0xff]
          %v560 = vld [vmem:[%s378 + $0x2c0] sm:$0xff]
          %v561 = vld [vmem:[%s378 + $0x2c8] sm:$0xff]
          %v562 = vld [vmem:[%s378 + $0x2d0] sm:$0xff]
          %v563 = vld [vmem:[%s378 + $0x2d8] sm:$0xff]
          %v564 = vld [vmem:[%s378 + $0x2e0] sm:$0xff]
          %v565 = vld [vmem:[%s378 + $0x2e8] sm:$0xff]
          %v566 = vld [vmem:[%s378 + $0x2f0] sm:$0xff]
          %v567 = vld [vmem:[%s378 + $0x2f8] sm:$0xff]
          %v568 = vld [vmem:[%s378 + $0x300] sm:$0xff]
          %v569 = vld [vmem:[%s378 + $0x308] sm:$0xff]
          %v570 = vld [vmem:[%s378 + $0x310] sm:$0xff]
          %v571 = vld [vmem:[%s378 + $0x318] sm:$0xff]
          %v572 = vld [vmem:[%s378 + $0x320] sm:$0xff]
          %v573 = vld [vmem:[%s378 + $0x328] sm:$0xff]
          %v574 = vld [vmem:[%s378 + $0x330] sm:$0xff]
          %v575 = vld [vmem:[%s378 + $0x338] sm:$0xff]
          %v576 = vld [vmem:[%s378 + $0x340] sm:$0xff]
          %v577 = vld [vmem:[%s378 + $0x348] sm:$0xff]
          %v578 = vld [vmem:[%s378 + $0x350] sm:$0xff]
          %v579 = vld [vmem:[%s378 + $0x358] sm:$0xff]
          %v580 = vld [vmem:[%s378 + $0x360] sm:$0xff]
          %v581 = vld [vmem:[%s378 + $0x368] sm:$0xff]
          %v582 = vld [vmem:[%s378 + $0x370] sm:$0xff]
          %v583 = vld [vmem:[%s378 + $0x378] sm:$0xff]
          %v584 = vld [vmem:[%s378 + $0x380] sm:$0xff]
          %v585 = vld [vmem:[%s378 + $0x388] sm:$0xff]
          %v586 = vld [vmem:[%s378 + $0x390] sm:$0xff]
          %v587 = vld [vmem:[%s378 + $0x398] sm:$0xff]
          %v588 = vld [vmem:[%s378 + $0x3a0] sm:$0xff]
          %v589 = vld [vmem:[%s378 + $0x3a8] sm:$0xff]
          %v590 = vld [vmem:[%s378 + $0x3b0] sm:$0xff]
          %v591 = vld [vmem:[%s378 + $0x3b8] sm:$0xff]
          %v592 = vld [vmem:[%s378 + $0x3c0] sm:$0xff]
          %v593 = vld [vmem:[%s378 + $0x3c8] sm:$0xff]
          %v594 = vld [vmem:[%s378 + $0x3d0] sm:$0xff]
          %v595 = vld [vmem:[%s378 + $0x3d8] sm:$0xff]
          %v596 = vld [vmem:[%s378 + $0x3e0] sm:$0xff]
          %v597 = vld [vmem:[%s378 + $0x3e8] sm:$0xff]
          %v598 = vld [vmem:[%s378 + $0x3f0] sm:$0xff]
          %v599 = vld [vmem:[%s378 + $0x3f8] sm:$0xff]
          %v600 = vld [vmem:[%s378 + $0x400] sm:$0xff]
          %v601 = vld [vmem:[%s378 + $0x408] sm:$0xff]
          %v602 = vld [vmem:[%s378 + $0x410] sm:$0xff]
          %v603 = vld [vmem:[%s378 + $0x418] sm:$0xff]
          %v604 = vld [vmem:[%s378 + $0x420] sm:$0xff]
          %v605 = vld [vmem:[%s378 + $0x428] sm:$0xff]
          %v606 = vld [vmem:[%s378 + $0x430] sm:$0xff]
          %v607 = vld [vmem:[%s378 + $0x438] sm:$0xff]
          %v608 = vld [vmem:[%s378 + $0x440] sm:$0xff]
          %v609 = vld [vmem:[%s378 + $0x448] sm:$0xff]
          %v610 = vld [vmem:[%s378 + $0x450] sm:$0xff]
          %v611 = vld [vmem:[%s378 + $0x458] sm:$0xff]
          %v612 = vld [vmem:[%s378 + $0x460] sm:$0xff]
          %v613 = vld [vmem:[%s378 + $0x468] sm:$0xff]
          %v614 = vld [vmem:[%s378 + $0x470] sm:$0xff]
          %v615 = vld [vmem:[%s378 + $0x478] sm:$0xff]
          %v616 = vadd.f32 %v472, %v473
          %v617 = vadd.f32 %v616, %v474
          %v618 = vadd.f32 %v617, %v475
          %v619 = vadd.f32 %v618, %v476
          %v620 = vadd.f32 %v619, %v477
          %621 = vadd.xlane.f32.xlu0 %v620
          %v622 = vpop.xlane.xlu0 %621
          %v623 = vadd.f32 %v478, %v479
          %v624 = vadd.f32 %v623, %v480
          %v625 = vadd.f32 %v624, %v481
          %v626 = vadd.f32 %v625, %v482
          %v627 = vadd.f32 %v626, %v483
          %628 = vadd.xlane.f32.xlu0 %v627
          %v629 = vpop.xlane.xlu0 %628
          %v630 = vadd.f32 %v484, %v485
          %v631 = vadd.f32 %v630, %v486
          %v632 = vadd.f32 %v631, %v487
          %v633 = vadd.f32 %v632, %v488
          %v634 = vadd.f32 %v633, %v489
          %635 = vadd.xlane.f32.xlu0 %v634
          %v636 = vpop.xlane.xlu0 %635
          %v637 = vadd.f32 %v490, %v491
          %v638 = vadd.f32 %v637, %v492
          %v639 = vadd.f32 %v638, %v493
          %v640 = vadd.f32 %v639, %v494
          %v641 = vadd.f32 %v640, %v495
          %642 = vadd.xlane.f32.xlu0 %v641
          %v643 = vpop.xlane.xlu0 %642
          %v644 = vadd.f32 %v496, %v497
          %v645 = vadd.f32 %v644, %v498
          %v646 = vadd.f32 %v645, %v499
          %v647 = vadd.f32 %v646, %v500
          %v648 = vadd.f32 %v647, %v501
          %649 = vadd.xlane.f32.xlu0 %v648
          %v650 = vpop.xlane.xlu0 %649
          %v651 = vadd.f32 %v502, %v503
          %v652 = vadd.f32 %v651, %v504
          %v653 = vadd.f32 %v652, %v505
          %v654 = vadd.f32 %v653, %v506
          %v655 = vadd.f32 %v654, %v507
          %656 = vadd.xlane.f32.xlu0 %v655
          %v657 = vpop.xlane.xlu0 %656
          %v658 = vadd.f32 %v508, %v509
          %v659 = vadd.f32 %v658, %v510
          %v660 = vadd.f32 %v659, %v511
          %v661 = vadd.f32 %v660, %v512
          %v662 = vadd.f32 %v661, %v513
          %663 = vadd.xlane.f32.xlu0 %v662
          %v664 = vpop.xlane.xlu0 %663
          %v665 = vadd.f32 %v514, %v515
          %v666 = vadd.f32 %v665, %v516
          %v667 = vadd.f32 %v666, %v517
          %v668 = vadd.f32 %v667, %v518
          %v669 = vadd.f32 %v668, %v519
          %670 = vadd.xlane.f32.xlu0 %v669
          %v671 = vpop.xlane.xlu0 %670
          %v672 = vadd.f32 %v520, %v521
          %v673 = vadd.f32 %v672, %v522
          %v674 = vadd.f32 %v673, %v523
          %v675 = vadd.f32 %v674, %v524
          %v676 = vadd.f32 %v675, %v525
          %677 = vadd.xlane.f32.xlu0 %v676
          %v678 = vpop.xlane.xlu0 %677
          %v679 = vadd.f32 %v526, %v527
          %v680 = vadd.f32 %v679, %v528
          %v681 = vadd.f32 %v680, %v529
          %v682 = vadd.f32 %v681, %v530
          %v683 = vadd.f32 %v682, %v531
          %684 = vadd.xlane.f32.xlu0 %v683
          %v685 = vpop.xlane.xlu0 %684
          %v686 = vadd.f32 %v532, %v533
          %v687 = vadd.f32 %v686, %v534
          %v688 = vadd.f32 %v687, %v535
          %v689 = vadd.f32 %v688, %v536
          %v690 = vadd.f32 %v689, %v537
          %691 = vadd.xlane.f32.xlu0 %v690
          %v692 = vpop.xlane.xlu0 %691
          %v693 = vadd.f32 %v538, %v539
          %v694 = vadd.f32 %v693, %v540
          %v695 = vadd.f32 %v694, %v541
          %v696 = vadd.f32 %v695, %v542
          %v697 = vadd.f32 %v696, %v543
          %698 = vadd.xlane.f32.xlu0 %v697
          %v699 = vpop.xlane.xlu0 %698
          %v700 = vadd.f32 %v544, %v545
          %v701 = vadd.f32 %v700, %v546
          %v702 = vadd.f32 %v701, %v547
          %v703 = vadd.f32 %v702, %v548
          %v704 = vadd.f32 %v703, %v549
          %705 = vadd.xlane.f32.xlu0 %v704
          %v706 = vpop.xlane.xlu0 %705
          %v707 = vadd.f32 %v550, %v551
          %v708 = vadd.f32 %v707, %v552
          %v709 = vadd.f32 %v708, %v553
          %v710 = vadd.f32 %v709, %v554
          %v711 = vadd.f32 %v710, %v555
          %712 = vadd.xlane.f32.xlu0 %v711
          %v713 = vpop.xlane.xlu0 %712
          %v714 = vadd.f32 %v556, %v557
          %v715 = vadd.f32 %v714, %v558
          %v716 = vadd.f32 %v715, %v559
          %v717 = vadd.f32 %v716, %v560
          %v718 = vadd.f32 %v717, %v561
          %719 = vadd.xlane.f32.xlu0 %v718
          %v720 = vpop.xlane.xlu0 %719
          %v721 = vadd.f32 %v562, %v563
          %v722 = vadd.f32 %v721, %v564
          %v723 = vadd.f32 %v722, %v565
          %v724 = vadd.f32 %v723, %v566
          %v725 = vadd.f32 %v724, %v567
          %726 = vadd.xlane.f32.xlu0 %v725
          %v727 = vpop.xlane.xlu0 %726
          %v728 = vadd.f32 %v568, %v569
          %v729 = vadd.f32 %v728, %v570
          %v730 = vadd.f32 %v729, %v571
          %v731 = vadd.f32 %v730, %v572
          %v732 = vadd.f32 %v731, %v573
          %733 = vadd.xlane.f32.xlu0 %v732
          %v734 = vpop.xlane.xlu0 %733
          %v735 = vadd.f32 %v574, %v575
          %v736 = vadd.f32 %v735, %v576
          %v737 = vadd.f32 %v736, %v577
          %v738 = vadd.f32 %v737, %v578
          %v739 = vadd.f32 %v738, %v579
          %740 = vadd.xlane.f32.xlu0 %v739
          %v741 = vpop.xlane.xlu0 %740
          %v742 = vadd.f32 %v580, %v581
          %v743 = vadd.f32 %v742, %v582
          %v744 = vadd.f32 %v743, %v583
          %v745 = vadd.f32 %v744, %v584
          %v746 = vadd.f32 %v745, %v585
          %747 = vadd.xlane.f32.xlu0 %v746
          %v748 = vpop.xlane.xlu0 %747
          %v749 = vadd.f32 %v586, %v587
          %v750 = vadd.f32 %v749, %v588
          %v751 = vadd.f32 %v750, %v589
          %v752 = vadd.f32 %v751, %v590
          %v753 = vadd.f32 %v752, %v591
          %754 = vadd.xlane.f32.xlu0 %v753
          %v755 = vpop.xlane.xlu0 %754
          %v756 = vadd.f32 %v592, %v593
          %v757 = vadd.f32 %v756, %v594
          %v758 = vadd.f32 %v757, %v595
          %v759 = vadd.f32 %v758, %v596
          %v760 = vadd.f32 %v759, %v597
          %761 = vadd.xlane.f32.xlu0 %v760
          %v762 = vpop.xlane.xlu0 %761
          %v763 = vadd.f32 %v598, %v599
          %v764 = vadd.f32 %v763, %v600
          %v765 = vadd.f32 %v764, %v601
          %v766 = vadd.f32 %v765, %v602
          %v767 = vadd.f32 %v766, %v603
          %768 = vadd.xlane.f32.xlu0 %v767
          %v769 = vpop.xlane.xlu0 %768
          %v770 = vadd.f32 %v604, %v605
          %v771 = vadd.f32 %v770, %v606
          %v772 = vadd.f32 %v771, %v607
          %v773 = vadd.f32 %v772, %v608
          %v774 = vadd.f32 %v773, %v609
          %775 = vadd.xlane.f32.xlu0 %v774
          %v776 = vpop.xlane.xlu0 %775
          %v777 = vadd.f32 %v610, %v611
          %v778 = vadd.f32 %v777, %v612
          %v779 = vadd.f32 %v778, %v613
          %v780 = vadd.f32 %v779, %v614
          %v781 = vadd.f32 %v780, %v615
          %782 = vadd.xlane.f32.xlu0 %v781
          %v783 = vpop.xlane.xlu0 %782
          %v784 = vrcp.pop 768.0
          %v785 = vmul.f32 %v622, %v784
          %v786 = vmul.f32 %v629, %v784
          %v787 = vmul.f32 %v636, %v784
          %v788 = vmul.f32 %v643, %v784
          %v789 = vmul.f32 %v650, %v784
          %v790 = vmul.f32 %v657, %v784
          %v791 = vmul.f32 %v664, %v784
          %v792 = vmul.f32 %v671, %v784
          %v793 = vmul.f32 %v678, %v784
          %v794 = vmul.f32 %v685, %v784
          %v795 = vmul.f32 %v692, %v784
          %v796 = vmul.f32 %v699, %v784
          %v797 = vmul.f32 %v706, %v784
          %v798 = vmul.f32 %v713, %v784
          %v799 = vmul.f32 %v720, %v784
          %v800 = vmul.f32 %v727, %v784
          %v801 = vmul.f32 %v734, %v784
          %v802 = vmul.f32 %v741, %v784
          %v803 = vmul.f32 %v748, %v784
          %v804 = vmul.f32 %v755, %v784
          %v805 = vmul.f32 %v762, %v784
          %v806 = vmul.f32 %v769, %v784
          %v807 = vmul.f32 %v776, %v784
          %v808 = vmul.f32 %v783, %v784
          %v809 = vsub.f32 %v472, %v785
          %v810 = vsub.f32 %v473, %v785
          %v811 = vsub.f32 %v474, %v785
          %v812 = vsub.f32 %v475, %v785
          %v813 = vsub.f32 %v476, %v785
          %v814 = vsub.f32 %v477, %v785
          %v815 = vsub.f32 %v478, %v786
          %v816 = vsub.f32 %v479, %v786
          %v817 = vsub.f32 %v480, %v786
          %v818 = vsub.f32 %v481, %v786
          %v819 = vsub.f32 %v482, %v786
          %v820 = vsub.f32 %v483, %v786
          %v821 = vsub.f32 %v484, %v787
          %v822 = vsub.f32 %v485, %v787
          %v823 = vsub.f32 %v486, %v787
          %v824 = vsub.f32 %v487, %v787
          %v825 = vsub.f32 %v488, %v787
          %v826 = vsub.f32 %v489, %v787
          %v827 = vsub.f32 %v490, %v788
          %v828 = vsub.f32 %v491, %v788
          %v829 = vsub.f32 %v492, %v788
          %v830 = vsub.f32 %v493, %v788
          %v831 = vsub.f32 %v494, %v788
          %v832 = vsub.f32 %v495, %v788
          %v833 = vsub.f32 %v496, %v789
          %v834 = vsub.f32 %v497, %v789
          %v835 = vsub.f32 %v498, %v789
          %v836 = vsub.f32 %v499, %v789
          %v837 = vsub.f32 %v500, %v789
          %v838 = vsub.f32 %v501, %v789
          %v839 = vsub.f32 %v502, %v790
          %v840 = vsub.f32 %v503, %v790
          %v841 = vsub.f32 %v504, %v790
          %v842 = vsub.f32 %v505, %v790
          %v843 = vsub.f32 %v506, %v790
          %v844 = vsub.f32 %v507, %v790
          %v845 = vsub.f32 %v508, %v791
          %v846 = vsub.f32 %v509, %v791
          %v847 = vsub.f32 %v510, %v791
          %v848 = vsub.f32 %v511, %v791
          %v849 = vsub.f32 %v512, %v791
          %v850 = vsub.f32 %v513, %v791
          %v851 = vsub.f32 %v514, %v792
          %v852 = vsub.f32 %v515, %v792
          %v853 = vsub.f32 %v516, %v792
          %v854 = vsub.f32 %v517, %v792
          %v855 = vsub.f32 %v518, %v792
          %v856 = vsub.f32 %v519, %v792
          %v857 = vsub.f32 %v520, %v793
          %v858 = vsub.f32 %v521, %v793
          %v859 = vsub.f32 %v522, %v793
          %v860 = vsub.f32 %v523, %v793
          %v861 = vsub.f32 %v524, %v793
          %v862 = vsub.f32 %v525, %v793
          %v863 = vsub.f32 %v526, %v794
          %v864 = vsub.f32 %v527, %v794
          %v865 = vsub.f32 %v528, %v794
          %v866 = vsub.f32 %v529, %v794
          %v867 = vsub.f32 %v530, %v794
          %v868 = vsub.f32 %v531, %v794
          %v869 = vsub.f32 %v532, %v795
          %v870 = vsub.f32 %v533, %v795
          %v871 = vsub.f32 %v534, %v795
          %v872 = vsub.f32 %v535, %v795
          %v873 = vsub.f32 %v536, %v795
          %v874 = vsub.f32 %v537, %v795
          %v875 = vsub.f32 %v538, %v796
          %v876 = vsub.f32 %v539, %v796
          %v877 = vsub.f32 %v540, %v796
          %v878 = vsub.f32 %v541, %v796
          %v879 = vsub.f32 %v542, %v796
          %v880 = vsub.f32 %v543, %v796
          %v881 = vsub.f32 %v544, %v797
          %v882 = vsub.f32 %v545, %v797
          %v883 = vsub.f32 %v546, %v797
          %v884 = vsub.f32 %v547, %v797
          %v885 = vsub.f32 %v548, %v797
          %v886 = vsub.f32 %v549, %v797
          %v887 = vsub.f32 %v550, %v798
          %v888 = vsub.f32 %v551, %v798
          %v889 = vsub.f32 %v552, %v798
          %v890 = vsub.f32 %v553, %v798
          %v891 = vsub.f32 %v554, %v798
          %v892 = vsub.f32 %v555, %v798
          %v893 = vsub.f32 %v556, %v799
          %v894 = vsub.f32 %v557, %v799
          %v895 = vsub.f32 %v558, %v799
          %v896 = vsub.f32 %v559, %v799
          %v897 = vsub.f32 %v560, %v799
          %v898 = vsub.f32 %v561, %v799
          %v899 = vsub.f32 %v562, %v800
          %v900 = vsub.f32 %v563, %v800
          %v901 = vsub.f32 %v564, %v800
          %v902 = vsub.f32 %v565, %v800
          %v903 = vsub.f32 %v566, %v800
          %v904 = vsub.f32 %v567, %v800
          %v905 = vsub.f32 %v568, %v801
          %v906 = vsub.f32 %v569, %v801
          %v907 = vsub.f32 %v570, %v801
          %v908 = vsub.f32 %v571, %v801
          %v909 = vsub.f32 %v572, %v801
          %v910 = vsub.f32 %v573, %v801
          %v911 = vsub.f32 %v574, %v802
          %v912 = vsub.f32 %v575, %v802
          %v913 = vsub.f32 %v576, %v802
          %v914 = vsub.f32 %v577, %v802
          %v915 = vsub.f32 %v578, %v802
          %v916 = vsub.f32 %v579, %v802
          %v917 = vsub.f32 %v580, %v803
          %v918 = vsub.f32 %v581, %v803
          %v919 = vsub.f32 %v582, %v803
          %v920 = vsub.f32 %v583, %v803
          %v921 = vsub.f32 %v584, %v803
          %v922 = vsub.f32 %v585, %v803
          %v923 = vsub.f32 %v586, %v804
          %v924 = vsub.f32 %v587, %v804
          %v925 = vsub.f32 %v588, %v804
          %v926 = vsub.f32 %v589, %v804
          %v927 = vsub.f32 %v590, %v804
          %v928 = vsub.f32 %v591, %v804
          %v929 = vsub.f32 %v592, %v805
          %v930 = vsub.f32 %v593, %v805
          %v931 = vsub.f32 %v594, %v805
          %v932 = vsub.f32 %v595, %v805
          %v933 = vsub.f32 %v596, %v805
          %v934 = vsub.f32 %v597, %v805
          %v935 = vsub.f32 %v598, %v806
          %v936 = vsub.f32 %v599, %v806
          %v937 = vsub.f32 %v600, %v806
          %v938 = vsub.f32 %v601, %v806
          %v939 = vsub.f32 %v602, %v806
          %v940 = vsub.f32 %v603, %v806
          %v941 = vsub.f32 %v604, %v807
          %v942 = vsub.f32 %v605, %v807
          %v943 = vsub.f32 %v606, %v807
          %v944 = vsub.f32 %v607, %v807
          %v945 = vsub.f32 %v608, %v807
          %v946 = vsub.f32 %v609, %v807
          %v947 = vsub.f32 %v610, %v808
          %v948 = vsub.f32 %v611, %v808
          %v949 = vsub.f32 %v612, %v808
          %v950 = vsub.f32 %v613, %v808
          %v951 = vsub.f32 %v614, %v808
          %v952 = vsub.f32 %v615, %v808
          %v953 = vmul.f32 %v809, %v809
          %v954 = vmul.f32 %v810, %v810
          %v955 = vmul.f32 %v811, %v811
          %v956 = vmul.f32 %v812, %v812
          %v957 = vmul.f32 %v813, %v813
          %v958 = vmul.f32 %v814, %v814
          %v959 = vmul.f32 %v815, %v815
          %v960 = vmul.f32 %v816, %v816
          %v961 = vmul.f32 %v817, %v817
          %v962 = vmul.f32 %v818, %v818
          %v963 = vmul.f32 %v819, %v819
          %v964 = vmul.f32 %v820, %v820
          %v965 = vmul.f32 %v821, %v821
          %v966 = vmul.f32 %v822, %v822
          %v967 = vmul.f32 %v823, %v823
          %v968 = vmul.f32 %v824, %v824
          %v969 = vmul.f32 %v825, %v825
          %v970 = vmul.f32 %v826, %v826
          %v971 = vmul.f32 %v827, %v827
          %v972 = vmul.f32 %v828, %v828
          %v973 = vmul.f32 %v829, %v829
          %v974 = vmul.f32 %v830, %v830
          %v975 = vmul.f32 %v831, %v831
          %v976 = vmul.f32 %v832, %v832
          %v977 = vmul.f32 %v833, %v833
          %v978 = vmul.f32 %v834, %v834
          %v979 = vmul.f32 %v835, %v835
          %v980 = vmul.f32 %v836, %v836
          %v981 = vmul.f32 %v837, %v837
          %v982 = vmul.f32 %v838, %v838
          %v983 = vmul.f32 %v839, %v839
          %v984 = vmul.f32 %v840, %v840
          %v985 = vmul.f32 %v841, %v841
          %v986 = vmul.f32 %v842, %v842
          %v987 = vmul.f32 %v843, %v843
          %v988 = vmul.f32 %v844, %v844
          %v989 = vmul.f32 %v845, %v845
          %v990 = vmul.f32 %v846, %v846
          %v991 = vmul.f32 %v847, %v847
          %v992 = vmul.f32 %v848, %v848
          %v993 = vmul.f32 %v849, %v849
          %v994 = vmul.f32 %v850, %v850
          %v995 = vmul.f32 %v851, %v851
          %v996 = vmul.f32 %v852, %v852
          %v997 = vmul.f32 %v853, %v853
          %v998 = vmul.f32 %v854, %v854
          %v999 = vmul.f32 %v855, %v855
          %v1000 = vmul.f32 %v856, %v856
          %v1001 = vmul.f32 %v857, %v857
          %v1002 = vmul.f32 %v858, %v858
          %v1003 = vmul.f32 %v859, %v859
          %v1004 = vmul.f32 %v860, %v860
          %v1005 = vmul.f32 %v861, %v861
          %v1006 = vmul.f32 %v862, %v862
          %v1007 = vmul.f32 %v863, %v863
          %v1008 = vmul.f32 %v864, %v864
          %v1009 = vmul.f32 %v865, %v865
          %v1010 = vmul.f32 %v866, %v866
          %v1011 = vmul.f32 %v867, %v867
          %v1012 = vmul.f32 %v868, %v868
          %v1013 = vmul.f32 %v869, %v869
          %v1014 = vmul.f32 %v870, %v870
          %v1015 = vmul.f32 %v871, %v871
          %v1016 = vmul.f32 %v872, %v872
          %v1017 = vmul.f32 %v873, %v873
          %v1018 = vmul.f32 %v874, %v874
          %v1019 = vmul.f32 %v875, %v875
          %v1020 = vmul.f32 %v876, %v876
          %v1021 = vmul.f32 %v877, %v877
          %v1022 = vmul.f32 %v878, %v878
          %v1023 = vmul.f32 %v879, %v879
          %v1024 = vmul.f32 %v880, %v880
          %v1025 = vmul.f32 %v881, %v881
          %v1026 = vmul.f32 %v882, %v882
          %v1027 = vmul.f32 %v883, %v883
          %v1028 = vmul.f32 %v884, %v884
          %v1029 = vmul.f32 %v885, %v885
          %v1030 = vmul.f32 %v886, %v886
          %v1031 = vmul.f32 %v887, %v887
          %v1032 = vmul.f32 %v888, %v888
          %v1033 = vmul.f32 %v889, %v889
          %v1034 = vmul.f32 %v890, %v890
          %v1035 = vmul.f32 %v891, %v891
          %v1036 = vmul.f32 %v892, %v892
          %v1037 = vmul.f32 %v893, %v893
          %v1038 = vmul.f32 %v894, %v894
          %v1039 = vmul.f32 %v895, %v895
          %v1040 = vmul.f32 %v896, %v896
          %v1041 = vmul.f32 %v897, %v897
          %v1042 = vmul.f32 %v898, %v898
          %v1043 = vmul.f32 %v899, %v899
          %v1044 = vmul.f32 %v900, %v900
          %v1045 = vmul.f32 %v901, %v901
          %v1046 = vmul.f32 %v902, %v902
          %v1047 = vmul.f32 %v903, %v903
          %v1048 = vmul.f32 %v904, %v904
          %v1049 = vmul.f32 %v905, %v905
          %v1050 = vmul.f32 %v906, %v906
          %v1051 = vmul.f32 %v907, %v907
          %v1052 = vmul.f32 %v908, %v908
          %v1053 = vmul.f32 %v909, %v909
          %v1054 = vmul.f32 %v910, %v910
          %v1055 = vmul.f32 %v911, %v911
          %v1056 = vmul.f32 %v912, %v912
          %v1057 = vmul.f32 %v913, %v913
          %v1058 = vmul.f32 %v914, %v914
          %v1059 = vmul.f32 %v915, %v915
          %v1060 = vmul.f32 %v916, %v916
          %v1061 = vmul.f32 %v917, %v917
          %v1062 = vmul.f32 %v918, %v918
          %v1063 = vmul.f32 %v919, %v919
          %v1064 = vmul.f32 %v920, %v920
          %v1065 = vmul.f32 %v921, %v921
          %v1066 = vmul.f32 %v922, %v922
          %v1067 = vmul.f32 %v923, %v923
          %v1068 = vmul.f32 %v924, %v924
          %v1069 = vmul.f32 %v925, %v925
          %v1070 = vmul.f32 %v926, %v926
          %v1071 = vmul.f32 %v927, %v927
          %v1072 = vmul.f32 %v928, %v928
          %v1073 = vmul.f32 %v929, %v929
          %v1074 = vmul.f32 %v930, %v930
          %v1075 = vmul.f32 %v931, %v931
          %v1076 = vmul.f32 %v932, %v932
          %v1077 = vmul.f32 %v933, %v933
          %v1078 = vmul.f32 %v934, %v934
          %v1079 = vmul.f32 %v935, %v935
          %v1080 = vmul.f32 %v936, %v936
          %v1081 = vmul.f32 %v937, %v937
          %v1082 = vmul.f32 %v938, %v938
          %v1083 = vmul.f32 %v939, %v939
          %v1084 = vmul.f32 %v940, %v940
          %v1085 = vmul.f32 %v941, %v941
          %v1086 = vmul.f32 %v942, %v942
          %v1087 = vmul.f32 %v943, %v943
          %v1088 = vmul.f32 %v944, %v944
          %v1089 = vmul.f32 %v945, %v945
          %v1090 = vmul.f32 %v946, %v946
          %v1091 = vmul.f32 %v947, %v947
          %v1092 = vmul.f32 %v948, %v948
          %v1093 = vmul.f32 %v949, %v949
          %v1094 = vmul.f32 %v950, %v950
          %v1095 = vmul.f32 %v951, %v951
          %v1096 = vmul.f32 %v952, %v952
          %v1097 = vadd.f32 %v953, %v954
          %v1098 = vadd.f32 %v1097, %v955
          %v1099 = vadd.f32 %v1098, %v956
          %v1100 = vadd.f32 %v1099, %v957
          %v1101 = vadd.f32 %v1100, %v958
          %1102 = vadd.xlane.f32.xlu0 %v1101
          %v1103 = vpop.xlane.xlu0 %1102
          %v1104 = vadd.f32 %v959, %v960
          %v1105 = vadd.f32 %v1104, %v961
          %v1106 = vadd.f32 %v1105, %v962
          %v1107 = vadd.f32 %v1106, %v963
          %v1108 = vadd.f32 %v1107, %v964
          %1109 = vadd.xlane.f32.xlu0 %v1108
          %v1110 = vpop.xlane.xlu0 %1109
          %v1111 = vadd.f32 %v965, %v966
          %v1112 = vadd.f32 %v1111, %v967
          %v1113 = vadd.f32 %v1112, %v968
          %v1114 = vadd.f32 %v1113, %v969
          %v1115 = vadd.f32 %v1114, %v970
          %1116 = vadd.xlane.f32.xlu0 %v1115
          %v1117 = vpop.xlane.xlu0 %1116
          %v1118 = vadd.f32 %v971, %v972
          %v1119 = vadd.f32 %v1118, %v973
          %v1120 = vadd.f32 %v1119, %v974
          %v1121 = vadd.f32 %v1120, %v975
          %v1122 = vadd.f32 %v1121, %v976
          %1123 = vadd.xlane.f32.xlu0 %v1122
          %v1124 = vpop.xlane.xlu0 %1123
          %v1125 = vadd.f32 %v977, %v978
          %v1126 = vadd.f32 %v1125, %v979
          %v1127 = vadd.f32 %v1126, %v980
          %v1128 = vadd.f32 %v1127, %v981
          %v1129 = vadd.f32 %v1128, %v982
          %1130 = vadd.xlane.f32.xlu0 %v1129
          %v1131 = vpop.xlane.xlu0 %1130
          %v1132 = vadd.f32 %v983, %v984
          %v1133 = vadd.f32 %v1132, %v985
          %v1134 = vadd.f32 %v1133, %v986
          %v1135 = vadd.f32 %v1134, %v987
          %v1136 = vadd.f32 %v1135, %v988
          %1137 = vadd.xlane.f32.xlu0 %v1136
          %v1138 = vpop.xlane.xlu0 %1137
          %v1139 = vadd.f32 %v989, %v990
          %v1140 = vadd.f32 %v1139, %v991
          %v1141 = vadd.f32 %v1140, %v992
          %v1142 = vadd.f32 %v1141, %v993
          %v1143 = vadd.f32 %v1142, %v994
          %1144 = vadd.xlane.f32.xlu0 %v1143
          %v1145 = vpop.xlane.xlu0 %1144
          %v1146 = vadd.f32 %v995, %v996
          %v1147 = vadd.f32 %v1146, %v997
          %v1148 = vadd.f32 %v1147, %v998
          %v1149 = vadd.f32 %v1148, %v999
          %v1150 = vadd.f32 %v1149, %v1000
          %1151 = vadd.xlane.f32.xlu0 %v1150
          %v1152 = vpop.xlane.xlu0 %1151
          %v1153 = vadd.f32 %v1001, %v1002
          %v1154 = vadd.f32 %v1153, %v1003
          %v1155 = vadd.f32 %v1154, %v1004
          %v1156 = vadd.f32 %v1155, %v1005
          %v1157 = vadd.f32 %v1156, %v1006
          %1158 = vadd.xlane.f32.xlu0 %v1157
          %v1159 = vpop.xlane.xlu0 %1158
          %v1160 = vadd.f32 %v1007, %v1008
          %v1161 = vadd.f32 %v1160, %v1009
          %v1162 = vadd.f32 %v1161, %v1010
          %v1163 = vadd.f32 %v1162, %v1011
          %v1164 = vadd.f32 %v1163, %v1012
          %1165 = vadd.xlane.f32.xlu0 %v1164
          %v1166 = vpop.xlane.xlu0 %1165
          %v1167 = vadd.f32 %v1013, %v1014
          %v1168 = vadd.f32 %v1167, %v1015
          %v1169 = vadd.f32 %v1168, %v1016
          %v1170 = vadd.f32 %v1169, %v1017
          %v1171 = vadd.f32 %v1170, %v1018
          %1172 = vadd.xlane.f32.xlu0 %v1171
          %v1173 = vpop.xlane.xlu0 %1172
          %v1174 = vadd.f32 %v1019, %v1020
          %v1175 = vadd.f32 %v1174, %v1021
          %v1176 = vadd.f32 %v1175, %v1022
          %v1177 = vadd.f32 %v1176, %v1023
          %v1178 = vadd.f32 %v1177, %v1024
          %1179 = vadd.xlane.f32.xlu0 %v1178
          %v1180 = vpop.xlane.xlu0 %1179
          %v1181 = vadd.f32 %v1025, %v1026
          %v1182 = vadd.f32 %v1181, %v1027
          %v1183 = vadd.f32 %v1182, %v1028
          %v1184 = vadd.f32 %v1183, %v1029
          %v1185 = vadd.f32 %v1184, %v1030
          %1186 = vadd.xlane.f32.xlu0 %v1185
          %v1187 = vpop.xlane.xlu0 %1186
          %v1188 = vadd.f32 %v1031, %v1032
          %v1189 = vadd.f32 %v1188, %v1033
          %v1190 = vadd.f32 %v1189, %v1034
          %v1191 = vadd.f32 %v1190, %v1035
          %v1192 = vadd.f32 %v1191, %v1036
          %1193 = vadd.xlane.f32.xlu0 %v1192
          %v1194 = vpop.xlane.xlu0 %1193
          %v1195 = vadd.f32 %v1037, %v1038
          %v1196 = vadd.f32 %v1195, %v1039
          %v1197 = vadd.f32 %v1196, %v1040
          %v1198 = vadd.f32 %v1197, %v1041
          %v1199 = vadd.f32 %v1198, %v1042
          %1200 = vadd.xlane.f32.xlu0 %v1199
          %v1201 = vpop.xlane.xlu0 %1200
          %v1202 = vadd.f32 %v1043, %v1044
          %v1203 = vadd.f32 %v1202, %v1045
          %v1204 = vadd.f32 %v1203, %v1046
          %v1205 = vadd.f32 %v1204, %v1047
          %v1206 = vadd.f32 %v1205, %v1048
          %1207 = vadd.xlane.f32.xlu0 %v1206
          %v1208 = vpop.xlane.xlu0 %1207
          %v1209 = vadd.f32 %v1049, %v1050
          %v1210 = vadd.f32 %v1209, %v1051
          %v1211 = vadd.f32 %v1210, %v1052
          %v1212 = vadd.f32 %v1211, %v1053
          %v1213 = vadd.f32 %v1212, %v1054
          %1214 = vadd.xlane.f32.xlu0 %v1213
          %v1215 = vpop.xlane.xlu0 %1214
          %v1216 = vadd.f32 %v1055, %v1056
          %v1217 = vadd.f32 %v1216, %v1057
          %v1218 = vadd.f32 %v1217, %v1058
          %v1219 = vadd.f32 %v1218, %v1059
          %v1220 = vadd.f32 %v1219, %v1060
          %1221 = vadd.xlane.f32.xlu0 %v1220
          %v1222 = vpop.xlane.xlu0 %1221
          %v1223 = vadd.f32 %v1061, %v1062
          %v1224 = vadd.f32 %v1223, %v1063
          %v1225 = vadd.f32 %v1224, %v1064
          %v1226 = vadd.f32 %v1225, %v1065
          %v1227 = vadd.f32 %v1226, %v1066
          %1228 = vadd.xlane.f32.xlu0 %v1227
          %v1229 = vpop.xlane.xlu0 %1228
          %v1230 = vadd.f32 %v1067, %v1068
          %v1231 = vadd.f32 %v1230, %v1069
          %v1232 = vadd.f32 %v1231, %v1070
          %v1233 = vadd.f32 %v1232, %v1071
          %v1234 = vadd.f32 %v1233, %v1072
          %1235 = vadd.xlane.f32.xlu0 %v1234
          %v1236 = vpop.xlane.xlu0 %1235
          %v1237 = vadd.f32 %v1073, %v1074
          %v1238 = vadd.f32 %v1237, %v1075
          %v1239 = vadd.f32 %v1238, %v1076
          %v1240 = vadd.f32 %v1239, %v1077
          %v1241 = vadd.f32 %v1240, %v1078
          %1242 = vadd.xlane.f32.xlu0 %v1241
          %v1243 = vpop.xlane.xlu0 %1242
          %v1244 = vadd.f32 %v1079, %v1080
          %v1245 = vadd.f32 %v1244, %v1081
          %v1246 = vadd.f32 %v1245, %v1082
          %v1247 = vadd.f32 %v1246, %v1083
          %v1248 = vadd.f32 %v1247, %v1084
          %1249 = vadd.xlane.f32.xlu0 %v1248
          %v1250 = vpop.xlane.xlu0 %1249
          %v1251 = vadd.f32 %v1085, %v1086
          %v1252 = vadd.f32 %v1251, %v1087
          %v1253 = vadd.f32 %v1252, %v1088
          %v1254 = vadd.f32 %v1253, %v1089
          %v1255 = vadd.f32 %v1254, %v1090
          %1256 = vadd.xlane.f32.xlu0 %v1255
          %v1257 = vpop.xlane.xlu0 %1256
          %v1258 = vadd.f32 %v1091, %v1092
          %v1259 = vadd.f32 %v1258, %v1093
          %v1260 = vadd.f32 %v1259, %v1094
          %v1261 = vadd.f32 %v1260, %v1095
          %v1262 = vadd.f32 %v1261, %v1096
          %1263 = vadd.xlane.f32.xlu0 %v1262
          %v1264 = vpop.xlane.xlu0 %1263
          %v1265 = vmul.f32 %v1103, %v784
          %v1266 = vmul.f32 %v1110, %v784
          %v1267 = vmul.f32 %v1117, %v784
          %v1268 = vmul.f32 %v1124, %v784
          %v1269 = vmul.f32 %v1131, %v784
          %v1270 = vmul.f32 %v1138, %v784
          %v1271 = vmul.f32 %v1145, %v784
          %v1272 = vmul.f32 %v1152, %v784
          %v1273 = vmul.f32 %v1159, %v784
          %v1274 = vmul.f32 %v1166, %v784
          %v1275 = vmul.f32 %v1173, %v784
          %v1276 = vmul.f32 %v1180, %v784
          %v1277 = vmul.f32 %v1187, %v784
          %v1278 = vmul.f32 %v1194, %v784
          %v1279 = vmul.f32 %v1201, %v784
          %v1280 = vmul.f32 %v1208, %v784
          %v1281 = vmul.f32 %v1215, %v784
          %v1282 = vmul.f32 %v1222, %v784
          %v1283 = vmul.f32 %v1229, %v784
          %v1284 = vmul.f32 %v1236, %v784
          %v1285 = vmul.f32 %v1243, %v784
          %v1286 = vmul.f32 %v1250, %v784
          %v1287 = vmul.f32 %v1257, %v784
          %v1288 = vmul.f32 %v1264, %v784
          %v1289 = vadd.f32 %v1265, 1e-12
          %v1290 = vadd.f32 %v1266, 1e-12
          %v1291 = vadd.f32 %v1267, 1e-12
          %v1292 = vadd.f32 %v1268, 1e-12
          %v1293 = vadd.f32 %v1269, 1e-12
          %v1294 = vadd.f32 %v1270, 1e-12
          %v1295 = vadd.f32 %v1271, 1e-12
          %v1296 = vadd.f32 %v1272, 1e-12
          %v1297 = vadd.f32 %v1273, 1e-12
          %v1298 = vadd.f32 %v1274, 1e-12
          %v1299 = vadd.f32 %v1275, 1e-12
          %v1300 = vadd.f32 %v1276, 1e-12
          %v1301 = vadd.f32 %v1277, 1e-12
          %v1302 = vadd.f32 %v1278, 1e-12
          %v1303 = vadd.f32 %v1279, 1e-12
          %v1304 = vadd.f32 %v1280, 1e-12
          %v1305 = vadd.f32 %v1281, 1e-12
          %v1306 = vadd.f32 %v1282, 1e-12
          %v1307 = vadd.f32 %v1283, 1e-12
          %v1308 = vadd.f32 %v1284, 1e-12
          %v1309 = vadd.f32 %v1285, 1e-12
          %v1310 = vadd.f32 %v1286, 1e-12
          %v1311 = vadd.f32 %v1287, 1e-12
          %v1312 = vadd.f32 %v1288, 1e-12
          %v1313 = vrsqrt.pop %v1289
          %v1314 = vrsqrt.pop %v1290
          %v1315 = vrsqrt.pop %v1291
          %v1316 = vrsqrt.pop %v1292
          %v1317 = vrsqrt.pop %v1293
          %v1318 = vrsqrt.pop %v1294
          %v1319 = vrsqrt.pop %v1295
          %v1320 = vrsqrt.pop %v1296
          %v1321 = vrsqrt.pop %v1297
          %v1322 = vrsqrt.pop %v1298
          %v1323 = vrsqrt.pop %v1299
          %v1324 = vrsqrt.pop %v1300
          %v1325 = vrsqrt.pop %v1301
          %v1326 = vrsqrt.pop %v1302
          %v1327 = vrsqrt.pop %v1303
          %v1328 = vrsqrt.pop %v1304
          %v1329 = vrsqrt.pop %v1305
          %v1330 = vrsqrt.pop %v1306
          %v1331 = vrsqrt.pop %v1307
          %v1332 = vrsqrt.pop %v1308
          %v1333 = vrsqrt.pop %v1309
          %v1334 = vrsqrt.pop %v1310
          %v1335 = vrsqrt.pop %v1311
          %v1336 = vrsqrt.pop %v1312
          %v1337 = vmul.f32 %v809, %v1313
          %v1338 = vmul.f32 %v810, %v1313
          %v1339 = vmul.f32 %v811, %v1313
          %v1340 = vmul.f32 %v812, %v1313
          %v1341 = vmul.f32 %v813, %v1313
          %v1342 = vmul.f32 %v814, %v1313
          %v1343 = vmul.f32 %v815, %v1314
          %v1344 = vmul.f32 %v816, %v1314
          %v1345 = vmul.f32 %v817, %v1314
          %v1346 = vmul.f32 %v818, %v1314
          %v1347 = vmul.f32 %v819, %v1314
          %v1348 = vmul.f32 %v820, %v1314
          %v1349 = vmul.f32 %v821, %v1315
          %v1350 = vmul.f32 %v822, %v1315
          %v1351 = vmul.f32 %v823, %v1315
          %v1352 = vmul.f32 %v824, %v1315
          %v1353 = vmul.f32 %v825, %v1315
          %v1354 = vmul.f32 %v826, %v1315
          %v1355 = vmul.f32 %v827, %v1316
          %v1356 = vmul.f32 %v828, %v1316
          %v1357 = vmul.f32 %v829, %v1316
          %v1358 = vmul.f32 %v830, %v1316
          %v1359 = vmul.f32 %v831, %v1316
          %v1360 = vmul.f32 %v832, %v1316
          %v1361 = vmul.f32 %v833, %v1317
          %v1362 = vmul.f32 %v834, %v1317
          %v1363 = vmul.f32 %v835, %v1317
          %v1364 = vmul.f32 %v836, %v1317
          %v1365 = vmul.f32 %v837, %v1317
          %v1366 = vmul.f32 %v838, %v1317
          %v1367 = vmul.f32 %v839, %v1318
          %v1368 = vmul.f32 %v840, %v1318
          %v1369 = vmul.f32 %v841, %v1318
          %v1370 = vmul.f32 %v842, %v1318
          %v1371 = vmul.f32 %v843, %v1318
          %v1372 = vmul.f32 %v844, %v1318
          %v1373 = vmul.f32 %v845, %v1319
          %v1374 = vmul.f32 %v846, %v1319
          %v1375 = vmul.f32 %v847, %v1319
          %v1376 = vmul.f32 %v848, %v1319
          %v1377 = vmul.f32 %v849, %v1319
          %v1378 = vmul.f32 %v850, %v1319
          %v1379 = vmul.f32 %v851, %v1320
          %v1380 = vmul.f32 %v852, %v1320
          %v1381 = vmul.f32 %v853, %v1320
          %v1382 = vmul.f32 %v854, %v1320
          %v1383 = vmul.f32 %v855, %v1320
          %v1384 = vmul.f32 %v856, %v1320
          %v1385 = vmul.f32 %v857, %v1321
          %v1386 = vmul.f32 %v858, %v1321
          %v1387 = vmul.f32 %v859, %v1321
          %v1388 = vmul.f32 %v860, %v1321
          %v1389 = vmul.f32 %v861, %v1321
          %v1390 = vmul.f32 %v862, %v1321
          %v1391 = vmul.f32 %v863, %v1322
          %v1392 = vmul.f32 %v864, %v1322
          %v1393 = vmul.f32 %v865, %v1322
          %v1394 = vmul.f32 %v866, %v1322
          %v1395 = vmul.f32 %v867, %v1322
          %v1396 = vmul.f32 %v868, %v1322
          %v1397 = vmul.f32 %v869, %v1323
          %v1398 = vmul.f32 %v870, %v1323
          %v1399 = vmul.f32 %v871, %v1323
          %v1400 = vmul.f32 %v872, %v1323
          %v1401 = vmul.f32 %v873, %v1323
          %v1402 = vmul.f32 %v874, %v1323
          %v1403 = vmul.f32 %v875, %v1324
          %v1404 = vmul.f32 %v876, %v1324
          %v1405 = vmul.f32 %v877, %v1324
          %v1406 = vmul.f32 %v878, %v1324
          %v1407 = vmul.f32 %v879, %v1324
          %v1408 = vmul.f32 %v880, %v1324
          %v1409 = vmul.f32 %v881, %v1325
          %v1410 = vmul.f32 %v882, %v1325
          %v1411 = vmul.f32 %v883, %v1325
          %v1412 = vmul.f32 %v884, %v1325
          %v1413 = vmul.f32 %v885, %v1325
          %v1414 = vmul.f32 %v886, %v1325
          %v1415 = vmul.f32 %v887, %v1326
          %v1416 = vmul.f32 %v888, %v1326
          %v1417 = vmul.f32 %v889, %v1326
          %v1418 = vmul.f32 %v890, %v1326
          %v1419 = vmul.f32 %v891, %v1326
          %v1420 = vmul.f32 %v892, %v1326
          %v1421 = vmul.f32 %v893, %v1327
          %v1422 = vmul.f32 %v894, %v1327
          %v1423 = vmul.f32 %v895, %v1327
          %v1424 = vmul.f32 %v896, %v1327
          %v1425 = vmul.f32 %v897, %v1327
          %v1426 = vmul.f32 %v898, %v1327
          %v1427 = vmul.f32 %v899, %v1328
          %v1428 = vmul.f32 %v900, %v1328
          %v1429 = vmul.f32 %v901, %v1328
          %v1430 = vmul.f32 %v902, %v1328
          %v1431 = vmul.f32 %v903, %v1328
          %v1432 = vmul.f32 %v904, %v1328
          %v1433 = vmul.f32 %v905, %v1329
          %v1434 = vmul.f32 %v906, %v1329
          %v1435 = vmul.f32 %v907, %v1329
          %v1436 = vmul.f32 %v908, %v1329
          %v1437 = vmul.f32 %v909, %v1329
          %v1438 = vmul.f32 %v910, %v1329
          %v1439 = vmul.f32 %v911, %v1330
          %v1440 = vmul.f32 %v912, %v1330
          %v1441 = vmul.f32 %v913, %v1330
          %v1442 = vmul.f32 %v914, %v1330
          %v1443 = vmul.f32 %v915, %v1330
          %v1444 = vmul.f32 %v916, %v1330
          %v1445 = vmul.f32 %v917, %v1331
          %v1446 = vmul.f32 %v918, %v1331
          %v1447 = vmul.f32 %v919, %v1331
          %v1448 = vmul.f32 %v920, %v1331
          %v1449 = vmul.f32 %v921, %v1331
          %v1450 = vmul.f32 %v922, %v1331
          %v1451 = vmul.f32 %v923, %v1332
          %v1452 = vmul.f32 %v924, %v1332
          %v1453 = vmul.f32 %v925, %v1332
          %v1454 = vmul.f32 %v926, %v1332
          %v1455 = vmul.f32 %v927, %v1332
          %v1456 = vmul.f32 %v928, %v1332
          %v1457 = vmul.f32 %v929, %v1333
          %v1458 = vmul.f32 %v930, %v1333
          %v1459 = vmul.f32 %v931, %v1333
          %v1460 = vmul.f32 %v932, %v1333
          %v1461 = vmul.f32 %v933, %v1333
          %v1462 = vmul.f32 %v934, %v1333
          %v1463 = vmul.f32 %v935, %v1334
          %v1464 = vmul.f32 %v936, %v1334
          %v1465 = vmul.f32 %v937, %v1334
          %v1466 = vmul.f32 %v938, %v1334
          %v1467 = vmul.f32 %v939, %v1334
          %v1468 = vmul.f32 %v940, %v1334
          %v1469 = vmul.f32 %v941, %v1335
          %v1470 = vmul.f32 %v942, %v1335
          %v1471 = vmul.f32 %v943, %v1335
          %v1472 = vmul.f32 %v944, %v1335
          %v1473 = vmul.f32 %v945, %v1335
          %v1474 = vmul.f32 %v946, %v1335
          %v1475 = vmul.f32 %v947, %v1336
          %v1476 = vmul.f32 %v948, %v1336
          %v1477 = vmul.f32 %v949, %v1336
          %v1478 = vmul.f32 %v950, %v1336
          %v1479 = vmul.f32 %v951, %v1336
          %v1480 = vmul.f32 %v952, %v1336
          %v1481 = vld [vmem:[#allocation7] sm:$0x3f]
          %v1483 = vlaneseq
          %v1484 = vshrl.u32 %v1483, 7
          %v1485 = vsub.s32 0, %v1484
          %v1486 = vrot.slane %v1481, %v1485
          %v1487 = vlaneseq
          %v1488 = vshrl.u32 %v1487, 7
          %v1489 = vsub.s32 1, %v1488
          %v1490 = vrot.slane %v1481, %v1489
          %v1491 = vlaneseq
          %v1492 = vshrl.u32 %v1491, 7
          %v1493 = vsub.s32 2, %v1492
          %v1494 = vrot.slane %v1481, %v1493
          %v1495 = vlaneseq
          %v1496 = vshrl.u32 %v1495, 7
          %v1497 = vsub.s32 3, %v1496
          %v1498 = vrot.slane %v1481, %v1497
          %v1499 = vlaneseq
          %v1500 = vshrl.u32 %v1499, 7
          %v1501 = vsub.s32 4, %v1500
          %v1502 = vrot.slane %v1481, %v1501
          %v1503 = vlaneseq
          %v1504 = vshrl.u32 %v1503, 7
          %v1505 = vsub.s32 5, %v1504
          %v1506 = vrot.slane %v1481, %v1505
          %v1513 = vmul.f32 %v1337, %v1486
          %v1514 = vmul.f32 %v1338, %v1490
          %v1515 = vmul.f32 %v1339, %v1494
          %v1516 = vmul.f32 %v1340, %v1498
          %v1517 = vmul.f32 %v1341, %v1502
          %v1518 = vmul.f32 %v1342, %v1506
          %v1519 = vmul.f32 %v1343, %v1486
          %v1520 = vmul.f32 %v1344, %v1490
          %v1521 = vmul.f32 %v1345, %v1494
          %v1522 = vmul.f32 %v1346, %v1498
          %v1523 = vmul.f32 %v1347, %v1502
          %v1524 = vmul.f32 %v1348, %v1506
          %v1525 = vmul.f32 %v1349, %v1486
          %v1526 = vmul.f32 %v1350, %v1490
          %v1527 = vmul.f32 %v1351, %v1494
          %v1528 = vmul.f32 %v1352, %v1498
          %v1529 = vmul.f32 %v1353, %v1502
          %v1530 = vmul.f32 %v1354, %v1506
          %v1531 = vmul.f32 %v1355, %v1486
          %v1532 = vmul.f32 %v1356, %v1490
          %v1533 = vmul.f32 %v1357, %v1494
          %v1534 = vmul.f32 %v1358, %v1498
          %v1535 = vmul.f32 %v1359, %v1502
          %v1536 = vmul.f32 %v1360, %v1506
          %v1537 = vmul.f32 %v1361, %v1486
          %v1538 = vmul.f32 %v1362, %v1490
          %v1539 = vmul.f32 %v1363, %v1494
          %v1540 = vmul.f32 %v1364, %v1498
          %v1541 = vmul.f32 %v1365, %v1502
          %v1542 = vmul.f32 %v1366, %v1506
          %v1543 = vmul.f32 %v1367, %v1486
          %v1544 = vmul.f32 %v1368, %v1490
          %v1545 = vmul.f32 %v1369, %v1494
          %v1546 = vmul.f32 %v1370, %v1498
          %v1547 = vmul.f32 %v1371, %v1502
          %v1548 = vmul.f32 %v1372, %v1506
          %v1549 = vmul.f32 %v1373, %v1486
          %v1550 = vmul.f32 %v1374, %v1490
          %v1551 = vmul.f32 %v1375, %v1494
          %v1552 = vmul.f32 %v1376, %v1498
          %v1553 = vmul.f32 %v1377, %v1502
          %v1554 = vmul.f32 %v1378, %v1506
          %v1555 = vmul.f32 %v1379, %v1486
          %v1556 = vmul.f32 %v1380, %v1490
          %v1557 = vmul.f32 %v1381, %v1494
          %v1558 = vmul.f32 %v1382, %v1498
          %v1559 = vmul.f32 %v1383, %v1502
          %v1560 = vmul.f32 %v1384, %v1506
          %v1561 = vmul.f32 %v1385, %v1486
          %v1562 = vmul.f32 %v1386, %v1490
          %v1563 = vmul.f32 %v1387, %v1494
          %v1564 = vmul.f32 %v1388, %v1498
          %v1565 = vmul.f32 %v1389, %v1502
          %v1566 = vmul.f32 %v1390, %v1506
          %v1567 = vmul.f32 %v1391, %v1486
          %v1568 = vmul.f32 %v1392, %v1490
          %v1569 = vmul.f32 %v1393, %v1494
          %v1570 = vmul.f32 %v1394, %v1498
          %v1571 = vmul.f32 %v1395, %v1502
          %v1572 = vmul.f32 %v1396, %v1506
          %v1573 = vmul.f32 %v1397, %v1486
          %v1574 = vmul.f32 %v1398, %v1490
          %v1575 = vmul.f32 %v1399, %v1494
          %v1576 = vmul.f32 %v1400, %v1498
          %v1577 = vmul.f32 %v1401, %v1502
          %v1578 = vmul.f32 %v1402, %v1506
          %v1579 = vmul.f32 %v1403, %v1486
          %v1580 = vmul.f32 %v1404, %v1490
          %v1581 = vmul.f32 %v1405, %v1494
          %v1582 = vmul.f32 %v1406, %v1498
          %v1583 = vmul.f32 %v1407, %v1502
          %v1584 = vmul.f32 %v1408, %v1506
          %v1585 = vmul.f32 %v1409, %v1486
          %v1586 = vmul.f32 %v1410, %v1490
          %v1587 = vmul.f32 %v1411, %v1494
          %v1588 = vmul.f32 %v1412, %v1498
          %v1589 = vmul.f32 %v1413, %v1502
          %v1590 = vmul.f32 %v1414, %v1506
          %v1591 = vmul.f32 %v1415, %v1486
          %v1592 = vmul.f32 %v1416, %v1490
          %v1593 = vmul.f32 %v1417, %v1494
          %v1594 = vmul.f32 %v1418, %v1498
          %v1595 = vmul.f32 %v1419, %v1502
          %v1596 = vmul.f32 %v1420, %v1506
          %v1597 = vmul.f32 %v1421, %v1486
          %v1598 = vmul.f32 %v1422, %v1490
          %v1599 = vmul.f32 %v1423, %v1494
          %v1600 = vmul.f32 %v1424, %v1498
          %v1601 = vmul.f32 %v1425, %v1502
          %v1602 = vmul.f32 %v1426, %v1506
          %v1603 = vmul.f32 %v1427, %v1486
          %v1604 = vmul.f32 %v1428, %v1490
          %v1605 = vmul.f32 %v1429, %v1494
          %v1606 = vmul.f32 %v1430, %v1498
          %v1607 = vmul.f32 %v1431, %v1502
          %v1608 = vmul.f32 %v1432, %v1506
          %v1609 = vmul.f32 %v1433, %v1486
          %v1610 = vmul.f32 %v1434, %v1490
          %v1611 = vmul.f32 %v1435, %v1494
          %v1612 = vmul.f32 %v1436, %v1498
          %v1613 = vmul.f32 %v1437, %v1502
          %v1614 = vmul.f32 %v1438, %v1506
          %v1615 = vmul.f32 %v1439, %v1486
          %v1616 = vmul.f32 %v1440, %v1490
          %v1617 = vmul.f32 %v1441, %v1494
          %v1618 = vmul.f32 %v1442, %v1498
          %v1619 = vmul.f32 %v1443, %v1502
          %v1620 = vmul.f32 %v1444, %v1506
          %v1621 = vmul.f32 %v1445, %v1486
          %v1622 = vmul.f32 %v1446, %v1490
          %v1623 = vmul.f32 %v1447, %v1494
          %v1624 = vmul.f32 %v1448, %v1498
          %v1625 = vmul.f32 %v1449, %v1502
          %v1626 = vmul.f32 %v1450, %v1506
          %v1627 = vmul.f32 %v1451, %v1486
          %v1628 = vmul.f32 %v1452, %v1490
          %v1629 = vmul.f32 %v1453, %v1494
          %v1630 = vmul.f32 %v1454, %v1498
          %v1631 = vmul.f32 %v1455, %v1502
          %v1632 = vmul.f32 %v1456, %v1506
          %v1633 = vmul.f32 %v1457, %v1486
          %v1634 = vmul.f32 %v1458, %v1490
          %v1635 = vmul.f32 %v1459, %v1494
          %v1636 = vmul.f32 %v1460, %v1498
          %v1637 = vmul.f32 %v1461, %v1502
          %v1638 = vmul.f32 %v1462, %v1506
          %v1639 = vmul.f32 %v1463, %v1486
          %v1640 = vmul.f32 %v1464, %v1490
          %v1641 = vmul.f32 %v1465, %v1494
          %v1642 = vmul.f32 %v1466, %v1498
          %v1643 = vmul.f32 %v1467, %v1502
          %v1644 = vmul.f32 %v1468, %v1506
          %v1645 = vmul.f32 %v1469, %v1486
          %v1646 = vmul.f32 %v1470, %v1490
          %v1647 = vmul.f32 %v1471, %v1494
          %v1648 = vmul.f32 %v1472, %v1498
          %v1649 = vmul.f32 %v1473, %v1502
          %v1650 = vmul.f32 %v1474, %v1506
          %v1651 = vmul.f32 %v1475, %v1486
          %v1652 = vmul.f32 %v1476, %v1490
          %v1653 = vmul.f32 %v1477, %v1494
          %v1654 = vmul.f32 %v1478, %v1498
          %v1655 = vmul.f32 %v1479, %v1502
          %v1656 = vmul.f32 %v1480, %v1506
          %v1657 = vld [vmem:[#allocation9] sm:$0x3f]
          %v1659 = vlaneseq
          %v1660 = vshrl.u32 %v1659, 7
          %v1661 = vsub.s32 0, %v1660
          %v1662 = vrot.slane %v1657, %v1661
          %v1663 = vlaneseq
          %v1664 = vshrl.u32 %v1663, 7
          %v1665 = vsub.s32 1, %v1664
          %v1666 = vrot.slane %v1657, %v1665
          %v1667 = vlaneseq
          %v1668 = vshrl.u32 %v1667, 7
          %v1669 = vsub.s32 2, %v1668
          %v1670 = vrot.slane %v1657, %v1669
          %v1671 = vlaneseq
          %v1672 = vshrl.u32 %v1671, 7
          %v1673 = vsub.s32 3, %v1672
          %v1674 = vrot.slane %v1657, %v1673
          %v1675 = vlaneseq
          %v1676 = vshrl.u32 %v1675, 7
          %v1677 = vsub.s32 4, %v1676
          %v1678 = vrot.slane %v1657, %v1677
          %v1679 = vlaneseq
          %v1680 = vshrl.u32 %v1679, 7
          %v1681 = vsub.s32 5, %v1680
          %v1682 = vrot.slane %v1657, %v1681
          %v1689 = vadd.f32 %v1513, %v1662
          %v1690 = vadd.f32 %v1514, %v1666
          %v1691 = vadd.f32 %v1515, %v1670
          %v1692 = vadd.f32 %v1516, %v1674
          %v1693 = vadd.f32 %v1517, %v1678
          %v1694 = vadd.f32 %v1518, %v1682
          %v1695 = vadd.f32 %v1519, %v1662
          %v1696 = vadd.f32 %v1520, %v1666
          %v1697 = vadd.f32 %v1521, %v1670
          %v1698 = vadd.f32 %v1522, %v1674
          %v1699 = vadd.f32 %v1523, %v1678
          %v1700 = vadd.f32 %v1524, %v1682
          %v1701 = vadd.f32 %v1525, %v1662
          %v1702 = vadd.f32 %v1526, %v1666
          %v1703 = vadd.f32 %v1527, %v1670
          %v1704 = vadd.f32 %v1528, %v1674
          %v1705 = vadd.f32 %v1529, %v1678
          %v1706 = vadd.f32 %v1530, %v1682
          %v1707 = vadd.f32 %v1531, %v1662
          %v1708 = vadd.f32 %v1532, %v1666
          %v1709 = vadd.f32 %v1533, %v1670
          %v1710 = vadd.f32 %v1534, %v1674
          %v1711 = vadd.f32 %v1535, %v1678
          %v1712 = vadd.f32 %v1536, %v1682
          %v1713 = vadd.f32 %v1537, %v1662
          %v1714 = vadd.f32 %v1538, %v1666
          %v1715 = vadd.f32 %v1539, %v1670
          %v1716 = vadd.f32 %v1540, %v1674
          %v1717 = vadd.f32 %v1541, %v1678
          %v1718 = vadd.f32 %v1542, %v1682
          %v1719 = vadd.f32 %v1543, %v1662
          %v1720 = vadd.f32 %v1544, %v1666
          %v1721 = vadd.f32 %v1545, %v1670
          %v1722 = vadd.f32 %v1546, %v1674
          %v1723 = vadd.f32 %v1547, %v1678
          %v1724 = vadd.f32 %v1548, %v1682
          %v1725 = vadd.f32 %v1549, %v1662
          %v1726 = vadd.f32 %v1550, %v1666
          %v1727 = vadd.f32 %v1551, %v1670
          %v1728 = vadd.f32 %v1552, %v1674
          %v1729 = vadd.f32 %v1553, %v1678
          %v1730 = vadd.f32 %v1554, %v1682
          %v1731 = vadd.f32 %v1555, %v1662
          %v1732 = vadd.f32 %v1556, %v1666
          %v1733 = vadd.f32 %v1557, %v1670
          %v1734 = vadd.f32 %v1558, %v1674
          %v1735 = vadd.f32 %v1559, %v1678
          %v1736 = vadd.f32 %v1560, %v1682
          %v1737 = vadd.f32 %v1561, %v1662
          %v1738 = vadd.f32 %v1562, %v1666
          %v1739 = vadd.f32 %v1563, %v1670
          %v1740 = vadd.f32 %v1564, %v1674
          %v1741 = vadd.f32 %v1565, %v1678
          %v1742 = vadd.f32 %v1566, %v1682
          %v1743 = vadd.f32 %v1567, %v1662
          %v1744 = vadd.f32 %v1568, %v1666
          %v1745 = vadd.f32 %v1569, %v1670
          %v1746 = vadd.f32 %v1570, %v1674
          %v1747 = vadd.f32 %v1571, %v1678
          %v1748 = vadd.f32 %v1572, %v1682
          %v1749 = vadd.f32 %v1573, %v1662
          %v1750 = vadd.f32 %v1574, %v1666
          %v1751 = vadd.f32 %v1575, %v1670
          %v1752 = vadd.f32 %v1576, %v1674
          %v1753 = vadd.f32 %v1577, %v1678
          %v1754 = vadd.f32 %v1578, %v1682
          %v1755 = vadd.f32 %v1579, %v1662
          %v1756 = vadd.f32 %v1580, %v1666
          %v1757 = vadd.f32 %v1581, %v1670
          %v1758 = vadd.f32 %v1582, %v1674
          %v1759 = vadd.f32 %v1583, %v1678
          %v1760 = vadd.f32 %v1584, %v1682
          %v1761 = vadd.f32 %v1585, %v1662
          %v1762 = vadd.f32 %v1586, %v1666
          %v1763 = vadd.f32 %v1587, %v1670
          %v1764 = vadd.f32 %v1588, %v1674
          %v1765 = vadd.f32 %v1589, %v1678
          %v1766 = vadd.f32 %v1590, %v1682
          %v1767 = vadd.f32 %v1591, %v1662
          %v1768 = vadd.f32 %v1592, %v1666
          %v1769 = vadd.f32 %v1593, %v1670
          %v1770 = vadd.f32 %v1594, %v1674
          %v1771 = vadd.f32 %v1595, %v1678
          %v1772 = vadd.f32 %v1596, %v1682
          %v1773 = vadd.f32 %v1597, %v1662
          %v1774 = vadd.f32 %v1598, %v1666
          %v1775 = vadd.f32 %v1599, %v1670
          %v1776 = vadd.f32 %v1600, %v1674
          %v1777 = vadd.f32 %v1601, %v1678
          %v1778 = vadd.f32 %v1602, %v1682
          %v1779 = vadd.f32 %v1603, %v1662
          %v1780 = vadd.f32 %v1604, %v1666
          %v1781 = vadd.f32 %v1605, %v1670
          %v1782 = vadd.f32 %v1606, %v1674
          %v1783 = vadd.f32 %v1607, %v1678
          %v1784 = vadd.f32 %v1608, %v1682
          %v1785 = vadd.f32 %v1609, %v1662
          %v1786 = vadd.f32 %v1610, %v1666
          %v1787 = vadd.f32 %v1611, %v1670
          %v1788 = vadd.f32 %v1612, %v1674
          %v1789 = vadd.f32 %v1613, %v1678
          %v1790 = vadd.f32 %v1614, %v1682
          %v1791 = vadd.f32 %v1615, %v1662
          %v1792 = vadd.f32 %v1616, %v1666
          %v1793 = vadd.f32 %v1617, %v1670
          %v1794 = vadd.f32 %v1618, %v1674
          %v1795 = vadd.f32 %v1619, %v1678
          %v1796 = vadd.f32 %v1620, %v1682
          %v1797 = vadd.f32 %v1621, %v1662
          %v1798 = vadd.f32 %v1622, %v1666
          %v1799 = vadd.f32 %v1623, %v1670
          %v1800 = vadd.f32 %v1624, %v1674
          %v1801 = vadd.f32 %v1625, %v1678
          %v1802 = vadd.f32 %v1626, %v1682
          %v1803 = vadd.f32 %v1627, %v1662
          %v1804 = vadd.f32 %v1628, %v1666
          %v1805 = vadd.f32 %v1629, %v1670
          %v1806 = vadd.f32 %v1630, %v1674
          %v1807 = vadd.f32 %v1631, %v1678
          %v1808 = vadd.f32 %v1632, %v1682
          %v1809 = vadd.f32 %v1633, %v1662
          %v1810 = vadd.f32 %v1634, %v1666
          %v1811 = vadd.f32 %v1635, %v1670
          %v1812 = vadd.f32 %v1636, %v1674
          %v1813 = vadd.f32 %v1637, %v1678
          %v1814 = vadd.f32 %v1638, %v1682
          %v1815 = vadd.f32 %v1639, %v1662
          %v1816 = vadd.f32 %v1640, %v1666
          %v1817 = vadd.f32 %v1641, %v1670
          %v1818 = vadd.f32 %v1642, %v1674
          %v1819 = vadd.f32 %v1643, %v1678
          %v1820 = vadd.f32 %v1644, %v1682
          %v1821 = vadd.f32 %v1645, %v1662
          %v1822 = vadd.f32 %v1646, %v1666
          %v1823 = vadd.f32 %v1647, %v1670
          %v1824 = vadd.f32 %v1648, %v1674
          %v1825 = vadd.f32 %v1649, %v1678
          %v1826 = vadd.f32 %v1650, %v1682
          %v1827 = vadd.f32 %v1651, %v1662
          %v1828 = vadd.f32 %v1652, %v1666
          %v1829 = vadd.f32 %v1653, %v1670
          %v1830 = vadd.f32 %v1654, %v1674
          %v1831 = vadd.f32 %v1655, %v1678
          %v1832 = vadd.f32 %v1656, %v1682
          %v1833 = vpack.c.bf16 %v1695, %v1689
          %v1834 = vpack.c.bf16 %v1696, %v1690
          %v1835 = vpack.c.bf16 %v1697, %v1691
          %v1836 = vpack.c.bf16 %v1698, %v1692
          %v1837 = vpack.c.bf16 %v1699, %v1693
          %v1838 = vpack.c.bf16 %v1700, %v1694
          %v1839 = vpack.c.bf16 %v1707, %v1701
          %v1840 = vpack.c.bf16 %v1708, %v1702
          %v1841 = vpack.c.bf16 %v1709, %v1703
          %v1842 = vpack.c.bf16 %v1710, %v1704
          %v1843 = vpack.c.bf16 %v1711, %v1705
          %v1844 = vpack.c.bf16 %v1712, %v1706
          %v1845 = vpack.c.bf16 %v1719, %v1713
          %v1846 = vpack.c.bf16 %v1720, %v1714
          %v1847 = vpack.c.bf16 %v1721, %v1715
          %v1848 = vpack.c.bf16 %v1722, %v1716
          %v1849 = vpack.c.bf16 %v1723, %v1717
          %v1850 = vpack.c.bf16 %v1724, %v1718
          %v1851 = vpack.c.bf16 %v1731, %v1725
          %v1852 = vpack.c.bf16 %v1732, %v1726
          %v1853 = vpack.c.bf16 %v1733, %v1727
          %v1854 = vpack.c.bf16 %v1734, %v1728
          %v1855 = vpack.c.bf16 %v1735, %v1729
          %v1856 = vpack.c.bf16 %v1736, %v1730
          %v1857 = vpack.c.bf16 %v1743, %v1737
          %v1858 = vpack.c.bf16 %v1744, %v1738
          %v1859 = vpack.c.bf16 %v1745, %v1739
          %v1860 = vpack.c.bf16 %v1746, %v1740
          %v1861 = vpack.c.bf16 %v1747, %v1741
          %v1862 = vpack.c.bf16 %v1748, %v1742
          %v1863 = vpack.c.bf16 %v1755, %v1749
          %v1864 = vpack.c.bf16 %v1756, %v1750
          %v1865 = vpack.c.bf16 %v1757, %v1751
          %v1866 = vpack.c.bf16 %v1758, %v1752
          %v1867 = vpack.c.bf16 %v1759, %v1753
          %v1868 = vpack.c.bf16 %v1760, %v1754
          %v1869 = vpack.c.bf16 %v1767, %v1761
          %v1870 = vpack.c.bf16 %v1768, %v1762
          %v1871 = vpack.c.bf16 %v1769, %v1763
          %v1872 = vpack.c.bf16 %v1770, %v1764
          %v1873 = vpack.c.bf16 %v1771, %v1765
          %v1874 = vpack.c.bf16 %v1772, %v1766
          %v1875 = vpack.c.bf16 %v1779, %v1773
          %v1876 = vpack.c.bf16 %v1780, %v1774
          %v1877 = vpack.c.bf16 %v1781, %v1775
          %v1878 = vpack.c.bf16 %v1782, %v1776
          %v1879 = vpack.c.bf16 %v1783, %v1777
          %v1880 = vpack.c.bf16 %v1784, %v1778
          %v1881 = vpack.c.bf16 %v1791, %v1785
          %v1882 = vpack.c.bf16 %v1792, %v1786
          %v1883 = vpack.c.bf16 %v1793, %v1787
          %v1884 = vpack.c.bf16 %v1794, %v1788
          %v1885 = vpack.c.bf16 %v1795, %v1789
          %v1886 = vpack.c.bf16 %v1796, %v1790
          %v1887 = vpack.c.bf16 %v1803, %v1797
          %v1888 = vpack.c.bf16 %v1804, %v1798
          %v1889 = vpack.c.bf16 %v1805, %v1799
          %v1890 = vpack.c.bf16 %v1806, %v1800
          %v1891 = vpack.c.bf16 %v1807, %v1801
          %v1892 = vpack.c.bf16 %v1808, %v1802
          %v1893 = vpack.c.bf16 %v1815, %v1809
          %v1894 = vpack.c.bf16 %v1816, %v1810
          %v1895 = vpack.c.bf16 %v1817, %v1811
          %v1896 = vpack.c.bf16 %v1818, %v1812
          %v1897 = vpack.c.bf16 %v1819, %v1813
          %v1898 = vpack.c.bf16 %v1820, %v1814
          %v1899 = vpack.c.bf16 %v1827, %v1821
          %v1900 = vpack.c.bf16 %v1828, %v1822
          %v1901 = vpack.c.bf16 %v1829, %v1823
          %v1902 = vpack.c.bf16 %v1830, %v1824
          %v1903 = vpack.c.bf16 %v1831, %v1825
          %v1904 = vpack.c.bf16 %v1832, %v1826
          %1905 = vst [vmem:[#allocation2] sm:$0xff] %v1833
          %1906 = vst [vmem:[#allocation2 + $0x8] sm:$0xff] %v1834
          %1907 = vst [vmem:[#allocation2 + $0x10] sm:$0xff] %v1835
          %1908 = vst [vmem:[#allocation2 + $0x18] sm:$0xff] %v1836
          %1909 = vst [vmem:[#allocation2 + $0x20] sm:$0xff] %v1837
          %1910 = vst [vmem:[#allocation2 + $0x28] sm:$0xff] %v1838
          %1911 = vst [vmem:[#allocation2 + $0x30] sm:$0xff] %v1839
          %1912 = vst [vmem:[#allocation2 + $0x38] sm:$0xff] %v1840
          %1913 = vst [vmem:[#allocation2 + $0x40] sm:$0xff] %v1841
          %1914 = vst [vmem:[#allocation2 + $0x48] sm:$0xff] %v1842
          %1915 = vst [vmem:[#allocation2 + $0x50] sm:$0xff] %v1843
          %1916 = vst [vmem:[#allocation2 + $0x58] sm:$0xff] %v1844
          %1917 = vst [vmem:[#allocation2 + $0x60] sm:$0xff] %v1845
          %1918 = vst [vmem:[#allocation2 + $0x68] sm:$0xff] %v1846
          %1919 = vst [vmem:[#allocation2 + $0x70] sm:$0xff] %v1847
          %1920 = vst [vmem:[#allocation2 + $0x78] sm:$0xff] %v1848
          %1921 = vst [vmem:[#allocation2 + $0x80] sm:$0xff] %v1849
          %1922 = vst [vmem:[#allocation2 + $0x88] sm:$0xff] %v1850
          %1923 = vst [vmem:[#allocation2 + $0x90] sm:$0xff] %v1851
          %1924 = vst [vmem:[#allocation2 + $0x98] sm:$0xff] %v1852
          %1925 = vst [vmem:[#allocation2 + $0xa0] sm:$0xff] %v1853
          %1926 = vst [vmem:[#allocation2 + $0xa8] sm:$0xff] %v1854
          %1927 = vst [vmem:[#allocation2 + $0xb0] sm:$0xff] %v1855
          %1928 = vst [vmem:[#allocation2 + $0xb8] sm:$0xff] %v1856
          %1929 = vst [vmem:[#allocation2 + $0xc0] sm:$0xff] %v1857
          %1930 = vst [vmem:[#allocation2 + $0xc8] sm:$0xff] %v1858
          %1931 = vst [vmem:[#allocation2 + $0xd0] sm:$0xff] %v1859
          %1932 = vst [vmem:[#allocation2 + $0xd8] sm:$0xff] %v1860
          %1933 = vst [vmem:[#allocation2 + $0xe0] sm:$0xff] %v1861
          %1934 = vst [vmem:[#allocation2 + $0xe8] sm:$0xff] %v1862
          %1935 = vst [vmem:[#allocation2 + $0xf0] sm:$0xff] %v1863
          %1936 = vst [vmem:[#allocation2 + $0xf8] sm:$0xff] %v1864
          %1937 = vst [vmem:[#allocation2 + $0x100] sm:$0xff] %v1865
          %1938 = vst [vmem:[#allocation2 + $0x108] sm:$0xff] %v1866
          %1939 = vst [vmem:[#allocation2 + $0x110] sm:$0xff] %v1867
          %1940 = vst [vmem:[#allocation2 + $0x118] sm:$0xff] %v1868
          %1941 = vst [vmem:[#allocation2 + $0x120] sm:$0xff] %v1869
          %1942 = vst [vmem:[#allocation2 + $0x128] sm:$0xff] %v1870
          %1943 = vst [vmem:[#allocation2 + $0x130] sm:$0xff] %v1871
          %1944 = vst [vmem:[#allocation2 + $0x138] sm:$0xff] %v1872
          %1945 = vst [vmem:[#allocation2 + $0x140] sm:$0xff] %v1873
          %1946 = vst [vmem:[#allocation2 + $0x148] sm:$0xff] %v1874
          %1947 = vst [vmem:[#allocation2 + $0x150] sm:$0xff] %v1875
          %1948 = vst [vmem:[#allocation2 + $0x158] sm:$0xff] %v1876
          %1949 = vst [vmem:[#allocation2 + $0x160] sm:$0xff] %v1877
          %1950 = vst [vmem:[#allocation2 + $0x168] sm:$0xff] %v1878
          %1951 = vst [vmem:[#allocation2 + $0x170] sm:$0xff] %v1879
          %1952 = vst [vmem:[#allocation2 + $0x178] sm:$0xff] %v1880
          %1953 = vst [vmem:[#allocation2 + $0x180] sm:$0xff] %v1881
          %1954 = vst [vmem:[#allocation2 + $0x188] sm:$0xff] %v1882
          %1955 = vst [vmem:[#allocation2 + $0x190] sm:$0xff] %v1883
          %1956 = vst [vmem:[#allocation2 + $0x198] sm:$0xff] %v1884
          %1957 = vst [vmem:[#allocation2 + $0x1a0] sm:$0xff] %v1885
          %1958 = vst [vmem:[#allocation2 + $0x1a8] sm:$0xff] %v1886
          %1959 = vst [vmem:[#allocation2 + $0x1b0] sm:$0xff] %v1887
          %1960 = vst [vmem:[#allocation2 + $0x1b8] sm:$0xff] %v1888
          %1961 = vst [vmem:[#allocation2 + $0x1c0] sm:$0xff] %v1889
          %1962 = vst [vmem:[#allocation2 + $0x1c8] sm:$0xff] %v1890
          %1963 = vst [vmem:[#allocation2 + $0x1d0] sm:$0xff] %v1891
          %1964 = vst [vmem:[#allocation2 + $0x1d8] sm:$0xff] %v1892
          %1965 = vst [vmem:[#allocation2 + $0x1e0] sm:$0xff] %v1893
          %1966 = vst [vmem:[#allocation2 + $0x1e8] sm:$0xff] %v1894
          %1967 = vst [vmem:[#allocation2 + $0x1f0] sm:$0xff] %v1895
          %1968 = vst [vmem:[#allocation2 + $0x1f8] sm:$0xff] %v1896
          %1969 = vst [vmem:[#allocation2 + $0x200] sm:$0xff] %v1897
          %1970 = vst [vmem:[#allocation2 + $0x208] sm:$0xff] %v1898
          %1971 = vst [vmem:[#allocation2 + $0x210] sm:$0xff] %v1899
          %1972 = vst [vmem:[#allocation2 + $0x218] sm:$0xff] %v1900
          %1973 = vst [vmem:[#allocation2 + $0x220] sm:$0xff] %v1901
          %1974 = vst [vmem:[#allocation2 + $0x228] sm:$0xff] %v1902
          %1975 = vst [vmem:[#allocation2 + $0x230] sm:$0xff] %v1903
          %1976 = vst [vmem:[#allocation2 + $0x238] sm:$0xff] %v1904
          %1977 = vst [vmem:[#allocation3] sm:$0xff] 0.0
          %1978 = vst [vmem:[#allocation3 + $0x8] sm:$0xff] 0.0
          %1979 = vst [vmem:[#allocation3 + $0x10] sm:$0xff] 0.0
          %1980 = vst [vmem:[#allocation3 + $0x18] sm:$0xff] 0.0
          %1981 = vst [vmem:[#allocation3 + $0x20] sm:$0xff] 0.0
          %1982 = vst [vmem:[#allocation3 + $0x28] sm:$0xff] 0.0
          %1983 = vst [vmem:[#allocation3 + $0x30] sm:$0xff] 0.0
          %1984 = vst [vmem:[#allocation3 + $0x38] sm:$0xff] 0.0
          %1985 = vst [vmem:[#allocation3 + $0x40] sm:$0xff] 0.0
          %1986 = vst [vmem:[#allocation3 + $0x48] sm:$0xff] 0.0
          %1987 = vst [vmem:[#allocation3 + $0x50] sm:$0xff] 0.0
          %1988 = vst [vmem:[#allocation3 + $0x58] sm:$0xff] 0.0
          %1989 = vst [vmem:[#allocation3 + $0x60] sm:$0xff] 0.0
          %1990 = vst [vmem:[#allocation3 + $0x68] sm:$0xff] 0.0
          %1991 = vst [vmem:[#allocation3 + $0x70] sm:$0xff] 0.0
          %1992 = vst [vmem:[#allocation3 + $0x78] sm:$0xff] 0.0
          %1993 = vst [vmem:[#allocation3 + $0x80] sm:$0xff] 0.0
          %1994 = vst [vmem:[#allocation3 + $0x88] sm:$0xff] 0.0
          %1995 = vst [vmem:[#allocation3 + $0x90] sm:$0xff] 0.0
          %1996 = vst [vmem:[#allocation3 + $0x98] sm:$0xff] 0.0
          %1997 = vst [vmem:[#allocation3 + $0xa0] sm:$0xff] 0.0
          %1998 = vst [vmem:[#allocation3 + $0xa8] sm:$0xff] 0.0
          %1999 = vst [vmem:[#allocation3 + $0xb0] sm:$0xff] 0.0
          %2000 = vst [vmem:[#allocation3 + $0xb8] sm:$0xff] 0.0
          %2001 = vst [vmem:[#allocation3 + $0xc0] sm:$0xff] 0.0
          %2002 = vst [vmem:[#allocation3 + $0xc8] sm:$0xff] 0.0
          %2003 = vst [vmem:[#allocation3 + $0xd0] sm:$0xff] 0.0
          %2004 = vst [vmem:[#allocation3 + $0xd8] sm:$0xff] 0.0
          %2005 = vst [vmem:[#allocation3 + $0xe0] sm:$0xff] 0.0
          %2006 = vst [vmem:[#allocation3 + $0xe8] sm:$0xff] 0.0
          %2007 = vst [vmem:[#allocation3 + $0xf0] sm:$0xff] 0.0
          %2008 = vst [vmem:[#allocation3 + $0xf8] sm:$0xff] 0.0
          %2009 = vst [vmem:[#allocation3 + $0x100] sm:$0xff] 0.0
          %2010 = vst [vmem:[#allocation3 + $0x108] sm:$0xff] 0.0
          %2011 = vst [vmem:[#allocation3 + $0x110] sm:$0xff] 0.0
          %2012 = vst [vmem:[#allocation3 + $0x118] sm:$0xff] 0.0
          %2013 = vst [vmem:[#allocation3 + $0x120] sm:$0xff] 0.0
          %2014 = vst [vmem:[#allocation3 + $0x128] sm:$0xff] 0.0
          %2015 = vst [vmem:[#allocation3 + $0x130] sm:$0xff] 0.0
          %2016 = vst [vmem:[#allocation3 + $0x138] sm:$0xff] 0.0
          %2017 = vst [vmem:[#allocation3 + $0x140] sm:$0xff] 0.0
          %2018 = vst [vmem:[#allocation3 + $0x148] sm:$0xff] 0.0
          %2019 = vst [vmem:[#allocation3 + $0x150] sm:$0xff] 0.0
          %2020 = vst [vmem:[#allocation3 + $0x158] sm:$0xff] 0.0
          %2021 = vst [vmem:[#allocation3 + $0x160] sm:$0xff] 0.0
          %2022 = vst [vmem:[#allocation3 + $0x168] sm:$0xff] 0.0
          %2023 = vst [vmem:[#allocation3 + $0x170] sm:$0xff] 0.0
          %2024 = vst [vmem:[#allocation3 + $0x178] sm:$0xff] 0.0
          %2025 = vst [vmem:[#allocation3 + $0x180] sm:$0xff] 0.0
          %2026 = vst [vmem:[#allocation3 + $0x188] sm:$0xff] 0.0
          %2027 = vst [vmem:[#allocation3 + $0x190] sm:$0xff] 0.0
          %2028 = vst [vmem:[#allocation3 + $0x198] sm:$0xff] 0.0
          %2029 = vst [vmem:[#allocation3 + $0x1a0] sm:$0xff] 0.0
          %2030 = vst [vmem:[#allocation3 + $0x1a8] sm:$0xff] 0.0
          %2031 = vst [vmem:[#allocation3 + $0x1b0] sm:$0xff] 0.0
          %2032 = vst [vmem:[#allocation3 + $0x1b8] sm:$0xff] 0.0
          %2033 = vst [vmem:[#allocation3 + $0x1c0] sm:$0xff] 0.0
          %2034 = vst [vmem:[#allocation3 + $0x1c8] sm:$0xff] 0.0
          %2035 = vst [vmem:[#allocation3 + $0x1d0] sm:$0xff] 0.0
          %2036 = vst [vmem:[#allocation3 + $0x1d8] sm:$0xff] 0.0
          %2037 = vst [vmem:[#allocation3 + $0x1e0] sm:$0xff] 0.0
          %2038 = vst [vmem:[#allocation3 + $0x1e8] sm:$0xff] 0.0
          %2039 = vst [vmem:[#allocation3 + $0x1f0] sm:$0xff] 0.0
          %2040 = vst [vmem:[#allocation3 + $0x1f8] sm:$0xff] 0.0
          %2041 = vst [vmem:[#allocation3 + $0x200] sm:$0xff] 0.0
          %2042 = vst [vmem:[#allocation3 + $0x208] sm:$0xff] 0.0
          %2043 = vst [vmem:[#allocation3 + $0x210] sm:$0xff] 0.0
          %2044 = vst [vmem:[#allocation3 + $0x218] sm:$0xff] 0.0
          %2045 = vst [vmem:[#allocation3 + $0x220] sm:$0xff] 0.0
          %2046 = vst [vmem:[#allocation3 + $0x228] sm:$0xff] 0.0
          %2047 = vst [vmem:[#allocation3 + $0x230] sm:$0xff] 0.0
          %2048 = vst [vmem:[#allocation3 + $0x238] sm:$0xff] 0.0
          %2049 = vst [vmem:[#allocation3 + $0x240] sm:$0xff] 0.0
          %2050 = vst [vmem:[#allocation3 + $0x248] sm:$0xff] 0.0
          %2051 = vst [vmem:[#allocation3 + $0x250] sm:$0xff] 0.0
          %2052 = vst [vmem:[#allocation3 + $0x258] sm:$0xff] 0.0
          %2053 = vst [vmem:[#allocation3 + $0x260] sm:$0xff] 0.0
          %2054 = vst [vmem:[#allocation3 + $0x268] sm:$0xff] 0.0
          %2055 = vst [vmem:[#allocation3 + $0x270] sm:$0xff] 0.0
          %2056 = vst [vmem:[#allocation3 + $0x278] sm:$0xff] 0.0
          %2057 = vst [vmem:[#allocation3 + $0x280] sm:$0xff] 0.0
          %2058 = vst [vmem:[#allocation3 + $0x288] sm:$0xff] 0.0
          %2059 = vst [vmem:[#allocation3 + $0x290] sm:$0xff] 0.0
          %2060 = vst [vmem:[#allocation3 + $0x298] sm:$0xff] 0.0
          %2061 = vst [vmem:[#allocation3 + $0x2a0] sm:$0xff] 0.0
          %2062 = vst [vmem:[#allocation3 + $0x2a8] sm:$0xff] 0.0
          %2063 = vst [vmem:[#allocation3 + $0x2b0] sm:$0xff] 0.0
          %2064 = vst [vmem:[#allocation3 + $0x2b8] sm:$0xff] 0.0
          %2065 = vst [vmem:[#allocation3 + $0x2c0] sm:$0xff] 0.0
          %2066 = vst [vmem:[#allocation3 + $0x2c8] sm:$0xff] 0.0
          %2067 = vst [vmem:[#allocation3 + $0x2d0] sm:$0xff] 0.0
          %2068 = vst [vmem:[#allocation3 + $0x2d8] sm:$0xff] 0.0
          %2069 = vst [vmem:[#allocation3 + $0x2e0] sm:$0xff] 0.0
          %2070 = vst [vmem:[#allocation3 + $0x2e8] sm:$0xff] 0.0
          %2071 = vst [vmem:[#allocation3 + $0x2f0] sm:$0xff] 0.0
          %2072 = vst [vmem:[#allocation3 + $0x2f8] sm:$0xff] 0.0
          %2073 = vst [vmem:[#allocation3 + $0x300] sm:$0xff] 0.0
          %2074 = vst [vmem:[#allocation3 + $0x308] sm:$0xff] 0.0
          %2075 = vst [vmem:[#allocation3 + $0x310] sm:$0xff] 0.0
          %2076 = vst [vmem:[#allocation3 + $0x318] sm:$0xff] 0.0
          %2077 = vst [vmem:[#allocation3 + $0x320] sm:$0xff] 0.0
          %2078 = vst [vmem:[#allocation3 + $0x328] sm:$0xff] 0.0
          %2079 = vst [vmem:[#allocation3 + $0x330] sm:$0xff] 0.0
          %2080 = vst [vmem:[#allocation3 + $0x338] sm:$0xff] 0.0
          %2081 = vst [vmem:[#allocation3 + $0x340] sm:$0xff] 0.0
          %2082 = vst [vmem:[#allocation3 + $0x348] sm:$0xff] 0.0
          %2083 = vst [vmem:[#allocation3 + $0x350] sm:$0xff] 0.0
          %2084 = vst [vmem:[#allocation3 + $0x358] sm:$0xff] 0.0
          %2085 = vst [vmem:[#allocation3 + $0x360] sm:$0xff] 0.0
          %2086 = vst [vmem:[#allocation3 + $0x368] sm:$0xff] 0.0
          %2087 = vst [vmem:[#allocation3 + $0x370] sm:$0xff] 0.0
          %2088 = vst [vmem:[#allocation3 + $0x378] sm:$0xff] 0.0
          %2089 = vst [vmem:[#allocation3 + $0x380] sm:$0xff] 0.0
          %2090 = vst [vmem:[#allocation3 + $0x388] sm:$0xff] 0.0
          %2091 = vst [vmem:[#allocation3 + $0x390] sm:$0xff] 0.0
          %2092 = vst [vmem:[#allocation3 + $0x398] sm:$0xff] 0.0
          %2093 = vst [vmem:[#allocation3 + $0x3a0] sm:$0xff] 0.0
          %2094 = vst [vmem:[#allocation3 + $0x3a8] sm:$0xff] 0.0
          %2095 = vst [vmem:[#allocation3 + $0x3b0] sm:$0xff] 0.0
          %2096 = vst [vmem:[#allocation3 + $0x3b8] sm:$0xff] 0.0
          %2097 = vst [vmem:[#allocation3 + $0x3c0] sm:$0xff] 0.0
          %2098 = vst [vmem:[#allocation3 + $0x3c8] sm:$0xff] 0.0
          %2099 = vst [vmem:[#allocation3 + $0x3d0] sm:$0xff] 0.0
          %2100 = vst [vmem:[#allocation3 + $0x3d8] sm:$0xff] 0.0
          %2101 = vst [vmem:[#allocation3 + $0x3e0] sm:$0xff] 0.0
          %2102 = vst [vmem:[#allocation3 + $0x3e8] sm:$0xff] 0.0
          %2103 = vst [vmem:[#allocation3 + $0x3f0] sm:$0xff] 0.0
          %2104 = vst [vmem:[#allocation3 + $0x3f8] sm:$0xff] 0.0
          %2105 = vst [vmem:[#allocation3 + $0x400] sm:$0xff] 0.0
          %2106 = vst [vmem:[#allocation3 + $0x408] sm:$0xff] 0.0
          %2107 = vst [vmem:[#allocation3 + $0x410] sm:$0xff] 0.0
          %2108 = vst [vmem:[#allocation3 + $0x418] sm:$0xff] 0.0
          %2109 = vst [vmem:[#allocation3 + $0x420] sm:$0xff] 0.0
          %2110 = vst [vmem:[#allocation3 + $0x428] sm:$0xff] 0.0
          %2111 = vst [vmem:[#allocation3 + $0x430] sm:$0xff] 0.0
          %2112 = vst [vmem:[#allocation3 + $0x438] sm:$0xff] 0.0
          %2113 = vst [vmem:[#allocation3 + $0x440] sm:$0xff] 0.0
          %2114 = vst [vmem:[#allocation3 + $0x448] sm:$0xff] 0.0
          %2115 = vst [vmem:[#allocation3 + $0x450] sm:$0xff] 0.0
          %2116 = vst [vmem:[#allocation3 + $0x458] sm:$0xff] 0.0
          %2117 = vst [vmem:[#allocation3 + $0x460] sm:$0xff] 0.0
          %2118 = vst [vmem:[#allocation3 + $0x468] sm:$0xff] 0.0
          %2119 = vst [vmem:[#allocation3 + $0x470] sm:$0xff] 0.0
          %2120 = vst [vmem:[#allocation3 + $0x478] sm:$0xff] 0.0
        $region80: #{tpu_custom_call.1} parent=47 // pred_fallthru
          _
        %v2121 = vld [vmem:[#allocation2] sm:$0xff]
        %v2122 = vld [vmem:[#allocation2 + $0x8] sm:$0xff]
        %v2123 = vld [vmem:[#allocation2 + $0x10] sm:$0xff]
        %v2124 = vld [vmem:[#allocation2 + $0x18] sm:$0xff]
        %v2125 = vld [vmem:[#allocation2 + $0x20] sm:$0xff]
        %v2126 = vld [vmem:[#allocation2 + $0x28] sm:$0xff]
        %v2127 = vld [vmem:[#allocation2 + $0x30] sm:$0xff]
        %v2128 = vld [vmem:[#allocation2 + $0x38] sm:$0xff]
        %v2129 = vld [vmem:[#allocation2 + $0x40] sm:$0xff]
        %v2130 = vld [vmem:[#allocation2 + $0x48] sm:$0xff]
        %v2131 = vld [vmem:[#allocation2 + $0x50] sm:$0xff]
        %v2132 = vld [vmem:[#allocation2 + $0x58] sm:$0xff]
        %v2133 = vld [vmem:[#allocation2 + $0x60] sm:$0xff]
        %v2134 = vld [vmem:[#allocation2 + $0x68] sm:$0xff]
        %v2135 = vld [vmem:[#allocation2 + $0x70] sm:$0xff]
        %v2136 = vld [vmem:[#allocation2 + $0x78] sm:$0xff]
        %v2137 = vld [vmem:[#allocation2 + $0x80] sm:$0xff]
        %v2138 = vld [vmem:[#allocation2 + $0x88] sm:$0xff]
        %v2139 = vld [vmem:[#allocation2 + $0x90] sm:$0xff]
        %v2140 = vld [vmem:[#allocation2 + $0x98] sm:$0xff]
        %v2141 = vld [vmem:[#allocation2 + $0xa0] sm:$0xff]
        %v2142 = vld [vmem:[#allocation2 + $0xa8] sm:$0xff]
        %v2143 = vld [vmem:[#allocation2 + $0xb0] sm:$0xff]
        %v2144 = vld [vmem:[#allocation2 + $0xb8] sm:$0xff]
        %v2145 = vld [vmem:[#allocation2 + $0xc0] sm:$0xff]
        %v2146 = vld [vmem:[#allocation2 + $0xc8] sm:$0xff]
        %v2147 = vld [vmem:[#allocation2 + $0xd0] sm:$0xff]
        %v2148 = vld [vmem:[#allocation2 + $0xd8] sm:$0xff]
        %v2149 = vld [vmem:[#allocation2 + $0xe0] sm:$0xff]
        %v2150 = vld [vmem:[#allocation2 + $0xe8] sm:$0xff]
        %v2151 = vld [vmem:[#allocation2 + $0xf0] sm:$0xff]
        %v2152 = vld [vmem:[#allocation2 + $0xf8] sm:$0xff]
        %v2153 = vld [vmem:[#allocation2 + $0x100] sm:$0xff]
        %v2154 = vld [vmem:[#allocation2 + $0x108] sm:$0xff]
        %v2155 = vld [vmem:[#allocation2 + $0x110] sm:$0xff]
        %v2156 = vld [vmem:[#allocation2 + $0x118] sm:$0xff]
        %v2157 = vld [vmem:[#allocation2 + $0x120] sm:$0xff]
        %v2158 = vld [vmem:[#allocation2 + $0x128] sm:$0xff]
        %v2159 = vld [vmem:[#allocation2 + $0x130] sm:$0xff]
        %v2160 = vld [vmem:[#allocation2 + $0x138] sm:$0xff]
        %v2161 = vld [vmem:[#allocation2 + $0x140] sm:$0xff]
        %v2162 = vld [vmem:[#allocation2 + $0x148] sm:$0xff]
        %v2163 = vld [vmem:[#allocation2 + $0x150] sm:$0xff]
        %v2164 = vld [vmem:[#allocation2 + $0x158] sm:$0xff]
        %v2165 = vld [vmem:[#allocation2 + $0x160] sm:$0xff]
        %v2166 = vld [vmem:[#allocation2 + $0x168] sm:$0xff]
        %v2167 = vld [vmem:[#allocation2 + $0x170] sm:$0xff]
        %v2168 = vld [vmem:[#allocation2 + $0x178] sm:$0xff]
        %v2169 = vld [vmem:[#allocation2 + $0x180] sm:$0xff]
        %v2170 = vld [vmem:[#allocation2 + $0x188] sm:$0xff]
        %v2171 = vld [vmem:[#allocation2 + $0x190] sm:$0xff]
        %v2172 = vld [vmem:[#allocation2 + $0x198] sm:$0xff]
        %v2173 = vld [vmem:[#allocation2 + $0x1a0] sm:$0xff]
        %v2174 = vld [vmem:[#allocation2 + $0x1a8] sm:$0xff]
        %v2175 = vld [vmem:[#allocation2 + $0x1b0] sm:$0xff]
        %v2176 = vld [vmem:[#allocation2 + $0x1b8] sm:$0xff]
        %v2177 = vld [vmem:[#allocation2 + $0x1c0] sm:$0xff]
        %v2178 = vld [vmem:[#allocation2 + $0x1c8] sm:$0xff]
        %v2179 = vld [vmem:[#allocation2 + $0x1d0] sm:$0xff]
        %v2180 = vld [vmem:[#allocation2 + $0x1d8] sm:$0xff]
        %v2181 = vld [vmem:[#allocation2 + $0x1e0] sm:$0xff]
        %v2182 = vld [vmem:[#allocation2 + $0x1e8] sm:$0xff]
        %v2183 = vld [vmem:[#allocation2 + $0x1f0] sm:$0xff]
        %v2184 = vld [vmem:[#allocation2 + $0x1f8] sm:$0xff]
        %v2185 = vld [vmem:[#allocation2 + $0x200] sm:$0xff]
        %v2186 = vld [vmem:[#allocation2 + $0x208] sm:$0xff]
        %v2187 = vld [vmem:[#allocation2 + $0x210] sm:$0xff]
        %v2188 = vld [vmem:[#allocation2 + $0x218] sm:$0xff]
        %v2189 = vld [vmem:[#allocation2 + $0x220] sm:$0xff]
        %v2190 = vld [vmem:[#allocation2 + $0x228] sm:$0xff]
        %v2191 = vld [vmem:[#allocation2 + $0x230] sm:$0xff]
        %v2192 = vld [vmem:[#allocation2 + $0x238] sm:$0xff]
        %v2193 = vld [vmem:[%s395] sm:$0xff]
        %v2194 = vld [vmem:[%s395 + $0x8] sm:$0xff]
        %v2195 = vld [vmem:[%s395 + $0x10] sm:$0xff]
        %v2196 = vld [vmem:[%s395 + $0x18] sm:$0xff]
        %v2197 = vld [vmem:[%s395 + $0x20] sm:$0xff]
        %v2198 = vld [vmem:[%s395 + $0x28] sm:$0xff]
        %v2199 = vld [vmem:[%s395 + $0x30] sm:$0xff]
        %v2200 = vld [vmem:[%s395 + $0x38] sm:$0xff]
        %v2201 = vld [vmem:[%s395 + $0x40] sm:$0xff]
        %v2202 = vld [vmem:[%s395 + $0x48] sm:$0xff]
        %v2203 = vld [vmem:[%s395 + $0x50] sm:$0xff]
        %v2204 = vld [vmem:[%s395 + $0x58] sm:$0xff]
        %v2205 = vld [vmem:[%s395 + $0x60] sm:$0xff]
        %v2206 = vld [vmem:[%s395 + $0x68] sm:$0xff]
        %v2207 = vld [vmem:[%s395 + $0x70] sm:$0xff]
        %v2208 = vld [vmem:[%s395 + $0x78] sm:$0xff]
        %v2209 = vld [vmem:[%s395 + $0x80] sm:$0xff]
        %v2210 = vld [vmem:[%s395 + $0x88] sm:$0xff]
        %v2211 = vld [vmem:[%s395 + $0x90] sm:$0xff]
        %v2212 = vld [vmem:[%s395 + $0x98] sm:$0xff]
        %v2213 = vld [vmem:[%s395 + $0xa0] sm:$0xff]
        %v2214 = vld [vmem:[%s395 + $0xa8] sm:$0xff]
        %v2215 = vld [vmem:[%s395 + $0xb0] sm:$0xff]
        %v2216 = vld [vmem:[%s395 + $0xb8] sm:$0xff]
        %v2217 = vld [vmem:[%s395 + $0xc0] sm:$0xff]
        %v2218 = vld [vmem:[%s395 + $0xc8] sm:$0xff]
        %v2219 = vld [vmem:[%s395 + $0xd0] sm:$0xff]
        %v2220 = vld [vmem:[%s395 + $0xd8] sm:$0xff]
        %v2221 = vld [vmem:[%s395 + $0xe0] sm:$0xff]
        %v2222 = vld [vmem:[%s395 + $0xe8] sm:$0xff]
        %v2223 = vld [vmem:[%s395 + $0xf0] sm:$0xff]
        %v2224 = vld [vmem:[%s395 + $0xf8] sm:$0xff]
        %v2225 = vld [vmem:[%s395 + $0x100] sm:$0xff]
        %v2226 = vld [vmem:[%s395 + $0x108] sm:$0xff]
        %v2227 = vld [vmem:[%s395 + $0x110] sm:$0xff]
        %v2228 = vld [vmem:[%s395 + $0x118] sm:$0xff]
        %v2229 = vld [vmem:[%s395 + $0x120] sm:$0xff]
        %v2230 = vld [vmem:[%s395 + $0x128] sm:$0xff]
        %v2231 = vld [vmem:[%s395 + $0x130] sm:$0xff]
        %v2232 = vld [vmem:[%s395 + $0x138] sm:$0xff]
        %v2233 = vld [vmem:[%s395 + $0x140] sm:$0xff]
        %v2234 = vld [vmem:[%s395 + $0x148] sm:$0xff]
        %v2235 = vld [vmem:[%s395 + $0x150] sm:$0xff]
        %v2236 = vld [vmem:[%s395 + $0x158] sm:$0xff]
        %v2237 = vld [vmem:[%s395 + $0x160] sm:$0xff]
        %v2238 = vld [vmem:[%s395 + $0x168] sm:$0xff]
        %v2239 = vld [vmem:[%s395 + $0x170] sm:$0xff]
        %v2240 = vld [vmem:[%s395 + $0x178] sm:$0xff]
        %v2241 = vld [vmem:[%s395 + $0x180] sm:$0xff]
        %v2242 = vld [vmem:[%s395 + $0x188] sm:$0xff]
        %v2243 = vld [vmem:[%s395 + $0x190] sm:$0xff]
        %v2244 = vld [vmem:[%s395 + $0x198] sm:$0xff]
        %v2245 = vld [vmem:[%s395 + $0x1a0] sm:$0xff]
        %v2246 = vld [vmem:[%s395 + $0x1a8] sm:$0xff]
        %v2247 = vld [vmem:[%s395 + $0x1b0] sm:$0xff]
        %v2248 = vld [vmem:[%s395 + $0x1b8] sm:$0xff]
        %v2249 = vld [vmem:[%s395 + $0x1c0] sm:$0xff]
        %v2250 = vld [vmem:[%s395 + $0x1c8] sm:$0xff]
        %v2251 = vld [vmem:[%s395 + $0x1d0] sm:$0xff]
        %v2252 = vld [vmem:[%s395 + $0x1d8] sm:$0xff]
        %v2253 = vld [vmem:[%s395 + $0x1e0] sm:$0xff]
        %v2254 = vld [vmem:[%s395 + $0x1e8] sm:$0xff]
        %v2255 = vld [vmem:[%s395 + $0x1f0] sm:$0xff]
        %v2256 = vld [vmem:[%s395 + $0x1f8] sm:$0xff]
        %v2257 = vld [vmem:[%s395 + $0x200] sm:$0xff]
        %v2258 = vld [vmem:[%s395 + $0x208] sm:$0xff]
        %v2259 = vld [vmem:[%s395 + $0x210] sm:$0xff]
        %v2260 = vld [vmem:[%s395 + $0x218] sm:$0xff]
        %v2261 = vld [vmem:[%s395 + $0x220] sm:$0xff]
        %v2262 = vld [vmem:[%s395 + $0x228] sm:$0xff]
        %v2263 = vld [vmem:[%s395 + $0x230] sm:$0xff]
        %v2264 = vld [vmem:[%s395 + $0x238] sm:$0xff]
        %v2265 = vld [vmem:[%s395 + $0x240] sm:$0xff]
        %v2266 = vld [vmem:[%s395 + $0x248] sm:$0xff]
        %v2267 = vld [vmem:[%s395 + $0x250] sm:$0xff]
        %v2268 = vld [vmem:[%s395 + $0x258] sm:$0xff]
        %v2269 = vld [vmem:[%s395 + $0x260] sm:$0xff]
        %v2270 = vld [vmem:[%s395 + $0x268] sm:$0xff]
        %v2271 = vld [vmem:[%s395 + $0x270] sm:$0xff]
        %v2272 = vld [vmem:[%s395 + $0x278] sm:$0xff]
        %v2273 = vld [vmem:[%s395 + $0x280] sm:$0xff]
        %v2274 = vld [vmem:[%s395 + $0x288] sm:$0xff]
        %v2275 = vld [vmem:[%s395 + $0x290] sm:$0xff]
        %v2276 = vld [vmem:[%s395 + $0x298] sm:$0xff]
        %v2277 = vld [vmem:[%s395 + $0x2a0] sm:$0xff]
        %v2278 = vld [vmem:[%s395 + $0x2a8] sm:$0xff]
        %v2279 = vld [vmem:[%s395 + $0x2b0] sm:$0xff]
        %v2280 = vld [vmem:[%s395 + $0x2b8] sm:$0xff]
        %v2281 = vld [vmem:[%s395 + $0x2c0] sm:$0xff]
        %v2282 = vld [vmem:[%s395 + $0x2c8] sm:$0xff]
        %v2283 = vld [vmem:[%s395 + $0x2d0] sm:$0xff]
        %v2284 = vld [vmem:[%s395 + $0x2d8] sm:$0xff]
        %v2285 = vld [vmem:[%s395 + $0x2e0] sm:$0xff]
        %v2286 = vld [vmem:[%s395 + $0x2e8] sm:$0xff]
        %v2287 = vld [vmem:[%s395 + $0x2f0] sm:$0xff]
        %v2288 = vld [vmem:[%s395 + $0x2f8] sm:$0xff]
        %v2289 = vld [vmem:[%s395 + $0x300] sm:$0xff]
        %v2290 = vld [vmem:[%s395 + $0x308] sm:$0xff]
        %v2291 = vld [vmem:[%s395 + $0x310] sm:$0xff]
        %v2292 = vld [vmem:[%s395 + $0x318] sm:$0xff]
        %v2293 = vld [vmem:[%s395 + $0x320] sm:$0xff]
        %v2294 = vld [vmem:[%s395 + $0x328] sm:$0xff]
        %v2295 = vld [vmem:[%s395 + $0x330] sm:$0xff]
        %v2296 = vld [vmem:[%s395 + $0x338] sm:$0xff]
        %v2297 = vld [vmem:[%s395 + $0x340] sm:$0xff]
        %v2298 = vld [vmem:[%s395 + $0x348] sm:$0xff]
        %v2299 = vld [vmem:[%s395 + $0x350] sm:$0xff]
        %v2300 = vld [vmem:[%s395 + $0x358] sm:$0xff]
        %v2301 = vld [vmem:[%s395 + $0x360] sm:$0xff]
        %v2302 = vld [vmem:[%s395 + $0x368] sm:$0xff]
        %v2303 = vld [vmem:[%s395 + $0x370] sm:$0xff]
        %v2304 = vld [vmem:[%s395 + $0x378] sm:$0xff]
        %v2305 = vld [vmem:[%s395 + $0x380] sm:$0xff]
        %v2306 = vld [vmem:[%s395 + $0x388] sm:$0xff]
        %v2307 = vld [vmem:[%s395 + $0x390] sm:$0xff]
        %v2308 = vld [vmem:[%s395 + $0x398] sm:$0xff]
        %v2309 = vld [vmem:[%s395 + $0x3a0] sm:$0xff]
        %v2310 = vld [vmem:[%s395 + $0x3a8] sm:$0xff]
        %v2311 = vld [vmem:[%s395 + $0x3b0] sm:$0xff]
        %v2312 = vld [vmem:[%s395 + $0x3b8] sm:$0xff]
        %v2313 = vld [vmem:[%s395 + $0x3c0] sm:$0xff]
        %v2314 = vld [vmem:[%s395 + $0x3c8] sm:$0xff]
        %v2315 = vld [vmem:[%s395 + $0x3d0] sm:$0xff]
        %v2316 = vld [vmem:[%s395 + $0x3d8] sm:$0xff]
        %v2317 = vld [vmem:[%s395 + $0x3e0] sm:$0xff]
        %v2318 = vld [vmem:[%s395 + $0x3e8] sm:$0xff]
        %v2319 = vld [vmem:[%s395 + $0x3f0] sm:$0xff]
        %v2320 = vld [vmem:[%s395 + $0x3f8] sm:$0xff]
        %v2321 = vld [vmem:[%s395 + $0x400] sm:$0xff]
        %v2322 = vld [vmem:[%s395 + $0x408] sm:$0xff]
        %v2323 = vld [vmem:[%s395 + $0x410] sm:$0xff]
        %v2324 = vld [vmem:[%s395 + $0x418] sm:$0xff]
        %v2325 = vld [vmem:[%s395 + $0x420] sm:$0xff]
        %v2326 = vld [vmem:[%s395 + $0x428] sm:$0xff]
        %v2327 = vld [vmem:[%s395 + $0x430] sm:$0xff]
        %v2328 = vld [vmem:[%s395 + $0x438] sm:$0xff]
        %v2329 = vld [vmem:[%s395 + $0x440] sm:$0xff]
        %v2330 = vld [vmem:[%s395 + $0x448] sm:$0xff]
        %v2331 = vld [vmem:[%s395 + $0x450] sm:$0xff]
        %v2332 = vld [vmem:[%s395 + $0x458] sm:$0xff]
        %v2333 = vld [vmem:[%s395 + $0x460] sm:$0xff]
        %v2334 = vld [vmem:[%s395 + $0x468] sm:$0xff]
        %v2335 = vld [vmem:[%s395 + $0x470] sm:$0xff]
        %v2336 = vld [vmem:[%s395 + $0x478] sm:$0xff]
        %v2337 = vld [vmem:[%s395 + $0x480] sm:$0xff]
        %v2338 = vld [vmem:[%s395 + $0x488] sm:$0xff]
        %v2339 = vld [vmem:[%s395 + $0x490] sm:$0xff]
        %v2340 = vld [vmem:[%s395 + $0x498] sm:$0xff]
        %v2341 = vld [vmem:[%s395 + $0x4a0] sm:$0xff]
        %v2342 = vld [vmem:[%s395 + $0x4a8] sm:$0xff]
        %v2343 = vld [vmem:[%s395 + $0x4b0] sm:$0xff]
        %v2344 = vld [vmem:[%s395 + $0x4b8] sm:$0xff]
        %v2345 = vld [vmem:[%s395 + $0x4c0] sm:$0xff]
        %v2346 = vld [vmem:[%s395 + $0x4c8] sm:$0xff]
        %v2347 = vld [vmem:[%s395 + $0x4d0] sm:$0xff]
        %v2348 = vld [vmem:[%s395 + $0x4d8] sm:$0xff]
        %v2349 = vld [vmem:[%s395 + $0x4e0] sm:$0xff]
        %v2350 = vld [vmem:[%s395 + $0x4e8] sm:$0xff]
        %v2351 = vld [vmem:[%s395 + $0x4f0] sm:$0xff]
        %v2352 = vld [vmem:[%s395 + $0x4f8] sm:$0xff]
        %v2353 = vld [vmem:[%s395 + $0x500] sm:$0xff]
        %v2354 = vld [vmem:[%s395 + $0x508] sm:$0xff]
        %v2355 = vld [vmem:[%s395 + $0x510] sm:$0xff]
        %v2356 = vld [vmem:[%s395 + $0x518] sm:$0xff]
        %v2357 = vld [vmem:[%s395 + $0x520] sm:$0xff]
        %v2358 = vld [vmem:[%s395 + $0x528] sm:$0xff]
        %v2359 = vld [vmem:[%s395 + $0x530] sm:$0xff]
        %v2360 = vld [vmem:[%s395 + $0x538] sm:$0xff]
        %v2361 = vld [vmem:[%s395 + $0x540] sm:$0xff]
        %v2362 = vld [vmem:[%s395 + $0x548] sm:$0xff]
        %v2363 = vld [vmem:[%s395 + $0x550] sm:$0xff]
        %v2364 = vld [vmem:[%s395 + $0x558] sm:$0xff]
        %v2365 = vld [vmem:[%s395 + $0x560] sm:$0xff]
        %v2366 = vld [vmem:[%s395 + $0x568] sm:$0xff]
        %v2367 = vld [vmem:[%s395 + $0x570] sm:$0xff]
        %v2368 = vld [vmem:[%s395 + $0x578] sm:$0xff]
        %v2369 = vld [vmem:[%s395 + $0x580] sm:$0xff]
        %v2370 = vld [vmem:[%s395 + $0x588] sm:$0xff]
        %v2371 = vld [vmem:[%s395 + $0x590] sm:$0xff]
        %v2372 = vld [vmem:[%s395 + $0x598] sm:$0xff]
        %v2373 = vld [vmem:[%s395 + $0x5a0] sm:$0xff]
        %v2374 = vld [vmem:[%s395 + $0x5a8] sm:$0xff]
        %v2375 = vld [vmem:[%s395 + $0x5b0] sm:$0xff]
        %v2376 = vld [vmem:[%s395 + $0x5b8] sm:$0xff]
        %v2377 = vld [vmem:[%s395 + $0x5c0] sm:$0xff]
        %v2378 = vld [vmem:[%s395 + $0x5c8] sm:$0xff]
        %v2379 = vld [vmem:[%s395 + $0x5d0] sm:$0xff]
        %v2380 = vld [vmem:[%s395 + $0x5d8] sm:$0xff]
        %v2381 = vld [vmem:[%s395 + $0x5e0] sm:$0xff]
        %v2382 = vld [vmem:[%s395 + $0x5e8] sm:$0xff]
        %v2383 = vld [vmem:[%s395 + $0x5f0] sm:$0xff]
        %v2384 = vld [vmem:[%s395 + $0x5f8] sm:$0xff]
        %v2385 = vld [vmem:[%s395 + $0x600] sm:$0xff]
        %v2386 = vld [vmem:[%s395 + $0x608] sm:$0xff]
        %v2387 = vld [vmem:[%s395 + $0x610] sm:$0xff]
        %v2388 = vld [vmem:[%s395 + $0x618] sm:$0xff]
        %v2389 = vld [vmem:[%s395 + $0x620] sm:$0xff]
        %v2390 = vld [vmem:[%s395 + $0x628] sm:$0xff]
        %v2391 = vld [vmem:[%s395 + $0x630] sm:$0xff]
        %v2392 = vld [vmem:[%s395 + $0x638] sm:$0xff]
        %v2393 = vld [vmem:[%s395 + $0x640] sm:$0xff]
        %v2394 = vld [vmem:[%s395 + $0x648] sm:$0xff]
        %v2395 = vld [vmem:[%s395 + $0x650] sm:$0xff]
        %v2396 = vld [vmem:[%s395 + $0x658] sm:$0xff]
        %v2397 = vld [vmem:[%s395 + $0x660] sm:$0xff]
        %v2398 = vld [vmem:[%s395 + $0x668] sm:$0xff]
        %v2399 = vld [vmem:[%s395 + $0x670] sm:$0xff]
        %v2400 = vld [vmem:[%s395 + $0x678] sm:$0xff]
        %v2401 = vld [vmem:[%s395 + $0x680] sm:$0xff]
        %v2402 = vld [vmem:[%s395 + $0x688] sm:$0xff]
        %v2403 = vld [vmem:[%s395 + $0x690] sm:$0xff]
        %v2404 = vld [vmem:[%s395 + $0x698] sm:$0xff]
        %v2405 = vld [vmem:[%s395 + $0x6a0] sm:$0xff]
        %v2406 = vld [vmem:[%s395 + $0x6a8] sm:$0xff]
        %v2407 = vld [vmem:[%s395 + $0x6b0] sm:$0xff]
        %v2408 = vld [vmem:[%s395 + $0x6b8] sm:$0xff]
        %v2409 = vld [vmem:[%s395 + $0x6c0] sm:$0xff]
        %v2410 = vld [vmem:[%s395 + $0x6c8] sm:$0xff]
        %v2411 = vld [vmem:[%s395 + $0x6d0] sm:$0xff]
        %v2412 = vld [vmem:[%s395 + $0x6d8] sm:$0xff]
        %v2413 = vld [vmem:[%s395 + $0x6e0] sm:$0xff]
        %v2414 = vld [vmem:[%s395 + $0x6e8] sm:$0xff]
        %v2415 = vld [vmem:[%s395 + $0x6f0] sm:$0xff]
        %v2416 = vld [vmem:[%s395 + $0x6f8] sm:$0xff]
        %v2417 = vld [vmem:[%s395 + $0x700] sm:$0xff]
        %v2418 = vld [vmem:[%s395 + $0x708] sm:$0xff]
        %v2419 = vld [vmem:[%s395 + $0x710] sm:$0xff]
        %v2420 = vld [vmem:[%s395 + $0x718] sm:$0xff]
        %v2421 = vld [vmem:[%s395 + $0x720] sm:$0xff]
        %v2422 = vld [vmem:[%s395 + $0x728] sm:$0xff]
        %v2423 = vld [vmem:[%s395 + $0x730] sm:$0xff]
        %v2424 = vld [vmem:[%s395 + $0x738] sm:$0xff]
        %v2425 = vld [vmem:[%s395 + $0x740] sm:$0xff]
        %v2426 = vld [vmem:[%s395 + $0x748] sm:$0xff]
        %v2427 = vld [vmem:[%s395 + $0x750] sm:$0xff]
        %v2428 = vld [vmem:[%s395 + $0x758] sm:$0xff]
        %v2429 = vld [vmem:[%s395 + $0x760] sm:$0xff]
        %v2430 = vld [vmem:[%s395 + $0x768] sm:$0xff]
        %v2431 = vld [vmem:[%s395 + $0x770] sm:$0xff]
        %v2432 = vld [vmem:[%s395 + $0x778] sm:$0xff]
        %v2433 = vld [vmem:[%s395 + $0x780] sm:$0xff]
        %v2434 = vld [vmem:[%s395 + $0x788] sm:$0xff]
        %v2435 = vld [vmem:[%s395 + $0x790] sm:$0xff]
        %v2436 = vld [vmem:[%s395 + $0x798] sm:$0xff]
        %v2437 = vld [vmem:[%s395 + $0x7a0] sm:$0xff]
        %v2438 = vld [vmem:[%s395 + $0x7a8] sm:$0xff]
        %v2439 = vld [vmem:[%s395 + $0x7b0] sm:$0xff]
        %v2440 = vld [vmem:[%s395 + $0x7b8] sm:$0xff]
        %v2441 = vld [vmem:[%s395 + $0x7c0] sm:$0xff]
        %v2442 = vld [vmem:[%s395 + $0x7c8] sm:$0xff]
        %v2443 = vld [vmem:[%s395 + $0x7d0] sm:$0xff]
        %v2444 = vld [vmem:[%s395 + $0x7d8] sm:$0xff]
        %v2445 = vld [vmem:[%s395 + $0x7e0] sm:$0xff]
        %v2446 = vld [vmem:[%s395 + $0x7e8] sm:$0xff]
        %v2447 = vld [vmem:[%s395 + $0x7f0] sm:$0xff]
        %v2448 = vld [vmem:[%s395 + $0x7f8] sm:$0xff]
        %v2449 = vld [vmem:[%s395 + $0x800] sm:$0xff]
        %v2450 = vld [vmem:[%s395 + $0x808] sm:$0xff]
        %v2451 = vld [vmem:[%s395 + $0x810] sm:$0xff]
        %v2452 = vld [vmem:[%s395 + $0x818] sm:$0xff]
        %v2453 = vld [vmem:[%s395 + $0x820] sm:$0xff]
        %v2454 = vld [vmem:[%s395 + $0x828] sm:$0xff]
        %v2455 = vld [vmem:[%s395 + $0x830] sm:$0xff]
        %v2456 = vld [vmem:[%s395 + $0x838] sm:$0xff]
        %v2457 = vld [vmem:[%s395 + $0x840] sm:$0xff]
        %v2458 = vld [vmem:[%s395 + $0x848] sm:$0xff]
        %v2459 = vld [vmem:[%s395 + $0x850] sm:$0xff]
        %v2460 = vld [vmem:[%s395 + $0x858] sm:$0xff]
        %v2461 = vld [vmem:[%s395 + $0x860] sm:$0xff]
        %v2462 = vld [vmem:[%s395 + $0x868] sm:$0xff]
        %v2463 = vld [vmem:[%s395 + $0x870] sm:$0xff]
        %v2464 = vld [vmem:[%s395 + $0x878] sm:$0xff]
        %v2465 = vld [vmem:[%s395 + $0x880] sm:$0xff]
        %v2466 = vld [vmem:[%s395 + $0x888] sm:$0xff]
        %v2467 = vld [vmem:[%s395 + $0x890] sm:$0xff]
        %v2468 = vld [vmem:[%s395 + $0x898] sm:$0xff]
        %v2469 = vld [vmem:[%s395 + $0x8a0] sm:$0xff]
        %v2470 = vld [vmem:[%s395 + $0x8a8] sm:$0xff]
        %v2471 = vld [vmem:[%s395 + $0x8b0] sm:$0xff]
        %v2472 = vld [vmem:[%s395 + $0x8b8] sm:$0xff]
        %v2473 = vld [vmem:[%s395 + $0x8c0] sm:$0xff]
        %v2474 = vld [vmem:[%s395 + $0x8c8] sm:$0xff]
        %v2475 = vld [vmem:[%s395 + $0x8d0] sm:$0xff]
        %v2476 = vld [vmem:[%s395 + $0x8d8] sm:$0xff]
        %v2477 = vld [vmem:[%s395 + $0x8e0] sm:$0xff]
        %v2478 = vld [vmem:[%s395 + $0x8e8] sm:$0xff]
        %v2479 = vld [vmem:[%s395 + $0x8f0] sm:$0xff]
        %v2480 = vld [vmem:[%s395 + $0x8f8] sm:$0xff]
        %v2481 = vld [vmem:[%s404] sm:$0x3f]
        %v2483 = vlaneseq
        %v2484 = vshrl.u32 %v2483, 7
        %v2485 = vsub.s32 0, %v2484
        %v2486 = vrot.slane %v2481, %v2485
        %v2487 = vlaneseq
        %v2488 = vshrl.u32 %v2487, 7
        %v2489 = vsub.s32 1, %v2488
        %v2490 = vrot.slane %v2481, %v2489
        %v2491 = vlaneseq
        %v2492 = vshrl.u32 %v2491, 7
        %v2493 = vsub.s32 2, %v2492
        %v2494 = vrot.slane %v2481, %v2493
        %v2495 = vlaneseq
        %v2496 = vshrl.u32 %v2495, 7
        %v2497 = vsub.s32 3, %v2496
        %v2498 = vrot.slane %v2481, %v2497
        %v2499 = vlaneseq
        %v2500 = vshrl.u32 %v2499, 7
        %v2501 = vsub.s32 4, %v2500
        %v2502 = vrot.slane %v2481, %v2501
        %v2503 = vlaneseq
        %v2504 = vshrl.u32 %v2503, 7
        %v2505 = vsub.s32 5, %v2504
        %v2506 = vrot.slane %v2481, %v2505
        %v2801 = vunpack.c.l.b16 %v2193
        %v2802 = vunpack.c.h.b16 %v2193
        %v2803 = vunpack.c.l.b16 %v2194
        %v2804 = vunpack.c.h.b16 %v2194
        %v2805 = vunpack.c.l.b16 %v2195
        %v2806 = vunpack.c.h.b16 %v2195
        %v2807 = vunpack.c.l.b16 %v2196
        %v2808 = vunpack.c.h.b16 %v2196
        %v2809 = vunpack.c.l.b16 %v2197
        %v2810 = vunpack.c.h.b16 %v2197
        %v2811 = vunpack.c.l.b16 %v2198
        %v2812 = vunpack.c.h.b16 %v2198
        %v2813 = vunpack.c.l.b16 %v2199
        %v2814 = vunpack.c.h.b16 %v2199
        %v2815 = vunpack.c.l.b16 %v2200
        %v2816 = vunpack.c.h.b16 %v2200
        %v2817 = vunpack.c.l.b16 %v2201
        %v2818 = vunpack.c.h.b16 %v2201
        %v2819 = vunpack.c.l.b16 %v2202
        %v2820 = vunpack.c.h.b16 %v2202
        %v2821 = vunpack.c.l.b16 %v2203
        %v2822 = vunpack.c.h.b16 %v2203
        %v2823 = vunpack.c.l.b16 %v2204
        %v2824 = vunpack.c.h.b16 %v2204
        %v2825 = vunpack.c.l.b16 %v2205
        %v2826 = vunpack.c.h.b16 %v2205
        %v2827 = vunpack.c.l.b16 %v2206
        %v2828 = vunpack.c.h.b16 %v2206
        %v2829 = vunpack.c.l.b16 %v2207
        %v2830 = vunpack.c.h.b16 %v2207
        %v2831 = vunpack.c.l.b16 %v2208
        %v2832 = vunpack.c.h.b16 %v2208
        %v2833 = vunpack.c.l.b16 %v2209
        %v2834 = vunpack.c.h.b16 %v2209
        %v2835 = vunpack.c.l.b16 %v2210
        %v2836 = vunpack.c.h.b16 %v2210
        %v2837 = vunpack.c.l.b16 %v2211
        %v2838 = vunpack.c.h.b16 %v2211
        %v2839 = vunpack.c.l.b16 %v2212
        %v2840 = vunpack.c.h.b16 %v2212
        %v2841 = vunpack.c.l.b16 %v2213
        %v2842 = vunpack.c.h.b16 %v2213
        %v2843 = vunpack.c.l.b16 %v2214
        %v2844 = vunpack.c.h.b16 %v2214
        %v2845 = vunpack.c.l.b16 %v2215
        %v2846 = vunpack.c.h.b16 %v2215
        %v2847 = vunpack.c.l.b16 %v2216
        %v2848 = vunpack.c.h.b16 %v2216
        %v2849 = vunpack.c.l.b16 %v2217
        %v2850 = vunpack.c.h.b16 %v2217
        %v2851 = vunpack.c.l.b16 %v2218
        %v2852 = vunpack.c.h.b16 %v2218
        %v2853 = vunpack.c.l.b16 %v2219
        %v2854 = vunpack.c.h.b16 %v2219
        %v2855 = vunpack.c.l.b16 %v2220
        %v2856 = vunpack.c.h.b16 %v2220
        %v2857 = vunpack.c.l.b16 %v2221
        %v2858 = vunpack.c.h.b16 %v2221
        %v2859 = vunpack.c.l.b16 %v2222
        %v2860 = vunpack.c.h.b16 %v2222
        %v2861 = vunpack.c.l.b16 %v2223
        %v2862 = vunpack.c.h.b16 %v2223
        %v2863 = vunpack.c.l.b16 %v2224
        %v2864 = vunpack.c.h.b16 %v2224
        %v2865 = vunpack.c.l.b16 %v2225
        %v2866 = vunpack.c.h.b16 %v2225
        %v2867 = vunpack.c.l.b16 %v2226
        %v2868 = vunpack.c.h.b16 %v2226
        %v2869 = vunpack.c.l.b16 %v2227
        %v2870 = vunpack.c.h.b16 %v2227
        %v2871 = vunpack.c.l.b16 %v2228
        %v2872 = vunpack.c.h.b16 %v2228
        %v2873 = vunpack.c.l.b16 %v2229
        %v2874 = vunpack.c.h.b16 %v2229
        %v2875 = vunpack.c.l.b16 %v2230
        %v2876 = vunpack.c.h.b16 %v2230
        %v2877 = vunpack.c.l.b16 %v2231
        %v2878 = vunpack.c.h.b16 %v2231
        %v2879 = vunpack.c.l.b16 %v2232
        %v2880 = vunpack.c.h.b16 %v2232
        %v2881 = vunpack.c.l.b16 %v2233
        %v2882 = vunpack.c.h.b16 %v2233
        %v2883 = vunpack.c.l.b16 %v2234
        %v2884 = vunpack.c.h.b16 %v2234
        %v2885 = vunpack.c.l.b16 %v2235
        %v2886 = vunpack.c.h.b16 %v2235
        %v2887 = vunpack.c.l.b16 %v2236
        %v2888 = vunpack.c.h.b16 %v2236
        %v2889 = vunpack.c.l.b16 %v2237
        %v2890 = vunpack.c.h.b16 %v2237
        %v2891 = vunpack.c.l.b16 %v2238
        %v2892 = vunpack.c.h.b16 %v2238
        %v2893 = vunpack.c.l.b16 %v2239
        %v2894 = vunpack.c.h.b16 %v2239
        %v2895 = vunpack.c.l.b16 %v2240
        %v2896 = vunpack.c.h.b16 %v2240
        %v2897 = vunpack.c.l.b16 %v2241
        %v2898 = vunpack.c.h.b16 %v2241
        %v2899 = vunpack.c.l.b16 %v2242
        %v2900 = vunpack.c.h.b16 %v2242
        %v2901 = vunpack.c.l.b16 %v2243
        %v2902 = vunpack.c.h.b16 %v2243
        %v2903 = vunpack.c.l.b16 %v2244
        %v2904 = vunpack.c.h.b16 %v2244
        %v2905 = vunpack.c.l.b16 %v2245
        %v2906 = vunpack.c.h.b16 %v2245
        %v2907 = vunpack.c.l.b16 %v2246
        %v2908 = vunpack.c.h.b16 %v2246
        %v2909 = vunpack.c.l.b16 %v2247
        %v2910 = vunpack.c.h.b16 %v2247
        %v2911 = vunpack.c.l.b16 %v2248
        %v2912 = vunpack.c.h.b16 %v2248
        %v2913 = vunpack.c.l.b16 %v2249
        %v2914 = vunpack.c.h.b16 %v2249
        %v2915 = vunpack.c.l.b16 %v2250
        %v2916 = vunpack.c.h.b16 %v2250
        %v2917 = vunpack.c.l.b16 %v2251
        %v2918 = vunpack.c.h.b16 %v2251
        %v2919 = vunpack.c.l.b16 %v2252
        %v2920 = vunpack.c.h.b16 %v2252
        %v2921 = vunpack.c.l.b16 %v2253
        %v2922 = vunpack.c.h.b16 %v2253
        %v2923 = vunpack.c.l.b16 %v2254
        %v2924 = vunpack.c.h.b16 %v2254
        %v2925 = vunpack.c.l.b16 %v2255
        %v2926 = vunpack.c.h.b16 %v2255
        %v2927 = vunpack.c.l.b16 %v2256
        %v2928 = vunpack.c.h.b16 %v2256
        %v2929 = vunpack.c.l.b16 %v2257
        %v2930 = vunpack.c.h.b16 %v2257
        %v2931 = vunpack.c.l.b16 %v2258
        %v2932 = vunpack.c.h.b16 %v2258
        %v2933 = vunpack.c.l.b16 %v2259
        %v2934 = vunpack.c.h.b16 %v2259
        %v2935 = vunpack.c.l.b16 %v2260
        %v2936 = vunpack.c.h.b16 %v2260
        %v2937 = vunpack.c.l.b16 %v2261
        %v2938 = vunpack.c.h.b16 %v2261
        %v2939 = vunpack.c.l.b16 %v2262
        %v2940 = vunpack.c.h.b16 %v2262
        %v2941 = vunpack.c.l.b16 %v2263
        %v2942 = vunpack.c.h.b16 %v2263
        %v2943 = vunpack.c.l.b16 %v2264
        %v2944 = vunpack.c.h.b16 %v2264
        %v2945 = vunpack.c.l.b16 %v2265
        %v2946 = vunpack.c.h.b16 %v2265
        %v2947 = vunpack.c.l.b16 %v2266
        %v2948 = vunpack.c.h.b16 %v2266
        %v2949 = vunpack.c.l.b16 %v2267
        %v2950 = vunpack.c.h.b16 %v2267
        %v2951 = vunpack.c.l.b16 %v2268
        %v2952 = vunpack.c.h.b16 %v2268
        %v2953 = vunpack.c.l.b16 %v2269
        %v2954 = vunpack.c.h.b16 %v2269
        %v2955 = vunpack.c.l.b16 %v2270
        %v2956 = vunpack.c.h.b16 %v2270
        %v2957 = vunpack.c.l.b16 %v2271
        %v2958 = vunpack.c.h.b16 %v2271
        %v2959 = vunpack.c.l.b16 %v2272
        %v2960 = vunpack.c.h.b16 %v2272
        %v2961 = vunpack.c.l.b16 %v2273
        %v2962 = vunpack.c.h.b16 %v2273
        %v2963 = vunpack.c.l.b16 %v2274
        %v2964 = vunpack.c.h.b16 %v2274
        %v2965 = vunpack.c.l.b16 %v2275
        %v2966 = vunpack.c.h.b16 %v2275
        %v2967 = vunpack.c.l.b16 %v2276
        %v2968 = vunpack.c.h.b16 %v2276
        %v2969 = vunpack.c.l.b16 %v2277
        %v2970 = vunpack.c.h.b16 %v2277
        %v2971 = vunpack.c.l.b16 %v2278
        %v2972 = vunpack.c.h.b16 %v2278
        %v2973 = vunpack.c.l.b16 %v2279
        %v2974 = vunpack.c.h.b16 %v2279
        %v2975 = vunpack.c.l.b16 %v2280
        %v2976 = vunpack.c.h.b16 %v2280
        %v2977 = vunpack.c.l.b16 %v2281
        %v2978 = vunpack.c.h.b16 %v2281
        %v2979 = vunpack.c.l.b16 %v2282
        %v2980 = vunpack.c.h.b16 %v2282
        %v2981 = vunpack.c.l.b16 %v2283
        %v2982 = vunpack.c.h.b16 %v2283
        %v2983 = vunpack.c.l.b16 %v2284
        %v2984 = vunpack.c.h.b16 %v2284
        %v2985 = vunpack.c.l.b16 %v2285
        %v2986 = vunpack.c.h.b16 %v2285
        %v2987 = vunpack.c.l.b16 %v2286
        %v2988 = vunpack.c.h.b16 %v2286
        %v2989 = vunpack.c.l.b16 %v2287
        %v2990 = vunpack.c.h.b16 %v2287
        %v2991 = vunpack.c.l.b16 %v2288
        %v2992 = vunpack.c.h.b16 %v2288
        %v2993 = vunpack.c.l.b16 %v2289
        %v2994 = vunpack.c.h.b16 %v2289
        %v2995 = vunpack.c.l.b16 %v2290
        %v2996 = vunpack.c.h.b16 %v2290
        %v2997 = vunpack.c.l.b16 %v2291
        %v2998 = vunpack.c.h.b16 %v2291
        %v2999 = vunpack.c.l.b16 %v2292
        %v3000 = vunpack.c.h.b16 %v2292
        %v3001 = vunpack.c.l.b16 %v2293
        %v3002 = vunpack.c.h.b16 %v2293
        %v3003 = vunpack.c.l.b16 %v2294
        %v3004 = vunpack.c.h.b16 %v2294
        %v3005 = vunpack.c.l.b16 %v2295
        %v3006 = vunpack.c.h.b16 %v2295
        %v3007 = vunpack.c.l.b16 %v2296
        %v3008 = vunpack.c.h.b16 %v2296
        %v3009 = vunpack.c.l.b16 %v2297
        %v3010 = vunpack.c.h.b16 %v2297
        %v3011 = vunpack.c.l.b16 %v2298
        %v3012 = vunpack.c.h.b16 %v2298
        %v3013 = vunpack.c.l.b16 %v2299
        %v3014 = vunpack.c.h.b16 %v2299
        %v3015 = vunpack.c.l.b16 %v2300
        %v3016 = vunpack.c.h.b16 %v2300
        %v3017 = vunpack.c.l.b16 %v2301
        %v3018 = vunpack.c.h.b16 %v2301
        %v3019 = vunpack.c.l.b16 %v2302
        %v3020 = vunpack.c.h.b16 %v2302
        %v3021 = vunpack.c.l.b16 %v2303
        %v3022 = vunpack.c.h.b16 %v2303
        %v3023 = vunpack.c.l.b16 %v2304
        %v3024 = vunpack.c.h.b16 %v2304
        %v3025 = vunpack.c.l.b16 %v2305
        %v3026 = vunpack.c.h.b16 %v2305
        %v3027 = vunpack.c.l.b16 %v2306
        %v3028 = vunpack.c.h.b16 %v2306
        %v3029 = vunpack.c.l.b16 %v2307
        %v3030 = vunpack.c.h.b16 %v2307
        %v3031 = vunpack.c.l.b16 %v2308
        %v3032 = vunpack.c.h.b16 %v2308
        %v3033 = vunpack.c.l.b16 %v2309
        %v3034 = vunpack.c.h.b16 %v2309
        %v3035 = vunpack.c.l.b16 %v2310
        %v3036 = vunpack.c.h.b16 %v2310
        %v3037 = vunpack.c.l.b16 %v2311
        %v3038 = vunpack.c.h.b16 %v2311
        %v3039 = vunpack.c.l.b16 %v2312
        %v3040 = vunpack.c.h.b16 %v2312
        %v3041 = vunpack.c.l.b16 %v2313
        %v3042 = vunpack.c.h.b16 %v2313
        %v3043 = vunpack.c.l.b16 %v2314
        %v3044 = vunpack.c.h.b16 %v2314
        %v3045 = vunpack.c.l.b16 %v2315
        %v3046 = vunpack.c.h.b16 %v2315
        %v3047 = vunpack.c.l.b16 %v2316
        %v3048 = vunpack.c.h.b16 %v2316
        %v3049 = vunpack.c.l.b16 %v2317
        %v3050 = vunpack.c.h.b16 %v2317
        %v3051 = vunpack.c.l.b16 %v2318
        %v3052 = vunpack.c.h.b16 %v2318
        %v3053 = vunpack.c.l.b16 %v2319
        %v3054 = vunpack.c.h.b16 %v2319
        %v3055 = vunpack.c.l.b16 %v2320
        %v3056 = vunpack.c.h.b16 %v2320
        %v3057 = vunpack.c.l.b16 %v2321
        %v3058 = vunpack.c.h.b16 %v2321
        %v3059 = vunpack.c.l.b16 %v2322
        %v3060 = vunpack.c.h.b16 %v2322
        %v3061 = vunpack.c.l.b16 %v2323
        %v3062 = vunpack.c.h.b16 %v2323
        %v3063 = vunpack.c.l.b16 %v2324
        %v3064 = vunpack.c.h.b16 %v2324
        %v3065 = vunpack.c.l.b16 %v2325
        %v3066 = vunpack.c.h.b16 %v2325
        %v3067 = vunpack.c.l.b16 %v2326
        %v3068 = vunpack.c.h.b16 %v2326
        %v3069 = vunpack.c.l.b16 %v2327
        %v3070 = vunpack.c.h.b16 %v2327
        %v3071 = vunpack.c.l.b16 %v2328
        %v3072 = vunpack.c.h.b16 %v2328
        %v3073 = vunpack.c.l.b16 %v2329
        %v3074 = vunpack.c.h.b16 %v2329
        %v3075 = vunpack.c.l.b16 %v2330
        %v3076 = vunpack.c.h.b16 %v2330
        %v3077 = vunpack.c.l.b16 %v2331
        %v3078 = vunpack.c.h.b16 %v2331
        %v3079 = vunpack.c.l.b16 %v2332
        %v3080 = vunpack.c.h.b16 %v2332
        %v3081 = vunpack.c.l.b16 %v2333
        %v3082 = vunpack.c.h.b16 %v2333
        %v3083 = vunpack.c.l.b16 %v2334
        %v3084 = vunpack.c.h.b16 %v2334
        %v3085 = vunpack.c.l.b16 %v2335
        %v3086 = vunpack.c.h.b16 %v2335
        %v3087 = vunpack.c.l.b16 %v2336
        %v3088 = vunpack.c.h.b16 %v2336
        %v3089 = vunpack.c.l.b16 %v2337
        %v3090 = vunpack.c.h.b16 %v2337
        %v3091 = vunpack.c.l.b16 %v2338
        %v3092 = vunpack.c.h.b16 %v2338
        %v3093 = vunpack.c.l.b16 %v2339
        %v3094 = vunpack.c.h.b16 %v2339
        %v3095 = vunpack.c.l.b16 %v2340
        %v3096 = vunpack.c.h.b16 %v2340
        %v3097 = vunpack.c.l.b16 %v2341
        %v3098 = vunpack.c.h.b16 %v2341
        %v3099 = vunpack.c.l.b16 %v2342
        %v3100 = vunpack.c.h.b16 %v2342
        %v3101 = vunpack.c.l.b16 %v2343
        %v3102 = vunpack.c.h.b16 %v2343
        %v3103 = vunpack.c.l.b16 %v2344
        %v3104 = vunpack.c.h.b16 %v2344
        %v3105 = vunpack.c.l.b16 %v2345
        %v3106 = vunpack.c.h.b16 %v2345
        %v3107 = vunpack.c.l.b16 %v2346
        %v3108 = vunpack.c.h.b16 %v2346
        %v3109 = vunpack.c.l.b16 %v2347
        %v3110 = vunpack.c.h.b16 %v2347
        %v3111 = vunpack.c.l.b16 %v2348
        %v3112 = vunpack.c.h.b16 %v2348
        %v3113 = vunpack.c.l.b16 %v2349
        %v3114 = vunpack.c.h.b16 %v2349
        %v3115 = vunpack.c.l.b16 %v2350
        %v3116 = vunpack.c.h.b16 %v2350
        %v3117 = vunpack.c.l.b16 %v2351
        %v3118 = vunpack.c.h.b16 %v2351
        %v3119 = vunpack.c.l.b16 %v2352
        %v3120 = vunpack.c.h.b16 %v2352
        %v3121 = vunpack.c.l.b16 %v2353
        %v3122 = vunpack.c.h.b16 %v2353
        %v3123 = vunpack.c.l.b16 %v2354
        %v3124 = vunpack.c.h.b16 %v2354
        %v3125 = vunpack.c.l.b16 %v2355
        %v3126 = vunpack.c.h.b16 %v2355
        %v3127 = vunpack.c.l.b16 %v2356
        %v3128 = vunpack.c.h.b16 %v2356
        %v3129 = vunpack.c.l.b16 %v2357
        %v3130 = vunpack.c.h.b16 %v2357
        %v3131 = vunpack.c.l.b16 %v2358
        %v3132 = vunpack.c.h.b16 %v2358
        %v3133 = vunpack.c.l.b16 %v2359
        %v3134 = vunpack.c.h.b16 %v2359
        %v3135 = vunpack.c.l.b16 %v2360
        %v3136 = vunpack.c.h.b16 %v2360
        %v3137 = vunpack.c.l.b16 %v2361
        %v3138 = vunpack.c.h.b16 %v2361
        %v3139 = vunpack.c.l.b16 %v2362
        %v3140 = vunpack.c.h.b16 %v2362
        %v3141 = vunpack.c.l.b16 %v2363
        %v3142 = vunpack.c.h.b16 %v2363
        %v3143 = vunpack.c.l.b16 %v2364
        %v3144 = vunpack.c.h.b16 %v2364
        %v3145 = vunpack.c.l.b16 %v2365
        %v3146 = vunpack.c.h.b16 %v2365
        %v3147 = vunpack.c.l.b16 %v2366
        %v3148 = vunpack.c.h.b16 %v2366
        %v3149 = vunpack.c.l.b16 %v2367
        %v3150 = vunpack.c.h.b16 %v2367
        %v3151 = vunpack.c.l.b16 %v2368
        %v3152 = vunpack.c.h.b16 %v2368
        %v3153 = vunpack.c.l.b16 %v2369
        %v3154 = vunpack.c.h.b16 %v2369
        %v3155 = vunpack.c.l.b16 %v2370
        %v3156 = vunpack.c.h.b16 %v2370
        %v3157 = vunpack.c.l.b16 %v2371
        %v3158 = vunpack.c.h.b16 %v2371
        %v3159 = vunpack.c.l.b16 %v2372
        %v3160 = vunpack.c.h.b16 %v2372
        %v3161 = vunpack.c.l.b16 %v2373
        %v3162 = vunpack.c.h.b16 %v2373
        %v3163 = vunpack.c.l.b16 %v2374
        %v3164 = vunpack.c.h.b16 %v2374
        %v3165 = vunpack.c.l.b16 %v2375
        %v3166 = vunpack.c.h.b16 %v2375
        %v3167 = vunpack.c.l.b16 %v2376
        %v3168 = vunpack.c.h.b16 %v2376
        %v3169 = vunpack.c.l.b16 %v2377
        %v3170 = vunpack.c.h.b16 %v2377
        %v3171 = vunpack.c.l.b16 %v2378
        %v3172 = vunpack.c.h.b16 %v2378
        %v3173 = vunpack.c.l.b16 %v2379
        %v3174 = vunpack.c.h.b16 %v2379
        %v3175 = vunpack.c.l.b16 %v2380
        %v3176 = vunpack.c.h.b16 %v2380
        %v3177 = vunpack.c.l.b16 %v2381
        %v3178 = vunpack.c.h.b16 %v2381
        %v3179 = vunpack.c.l.b16 %v2382
        %v3180 = vunpack.c.h.b16 %v2382
        %v3181 = vunpack.c.l.b16 %v2383
        %v3182 = vunpack.c.h.b16 %v2383
        %v3183 = vunpack.c.l.b16 %v2384
        %v3184 = vunpack.c.h.b16 %v2384
        %v3185 = vunpack.c.l.b16 %v2385
        %v3186 = vunpack.c.h.b16 %v2385
        %v3187 = vunpack.c.l.b16 %v2386
        %v3188 = vunpack.c.h.b16 %v2386
        %v3189 = vunpack.c.l.b16 %v2387
        %v3190 = vunpack.c.h.b16 %v2387
        %v3191 = vunpack.c.l.b16 %v2388
        %v3192 = vunpack.c.h.b16 %v2388
        %v3193 = vunpack.c.l.b16 %v2389
        %v3194 = vunpack.c.h.b16 %v2389
        %v3195 = vunpack.c.l.b16 %v2390
        %v3196 = vunpack.c.h.b16 %v2390
        %v3197 = vunpack.c.l.b16 %v2391
        %v3198 = vunpack.c.h.b16 %v2391
        %v3199 = vunpack.c.l.b16 %v2392
        %v3200 = vunpack.c.h.b16 %v2392
        %v3201 = vunpack.c.l.b16 %v2393
        %v3202 = vunpack.c.h.b16 %v2393
        %v3203 = vunpack.c.l.b16 %v2394
        %v3204 = vunpack.c.h.b16 %v2394
        %v3205 = vunpack.c.l.b16 %v2395
        %v3206 = vunpack.c.h.b16 %v2395
        %v3207 = vunpack.c.l.b16 %v2396
        %v3208 = vunpack.c.h.b16 %v2396
        %v3209 = vunpack.c.l.b16 %v2397
        %v3210 = vunpack.c.h.b16 %v2397
        %v3211 = vunpack.c.l.b16 %v2398
        %v3212 = vunpack.c.h.b16 %v2398
        %v3213 = vunpack.c.l.b16 %v2399
        %v3214 = vunpack.c.h.b16 %v2399
        %v3215 = vunpack.c.l.b16 %v2400
        %v3216 = vunpack.c.h.b16 %v2400
        %v3217 = vunpack.c.l.b16 %v2401
        %v3218 = vunpack.c.h.b16 %v2401
        %v3219 = vunpack.c.l.b16 %v2402
        %v3220 = vunpack.c.h.b16 %v2402
        %v3221 = vunpack.c.l.b16 %v2403
        %v3222 = vunpack.c.h.b16 %v2403
        %v3223 = vunpack.c.l.b16 %v2404
        %v3224 = vunpack.c.h.b16 %v2404
        %v3225 = vunpack.c.l.b16 %v2405
        %v3226 = vunpack.c.h.b16 %v2405
        %v3227 = vunpack.c.l.b16 %v2406
        %v3228 = vunpack.c.h.b16 %v2406
        %v3229 = vunpack.c.l.b16 %v2407
        %v3230 = vunpack.c.h.b16 %v2407
        %v3231 = vunpack.c.l.b16 %v2408
        %v3232 = vunpack.c.h.b16 %v2408
        %v3233 = vunpack.c.l.b16 %v2409
        %v3234 = vunpack.c.h.b16 %v2409
        %v3235 = vunpack.c.l.b16 %v2410
        %v3236 = vunpack.c.h.b16 %v2410
        %v3237 = vunpack.c.l.b16 %v2411
        %v3238 = vunpack.c.h.b16 %v2411
        %v3239 = vunpack.c.l.b16 %v2412
        %v3240 = vunpack.c.h.b16 %v2412
        %v3241 = vunpack.c.l.b16 %v2413
        %v3242 = vunpack.c.h.b16 %v2413
        %v3243 = vunpack.c.l.b16 %v2414
        %v3244 = vunpack.c.h.b16 %v2414
        %v3245 = vunpack.c.l.b16 %v2415
        %v3246 = vunpack.c.h.b16 %v2415
        %v3247 = vunpack.c.l.b16 %v2416
        %v3248 = vunpack.c.h.b16 %v2416
        %v3249 = vunpack.c.l.b16 %v2417
        %v3250 = vunpack.c.h.b16 %v2417
        %v3251 = vunpack.c.l.b16 %v2418
        %v3252 = vunpack.c.h.b16 %v2418
        %v3253 = vunpack.c.l.b16 %v2419
        %v3254 = vunpack.c.h.b16 %v2419
        %v3255 = vunpack.c.l.b16 %v2420
        %v3256 = vunpack.c.h.b16 %v2420
        %v3257 = vunpack.c.l.b16 %v2421
        %v3258 = vunpack.c.h.b16 %v2421
        %v3259 = vunpack.c.l.b16 %v2422
        %v3260 = vunpack.c.h.b16 %v2422
        %v3261 = vunpack.c.l.b16 %v2423
        %v3262 = vunpack.c.h.b16 %v2423
        %v3263 = vunpack.c.l.b16 %v2424
        %v3264 = vunpack.c.h.b16 %v2424
        %v3265 = vunpack.c.l.b16 %v2425
        %v3266 = vunpack.c.h.b16 %v2425
        %v3267 = vunpack.c.l.b16 %v2426
        %v3268 = vunpack.c.h.b16 %v2426
        %v3269 = vunpack.c.l.b16 %v2427
        %v3270 = vunpack.c.h.b16 %v2427
        %v3271 = vunpack.c.l.b16 %v2428
        %v3272 = vunpack.c.h.b16 %v2428
        %v3273 = vunpack.c.l.b16 %v2429
        %v3274 = vunpack.c.h.b16 %v2429
        %v3275 = vunpack.c.l.b16 %v2430
        %v3276 = vunpack.c.h.b16 %v2430
        %v3277 = vunpack.c.l.b16 %v2431
        %v3278 = vunpack.c.h.b16 %v2431
        %v3279 = vunpack.c.l.b16 %v2432
        %v3280 = vunpack.c.h.b16 %v2432
        %v3281 = vunpack.c.l.b16 %v2433
        %v3282 = vunpack.c.h.b16 %v2433
        %v3283 = vunpack.c.l.b16 %v2434
        %v3284 = vunpack.c.h.b16 %v2434
        %v3285 = vunpack.c.l.b16 %v2435
        %v3286 = vunpack.c.h.b16 %v2435
        %v3287 = vunpack.c.l.b16 %v2436
        %v3288 = vunpack.c.h.b16 %v2436
        %v3289 = vunpack.c.l.b16 %v2437
        %v3290 = vunpack.c.h.b16 %v2437
        %v3291 = vunpack.c.l.b16 %v2438
        %v3292 = vunpack.c.h.b16 %v2438
        %v3293 = vunpack.c.l.b16 %v2439
        %v3294 = vunpack.c.h.b16 %v2439
        %v3295 = vunpack.c.l.b16 %v2440
        %v3296 = vunpack.c.h.b16 %v2440
        %v3297 = vunpack.c.l.b16 %v2441
        %v3298 = vunpack.c.h.b16 %v2441
        %v3299 = vunpack.c.l.b16 %v2442
        %v3300 = vunpack.c.h.b16 %v2442
        %v3301 = vunpack.c.l.b16 %v2443
        %v3302 = vunpack.c.h.b16 %v2443
        %v3303 = vunpack.c.l.b16 %v2444
        %v3304 = vunpack.c.h.b16 %v2444
        %v3305 = vunpack.c.l.b16 %v2445
        %v3306 = vunpack.c.h.b16 %v2445
        %v3307 = vunpack.c.l.b16 %v2446
        %v3308 = vunpack.c.h.b16 %v2446
        %v3309 = vunpack.c.l.b16 %v2447
        %v3310 = vunpack.c.h.b16 %v2447
        %v3311 = vunpack.c.l.b16 %v2448
        %v3312 = vunpack.c.h.b16 %v2448
        %v3313 = vunpack.c.l.b16 %v2449
        %v3314 = vunpack.c.h.b16 %v2449
        %v3315 = vunpack.c.l.b16 %v2450
        %v3316 = vunpack.c.h.b16 %v2450
        %v3317 = vunpack.c.l.b16 %v2451
        %v3318 = vunpack.c.h.b16 %v2451
        %v3319 = vunpack.c.l.b16 %v2452
        %v3320 = vunpack.c.h.b16 %v2452
        %v3321 = vunpack.c.l.b16 %v2453
        %v3322 = vunpack.c.h.b16 %v2453
        %v3323 = vunpack.c.l.b16 %v2454
        %v3324 = vunpack.c.h.b16 %v2454
        %v3325 = vunpack.c.l.b16 %v2455
        %v3326 = vunpack.c.h.b16 %v2455
        %v3327 = vunpack.c.l.b16 %v2456
        %v3328 = vunpack.c.h.b16 %v2456
        %v3329 = vunpack.c.l.b16 %v2457
        %v3330 = vunpack.c.h.b16 %v2457
        %v3331 = vunpack.c.l.b16 %v2458
        %v3332 = vunpack.c.h.b16 %v2458
        %v3333 = vunpack.c.l.b16 %v2459
        %v3334 = vunpack.c.h.b16 %v2459
        %v3335 = vunpack.c.l.b16 %v2460
        %v3336 = vunpack.c.h.b16 %v2460
        %v3337 = vunpack.c.l.b16 %v2461
        %v3338 = vunpack.c.h.b16 %v2461
        %v3339 = vunpack.c.l.b16 %v2462
        %v3340 = vunpack.c.h.b16 %v2462
        %v3341 = vunpack.c.l.b16 %v2463
        %v3342 = vunpack.c.h.b16 %v2463
        %v3343 = vunpack.c.l.b16 %v2464
        %v3344 = vunpack.c.h.b16 %v2464
        %v3345 = vunpack.c.l.b16 %v2465
        %v3346 = vunpack.c.h.b16 %v2465
        %v3347 = vunpack.c.l.b16 %v2466
        %v3348 = vunpack.c.h.b16 %v2466
        %v3349 = vunpack.c.l.b16 %v2467
        %v3350 = vunpack.c.h.b16 %v2467
        %v3351 = vunpack.c.l.b16 %v2468
        %v3352 = vunpack.c.h.b16 %v2468
        %v3353 = vunpack.c.l.b16 %v2469
        %v3354 = vunpack.c.h.b16 %v2469
        %v3355 = vunpack.c.l.b16 %v2470
        %v3356 = vunpack.c.h.b16 %v2470
        %v3357 = vunpack.c.l.b16 %v2471
        %v3358 = vunpack.c.h.b16 %v2471
        %v3359 = vunpack.c.l.b16 %v2472
        %v3360 = vunpack.c.h.b16 %v2472
        %v3361 = vunpack.c.l.b16 %v2473
        %v3362 = vunpack.c.h.b16 %v2473
        %v3363 = vunpack.c.l.b16 %v2474
        %v3364 = vunpack.c.h.b16 %v2474
        %v3365 = vunpack.c.l.b16 %v2475
        %v3366 = vunpack.c.h.b16 %v2475
        %v3367 = vunpack.c.l.b16 %v2476
        %v3368 = vunpack.c.h.b16 %v2476
        %v3369 = vunpack.c.l.b16 %v2477
        %v3370 = vunpack.c.h.b16 %v2477
        %v3371 = vunpack.c.l.b16 %v2478
        %v3372 = vunpack.c.h.b16 %v2478
        %v3373 = vunpack.c.l.b16 %v2479
        %v3374 = vunpack.c.h.b16 %v2479
        %v3375 = vunpack.c.l.b16 %v2480
        %v3376 = vunpack.c.h.b16 %v2480
        %v3377 = vpack.c.b16 %v2807, %v2801
        %v3378 = vpack.c.b16 %v2808, %v2802
        %v3379 = vpack.c.b16 %v2809, %v2803
        %v3380 = vpack.c.b16 %v2810, %v2804
        %v3381 = vpack.c.b16 %v2811, %v2805
        %v3382 = vpack.c.b16 %v2812, %v2806
        %v3383 = vpack.c.b16 %v2819, %v2813
        %v3384 = vpack.c.b16 %v2820, %v2814
        %v3385 = vpack.c.b16 %v2821, %v2815
        %v3386 = vpack.c.b16 %v2822, %v2816
        %v3387 = vpack.c.b16 %v2823, %v2817
        %v3388 = vpack.c.b16 %v2824, %v2818
        %v3389 = vpack.c.b16 %v2831, %v2825
        %v3390 = vpack.c.b16 %v2832, %v2826
        %v3391 = vpack.c.b16 %v2833, %v2827
        %v3392 = vpack.c.b16 %v2834, %v2828
        %v3393 = vpack.c.b16 %v2835, %v2829
        %v3394 = vpack.c.b16 %v2836, %v2830
        %v3395 = vpack.c.b16 %v2843, %v2837
        %v3396 = vpack.c.b16 %v2844, %v2838
        %v3397 = vpack.c.b16 %v2845, %v2839
        %v3398 = vpack.c.b16 %v2846, %v2840
        %v3399 = vpack.c.b16 %v2847, %v2841
        %v3400 = vpack.c.b16 %v2848, %v2842
        %v3401 = vpack.c.b16 %v2855, %v2849
        %v3402 = vpack.c.b16 %v2856, %v2850
        %v3403 = vpack.c.b16 %v2857, %v2851
        %v3404 = vpack.c.b16 %v2858, %v2852
        %v3405 = vpack.c.b16 %v2859, %v2853
        %v3406 = vpack.c.b16 %v2860, %v2854
        %v3407 = vpack.c.b16 %v2867, %v2861
        %v3408 = vpack.c.b16 %v2868, %v2862
        %v3409 = vpack.c.b16 %v2869, %v2863
        %v3410 = vpack.c.b16 %v2870, %v2864
        %v3411 = vpack.c.b16 %v2871, %v2865
        %v3412 = vpack.c.b16 %v2872, %v2866
        %v3413 = vpack.c.b16 %v2879, %v2873
        %v3414 = vpack.c.b16 %v2880, %v2874
        %v3415 = vpack.c.b16 %v2881, %v2875
        %v3416 = vpack.c.b16 %v2882, %v2876
        %v3417 = vpack.c.b16 %v2883, %v2877
        %v3418 = vpack.c.b16 %v2884, %v2878
        %v3419 = vpack.c.b16 %v2891, %v2885
        %v3420 = vpack.c.b16 %v2892, %v2886
        %v3421 = vpack.c.b16 %v2893, %v2887
        %v3422 = vpack.c.b16 %v2894, %v2888
        %v3423 = vpack.c.b16 %v2895, %v2889
        %v3424 = vpack.c.b16 %v2896, %v2890
        %v3425 = vpack.c.b16 %v2903, %v2897
        %v3426 = vpack.c.b16 %v2904, %v2898
        %v3427 = vpack.c.b16 %v2905, %v2899
        %v3428 = vpack.c.b16 %v2906, %v2900
        %v3429 = vpack.c.b16 %v2907, %v2901
        %v3430 = vpack.c.b16 %v2908, %v2902
        %v3431 = vpack.c.b16 %v2915, %v2909
        %v3432 = vpack.c.b16 %v2916, %v2910
        %v3433 = vpack.c.b16 %v2917, %v2911
        %v3434 = vpack.c.b16 %v2918, %v2912
        %v3435 = vpack.c.b16 %v2919, %v2913
        %v3436 = vpack.c.b16 %v2920, %v2914
        %v3437 = vpack.c.b16 %v2927, %v2921
        %v3438 = vpack.c.b16 %v2928, %v2922
        %v3439 = vpack.c.b16 %v2929, %v2923
        %v3440 = vpack.c.b16 %v2930, %v2924
        %v3441 = vpack.c.b16 %v2931, %v2925
        %v3442 = vpack.c.b16 %v2932, %v2926
        %v3443 = vpack.c.b16 %v2939, %v2933
        %v3444 = vpack.c.b16 %v2940, %v2934
        %v3445 = vpack.c.b16 %v2941, %v2935
        %v3446 = vpack.c.b16 %v2942, %v2936
        %v3447 = vpack.c.b16 %v2943, %v2937
        %v3448 = vpack.c.b16 %v2944, %v2938
        %v3449 = vpack.c.b16 %v2951, %v2945
        %v3450 = vpack.c.b16 %v2952, %v2946
        %v3451 = vpack.c.b16 %v2953, %v2947
        %v3452 = vpack.c.b16 %v2954, %v2948
        %v3453 = vpack.c.b16 %v2955, %v2949
        %v3454 = vpack.c.b16 %v2956, %v2950
        %v3455 = vpack.c.b16 %v2963, %v2957
        %v3456 = vpack.c.b16 %v2964, %v2958
        %v3457 = vpack.c.b16 %v2965, %v2959
        %v3458 = vpack.c.b16 %v2966, %v2960
        %v3459 = vpack.c.b16 %v2967, %v2961
        %v3460 = vpack.c.b16 %v2968, %v2962
        %v3461 = vpack.c.b16 %v2975, %v2969
        %v3462 = vpack.c.b16 %v2976, %v2970
        %v3463 = vpack.c.b16 %v2977, %v2971
        %v3464 = vpack.c.b16 %v2978, %v2972
        %v3465 = vpack.c.b16 %v2979, %v2973
        %v3466 = vpack.c.b16 %v2980, %v2974
        %v3467 = vpack.c.b16 %v2987, %v2981
        %v3468 = vpack.c.b16 %v2988, %v2982
        %v3469 = vpack.c.b16 %v2989, %v2983
        %v3470 = vpack.c.b16 %v2990, %v2984
        %v3471 = vpack.c.b16 %v2991, %v2985
        %v3472 = vpack.c.b16 %v2992, %v2986
        %v3473 = vpack.c.b16 %v2999, %v2993
        %v3474 = vpack.c.b16 %v3000, %v2994
        %v3475 = vpack.c.b16 %v3001, %v2995
        %v3476 = vpack.c.b16 %v3002, %v2996
        %v3477 = vpack.c.b16 %v3003, %v2997
        %v3478 = vpack.c.b16 %v3004, %v2998
        %v3479 = vpack.c.b16 %v3011, %v3005
        %v3480 = vpack.c.b16 %v3012, %v3006
        %v3481 = vpack.c.b16 %v3013, %v3007
        %v3482 = vpack.c.b16 %v3014, %v3008
        %v3483 = vpack.c.b16 %v3015, %v3009
        %v3484 = vpack.c.b16 %v3016, %v3010
        %v3485 = vpack.c.b16 %v3023, %v3017
        %v3486 = vpack.c.b16 %v3024, %v3018
        %v3487 = vpack.c.b16 %v3025, %v3019
        %v3488 = vpack.c.b16 %v3026, %v3020
        %v3489 = vpack.c.b16 %v3027, %v3021
        %v3490 = vpack.c.b16 %v3028, %v3022
        %v3491 = vpack.c.b16 %v3035, %v3029
        %v3492 = vpack.c.b16 %v3036, %v3030
        %v3493 = vpack.c.b16 %v3037, %v3031
        %v3494 = vpack.c.b16 %v3038, %v3032
        %v3495 = vpack.c.b16 %v3039, %v3033
        %v3496 = vpack.c.b16 %v3040, %v3034
        %v3497 = vpack.c.b16 %v3047, %v3041
        %v3498 = vpack.c.b16 %v3048, %v3042
        %v3499 = vpack.c.b16 %v3049, %v3043
        %v3500 = vpack.c.b16 %v3050, %v3044
        %v3501 = vpack.c.b16 %v3051, %v3045
        %v3502 = vpack.c.b16 %v3052, %v3046
        %v3503 = vpack.c.b16 %v3059, %v3053
        %v3504 = vpack.c.b16 %v3060, %v3054
        %v3505 = vpack.c.b16 %v3061, %v3055
        %v3506 = vpack.c.b16 %v3062, %v3056
        %v3507 = vpack.c.b16 %v3063, %v3057
        %v3508 = vpack.c.b16 %v3064, %v3058
        %v3509 = vpack.c.b16 %v3071, %v3065
        %v3510 = vpack.c.b16 %v3072, %v3066
        %v3511 = vpack.c.b16 %v3073, %v3067
        %v3512 = vpack.c.b16 %v3074, %v3068
        %v3513 = vpack.c.b16 %v3075, %v3069
        %v3514 = vpack.c.b16 %v3076, %v3070
        %v3515 = vpack.c.b16 %v3083, %v3077
        %v3516 = vpack.c.b16 %v3084, %v3078
        %v3517 = vpack.c.b16 %v3085, %v3079
        %v3518 = vpack.c.b16 %v3086, %v3080
        %v3519 = vpack.c.b16 %v3087, %v3081
        %v3520 = vpack.c.b16 %v3088, %v3082
        %v3521 = vpack.c.b16 %v3095, %v3089
        %v3522 = vpack.c.b16 %v3096, %v3090
        %v3523 = vpack.c.b16 %v3097, %v3091
        %v3524 = vpack.c.b16 %v3098, %v3092
        %v3525 = vpack.c.b16 %v3099, %v3093
        %v3526 = vpack.c.b16 %v3100, %v3094
        %v3527 = vpack.c.b16 %v3107, %v3101
        %v3528 = vpack.c.b16 %v3108, %v3102
        %v3529 = vpack.c.b16 %v3109, %v3103
        %v3530 = vpack.c.b16 %v3110, %v3104
        %v3531 = vpack.c.b16 %v3111, %v3105
        %v3532 = vpack.c.b16 %v3112, %v3106
        %v3533 = vpack.c.b16 %v3119, %v3113
        %v3534 = vpack.c.b16 %v3120, %v3114
        %v3535 = vpack.c.b16 %v3121, %v3115
        %v3536 = vpack.c.b16 %v3122, %v3116
        %v3537 = vpack.c.b16 %v3123, %v3117
        %v3538 = vpack.c.b16 %v3124, %v3118
        %v3539 = vpack.c.b16 %v3131, %v3125
        %v3540 = vpack.c.b16 %v3132, %v3126
        %v3541 = vpack.c.b16 %v3133, %v3127
        %v3542 = vpack.c.b16 %v3134, %v3128
        %v3543 = vpack.c.b16 %v3135, %v3129
        %v3544 = vpack.c.b16 %v3136, %v3130
        %v3545 = vpack.c.b16 %v3143, %v3137
        %v3546 = vpack.c.b16 %v3144, %v3138
        %v3547 = vpack.c.b16 %v3145, %v3139
        %v3548 = vpack.c.b16 %v3146, %v3140
        %v3549 = vpack.c.b16 %v3147, %v3141
        %v3550 = vpack.c.b16 %v3148, %v3142
        %v3551 = vpack.c.b16 %v3155, %v3149
        %v3552 = vpack.c.b16 %v3156, %v3150
        %v3553 = vpack.c.b16 %v3157, %v3151
        %v3554 = vpack.c.b16 %v3158, %v3152
        %v3555 = vpack.c.b16 %v3159, %v3153
        %v3556 = vpack.c.b16 %v3160, %v3154
        %v3557 = vpack.c.b16 %v3167, %v3161
        %v3558 = vpack.c.b16 %v3168, %v3162
        %v3559 = vpack.c.b16 %v3169, %v3163
        %v3560 = vpack.c.b16 %v3170, %v3164
        %v3561 = vpack.c.b16 %v3171, %v3165
        %v3562 = vpack.c.b16 %v3172, %v3166
        %v3563 = vpack.c.b16 %v3179, %v3173
        %v3564 = vpack.c.b16 %v3180, %v3174
        %v3565 = vpack.c.b16 %v3181, %v3175
        %v3566 = vpack.c.b16 %v3182, %v3176
        %v3567 = vpack.c.b16 %v3183, %v3177
        %v3568 = vpack.c.b16 %v3184, %v3178
        %v3569 = vpack.c.b16 %v3191, %v3185
        %v3570 = vpack.c.b16 %v3192, %v3186
        %v3571 = vpack.c.b16 %v3193, %v3187
        %v3572 = vpack.c.b16 %v3194, %v3188
        %v3573 = vpack.c.b16 %v3195, %v3189
        %v3574 = vpack.c.b16 %v3196, %v3190
        %v3575 = vpack.c.b16 %v3203, %v3197
        %v3576 = vpack.c.b16 %v3204, %v3198
        %v3577 = vpack.c.b16 %v3205, %v3199
        %v3578 = vpack.c.b16 %v3206, %v3200
        %v3579 = vpack.c.b16 %v3207, %v3201
        %v3580 = vpack.c.b16 %v3208, %v3202
        %v3581 = vpack.c.b16 %v3215, %v3209
        %v3582 = vpack.c.b16 %v3216, %v3210
        %v3583 = vpack.c.b16 %v3217, %v3211
        %v3584 = vpack.c.b16 %v3218, %v3212
        %v3585 = vpack.c.b16 %v3219, %v3213
        %v3586 = vpack.c.b16 %v3220, %v3214
        %v3587 = vpack.c.b16 %v3227, %v3221
        %v3588 = vpack.c.b16 %v3228, %v3222
        %v3589 = vpack.c.b16 %v3229, %v3223
        %v3590 = vpack.c.b16 %v3230, %v3224
        %v3591 = vpack.c.b16 %v3231, %v3225
        %v3592 = vpack.c.b16 %v3232, %v3226
        %v3593 = vpack.c.b16 %v3239, %v3233
        %v3594 = vpack.c.b16 %v3240, %v3234
        %v3595 = vpack.c.b16 %v3241, %v3235
        %v3596 = vpack.c.b16 %v3242, %v3236
        %v3597 = vpack.c.b16 %v3243, %v3237
        %v3598 = vpack.c.b16 %v3244, %v3238
        %v3599 = vpack.c.b16 %v3251, %v3245
        %v3600 = vpack.c.b16 %v3252, %v3246
        %v3601 = vpack.c.b16 %v3253, %v3247
        %v3602 = vpack.c.b16 %v3254, %v3248
        %v3603 = vpack.c.b16 %v3255, %v3249
        %v3604 = vpack.c.b16 %v3256, %v3250
        %v3605 = vpack.c.b16 %v3263, %v3257
        %v3606 = vpack.c.b16 %v3264, %v3258
        %v3607 = vpack.c.b16 %v3265, %v3259
        %v3608 = vpack.c.b16 %v3266, %v3260
        %v3609 = vpack.c.b16 %v3267, %v3261
        %v3610 = vpack.c.b16 %v3268, %v3262
        %v3611 = vpack.c.b16 %v3275, %v3269
        %v3612 = vpack.c.b16 %v3276, %v3270
        %v3613 = vpack.c.b16 %v3277, %v3271
        %v3614 = vpack.c.b16 %v3278, %v3272
        %v3615 = vpack.c.b16 %v3279, %v3273
        %v3616 = vpack.c.b16 %v3280, %v3274
        %v3617 = vpack.c.b16 %v3287, %v3281
        %v3618 = vpack.c.b16 %v3288, %v3282
        %v3619 = vpack.c.b16 %v3289, %v3283
        %v3620 = vpack.c.b16 %v3290, %v3284
        %v3621 = vpack.c.b16 %v3291, %v3285
        %v3622 = vpack.c.b16 %v3292, %v3286
        %v3623 = vpack.c.b16 %v3299, %v3293
        %v3624 = vpack.c.b16 %v3300, %v3294
        %v3625 = vpack.c.b16 %v3301, %v3295
        %v3626 = vpack.c.b16 %v3302, %v3296
        %v3627 = vpack.c.b16 %v3303, %v3297
        %v3628 = vpack.c.b16 %v3304, %v3298
        %v3629 = vpack.c.b16 %v3311, %v3305
        %v3630 = vpack.c.b16 %v3312, %v3306
        %v3631 = vpack.c.b16 %v3313, %v3307
        %v3632 = vpack.c.b16 %v3314, %v3308
        %v3633 = vpack.c.b16 %v3315, %v3309
        %v3634 = vpack.c.b16 %v3316, %v3310
        %v3635 = vpack.c.b16 %v3323, %v3317
        %v3636 = vpack.c.b16 %v3324, %v3318
        %v3637 = vpack.c.b16 %v3325, %v3319
        %v3638 = vpack.c.b16 %v3326, %v3320
        %v3639 = vpack.c.b16 %v3327, %v3321
        %v3640 = vpack.c.b16 %v3328, %v3322
        %v3641 = vpack.c.b16 %v3335, %v3329
        %v3642 = vpack.c.b16 %v3336, %v3330
        %v3643 = vpack.c.b16 %v3337, %v3331
        %v3644 = vpack.c.b16 %v3338, %v3332
        %v3645 = vpack.c.b16 %v3339, %v3333
        %v3646 = vpack.c.b16 %v3340, %v3334
        %v3647 = vpack.c.b16 %v3347, %v3341
        %v3648 = vpack.c.b16 %v3348, %v3342
        %v3649 = vpack.c.b16 %v3349, %v3343
        %v3650 = vpack.c.b16 %v3350, %v3344
        %v3651 = vpack.c.b16 %v3351, %v3345
        %v3652 = vpack.c.b16 %v3352, %v3346
        %v3653 = vpack.c.b16 %v3359, %v3353
        %v3654 = vpack.c.b16 %v3360, %v3354
        %v3655 = vpack.c.b16 %v3361, %v3355
        %v3656 = vpack.c.b16 %v3362, %v3356
        %v3657 = vpack.c.b16 %v3363, %v3357
        %v3658 = vpack.c.b16 %v3364, %v3358
        %v3659 = vpack.c.b16 %v3371, %v3365
        %v3660 = vpack.c.b16 %v3372, %v3366
        %v3661 = vpack.c.b16 %v3373, %v3367
        %v3662 = vpack.c.b16 %v3374, %v3368
        %v3663 = vpack.c.b16 %v3375, %v3369
        %v3664 = vpack.c.b16 %v3376, %v3370
        %3953 = vmatprep.subr.bf16.mxu0 %v3378
        %3954 = vmatpush1.bf16.msra.mxu0 %v3377
        %3955 = vmatprep.subr.bf16.mxu0 %v3384
        %3956 = vmatpush1.bf16.msra.mxu0 %v3383
        %3957 = vmatprep.subr.bf16.mxu0 %v3390
        %3958 = vmatpush1.bf16.msra.mxu0 %v3389
        %3959 = vmatprep.subr.bf16.mxu0 %v3396
        %3960 = vmatpush1.bf16.msra.mxu0 %v3395
        %3961 = vmatprep.subr.bf16.mxu0 %v3402
        %3962 = vmatpush1.bf16.msra.mxu0 %v3401
        %3963 = vmatprep.subr.bf16.mxu0 %v3408
        %3964 = vmatpush1.bf16.msra.mxu0 %v3407
        %3965 = vmatprep.subr.bf16.mxu0 %v3414
        %3966 = vmatpush1.bf16.msra.mxu0 %v3413
        %3967 = vmatprep.subr.bf16.mxu0 %v3420
        %3968 = vmatpush1.bf16.msra.mxu0 %v3419
        %3969 = vmatprep.subr.bf16.mxu0 %v3426
        %3970 = vmatpush1.bf16.msra.mxu0 %v3425
        %3971 = vmatprep.subr.bf16.mxu0 %v3432
        %3972 = vmatpush1.bf16.msra.mxu0 %v3431
        %3973 = vmatprep.subr.bf16.mxu0 %v3438
        %3974 = vmatpush1.bf16.msra.mxu0 %v3437
        %3975 = vmatprep.subr.bf16.mxu0 %v3444
        %3976 = vmatpush1.bf16.msra.mxu0 %v3443
        %3977 = vmatprep.subr.bf16.mxu0 %v3450
        %3978 = vmatpush1.bf16.msra.mxu0 %v3449
        %3979 = vmatprep.subr.bf16.mxu0 %v3456
        %3980 = vmatpush1.bf16.msra.mxu0 %v3455
        %3981 = vmatprep.subr.bf16.mxu0 %v3462
        %3982 = vmatpush1.bf16.msra.mxu0 %v3461
        %3983 = vmatprep.subr.bf16.mxu0 %v3468
        %3984 = vmatpush1.bf16.msra.mxu0 %v3467
        %3985 = vmatprep.mubr.bf16.mxu0 %v2122
        %3986 = vmatmul.mubr.bf16.gmra.mrb[0].mxu0 %v2121
        %v3987 = vpop.f32.mrb[0].mxu0
        %v3988 = vadd.f32 %v2486, %v3987
        %v3989 = vpop.f32.mrb[0].mxu0
        %v3990 = vadd.f32 %v2490, %v3989
        %v3991 = vpop.f32.mrb[0].mxu0
        %v3992 = vadd.f32 %v2486, %v3991
        %v3993 = vpop.f32.mrb[0].mxu0
        %v3994 = vadd.f32 %v2490, %v3993
        %3995 = vmatprep.mubr.bf16.mxu0 %v2128
        %3996 = vmatmul.mubr.bf16.gmra.mrb[0].mxu0 %v2127
        %v3997 = vpop.f32.mrb[0].mxu0
        %v3998 = vadd.f32 %v2486, %v3997
        %v3999 = vpop.f32.mrb[0].mxu0
        %v4000 = vadd.f32 %v2490, %v3999
        %v4001 = vpop.f32.mrb[0].mxu0
        %v4002 = vadd.f32 %v2486, %v4001
        %v4003 = vpop.f32.mrb[0].mxu0
        %v4004 = vadd.f32 %v2490, %v4003
        %4005 = vmatprep.mubr.bf16.mxu0 %v2134
        %4006 = vmatmul.mubr.bf16.gmra.mrb[0].mxu0 %v2133
        %v4007 = vpop.f32.mrb[0].mxu0
        %v4008 = vadd.f32 %v2486, %v4007
        %v4009 = vpop.f32.mrb[0].mxu0
        %v4010 = vadd.f32 %v2490, %v4009
        %v4011 = vpop.f32.mrb[0].mxu0
        %v4012 = vadd.f32 %v2486, %v4011
        %v4013 = vpop.f32.mrb[0].mxu0
        %v4014 = vadd.f32 %v2490, %v4013
        %4015 = vmatprep.mubr.bf16.mxu0 %v2140
        %4016 = vmatmul.mubr.bf16.gmra.mrb[0].mxu0 %v2139
        %v4017 = vpop.f32.mrb[0].mxu0
        %v4018 = vadd.f32 %v2486, %v4017
        %v4019 = vpop.f32.mrb[0].mxu0
        %v4020 = vadd.f32 %v2490, %v4019
        %v4021 = vpop.f32.mrb[0].mxu0
        %v4022 = vadd.f32 %v2486, %v4021
        %v4023 = vpop.f32.mrb[0].mxu0
        %v4024 = vadd.f32 %v2490, %v4023
        %4025 = vmatprep.mubr.bf16.mxu0 %v2146
        %4026 = vmatmul.mubr.bf16.gmra.mrb[0].mxu0 %v2145
        %v4027 = vpop.f32.mrb[0].mxu0
        %v4028 = vadd.f32 %v2486, %v4027
        %v4029 = vpop.f32.mrb[0].mxu0
        %v4030 = vadd.f32 %v2490, %v4029
        %v4031 = vpop.f32.mrb[0].mxu0
        %v4032 = vadd.f32 %v2486, %v4031
        %v4033 = vpop.f32.mrb[0].mxu0
        %v4034 = vadd.f32 %v2490, %v4033
        %4035 = vmatprep.mubr.bf16.mxu0 %v2152
        %4036 = vmatmul.mubr.bf16.gmra.mrb[0].mxu0 %v2151
        %v4037 = vpop.f32.mrb[0].mxu0
        %v4038 = vadd.f32 %v2486, %v4037
        %v4039 = vpop.f32.mrb[0].mxu0
        %v4040 = vadd.f32 %v2490, %v4039
        %v4041 = vpop.f32.mrb[0].mxu0
        %v4042 = vadd.f32 %v2486, %v4041
        %v4043 = vpop.f32.mrb[0].mxu0
        %v4044 = vadd.f32 %v2490, %v4043
        %4045 = vmatprep.mubr.bf16.mxu0 %v2158
        %4046 = vmatmul.mubr.bf16.gmra.mrb[0].mxu0 %v2157
        %v4047 = vpop.f32.mrb[0].mxu0
        %v4048 = vadd.f32 %v2486, %v4047
        %v4049 = vpop.f32.mrb[0].mxu0
        %v4050 = vadd.f32 %v2490, %v4049
        %v4051 = vpop.f32.mrb[0].mxu0
        %v4052 = vadd.f32 %v2486, %v4051
        %v4053 = vpop.f32.mrb[0].mxu0
        %v4054 = vadd.f32 %v2490, %v4053
        %4055 = vmatprep.mubr.bf16.mxu0 %v2164
        %4056 = vmatmul.mubr.bf16.gmra.mrb[0].mxu0 %v2163
        %v4057 = vpop.f32.mrb[0].mxu0
        %v4058 = vadd.f32 %v2486, %v4057
        %v4059 = vpop.f32.mrb[0].mxu0
        %v4060 = vadd.f32 %v2490, %v4059
        %v4061 = vpop.f32.mrb[0].mxu0
        %v4062 = vadd.f32 %v2486, %v4061
        %v4063 = vpop.f32.mrb[0].mxu0
        %v4064 = vadd.f32 %v2490, %v4063
        %4065 = vmatprep.mubr.bf16.mxu0 %v2170
        %4066 = vmatmul.mubr.bf16.gmra.mrb[0].mxu0 %v2169
        %v4067 = vpop.f32.mrb[0].mxu0
        %v4068 = vadd.f32 %v2486, %v4067
        %v4069 = vpop.f32.mrb[0].mxu0
        %v4070 = vadd.f32 %v2490, %v4069
        %v4071 = vpop.f32.mrb[0].mxu0
        %v4072 = vadd.f32 %v2486, %v4071
        %v4073 = vpop.f32.mrb[0].mxu0
        %v4074 = vadd.f32 %v2490, %v4073
        %4075 = vmatprep.mubr.bf16.mxu0 %v2176
        %4076 = vmatmul.mubr.bf16.gmra.mrb[0].mxu0 %v2175
        %v4077 = vpop.f32.mrb[0].mxu0
        %v4078 = vadd.f32 %v2486, %v4077
        %v4079 = vpop.f32.mrb[0].mxu0
        %v4080 = vadd.f32 %v2490, %v4079
        %v4081 = vpop.f32.mrb[0].mxu0
        %v4082 = vadd.f32 %v2486, %v4081
        %v4083 = vpop.f32.mrb[0].mxu0
        %v4084 = vadd.f32 %v2490, %v4083
        %4085 = vmatprep.mubr.bf16.mxu0 %v2182
        %4086 = vmatmul.mubr.bf16.gmra.mrb[0].mxu0 %v2181
        %v4087 = vpop.f32.mrb[0].mxu0
        %v4088 = vadd.f32 %v2486, %v4087
        %v4089 = vpop.f32.mrb[0].mxu0
        %v4090 = vadd.f32 %v2490, %v4089
        %v4091 = vpop.f32.mrb[0].mxu0
        %v4092 = vadd.f32 %v2486, %v4091
        %v4093 = vpop.f32.mrb[0].mxu0
        %v4094 = vadd.f32 %v2490, %v4093
        %4095 = vmatprep.mubr.bf16.mxu0 %v2188
        %4096 = vmatmul.mubr.bf16.gmra.mrb[0].mxu0 %v2187
        %v4097 = vpop.f32.mrb[0].mxu0
        %v4098 = vadd.f32 %v2486, %v4097
        %v4099 = vpop.f32.mrb[0].mxu0
        %v4100 = vadd.f32 %v2490, %v4099
        %v4101 = vpop.f32.mrb[0].mxu0
        %v4102 = vadd.f32 %v2486, %v4101
        %v4103 = vpop.f32.mrb[0].mxu0
        %v4104 = vadd.f32 %v2490, %v4103
        %4105 = vdwg.mxu0
        %4106 = vmatprep.subr.bf16.mxu0 %v3474
        %4107 = vmatpush1.bf16.msra.mxu0 %v3473
        %4108 = vmatprep.subr.bf16.mxu0 %v3480
        %4109 = vmatpush1.bf16.msra.mxu0 %v3479
        %4110 = vmatprep.subr.bf16.mxu0 %v3486
        %4111 = vmatpush1.bf16.msra.mxu0 %v3485
        %4112 = vmatprep.subr.bf16.mxu0 %v3492
        %4113 = vmatpush1.bf16.msra.mxu0 %v3491
        %4114 = vmatprep.subr.bf16.mxu0 %v3498
        %4115 = vmatpush1.bf16.msra.mxu0 %v3497
        %4116 = vmatprep.subr.bf16.mxu0 %v3504
        %4117 = vmatpush1.bf16.msra.mxu0 %v3503
        %4118 = vmatprep.subr.bf16.mxu0 %v3510
        %4119 = vmatpush1.bf16.msra.mxu0 %v3509
        %4120 = vmatprep.subr.bf16.mxu0 %v3516
        %4121 = vmatpush1.bf16.msra.mxu0 %v3515
        %4122 = vmatprep.subr.bf16.mxu0 %v3522
        %4123 = vmatpush1.bf16.msra.mxu0 %v3521
        %4124 = vmatprep.subr.bf16.mxu0 %v3528
        %4125 = vmatpush1.bf16.msra.mxu0 %v3527
        %4126 = vmatprep.subr.bf16.mxu0 %v3534
        %4127 = vmatpush1.bf16.msra.mxu0 %v3533
        %4128 = vmatprep.subr.bf16.mxu0 %v3540
        %4129 = vmatpush1.bf16.msra.mxu0 %v3539
        %4130 = vmatprep.subr.bf16.mxu0 %v3546
        %4131 = vmatpush1.bf16.msra.mxu0 %v3545
        %4132 = vmatprep.subr.bf16.mxu0 %v3552
        %4133 = vmatpush1.bf16.msra.mxu0 %v3551
        %4134 = vmatprep.subr.bf16.mxu0 %v3558
        %4135 = vmatpush1.bf16.msra.mxu0 %v3557
        %4136 = vmatprep.subr.bf16.mxu0 %v3564
        %4137 = vmatpush1.bf16.msra.mxu0 %v3563
        %4138 = vmatprep.mubr.bf16.mxu0 %v2124
        %4139 = vmatmul.mubr.bf16.gmra.mrb[0].mxu0 %v2123
        %v4140 = vpop.f32.mrb[0].mxu0
        %v4141 = vadd.f32 %v3988, %v4140
        %v4142 = vpop.f32.mrb[0].mxu0
        %v4143 = vadd.f32 %v3990, %v4142
        %v4144 = vpop.f32.mrb[0].mxu0
        %v4145 = vadd.f32 %v3992, %v4144
        %v4146 = vpop.f32.mrb[0].mxu0
        %v4147 = vadd.f32 %v3994, %v4146
        %4148 = vmatprep.mubr.bf16.mxu0 %v2130
        %4149 = vmatmul.mubr.bf16.gmra.mrb[0].mxu0 %v2129
        %v4150 = vpop.f32.mrb[0].mxu0
        %v4151 = vadd.f32 %v3998, %v4150
        %v4152 = vpop.f32.mrb[0].mxu0
        %v4153 = vadd.f32 %v4000, %v4152
        %v4154 = vpop.f32.mrb[0].mxu0
        %v4155 = vadd.f32 %v4002, %v4154
        %v4156 = vpop.f32.mrb[0].mxu0
        %v4157 = vadd.f32 %v4004, %v4156
        %4158 = vmatprep.mubr.bf16.mxu0 %v2136
        %4159 = vmatmul.mubr.bf16.gmra.mrb[0].mxu0 %v2135
        %v4160 = vpop.f32.mrb[0].mxu0
        %v4161 = vadd.f32 %v4008, %v4160
        %v4162 = vpop.f32.mrb[0].mxu0
        %v4163 = vadd.f32 %v4010, %v4162
        %v4164 = vpop.f32.mrb[0].mxu0
        %v4165 = vadd.f32 %v4012, %v4164
        %v4166 = vpop.f32.mrb[0].mxu0
        %v4167 = vadd.f32 %v4014, %v4166
        %4168 = vmatprep.mubr.bf16.mxu0 %v2142
        %4169 = vmatmul.mubr.bf16.gmra.mrb[0].mxu0 %v2141
        %v4170 = vpop.f32.mrb[0].mxu0
        %v4171 = vadd.f32 %v4018, %v4170
        %v4172 = vpop.f32.mrb[0].mxu0
        %v4173 = vadd.f32 %v4020, %v4172
        %v4174 = vpop.f32.mrb[0].mxu0
        %v4175 = vadd.f32 %v4022, %v4174
        %v4176 = vpop.f32.mrb[0].mxu0
        %v4177 = vadd.f32 %v4024, %v4176
        %4178 = vmatprep.mubr.bf16.mxu0 %v2148
        %4179 = vmatmul.mubr.bf16.gmra.mrb[0].mxu0 %v2147
        %v4180 = vpop.f32.mrb[0].mxu0
        %v4181 = vadd.f32 %v4028, %v4180
        %v4182 = vpop.f32.mrb[0].mxu0
        %v4183 = vadd.f32 %v4030, %v4182
        %v4184 = vpop.f32.mrb[0].mxu0
        %v4185 = vadd.f32 %v4032, %v4184
        %v4186 = vpop.f32.mrb[0].mxu0
        %v4187 = vadd.f32 %v4034, %v4186
        %4188 = vmatprep.mubr.bf16.mxu0 %v2154
        %4189 = vmatmul.mubr.bf16.gmra.mrb[0].mxu0 %v2153
        %v4190 = vpop.f32.mrb[0].mxu0
        %v4191 = vadd.f32 %v4038, %v4190
        %v4192 = vpop.f32.mrb[0].mxu0
        %v4193 = vadd.f32 %v4040, %v4192
        %v4194 = vpop.f32.mrb[0].mxu0
        %v4195 = vadd.f32 %v4042, %v4194
        %v4196 = vpop.f32.mrb[0].mxu0
        %v4197 = vadd.f32 %v4044, %v4196
        %4198 = vmatprep.mubr.bf16.mxu0 %v2160
        %4199 = vmatmul.mubr.bf16.gmra.mrb[0].mxu0 %v2159
        %v4200 = vpop.f32.mrb[0].mxu0
        %v4201 = vadd.f32 %v4048, %v4200
        %v4202 = vpop.f32.mrb[0].mxu0
        %v4203 = vadd.f32 %v4050, %v4202
        %v4204 = vpop.f32.mrb[0].mxu0
        %v4205 = vadd.f32 %v4052, %v4204
        %v4206 = vpop.f32.mrb[0].mxu0
        %v4207 = vadd.f32 %v4054, %v4206
        %4208 = vmatprep.mubr.bf16.mxu0 %v2166
        %4209 = vmatmul.mubr.bf16.gmra.mrb[0].mxu0 %v2165
        %v4210 = vpop.f32.mrb[0].mxu0
        %v4211 = vadd.f32 %v4058, %v4210
        %v4212 = vpop.f32.mrb[0].mxu0
        %v4213 = vadd.f32 %v4060, %v4212
        %v4214 = vpop.f32.mrb[0].mxu0
        %v4215 = vadd.f32 %v4062, %v4214
        %v4216 = vpop.f32.mrb[0].mxu0
        %v4217 = vadd.f32 %v4064, %v4216
        %4218 = vmatprep.mubr.bf16.mxu0 %v2172
        %4219 = vmatmul.mubr.bf16.gmra.mrb[0].mxu0 %v2171
        %v4220 = vpop.f32.mrb[0].mxu0
        %v4221 = vadd.f32 %v4068, %v4220
        %v4222 = vpop.f32.mrb[0].mxu0
        %v4223 = vadd.f32 %v4070, %v4222
        %v4224 = vpop.f32.mrb[0].mxu0
        %v4225 = vadd.f32 %v4072, %v4224
        %v4226 = vpop.f32.mrb[0].mxu0
        %v4227 = vadd.f32 %v4074, %v4226
        %4228 = vmatprep.mubr.bf16.mxu0 %v2178
        %4229 = vmatmul.mubr.bf16.gmra.mrb[0].mxu0 %v2177
        %v4230 = vpop.f32.mrb[0].mxu0
        %v4231 = vadd.f32 %v4078, %v4230
        %v4232 = vpop.f32.mrb[0].mxu0
        %v4233 = vadd.f32 %v4080, %v4232
        %v4234 = vpop.f32.mrb[0].mxu0
        %v4235 = vadd.f32 %v4082, %v4234
        %v4236 = vpop.f32.mrb[0].mxu0
        %v4237 = vadd.f32 %v4084, %v4236
        %4238 = vmatprep.mubr.bf16.mxu0 %v2184
        %4239 = vmatmul.mubr.bf16.gmra.mrb[0].mxu0 %v2183
        %v4240 = vpop.f32.mrb[0].mxu0
        %v4241 = vadd.f32 %v4088, %v4240
        %v4242 = vpop.f32.mrb[0].mxu0
        %v4243 = vadd.f32 %v4090, %v4242
        %v4244 = vpop.f32.mrb[0].mxu0
        %v4245 = vadd.f32 %v4092, %v4244
        %v4246 = vpop.f32.mrb[0].mxu0
        %v4247 = vadd.f32 %v4094, %v4246
        %4248 = vmatprep.mubr.bf16.mxu0 %v2190
        %4249 = vmatmul.mubr.bf16.gmra.mrb[0].mxu0 %v2189
        %v4250 = vpop.f32.mrb[0].mxu0
        %v4251 = vadd.f32 %v4098, %v4250
        %v4252 = vpop.f32.mrb[0].mxu0
        %v4253 = vadd.f32 %v4100, %v4252
        %v4254 = vpop.f32.mrb[0].mxu0
        %v4255 = vadd.f32 %v4102, %v4254
        %v4256 = vpop.f32.mrb[0].mxu0
        %v4257 = vadd.f32 %v4104, %v4256
        %4258 = vdwg.mxu0
        %4259 = vmatprep.subr.bf16.mxu0 %v3570
        %4260 = vmatpush1.bf16.msra.mxu0 %v3569
        %4261 = vmatprep.subr.bf16.mxu0 %v3576
        %4262 = vmatpush1.bf16.msra.mxu0 %v3575
        %4263 = vmatprep.subr.bf16.mxu0 %v3582
        %4264 = vmatpush1.bf16.msra.mxu0 %v3581
        %4265 = vmatprep.subr.bf16.mxu0 %v3588
        %4266 = vmatpush1.bf16.msra.mxu0 %v3587
        %4267 = vmatprep.subr.bf16.mxu0 %v3594
        %4268 = vmatpush1.bf16.msra.mxu0 %v3593
        %4269 = vmatprep.subr.bf16.mxu0 %v3600
        %4270 = vmatpush1.bf16.msra.mxu0 %v3599
        %4271 = vmatprep.subr.bf16.mxu0 %v3606
        %4272 = vmatpush1.bf16.msra.mxu0 %v3605
        %4273 = vmatprep.subr.bf16.mxu0 %v3612
        %4274 = vmatpush1.bf16.msra.mxu0 %v3611
        %4275 = vmatprep.subr.bf16.mxu0 %v3618
        %4276 = vmatpush1.bf16.msra.mxu0 %v3617
        %4277 = vmatprep.subr.bf16.mxu0 %v3624
        %4278 = vmatpush1.bf16.msra.mxu0 %v3623
        %4279 = vmatprep.subr.bf16.mxu0 %v3630
        %4280 = vmatpush1.bf16.msra.mxu0 %v3629
        %4281 = vmatprep.subr.bf16.mxu0 %v3636
        %4282 = vmatpush1.bf16.msra.mxu0 %v3635
        %4283 = vmatprep.subr.bf16.mxu0 %v3642
        %4284 = vmatpush1.bf16.msra.mxu0 %v3641
        %4285 = vmatprep.subr.bf16.mxu0 %v3648
        %4286 = vmatpush1.bf16.msra.mxu0 %v3647
        %4287 = vmatprep.subr.bf16.mxu0 %v3654
        %4288 = vmatpush1.bf16.msra.mxu0 %v3653
        %4289 = vmatprep.subr.bf16.mxu0 %v3660
        %4290 = vmatpush1.bf16.msra.mxu0 %v3659
        %4291 = vmatprep.mubr.bf16.mxu0 %v2126
        %4292 = vmatmul.mubr.bf16.gmra.mrb[0].mxu0 %v2125
        %v4293 = vpop.f32.mrb[0].mxu0
        %v4294 = vadd.f32 %v4141, %v4293
        %v4295 = vpop.f32.mrb[0].mxu0
        %v4296 = vadd.f32 %v4143, %v4295
        %v4297 = vpop.f32.mrb[0].mxu0
        %v4298 = vadd.f32 %v4145, %v4297
        %v4299 = vpop.f32.mrb[0].mxu0
        %v4300 = vadd.f32 %v4147, %v4299
        %4301 = vmatprep.mubr.bf16.mxu0 %v2132
        %4302 = vmatmul.mubr.bf16.gmra.mrb[0].mxu0 %v2131
        %v4303 = vpop.f32.mrb[0].mxu0
        %v4304 = vadd.f32 %v4151, %v4303
        %v4305 = vpop.f32.mrb[0].mxu0
        %v4306 = vadd.f32 %v4153, %v4305
        %v4307 = vpop.f32.mrb[0].mxu0
        %v4308 = vadd.f32 %v4155, %v4307
        %v4309 = vpop.f32.mrb[0].mxu0
        %v4310 = vadd.f32 %v4157, %v4309
        %4311 = vmatprep.mubr.bf16.mxu0 %v2138
        %4312 = vmatmul.mubr.bf16.gmra.mrb[0].mxu0 %v2137
        %v4313 = vpop.f32.mrb[0].mxu0
        %v4314 = vadd.f32 %v4161, %v4313
        %v4315 = vpop.f32.mrb[0].mxu0
        %v4316 = vadd.f32 %v4163, %v4315
        %v4317 = vpop.f32.mrb[0].mxu0
        %v4318 = vadd.f32 %v4165, %v4317
        %v4319 = vpop.f32.mrb[0].mxu0
        %v4320 = vadd.f32 %v4167, %v4319
        %4321 = vmatprep.mubr.bf16.mxu0 %v2144
        %4322 = vmatmul.mubr.bf16.gmra.mrb[0].mxu0 %v2143
        %v4323 = vpop.f32.mrb[0].mxu0
        %v4324 = vadd.f32 %v4171, %v4323
        %v4325 = vpop.f32.mrb[0].mxu0
        %v4326 = vadd.f32 %v4173, %v4325
        %v4327 = vpop.f32.mrb[0].mxu0
        %v4328 = vadd.f32 %v4175, %v4327
        %v4329 = vpop.f32.mrb[0].mxu0
        %v4330 = vadd.f32 %v4177, %v4329
        %4331 = vmatprep.mubr.bf16.mxu0 %v2150
        %4332 = vmatmul.mubr.bf16.gmra.mrb[0].mxu0 %v2149
        %v4333 = vpop.f32.mrb[0].mxu0
        %v4334 = vadd.f32 %v4181, %v4333
        %v4335 = vpop.f32.mrb[0].mxu0
        %v4336 = vadd.f32 %v4183, %v4335
        %v4337 = vpop.f32.mrb[0].mxu0
        %v4338 = vadd.f32 %v4185, %v4337
        %v4339 = vpop.f32.mrb[0].mxu0
        %v4340 = vadd.f32 %v4187, %v4339
        %4341 = vmatprep.mubr.bf16.mxu0 %v2156
        %4342 = vmatmul.mubr.bf16.gmra.mrb[0].mxu0 %v2155
        %v4343 = vpop.f32.mrb[0].mxu0
        %v4344 = vadd.f32 %v4191, %v4343
        %v4345 = vpop.f32.mrb[0].mxu0
        %v4346 = vadd.f32 %v4193, %v4345
        %v4347 = vpop.f32.mrb[0].mxu0
        %v4348 = vadd.f32 %v4195, %v4347
        %v4349 = vpop.f32.mrb[0].mxu0
        %v4350 = vadd.f32 %v4197, %v4349
        %4351 = vmatprep.mubr.bf16.mxu0 %v2162
        %4352 = vmatmul.mubr.bf16.gmra.mrb[0].mxu0 %v2161
        %v4353 = vpop.f32.mrb[0].mxu0
        %v4354 = vadd.f32 %v4201, %v4353
        %v4355 = vpop.f32.mrb[0].mxu0
        %v4356 = vadd.f32 %v4203, %v4355
        %v4357 = vpop.f32.mrb[0].mxu0
        %v4358 = vadd.f32 %v4205, %v4357
        %v4359 = vpop.f32.mrb[0].mxu0
        %v4360 = vadd.f32 %v4207, %v4359
        %4361 = vmatprep.mubr.bf16.mxu0 %v2168
        %4362 = vmatmul.mubr.bf16.gmra.mrb[0].mxu0 %v2167
        %v4363 = vpop.f32.mrb[0].mxu0
        %v4364 = vadd.f32 %v4211, %v4363
        %v4365 = vpop.f32.mrb[0].mxu0
        %v4366 = vadd.f32 %v4213, %v4365
        %v4367 = vpop.f32.mrb[0].mxu0
        %v4368 = vadd.f32 %v4215, %v4367
        %v4369 = vpop.f32.mrb[0].mxu0
        %v4370 = vadd.f32 %v4217, %v4369
        %4371 = vmatprep.mubr.bf16.mxu0 %v2174
        %4372 = vmatmul.mubr.bf16.gmra.mrb[0].mxu0 %v2173
        %v4373 = vpop.f32.mrb[0].mxu0
        %v4374 = vadd.f32 %v4221, %v4373
        %v4375 = vpop.f32.mrb[0].mxu0
        %v4376 = vadd.f32 %v4223, %v4375
        %v4377 = vpop.f32.mrb[0].mxu0
        %v4378 = vadd.f32 %v4225, %v4377
        %v4379 = vpop.f32.mrb[0].mxu0
        %v4380 = vadd.f32 %v4227, %v4379
        %4381 = vmatprep.mubr.bf16.mxu0 %v2180
        %4382 = vmatmul.mubr.bf16.gmra.mrb[0].mxu0 %v2179
        %v4383 = vpop.f32.mrb[0].mxu0
        %v4384 = vadd.f32 %v4231, %v4383
        %v4385 = vpop.f32.mrb[0].mxu0
        %v4386 = vadd.f32 %v4233, %v4385
        %v4387 = vpop.f32.mrb[0].mxu0
        %v4388 = vadd.f32 %v4235, %v4387
        %v4389 = vpop.f32.mrb[0].mxu0
        %v4390 = vadd.f32 %v4237, %v4389
        %4391 = vmatprep.mubr.bf16.mxu0 %v2186
        %4392 = vmatmul.mubr.bf16.gmra.mrb[0].mxu0 %v2185
        %v4393 = vpop.f32.mrb[0].mxu0
        %v4394 = vadd.f32 %v4241, %v4393
        %v4395 = vpop.f32.mrb[0].mxu0
        %v4396 = vadd.f32 %v4243, %v4395
        %v4397 = vpop.f32.mrb[0].mxu0
        %v4398 = vadd.f32 %v4245, %v4397
        %v4399 = vpop.f32.mrb[0].mxu0
        %v4400 = vadd.f32 %v4247, %v4399
        %4401 = vmatprep.mubr.bf16.mxu0 %v2192
        %4402 = vmatmul.mubr.bf16.gmra.mrb[0].mxu0 %v2191
        %v4403 = vpop.f32.mrb[0].mxu0
        %v4404 = vadd.f32 %v4251, %v4403
        %v4405 = vpop.f32.mrb[0].mxu0
        %v4406 = vadd.f32 %v4253, %v4405
        %v4407 = vpop.f32.mrb[0].mxu0
        %v4408 = vadd.f32 %v4255, %v4407
        %v4409 = vpop.f32.mrb[0].mxu0
        %v4410 = vadd.f32 %v4257, %v4409
        %4411 = vdwg.mxu0
        %4412 = vmatprep.subr.bf16.mxu0 %v3380
        %4413 = vmatpush1.bf16.msra.mxu0 %v3379
        %4414 = vmatprep.subr.bf16.mxu0 %v3386
        %4415 = vmatpush1.bf16.msra.mxu0 %v3385
        %4416 = vmatprep.subr.bf16.mxu0 %v3392
        %4417 = vmatpush1.bf16.msra.mxu0 %v3391
        %4418 = vmatprep.subr.bf16.mxu0 %v3398
        %4419 = vmatpush1.bf16.msra.mxu0 %v3397
        %4420 = vmatprep.subr.bf16.mxu0 %v3404
        %4421 = vmatpush1.bf16.msra.mxu0 %v3403
        %4422 = vmatprep.subr.bf16.mxu0 %v3410
        %4423 = vmatpush1.bf16.msra.mxu0 %v3409
        %4424 = vmatprep.subr.bf16.mxu0 %v3416
        %4425 = vmatpush1.bf16.msra.mxu0 %v3415
        %4426 = vmatprep.subr.bf16.mxu0 %v3422
        %4427 = vmatpush1.bf16.msra.mxu0 %v3421
        %4428 = vmatprep.subr.bf16.mxu0 %v3428
        %4429 = vmatpush1.bf16.msra.mxu0 %v3427
        %4430 = vmatprep.subr.bf16.mxu0 %v3434
        %4431 = vmatpush1.bf16.msra.mxu0 %v3433
        %4432 = vmatprep.subr.bf16.mxu0 %v3440
        %4433 = vmatpush1.bf16.msra.mxu0 %v3439
        %4434 = vmatprep.subr.bf16.mxu0 %v3446
        %4435 = vmatpush1.bf16.msra.mxu0 %v3445
        %4436 = vmatprep.subr.bf16.mxu0 %v3452
        %4437 = vmatpush1.bf16.msra.mxu0 %v3451
        %4438 = vmatprep.subr.bf16.mxu0 %v3458
        %4439 = vmatpush1.bf16.msra.mxu0 %v3457
        %4440 = vmatprep.subr.bf16.mxu0 %v3464
        %4441 = vmatpush1.bf16.msra.mxu0 %v3463
        %4442 = vmatprep.subr.bf16.mxu0 %v3470
        %4443 = vmatpush1.bf16.msra.mxu0 %v3469
        %4444 = vmatprep.mubr.bf16.mxu0 %v2122
        %4445 = vmatmul.mubr.bf16.gmra.mrb[0].mxu0 %v2121
        %v4446 = vpop.f32.mrb[0].mxu0
        %v4447 = vadd.f32 %v2494, %v4446
        %v4448 = vpop.f32.mrb[0].mxu0
        %v4449 = vadd.f32 %v2498, %v4448
        %v4450 = vpop.f32.mrb[0].mxu0
        %v4451 = vadd.f32 %v2494, %v4450
        %v4452 = vpop.f32.mrb[0].mxu0
        %v4453 = vadd.f32 %v2498, %v4452
        %4454 = vmatprep.mubr.bf16.mxu0 %v2128
        %4455 = vmatmul.mubr.bf16.gmra.mrb[0].mxu0 %v2127
        %v4456 = vpop.f32.mrb[0].mxu0
        %v4457 = vadd.f32 %v2494, %v4456
        %v4458 = vpop.f32.mrb[0].mxu0
        %v4459 = vadd.f32 %v2498, %v4458
        %v4460 = vpop.f32.mrb[0].mxu0
        %v4461 = vadd.f32 %v2494, %v4460
        %v4462 = vpop.f32.mrb[0].mxu0
        %v4463 = vadd.f32 %v2498, %v4462
        %4464 = vmatprep.mubr.bf16.mxu0 %v2134
        %4465 = vmatmul.mubr.bf16.gmra.mrb[0].mxu0 %v2133
        %v4466 = vpop.f32.mrb[0].mxu0
        %v4467 = vadd.f32 %v2494, %v4466
        %v4468 = vpop.f32.mrb[0].mxu0
        %v4469 = vadd.f32 %v2498, %v4468
        %v4470 = vpop.f32.mrb[0].mxu0
        %v4471 = vadd.f32 %v2494, %v4470
        %v4472 = vpop.f32.mrb[0].mxu0
        %v4473 = vadd.f32 %v2498, %v4472
        %4474 = vmatprep.mubr.bf16.mxu0 %v2140
        %4475 = vmatmul.mubr.bf16.gmra.mrb[0].mxu0 %v2139
        %v4476 = vpop.f32.mrb[0].mxu0
        %v4477 = vadd.f32 %v2494, %v4476
        %v4478 = vpop.f32.mrb[0].mxu0
        %v4479 = vadd.f32 %v2498, %v4478
        %v4480 = vpop.f32.mrb[0].mxu0
        %v4481 = vadd.f32 %v2494, %v4480
        %v4482 = vpop.f32.mrb[0].mxu0
        %v4483 = vadd.f32 %v2498, %v4482
        %4484 = vmatprep.mubr.bf16.mxu0 %v2146
        %4485 = vmatmul.mubr.bf16.gmra.mrb[0].mxu0 %v2145
        %v4486 = vpop.f32.mrb[0].mxu0
        %v4487 = vadd.f32 %v2494, %v4486
        %v4488 = vpop.f32.mrb[0].mxu0
        %v4489 = vadd.f32 %v2498, %v4488
        %v4490 = vpop.f32.mrb[0].mxu0
        %v4491 = vadd.f32 %v2494, %v4490
        %v4492 = vpop.f32.mrb[0].mxu0
        %v4493 = vadd.f32 %v2498, %v4492
        %4494 = vmatprep.mubr.bf16.mxu0 %v2152
        %4495 = vmatmul.mubr.bf16.gmra.mrb[0].mxu0 %v2151
        %v4496 = vpop.f32.mrb[0].mxu0
        %v4497 = vadd.f32 %v2494, %v4496
        %v4498 = vpop.f32.mrb[0].mxu0
        %v4499 = vadd.f32 %v2498, %v4498
        %v4500 = vpop.f32.mrb[0].mxu0
        %v4501 = vadd.f32 %v2494, %v4500
        %v4502 = vpop.f32.mrb[0].mxu0
        %v4503 = vadd.f32 %v2498, %v4502
        %4504 = vmatprep.mubr.bf16.mxu0 %v2158
        %4505 = vmatmul.mubr.bf16.gmra.mrb[0].mxu0 %v2157
        %v4506 = vpop.f32.mrb[0].mxu0
        %v4507 = vadd.f32 %v2494, %v4506
        %v4508 = vpop.f32.mrb[0].mxu0
        %v4509 = vadd.f32 %v2498, %v4508
        %v4510 = vpop.f32.mrb[0].mxu0
        %v4511 = vadd.f32 %v2494, %v4510
        %v4512 = vpop.f32.mrb[0].mxu0
        %v4513 = vadd.f32 %v2498, %v4512
        %4514 = vmatprep.mubr.bf16.mxu0 %v2164
        %4515 = vmatmul.mubr.bf16.gmra.mrb[0].mxu0 %v2163
        %v4516 = vpop.f32.mrb[0].mxu0
        %v4517 = vadd.f32 %v2494, %v4516
        %v4518 = vpop.f32.mrb[0].mxu0
        %v4519 = vadd.f32 %v2498, %v4518
        %v4520 = vpop.f32.mrb[0].mxu0
        %v4521 = vadd.f32 %v2494, %v4520
        %v4522 = vpop.f32.mrb[0].mxu0
        %v4523 = vadd.f32 %v2498, %v4522
        %4524 = vmatprep.mubr.bf16.mxu0 %v2170
        %4525 = vmatmul.mubr.bf16.gmra.mrb[0].mxu0 %v2169
        %v4526 = vpop.f32.mrb[0].mxu0
        %v4527 = vadd.f32 %v2494, %v4526
        %v4528 = vpop.f32.mrb[0].mxu0
        %v4529 = vadd.f32 %v2498, %v4528
        %v4530 = vpop.f32.mrb[0].mxu0
        %v4531 = vadd.f32 %v2494, %v4530
        %v4532 = vpop.f32.mrb[0].mxu0
        %v4533 = vadd.f32 %v2498, %v4532
        %4534 = vmatprep.mubr.bf16.mxu0 %v2176
        %4535 = vmatmul.mubr.bf16.gmra.mrb[0].mxu0 %v2175
        %v4536 = vpop.f32.mrb[0].mxu0
        %v4537 = vadd.f32 %v2494, %v4536
        %v4538 = vpop.f32.mrb[0].mxu0
        %v4539 = vadd.f32 %v2498, %v4538
        %v4540 = vpop.f32.mrb[0].mxu0
        %v4541 = vadd.f32 %v2494, %v4540
        %v4542 = vpop.f32.mrb[0].mxu0
        %v4543 = vadd.f32 %v2498, %v4542
        %4544 = vmatprep.mubr.bf16.mxu0 %v2182
        %4545 = vmatmul.mubr.bf16.gmra.mrb[0].mxu0 %v2181
        %v4546 = vpop.f32.mrb[0].mxu0
        %v4547 = vadd.f32 %v2494, %v4546
        %v4548 = vpop.f32.mrb[0].mxu0
        %v4549 = vadd.f32 %v2498, %v4548
        %v4550 = vpop.f32.mrb[0].mxu0
        %v4551 = vadd.f32 %v2494, %v4550
        %v4552 = vpop.f32.mrb[0].mxu0
        %v4553 = vadd.f32 %v2498, %v4552
        %4554 = vmatprep.mubr.bf16.mxu0 %v2188
        %4555 = vmatmul.mubr.bf16.gmra.mrb[0].mxu0 %v2187
        %v4556 = vpop.f32.mrb[0].mxu0
        %v4557 = vadd.f32 %v2494, %v4556
        %v4558 = vpop.f32.mrb[0].mxu0
        %v4559 = vadd.f32 %v2498, %v4558
        %v4560 = vpop.f32.mrb[0].mxu0
        %v4561 = vadd.f32 %v2494, %v4560
        %v4562 = vpop.f32.mrb[0].mxu0
        %v4563 = vadd.f32 %v2498, %v4562
        %4564 = vdwg.mxu0
        %4565 = vmatprep.subr.bf16.mxu0 %v3476
        %4566 = vmatpush1.bf16.msra.mxu0 %v3475
        %4567 = vmatprep.subr.bf16.mxu0 %v3482
        %4568 = vmatpush1.bf16.msra.mxu0 %v3481
        %4569 = vmatprep.subr.bf16.mxu0 %v3488
        %4570 = vmatpush1.bf16.msra.mxu0 %v3487
        %4571 = vmatprep.subr.bf16.mxu0 %v3494
        %4572 = vmatpush1.bf16.msra.mxu0 %v3493
        %4573 = vmatprep.subr.bf16.mxu0 %v3500
        %4574 = vmatpush1.bf16.msra.mxu0 %v3499
        %4575 = vmatprep.subr.bf16.mxu0 %v3506
        %4576 = vmatpush1.bf16.msra.mxu0 %v3505
        %4577 = vmatprep.subr.bf16.mxu0 %v3512
        %4578 = vmatpush1.bf16.msra.mxu0 %v3511
        %4579 = vmatprep.subr.bf16.mxu0 %v3518
        %4580 = vmatpush1.bf16.msra.mxu0 %v3517
        %4581 = vmatprep.subr.bf16.mxu0 %v3524
        %4582 = vmatpush1.bf16.msra.mxu0 %v3523
        %4583 = vmatprep.subr.bf16.mxu0 %v3530
        %4584 = vmatpush1.bf16.msra.mxu0 %v3529
        %4585 = vmatprep.subr.bf16.mxu0 %v3536
        %4586 = vmatpush1.bf16.msra.mxu0 %v3535
        %4587 = vmatprep.subr.bf16.mxu0 %v3542
        %4588 = vmatpush1.bf16.msra.mxu0 %v3541
        %4589 = vmatprep.subr.bf16.mxu0 %v3548
        %4590 = vmatpush1.bf16.msra.mxu0 %v3547
        %4591 = vmatprep.subr.bf16.mxu0 %v3554
        %4592 = vmatpush1.bf16.msra.mxu0 %v3553
        %4593 = vmatprep.subr.bf16.mxu0 %v3560
        %4594 = vmatpush1.bf16.msra.mxu0 %v3559
        %4595 = vmatprep.subr.bf16.mxu0 %v3566
        %4596 = vmatpush1.bf16.msra.mxu0 %v3565
        %4597 = vmatprep.mubr.bf16.mxu0 %v2124
        %4598 = vmatmul.mubr.bf16.gmra.mrb[0].mxu0 %v2123
        %v4599 = vpop.f32.mrb[0].mxu0
        %v4600 = vadd.f32 %v4447, %v4599
        %v4601 = vpop.f32.mrb[0].mxu0
        %v4602 = vadd.f32 %v4449, %v4601
        %v4603 = vpop.f32.mrb[0].mxu0
        %v4604 = vadd.f32 %v4451, %v4603
        %v4605 = vpop.f32.mrb[0].mxu0
        %v4606 = vadd.f32 %v4453, %v4605
        %4607 = vmatprep.mubr.bf16.mxu0 %v2130
        %4608 = vmatmul.mubr.bf16.gmra.mrb[0].mxu0 %v2129
        %v4609 = vpop.f32.mrb[0].mxu0
        %v4610 = vadd.f32 %v4457, %v4609
        %v4611 = vpop.f32.mrb[0].mxu0
        %v4612 = vadd.f32 %v4459, %v4611
        %v4613 = vpop.f32.mrb[0].mxu0
        %v4614 = vadd.f32 %v4461, %v4613
        %v4615 = vpop.f32.mrb[0].mxu0
        %v4616 = vadd.f32 %v4463, %v4615
        %4617 = vmatprep.mubr.bf16.mxu0 %v2136
        %4618 = vmatmul.mubr.bf16.gmra.mrb[0].mxu0 %v2135
        %v4619 = vpop.f32.mrb[0].mxu0
        %v4620 = vadd.f32 %v4467, %v4619
        %v4621 = vpop.f32.mrb[0].mxu0
        %v4622 = vadd.f32 %v4469, %v4621
        %v4623 = vpop.f32.mrb[0].mxu0
        %v4624 = vadd.f32 %v4471, %v4623
        %v4625 = vpop.f32.mrb[0].mxu0
        %v4626 = vadd.f32 %v4473, %v4625
        %4627 = vmatprep.mubr.bf16.mxu0 %v2142
        %4628 = vmatmul.mubr.bf16.gmra.mrb[0].mxu0 %v2141
        %v4629 = vpop.f32.mrb[0].mxu0
        %v4630 = vadd.f32 %v4477, %v4629
        %v4631 = vpop.f32.mrb[0].mxu0
        %v4632 = vadd.f32 %v4479, %v4631
        %v4633 = vpop.f32.mrb[0].mxu0
        %v4634 = vadd.f32 %v4481, %v4633
        %v4635 = vpop.f32.mrb[0].mxu0
        %v4636 = vadd.f32 %v4483, %v4635
        %4637 = vmatprep.mubr.bf16.mxu0 %v2148
        %4638 = vmatmul.mubr.bf16.gmra.mrb[0].mxu0 %v2147
        %v4639 = vpop.f32.mrb[0].mxu0
        %v4640 = vadd.f32 %v4487, %v4639
        %v4641 = vpop.f32.mrb[0].mxu0
        %v4642 = vadd.f32 %v4489, %v4641
        %v4643 = vpop.f32.mrb[0].mxu0
        %v4644 = vadd.f32 %v4491, %v4643
        %v4645 = vpop.f32.mrb[0].mxu0
        %v4646 = vadd.f32 %v4493, %v4645
        %4647 = vmatprep.mubr.bf16.mxu0 %v2154
        %4648 = vmatmul.mubr.bf16.gmra.mrb[0].mxu0 %v2153
        %v4649 = vpop.f32.mrb[0].mxu0
        %v4650 = vadd.f32 %v4497, %v4649
        %v4651 = vpop.f32.mrb[0].mxu0
        %v4652 = vadd.f32 %v4499, %v4651
        %v4653 = vpop.f32.mrb[0].mxu0
        %v4654 = vadd.f32 %v4501, %v4653
        %v4655 = vpop.f32.mrb[0].mxu0
        %v4656 = vadd.f32 %v4503, %v4655
        %4657 = vmatprep.mubr.bf16.mxu0 %v2160
        %4658 = vmatmul.mubr.bf16.gmra.mrb[0].mxu0 %v2159
        %v4659 = vpop.f32.mrb[0].mxu0
        %v4660 = vadd.f32 %v4507, %v4659
        %v4661 = vpop.f32.mrb[0].mxu0
        %v4662 = vadd.f32 %v4509, %v4661
        %v4663 = vpop.f32.mrb[0].mxu0
        %v4664 = vadd.f32 %v4511, %v4663
        %v4665 = vpop.f32.mrb[0].mxu0
        %v4666 = vadd.f32 %v4513, %v4665
        %4667 = vmatprep.mubr.bf16.mxu0 %v2166
        %4668 = vmatmul.mubr.bf16.gmra.mrb[0].mxu0 %v2165
        %v4669 = vpop.f32.mrb[0].mxu0
        %v4670 = vadd.f32 %v4517, %v4669
        %v4671 = vpop.f32.mrb[0].mxu0
        %v4672 = vadd.f32 %v4519, %v4671
        %v4673 = vpop.f32.mrb[0].mxu0
        %v4674 = vadd.f32 %v4521, %v4673
        %v4675 = vpop.f32.mrb[0].mxu0
        %v4676 = vadd.f32 %v4523, %v4675
        %4677 = vmatprep.mubr.bf16.mxu0 %v2172
        %4678 = vmatmul.mubr.bf16.gmra.mrb[0].mxu0 %v2171
        %v4679 = vpop.f32.mrb[0].mxu0
        %v4680 = vadd.f32 %v4527, %v4679
        %v4681 = vpop.f32.mrb[0].mxu0
        %v4682 = vadd.f32 %v4529, %v4681
        %v4683 = vpop.f32.mrb[0].mxu0
        %v4684 = vadd.f32 %v4531, %v4683
        %v4685 = vpop.f32.mrb[0].mxu0
        %v4686 = vadd.f32 %v4533, %v4685
        %4687 = vmatprep.mubr.bf16.mxu0 %v2178
        %4688 = vmatmul.mubr.bf16.gmra.mrb[0].mxu0 %v2177
        %v4689 = vpop.f32.mrb[0].mxu0
        %v4690 = vadd.f32 %v4537, %v4689
        %v4691 = vpop.f32.mrb[0].mxu0
        %v4692 = vadd.f32 %v4539, %v4691
        %v4693 = vpop.f32.mrb[0].mxu0
        %v4694 = vadd.f32 %v4541, %v4693
        %v4695 = vpop.f32.mrb[0].mxu0
        %v4696 = vadd.f32 %v4543, %v4695
        %4697 = vmatprep.mubr.bf16.mxu0 %v2184
        %4698 = vmatmul.mubr.bf16.gmra.mrb[0].mxu0 %v2183
        %v4699 = vpop.f32.mrb[0].mxu0
        %v4700 = vadd.f32 %v4547, %v4699
        %v4701 = vpop.f32.mrb[0].mxu0
        %v4702 = vadd.f32 %v4549, %v4701
        %v4703 = vpop.f32.mrb[0].mxu0
        %v4704 = vadd.f32 %v4551, %v4703
        %v4705 = vpop.f32.mrb[0].mxu0
        %v4706 = vadd.f32 %v4553, %v4705
        %4707 = vmatprep.mubr.bf16.mxu0 %v2190
        %4708 = vmatmul.mubr.bf16.gmra.mrb[0].mxu0 %v2189
        %v4709 = vpop.f32.mrb[0].mxu0
        %v4710 = vadd.f32 %v4557, %v4709
        %v4711 = vpop.f32.mrb[0].mxu0
        %v4712 = vadd.f32 %v4559, %v4711
        %v4713 = vpop.f32.mrb[0].mxu0
        %v4714 = vadd.f32 %v4561, %v4713
        %v4715 = vpop.f32.mrb[0].mxu0
        %v4716 = vadd.f32 %v4563, %v4715
        %4717 = vdwg.mxu0
        %4718 = vmatprep.subr.bf16.mxu0 %v3572
        %4719 = vmatpush1.bf16.msra.mxu0 %v3571
        %4720 = vmatprep.subr.bf16.mxu0 %v3578
        %4721 = vmatpush1.bf16.msra.mxu0 %v3577
        %4722 = vmatprep.subr.bf16.mxu0 %v3584
        %4723 = vmatpush1.bf16.msra.mxu0 %v3583
        %4724 = vmatprep.subr.bf16.mxu0 %v3590
        %4725 = vmatpush1.bf16.msra.mxu0 %v3589
        %4726 = vmatprep.subr.bf16.mxu0 %v3596
        %4727 = vmatpush1.bf16.msra.mxu0 %v3595
        %4728 = vmatprep.subr.bf16.mxu0 %v3602
        %4729 = vmatpush1.bf16.msra.mxu0 %v3601
        %4730 = vmatprep.subr.bf16.mxu0 %v3608
        %4731 = vmatpush1.bf16.msra.mxu0 %v3607
        %4732 = vmatprep.subr.bf16.mxu0 %v3614
        %4733 = vmatpush1.bf16.msra.mxu0 %v3613
        %4734 = vmatprep.subr.bf16.mxu0 %v3620
        %4735 = vmatpush1.bf16.msra.mxu0 %v3619
        %4736 = vmatprep.subr.bf16.mxu0 %v3626
        %4737 = vmatpush1.bf16.msra.mxu0 %v3625
        %4738 = vmatprep.subr.bf16.mxu0 %v3632
        %4739 = vmatpush1.bf16.msra.mxu0 %v3631
        %4740 = vmatprep.subr.bf16.mxu0 %v3638
        %4741 = vmatpush1.bf16.msra.mxu0 %v3637
        %4742 = vmatprep.subr.bf16.mxu0 %v3644
        %4743 = vmatpush1.bf16.msra.mxu0 %v3643
        %4744 = vmatprep.subr.bf16.mxu0 %v3650
        %4745 = vmatpush1.bf16.msra.mxu0 %v3649
        %4746 = vmatprep.subr.bf16.mxu0 %v3656
        %4747 = vmatpush1.bf16.msra.mxu0 %v3655
        %4748 = vmatprep.subr.bf16.mxu0 %v3662
        %4749 = vmatpush1.bf16.msra.mxu0 %v3661
        %4750 = vmatprep.mubr.bf16.mxu0 %v2126
        %4751 = vmatmul.mubr.bf16.gmra.mrb[0].mxu0 %v2125
        %v4752 = vpop.f32.mrb[0].mxu0
        %v4753 = vadd.f32 %v4600, %v4752
        %v4754 = vpop.f32.mrb[0].mxu0
        %v4755 = vadd.f32 %v4602, %v4754
        %v4756 = vpop.f32.mrb[0].mxu0
        %v4757 = vadd.f32 %v4604, %v4756
        %v4758 = vpop.f32.mrb[0].mxu0
        %v4759 = vadd.f32 %v4606, %v4758
        %4760 = vmatprep.mubr.bf16.mxu0 %v2132
        %4761 = vmatmul.mubr.bf16.gmra.mrb[0].mxu0 %v2131
        %v4762 = vpop.f32.mrb[0].mxu0
        %v4763 = vadd.f32 %v4610, %v4762
        %v4764 = vpop.f32.mrb[0].mxu0
        %v4765 = vadd.f32 %v4612, %v4764
        %v4766 = vpop.f32.mrb[0].mxu0
        %v4767 = vadd.f32 %v4614, %v4766
        %v4768 = vpop.f32.mrb[0].mxu0
        %v4769 = vadd.f32 %v4616, %v4768
        %4770 = vmatprep.mubr.bf16.mxu0 %v2138
        %4771 = vmatmul.mubr.bf16.gmra.mrb[0].mxu0 %v2137
        %v4772 = vpop.f32.mrb[0].mxu0
        %v4773 = vadd.f32 %v4620, %v4772
        %v4774 = vpop.f32.mrb[0].mxu0
        %v4775 = vadd.f32 %v4622, %v4774
        %v4776 = vpop.f32.mrb[0].mxu0
        %v4777 = vadd.f32 %v4624, %v4776
        %v4778 = vpop.f32.mrb[0].mxu0
        %v4779 = vadd.f32 %v4626, %v4778
        %4780 = vmatprep.mubr.bf16.mxu0 %v2144
        %4781 = vmatmul.mubr.bf16.gmra.mrb[0].mxu0 %v2143
        %v4782 = vpop.f32.mrb[0].mxu0
        %v4783 = vadd.f32 %v4630, %v4782
        %v4784 = vpop.f32.mrb[0].mxu0
        %v4785 = vadd.f32 %v4632, %v4784
        %v4786 = vpop.f32.mrb[0].mxu0
        %v4787 = vadd.f32 %v4634, %v4786
        %v4788 = vpop.f32.mrb[0].mxu0
        %v4789 = vadd.f32 %v4636, %v4788
        %4790 = vmatprep.mubr.bf16.mxu0 %v2150
        %4791 = vmatmul.mubr.bf16.gmra.mrb[0].mxu0 %v2149
        %v4792 = vpop.f32.mrb[0].mxu0
        %v4793 = vadd.f32 %v4640, %v4792
        %v4794 = vpop.f32.mrb[0].mxu0
        %v4795 = vadd.f32 %v4642, %v4794
        %v4796 = vpop.f32.mrb[0].mxu0
        %v4797 = vadd.f32 %v4644, %v4796
        %v4798 = vpop.f32.mrb[0].mxu0
        %v4799 = vadd.f32 %v4646, %v4798
        %4800 = vmatprep.mubr.bf16.mxu0 %v2156
        %4801 = vmatmul.mubr.bf16.gmra.mrb[0].mxu0 %v2155
        %v4802 = vpop.f32.mrb[0].mxu0
        %v4803 = vadd.f32 %v4650, %v4802
        %v4804 = vpop.f32.mrb[0].mxu0
        %v4805 = vadd.f32 %v4652, %v4804
        %v4806 = vpop.f32.mrb[0].mxu0
        %v4807 = vadd.f32 %v4654, %v4806
        %v4808 = vpop.f32.mrb[0].mxu0
        %v4809 = vadd.f32 %v4656, %v4808
        %4810 = vmatprep.mubr.bf16.mxu0 %v2162
        %4811 = vmatmul.mubr.bf16.gmra.mrb[0].mxu0 %v2161
        %v4812 = vpop.f32.mrb[0].mxu0
        %v4813 = vadd.f32 %v4660, %v4812
        %v4814 = vpop.f32.mrb[0].mxu0
        %v4815 = vadd.f32 %v4662, %v4814
        %v4816 = vpop.f32.mrb[0].mxu0
        %v4817 = vadd.f32 %v4664, %v4816
        %v4818 = vpop.f32.mrb[0].mxu0
        %v4819 = vadd.f32 %v4666, %v4818
        %4820 = vmatprep.mubr.bf16.mxu0 %v2168
        %4821 = vmatmul.mubr.bf16.gmra.mrb[0].mxu0 %v2167
        %v4822 = vpop.f32.mrb[0].mxu0
        %v4823 = vadd.f32 %v4670, %v4822
        %v4824 = vpop.f32.mrb[0].mxu0
        %v4825 = vadd.f32 %v4672, %v4824
        %v4826 = vpop.f32.mrb[0].mxu0
        %v4827 = vadd.f32 %v4674, %v4826
        %v4828 = vpop.f32.mrb[0].mxu0
        %v4829 = vadd.f32 %v4676, %v4828
        %4830 = vmatprep.mubr.bf16.mxu0 %v2174
        %4831 = vmatmul.mubr.bf16.gmra.mrb[0].mxu0 %v2173
        %v4832 = vpop.f32.mrb[0].mxu0
        %v4833 = vadd.f32 %v4680, %v4832
        %v4834 = vpop.f32.mrb[0].mxu0
        %v4835 = vadd.f32 %v4682, %v4834
        %v4836 = vpop.f32.mrb[0].mxu0
        %v4837 = vadd.f32 %v4684, %v4836
        %v4838 = vpop.f32.mrb[0].mxu0
        %v4839 = vadd.f32 %v4686, %v4838
        %4840 = vmatprep.mubr.bf16.mxu0 %v2180
        %4841 = vmatmul.mubr.bf16.gmra.mrb[0].mxu0 %v2179
        %v4842 = vpop.f32.mrb[0].mxu0
        %v4843 = vadd.f32 %v4690, %v4842
        %v4844 = vpop.f32.mrb[0].mxu0
        %v4845 = vadd.f32 %v4692, %v4844
        %v4846 = vpop.f32.mrb[0].mxu0
        %v4847 = vadd.f32 %v4694, %v4846
        %v4848 = vpop.f32.mrb[0].mxu0
        %v4849 = vadd.f32 %v4696, %v4848
        %4850 = vmatprep.mubr.bf16.mxu0 %v2186
        %4851 = vmatmul.mubr.bf16.gmra.mrb[0].mxu0 %v2185
        %v4852 = vpop.f32.mrb[0].mxu0
        %v4853 = vadd.f32 %v4700, %v4852
        %v4854 = vpop.f32.mrb[0].mxu0
        %v4855 = vadd.f32 %v4702, %v4854
        %v4856 = vpop.f32.mrb[0].mxu0
        %v4857 = vadd.f32 %v4704, %v4856
        %v4858 = vpop.f32.mrb[0].mxu0
        %v4859 = vadd.f32 %v4706, %v4858
        %4860 = vmatprep.mubr.bf16.mxu0 %v2192
        %4861 = vmatmul.mubr.bf16.gmra.mrb[0].mxu0 %v2191
        %v4862 = vpop.f32.mrb[0].mxu0
        %v4863 = vadd.f32 %v4710, %v4862
        %v4864 = vpop.f32.mrb[0].mxu0
        %v4865 = vadd.f32 %v4712, %v4864
        %v4866 = vpop.f32.mrb[0].mxu0
        %v4867 = vadd.f32 %v4714, %v4866
        %v4868 = vpop.f32.mrb[0].mxu0
        %v4869 = vadd.f32 %v4716, %v4868
        %4870 = vdwg.mxu0
        %4871 = vmatprep.subr.bf16.mxu0 %v3382
        %4872 = vmatpush1.bf16.msra.mxu0 %v3381
        %4873 = vmatprep.subr.bf16.mxu0 %v3388
        %4874 = vmatpush1.bf16.msra.mxu0 %v3387
        %4875 = vmatprep.subr.bf16.mxu0 %v3394
        %4876 = vmatpush1.bf16.msra.mxu0 %v3393
        %4877 = vmatprep.subr.bf16.mxu0 %v3400
        %4878 = vmatpush1.bf16.msra.mxu0 %v3399
        %4879 = vmatprep.subr.bf16.mxu0 %v3406
        %4880 = vmatpush1.bf16.msra.mxu0 %v3405
        %4881 = vmatprep.subr.bf16.mxu0 %v3412
        %4882 = vmatpush1.bf16.msra.mxu0 %v3411
        %4883 = vmatprep.subr.bf16.mxu0 %v3418
        %4884 = vmatpush1.bf16.msra.mxu0 %v3417
        %4885 = vmatprep.subr.bf16.mxu0 %v3424
        %4886 = vmatpush1.bf16.msra.mxu0 %v3423
        %4887 = vmatprep.subr.bf16.mxu0 %v3430
        %4888 = vmatpush1.bf16.msra.mxu0 %v3429
        %4889 = vmatprep.subr.bf16.mxu0 %v3436
        %4890 = vmatpush1.bf16.msra.mxu0 %v3435
        %4891 = vmatprep.subr.bf16.mxu0 %v3442
        %4892 = vmatpush1.bf16.msra.mxu0 %v3441
        %4893 = vmatprep.subr.bf16.mxu0 %v3448
        %4894 = vmatpush1.bf16.msra.mxu0 %v3447
        %4895 = vmatprep.subr.bf16.mxu0 %v3454
        %4896 = vmatpush1.bf16.msra.mxu0 %v3453
        %4897 = vmatprep.subr.bf16.mxu0 %v3460
        %4898 = vmatpush1.bf16.msra.mxu0 %v3459
        %4899 = vmatprep.subr.bf16.mxu0 %v3466
        %4900 = vmatpush1.bf16.msra.mxu0 %v3465
        %4901 = vmatprep.subr.bf16.mxu0 %v3472
        %4902 = vmatpush1.bf16.msra.mxu0 %v3471
        %4903 = vmatprep.mubr.bf16.mxu0 %v2122
        %4904 = vmatmul.mubr.bf16.gmra.mrb[0].mxu0 %v2121
        %v4905 = vpop.f32.mrb[0].mxu0
        %v4906 = vadd.f32 %v2502, %v4905
        %v4907 = vpop.f32.mrb[0].mxu0
        %v4908 = vadd.f32 %v2506, %v4907
        %v4909 = vpop.f32.mrb[0].mxu0
        %v4910 = vadd.f32 %v2502, %v4909
        %v4911 = vpop.f32.mrb[0].mxu0
        %v4912 = vadd.f32 %v2506, %v4911
        %4913 = vmatprep.mubr.bf16.mxu0 %v2128
        %4914 = vmatmul.mubr.bf16.gmra.mrb[0].mxu0 %v2127
        %v4915 = vpop.f32.mrb[0].mxu0
        %v4916 = vadd.f32 %v2502, %v4915
        %v4917 = vpop.f32.mrb[0].mxu0
        %v4918 = vadd.f32 %v2506, %v4917
        %v4919 = vpop.f32.mrb[0].mxu0
        %v4920 = vadd.f32 %v2502, %v4919
        %v4921 = vpop.f32.mrb[0].mxu0
        %v4922 = vadd.f32 %v2506, %v4921
        %4923 = vmatprep.mubr.bf16.mxu0 %v2134
        %4924 = vmatmul.mubr.bf16.gmra.mrb[0].mxu0 %v2133
        %v4925 = vpop.f32.mrb[0].mxu0
        %v4926 = vadd.f32 %v2502, %v4925
        %v4927 = vpop.f32.mrb[0].mxu0
        %v4928 = vadd.f32 %v2506, %v4927
        %v4929 = vpop.f32.mrb[0].mxu0
        %v4930 = vadd.f32 %v2502, %v4929
        %v4931 = vpop.f32.mrb[0].mxu0
        %v4932 = vadd.f32 %v2506, %v4931
        %4933 = vmatprep.mubr.bf16.mxu0 %v2140
        %4934 = vmatmul.mubr.bf16.gmra.mrb[0].mxu0 %v2139
        %v4935 = vpop.f32.mrb[0].mxu0
        %v4936 = vadd.f32 %v2502, %v4935
        %v4937 = vpop.f32.mrb[0].mxu0
        %v4938 = vadd.f32 %v2506, %v4937
        %v4939 = vpop.f32.mrb[0].mxu0
        %v4940 = vadd.f32 %v2502, %v4939
        %v4941 = vpop.f32.mrb[0].mxu0
        %v4942 = vadd.f32 %v2506, %v4941
        %4943 = vmatprep.mubr.bf16.mxu0 %v2146
        %4944 = vmatmul.mubr.bf16.gmra.mrb[0].mxu0 %v2145
        %v4945 = vpop.f32.mrb[0].mxu0
        %v4946 = vadd.f32 %v2502, %v4945
        %v4947 = vpop.f32.mrb[0].mxu0
        %v4948 = vadd.f32 %v2506, %v4947
        %v4949 = vpop.f32.mrb[0].mxu0
        %v4950 = vadd.f32 %v2502, %v4949
        %v4951 = vpop.f32.mrb[0].mxu0
        %v4952 = vadd.f32 %v2506, %v4951
        %4953 = vmatprep.mubr.bf16.mxu0 %v2152
        %4954 = vmatmul.mubr.bf16.gmra.mrb[0].mxu0 %v2151
        %v4955 = vpop.f32.mrb[0].mxu0
        %v4956 = vadd.f32 %v2502, %v4955
        %v4957 = vpop.f32.mrb[0].mxu0
        %v4958 = vadd.f32 %v2506, %v4957
        %v4959 = vpop.f32.mrb[0].mxu0
        %v4960 = vadd.f32 %v2502, %v4959
        %v4961 = vpop.f32.mrb[0].mxu0
        %v4962 = vadd.f32 %v2506, %v4961
        %4963 = vmatprep.mubr.bf16.mxu0 %v2158
        %4964 = vmatmul.mubr.bf16.gmra.mrb[0].mxu0 %v2157
        %v4965 = vpop.f32.mrb[0].mxu0
        %v4966 = vadd.f32 %v2502, %v4965
        %v4967 = vpop.f32.mrb[0].mxu0
        %v4968 = vadd.f32 %v2506, %v4967
        %v4969 = vpop.f32.mrb[0].mxu0
        %v4970 = vadd.f32 %v2502, %v4969
        %v4971 = vpop.f32.mrb[0].mxu0
        %v4972 = vadd.f32 %v2506, %v4971
        %4973 = vmatprep.mubr.bf16.mxu0 %v2164
        %4974 = vmatmul.mubr.bf16.gmra.mrb[0].mxu0 %v2163
        %v4975 = vpop.f32.mrb[0].mxu0
        %v4976 = vadd.f32 %v2502, %v4975
        %v4977 = vpop.f32.mrb[0].mxu0
        %v4978 = vadd.f32 %v2506, %v4977
        %v4979 = vpop.f32.mrb[0].mxu0
        %v4980 = vadd.f32 %v2502, %v4979
        %v4981 = vpop.f32.mrb[0].mxu0
        %v4982 = vadd.f32 %v2506, %v4981
        %4983 = vmatprep.mubr.bf16.mxu0 %v2170
        %4984 = vmatmul.mubr.bf16.gmra.mrb[0].mxu0 %v2169
        %v4985 = vpop.f32.mrb[0].mxu0
        %v4986 = vadd.f32 %v2502, %v4985
        %v4987 = vpop.f32.mrb[0].mxu0
        %v4988 = vadd.f32 %v2506, %v4987
        %v4989 = vpop.f32.mrb[0].mxu0
        %v4990 = vadd.f32 %v2502, %v4989
        %v4991 = vpop.f32.mrb[0].mxu0
        %v4992 = vadd.f32 %v2506, %v4991
        %4993 = vmatprep.mubr.bf16.mxu0 %v2176
        %4994 = vmatmul.mubr.bf16.gmra.mrb[0].mxu0 %v2175
        %v4995 = vpop.f32.mrb[0].mxu0
        %v4996 = vadd.f32 %v2502, %v4995
        %v4997 = vpop.f32.mrb[0].mxu0
        %v4998 = vadd.f32 %v2506, %v4997
        %v4999 = vpop.f32.mrb[0].mxu0
        %v5000 = vadd.f32 %v2502, %v4999
        %v5001 = vpop.f32.mrb[0].mxu0
        %v5002 = vadd.f32 %v2506, %v5001
        %5003 = vmatprep.mubr.bf16.mxu0 %v2182
        %5004 = vmatmul.mubr.bf16.gmra.mrb[0].mxu0 %v2181
        %v5005 = vpop.f32.mrb[0].mxu0
        %v5006 = vadd.f32 %v2502, %v5005
        %v5007 = vpop.f32.mrb[0].mxu0
        %v5008 = vadd.f32 %v2506, %v5007
        %v5009 = vpop.f32.mrb[0].mxu0
        %v5010 = vadd.f32 %v2502, %v5009
        %v5011 = vpop.f32.mrb[0].mxu0
        %v5012 = vadd.f32 %v2506, %v5011
        %5013 = vmatprep.mubr.bf16.mxu0 %v2188
        %5014 = vmatmul.mubr.bf16.gmra.mrb[0].mxu0 %v2187
        %v5015 = vpop.f32.mrb[0].mxu0
        %v5016 = vadd.f32 %v2502, %v5015
        %v5017 = vpop.f32.mrb[0].mxu0
        %v5018 = vadd.f32 %v2506, %v5017
        %v5019 = vpop.f32.mrb[0].mxu0
        %v5020 = vadd.f32 %v2502, %v5019
        %v5021 = vpop.f32.mrb[0].mxu0
        %v5022 = vadd.f32 %v2506, %v5021
        %5023 = vdwg.mxu0
        %5024 = vmatprep.subr.bf16.mxu0 %v3478
        %5025 = vmatpush1.bf16.msra.mxu0 %v3477
        %5026 = vmatprep.subr.bf16.mxu0 %v3484
        %5027 = vmatpush1.bf16.msra.mxu0 %v3483
        %5028 = vmatprep.subr.bf16.mxu0 %v3490
        %5029 = vmatpush1.bf16.msra.mxu0 %v3489
        %5030 = vmatprep.subr.bf16.mxu0 %v3496
        %5031 = vmatpush1.bf16.msra.mxu0 %v3495
        %5032 = vmatprep.subr.bf16.mxu0 %v3502
        %5033 = vmatpush1.bf16.msra.mxu0 %v3501
        %5034 = vmatprep.subr.bf16.mxu0 %v3508
        %5035 = vmatpush1.bf16.msra.mxu0 %v3507
        %5036 = vmatprep.subr.bf16.mxu0 %v3514
        %5037 = vmatpush1.bf16.msra.mxu0 %v3513
        %5038 = vmatprep.subr.bf16.mxu0 %v3520
        %5039 = vmatpush1.bf16.msra.mxu0 %v3519
        %5040 = vmatprep.subr.bf16.mxu0 %v3526
        %5041 = vmatpush1.bf16.msra.mxu0 %v3525
        %5042 = vmatprep.subr.bf16.mxu0 %v3532
        %5043 = vmatpush1.bf16.msra.mxu0 %v3531
        %5044 = vmatprep.subr.bf16.mxu0 %v3538
        %5045 = vmatpush1.bf16.msra.mxu0 %v3537
        %5046 = vmatprep.subr.bf16.mxu0 %v3544
        %5047 = vmatpush1.bf16.msra.mxu0 %v3543
        %5048 = vmatprep.subr.bf16.mxu0 %v3550
        %5049 = vmatpush1.bf16.msra.mxu0 %v3549
        %5050 = vmatprep.subr.bf16.mxu0 %v3556
        %5051 = vmatpush1.bf16.msra.mxu0 %v3555
        %5052 = vmatprep.subr.bf16.mxu0 %v3562
        %5053 = vmatpush1.bf16.msra.mxu0 %v3561
        %5054 = vmatprep.subr.bf16.mxu0 %v3568
        %5055 = vmatpush1.bf16.msra.mxu0 %v3567
        %5056 = vmatprep.mubr.bf16.mxu0 %v2124
        %5057 = vmatmul.mubr.bf16.gmra.mrb[0].mxu0 %v2123
        %v5058 = vpop.f32.mrb[0].mxu0
        %v5059 = vadd.f32 %v4906, %v5058
        %v5060 = vpop.f32.mrb[0].mxu0
        %v5061 = vadd.f32 %v4908, %v5060
        %v5062 = vpop.f32.mrb[0].mxu0
        %v5063 = vadd.f32 %v4910, %v5062
        %v5064 = vpop.f32.mrb[0].mxu0
        %v5065 = vadd.f32 %v4912, %v5064
        %5066 = vmatprep.mubr.bf16.mxu0 %v2130
        %5067 = vmatmul.mubr.bf16.gmra.mrb[0].mxu0 %v2129
        %v5068 = vpop.f32.mrb[0].mxu0
        %v5069 = vadd.f32 %v4916, %v5068
        %v5070 = vpop.f32.mrb[0].mxu0
        %v5071 = vadd.f32 %v4918, %v5070
        %v5072 = vpop.f32.mrb[0].mxu0
        %v5073 = vadd.f32 %v4920, %v5072
        %v5074 = vpop.f32.mrb[0].mxu0
        %v5075 = vadd.f32 %v4922, %v5074
        %5076 = vmatprep.mubr.bf16.mxu0 %v2136
        %5077 = vmatmul.mubr.bf16.gmra.mrb[0].mxu0 %v2135
        %v5078 = vpop.f32.mrb[0].mxu0
        %v5079 = vadd.f32 %v4926, %v5078
        %v5080 = vpop.f32.mrb[0].mxu0
        %v5081 = vadd.f32 %v4928, %v5080
        %v5082 = vpop.f32.mrb[0].mxu0
        %v5083 = vadd.f32 %v4930, %v5082
        %v5084 = vpop.f32.mrb[0].mxu0
        %v5085 = vadd.f32 %v4932, %v5084
        %5086 = vmatprep.mubr.bf16.mxu0 %v2142
        %5087 = vmatmul.mubr.bf16.gmra.mrb[0].mxu0 %v2141
        %v5088 = vpop.f32.mrb[0].mxu0
        %v5089 = vadd.f32 %v4936, %v5088
        %v5090 = vpop.f32.mrb[0].mxu0
        %v5091 = vadd.f32 %v4938, %v5090
        %v5092 = vpop.f32.mrb[0].mxu0
        %v5093 = vadd.f32 %v4940, %v5092
        %v5094 = vpop.f32.mrb[0].mxu0
        %v5095 = vadd.f32 %v4942, %v5094
        %5096 = vmatprep.mubr.bf16.mxu0 %v2148
        %5097 = vmatmul.mubr.bf16.gmra.mrb[0].mxu0 %v2147
        %v5098 = vpop.f32.mrb[0].mxu0
        %v5099 = vadd.f32 %v4946, %v5098
        %v5100 = vpop.f32.mrb[0].mxu0
        %v5101 = vadd.f32 %v4948, %v5100
        %v5102 = vpop.f32.mrb[0].mxu0
        %v5103 = vadd.f32 %v4950, %v5102
        %v5104 = vpop.f32.mrb[0].mxu0
        %v5105 = vadd.f32 %v4952, %v5104
        %5106 = vmatprep.mubr.bf16.mxu0 %v2154
        %5107 = vmatmul.mubr.bf16.gmra.mrb[0].mxu0 %v2153
        %v5108 = vpop.f32.mrb[0].mxu0
        %v5109 = vadd.f32 %v4956, %v5108
        %v5110 = vpop.f32.mrb[0].mxu0
        %v5111 = vadd.f32 %v4958, %v5110
        %v5112 = vpop.f32.mrb[0].mxu0
        %v5113 = vadd.f32 %v4960, %v5112
        %v5114 = vpop.f32.mrb[0].mxu0
        %v5115 = vadd.f32 %v4962, %v5114
        %5116 = vmatprep.mubr.bf16.mxu0 %v2160
        %5117 = vmatmul.mubr.bf16.gmra.mrb[0].mxu0 %v2159
        %v5118 = vpop.f32.mrb[0].mxu0
        %v5119 = vadd.f32 %v4966, %v5118
        %v5120 = vpop.f32.mrb[0].mxu0
        %v5121 = vadd.f32 %v4968, %v5120
        %v5122 = vpop.f32.mrb[0].mxu0
        %v5123 = vadd.f32 %v4970, %v5122
        %v5124 = vpop.f32.mrb[0].mxu0
        %v5125 = vadd.f32 %v4972, %v5124
        %5126 = vmatprep.mubr.bf16.mxu0 %v2166
        %5127 = vmatmul.mubr.bf16.gmra.mrb[0].mxu0 %v2165
        %v5128 = vpop.f32.mrb[0].mxu0
        %v5129 = vadd.f32 %v4976, %v5128
        %v5130 = vpop.f32.mrb[0].mxu0
        %v5131 = vadd.f32 %v4978, %v5130
        %v5132 = vpop.f32.mrb[0].mxu0
        %v5133 = vadd.f32 %v4980, %v5132
        %v5134 = vpop.f32.mrb[0].mxu0
        %v5135 = vadd.f32 %v4982, %v5134
        %5136 = vmatprep.mubr.bf16.mxu0 %v2172
        %5137 = vmatmul.mubr.bf16.gmra.mrb[0].mxu0 %v2171
        %v5138 = vpop.f32.mrb[0].mxu0
        %v5139 = vadd.f32 %v4986, %v5138
        %v5140 = vpop.f32.mrb[0].mxu0
        %v5141 = vadd.f32 %v4988, %v5140
        %v5142 = vpop.f32.mrb[0].mxu0
        %v5143 = vadd.f32 %v4990, %v5142
        %v5144 = vpop.f32.mrb[0].mxu0
        %v5145 = vadd.f32 %v4992, %v5144
        %5146 = vmatprep.mubr.bf16.mxu0 %v2178
        %5147 = vmatmul.mubr.bf16.gmra.mrb[0].mxu0 %v2177
        %v5148 = vpop.f32.mrb[0].mxu0
        %v5149 = vadd.f32 %v4996, %v5148
        %v5150 = vpop.f32.mrb[0].mxu0
        %v5151 = vadd.f32 %v4998, %v5150
        %v5152 = vpop.f32.mrb[0].mxu0
        %v5153 = vadd.f32 %v5000, %v5152
        %v5154 = vpop.f32.mrb[0].mxu0
        %v5155 = vadd.f32 %v5002, %v5154
        %5156 = vmatprep.mubr.bf16.mxu0 %v2184
        %5157 = vmatmul.mubr.bf16.gmra.mrb[0].mxu0 %v2183
        %v5158 = vpop.f32.mrb[0].mxu0
        %v5159 = vadd.f32 %v5006, %v5158
        %v5160 = vpop.f32.mrb[0].mxu0
        %v5161 = vadd.f32 %v5008, %v5160
        %v5162 = vpop.f32.mrb[0].mxu0
        %v5163 = vadd.f32 %v5010, %v5162
        %v5164 = vpop.f32.mrb[0].mxu0
        %v5165 = vadd.f32 %v5012, %v5164
        %5166 = vmatprep.mubr.bf16.mxu0 %v2190
        %5167 = vmatmul.mubr.bf16.gmra.mrb[0].mxu0 %v2189
        %v5168 = vpop.f32.mrb[0].mxu0
        %v5169 = vadd.f32 %v5016, %v5168
        %v5170 = vpop.f32.mrb[0].mxu0
        %v5171 = vadd.f32 %v5018, %v5170
        %v5172 = vpop.f32.mrb[0].mxu0
        %v5173 = vadd.f32 %v5020, %v5172
        %v5174 = vpop.f32.mrb[0].mxu0
        %v5175 = vadd.f32 %v5022, %v5174
        %5176 = vdwg.mxu0
        %5177 = vmatprep.subr.bf16.mxu0 %v3574
        %5178 = vmatpush1.bf16.msra.mxu0 %v3573
        %5179 = vmatprep.subr.bf16.mxu0 %v3580
        %5180 = vmatpush1.bf16.msra.mxu0 %v3579
        %5181 = vmatprep.subr.bf16.mxu0 %v3586
        %5182 = vmatpush1.bf16.msra.mxu0 %v3585
        %5183 = vmatprep.subr.bf16.mxu0 %v3592
        %5184 = vmatpush1.bf16.msra.mxu0 %v3591
        %5185 = vmatprep.subr.bf16.mxu0 %v3598
        %5186 = vmatpush1.bf16.msra.mxu0 %v3597
        %5187 = vmatprep.subr.bf16.mxu0 %v3604
        %5188 = vmatpush1.bf16.msra.mxu0 %v3603
        %5189 = vmatprep.subr.bf16.mxu0 %v3610
        %5190 = vmatpush1.bf16.msra.mxu0 %v3609
        %5191 = vmatprep.subr.bf16.mxu0 %v3616
        %5192 = vmatpush1.bf16.msra.mxu0 %v3615
        %5193 = vmatprep.subr.bf16.mxu0 %v3622
        %5194 = vmatpush1.bf16.msra.mxu0 %v3621
        %5195 = vmatprep.subr.bf16.mxu0 %v3628
        %5196 = vmatpush1.bf16.msra.mxu0 %v3627
        %5197 = vmatprep.subr.bf16.mxu0 %v3634
        %5198 = vmatpush1.bf16.msra.mxu0 %v3633
        %5199 = vmatprep.subr.bf16.mxu0 %v3640
        %5200 = vmatpush1.bf16.msra.mxu0 %v3639
        %5201 = vmatprep.subr.bf16.mxu0 %v3646
        %5202 = vmatpush1.bf16.msra.mxu0 %v3645
        %5203 = vmatprep.subr.bf16.mxu0 %v3652
        %5204 = vmatpush1.bf16.msra.mxu0 %v3651
        %5205 = vmatprep.subr.bf16.mxu0 %v3658
        %5206 = vmatpush1.bf16.msra.mxu0 %v3657
        %5207 = vmatprep.subr.bf16.mxu0 %v3664
        %5208 = vmatpush1.bf16.msra.mxu0 %v3663
        %5209 = vmatprep.mubr.bf16.mxu0 %v2126
        %5210 = vmatmul.mubr.bf16.gmra.mrb[0].mxu0 %v2125
        %v5211 = vpop.f32.mrb[0].mxu0
        %v5212 = vadd.f32 %v5059, %v5211
        %v5213 = vpop.f32.mrb[0].mxu0
        %v5214 = vadd.f32 %v5061, %v5213
        %v5215 = vpop.f32.mrb[0].mxu0
        %v5216 = vadd.f32 %v5063, %v5215
        %v5217 = vpop.f32.mrb[0].mxu0
        %v5218 = vadd.f32 %v5065, %v5217
        %5219 = vmatprep.mubr.bf16.mxu0 %v2132
        %5220 = vmatmul.mubr.bf16.gmra.mrb[0].mxu0 %v2131
        %v5221 = vpop.f32.mrb[0].mxu0
        %v5222 = vadd.f32 %v5069, %v5221
        %v5223 = vpop.f32.mrb[0].mxu0
        %v5224 = vadd.f32 %v5071, %v5223
        %v5225 = vpop.f32.mrb[0].mxu0
        %v5226 = vadd.f32 %v5073, %v5225
        %v5227 = vpop.f32.mrb[0].mxu0
        %v5228 = vadd.f32 %v5075, %v5227
        %5229 = vmatprep.mubr.bf16.mxu0 %v2138
        %5230 = vmatmul.mubr.bf16.gmra.mrb[0].mxu0 %v2137
        %v5231 = vpop.f32.mrb[0].mxu0
        %v5232 = vadd.f32 %v5079, %v5231
        %v5233 = vpop.f32.mrb[0].mxu0
        %v5234 = vadd.f32 %v5081, %v5233
        %v5235 = vpop.f32.mrb[0].mxu0
        %v5236 = vadd.f32 %v5083, %v5235
        %v5237 = vpop.f32.mrb[0].mxu0
        %v5238 = vadd.f32 %v5085, %v5237
        %5239 = vmatprep.mubr.bf16.mxu0 %v2144
        %5240 = vmatmul.mubr.bf16.gmra.mrb[0].mxu0 %v2143
        %v5241 = vpop.f32.mrb[0].mxu0
        %v5242 = vadd.f32 %v5089, %v5241
        %v5243 = vpop.f32.mrb[0].mxu0
        %v5244 = vadd.f32 %v5091, %v5243
        %v5245 = vpop.f32.mrb[0].mxu0
        %v5246 = vadd.f32 %v5093, %v5245
        %v5247 = vpop.f32.mrb[0].mxu0
        %v5248 = vadd.f32 %v5095, %v5247
        %5249 = vmatprep.mubr.bf16.mxu0 %v2150
        %5250 = vmatmul.mubr.bf16.gmra.mrb[0].mxu0 %v2149
        %v5251 = vpop.f32.mrb[0].mxu0
        %v5252 = vadd.f32 %v5099, %v5251
        %v5253 = vpop.f32.mrb[0].mxu0
        %v5254 = vadd.f32 %v5101, %v5253
        %v5255 = vpop.f32.mrb[0].mxu0
        %v5256 = vadd.f32 %v5103, %v5255
        %v5257 = vpop.f32.mrb[0].mxu0
        %v5258 = vadd.f32 %v5105, %v5257
        %5259 = vmatprep.mubr.bf16.mxu0 %v2156
        %5260 = vmatmul.mubr.bf16.gmra.mrb[0].mxu0 %v2155
        %v5261 = vpop.f32.mrb[0].mxu0
        %v5262 = vadd.f32 %v5109, %v5261
        %v5263 = vpop.f32.mrb[0].mxu0
        %v5264 = vadd.f32 %v5111, %v5263
        %v5265 = vpop.f32.mrb[0].mxu0
        %v5266 = vadd.f32 %v5113, %v5265
        %v5267 = vpop.f32.mrb[0].mxu0
        %v5268 = vadd.f32 %v5115, %v5267
        %5269 = vmatprep.mubr.bf16.mxu0 %v2162
        %5270 = vmatmul.mubr.bf16.gmra.mrb[0].mxu0 %v2161
        %v5271 = vpop.f32.mrb[0].mxu0
        %v5272 = vadd.f32 %v5119, %v5271
        %v5273 = vpop.f32.mrb[0].mxu0
        %v5274 = vadd.f32 %v5121, %v5273
        %v5275 = vpop.f32.mrb[0].mxu0
        %v5276 = vadd.f32 %v5123, %v5275
        %v5277 = vpop.f32.mrb[0].mxu0
        %v5278 = vadd.f32 %v5125, %v5277
        %5279 = vmatprep.mubr.bf16.mxu0 %v2168
        %5280 = vmatmul.mubr.bf16.gmra.mrb[0].mxu0 %v2167
        %v5281 = vpop.f32.mrb[0].mxu0
        %v5282 = vadd.f32 %v5129, %v5281
        %v5283 = vpop.f32.mrb[0].mxu0
        %v5284 = vadd.f32 %v5131, %v5283
        %v5285 = vpop.f32.mrb[0].mxu0
        %v5286 = vadd.f32 %v5133, %v5285
        %v5287 = vpop.f32.mrb[0].mxu0
        %v5288 = vadd.f32 %v5135, %v5287
        %5289 = vmatprep.mubr.bf16.mxu0 %v2174
        %5290 = vmatmul.mubr.bf16.gmra.mrb[0].mxu0 %v2173
        %v5291 = vpop.f32.mrb[0].mxu0
        %v5292 = vadd.f32 %v5139, %v5291
        %v5293 = vpop.f32.mrb[0].mxu0
        %v5294 = vadd.f32 %v5141, %v5293
        %v5295 = vpop.f32.mrb[0].mxu0
        %v5296 = vadd.f32 %v5143, %v5295
        %v5297 = vpop.f32.mrb[0].mxu0
        %v5298 = vadd.f32 %v5145, %v5297
        %5299 = vmatprep.mubr.bf16.mxu0 %v2180
        %5300 = vmatmul.mubr.bf16.gmra.mrb[0].mxu0 %v2179
        %v5301 = vpop.f32.mrb[0].mxu0
        %v5302 = vadd.f32 %v5149, %v5301
        %v5303 = vpop.f32.mrb[0].mxu0
        %v5304 = vadd.f32 %v5151, %v5303
        %v5305 = vpop.f32.mrb[0].mxu0
        %v5306 = vadd.f32 %v5153, %v5305
        %v5307 = vpop.f32.mrb[0].mxu0
        %v5308 = vadd.f32 %v5155, %v5307
        %5309 = vmatprep.mubr.bf16.mxu0 %v2186
        %5310 = vmatmul.mubr.bf16.gmra.mrb[0].mxu0 %v2185
        %v5311 = vpop.f32.mrb[0].mxu0
        %v5312 = vadd.f32 %v5159, %v5311
        %v5313 = vpop.f32.mrb[0].mxu0
        %v5314 = vadd.f32 %v5161, %v5313
        %v5315 = vpop.f32.mrb[0].mxu0
        %v5316 = vadd.f32 %v5163, %v5315
        %v5317 = vpop.f32.mrb[0].mxu0
        %v5318 = vadd.f32 %v5165, %v5317
        %5319 = vmatprep.mubr.bf16.mxu0 %v2192
        %5320 = vmatmul.mubr.bf16.gmra.mrb[0].mxu0 %v2191
        %v5321 = vpop.f32.mrb[0].mxu0
        %v5322 = vadd.f32 %v5169, %v5321
        %v5323 = vpop.f32.mrb[0].mxu0
        %v5324 = vadd.f32 %v5171, %v5323
        %v5325 = vpop.f32.mrb[0].mxu0
        %v5326 = vadd.f32 %v5173, %v5325
        %v5327 = vpop.f32.mrb[0].mxu0
        %v5328 = vadd.f32 %v5175, %v5327
        %5329 = vdwg.mxu0
        %v5330 = vmul.f32 %v4294, 0.5
        %v5331 = vmul.f32 %v4296, 0.5
        %v5332 = vmul.f32 %v4753, 0.5
        %v5333 = vmul.f32 %v4755, 0.5
        %v5334 = vmul.f32 %v5212, 0.5
        %v5335 = vmul.f32 %v5214, 0.5
        %v5336 = vmul.f32 %v4298, 0.5
        %v5337 = vmul.f32 %v4300, 0.5
        %v5338 = vmul.f32 %v4757, 0.5
        %v5339 = vmul.f32 %v4759, 0.5
        %v5340 = vmul.f32 %v5216, 0.5
        %v5341 = vmul.f32 %v5218, 0.5
        %v5342 = vmul.f32 %v4304, 0.5
        %v5343 = vmul.f32 %v4306, 0.5
        %v5344 = vmul.f32 %v4763, 0.5
        %v5345 = vmul.f32 %v4765, 0.5
        %v5346 = vmul.f32 %v5222, 0.5
        %v5347 = vmul.f32 %v5224, 0.5
        %v5348 = vmul.f32 %v4308, 0.5
        %v5349 = vmul.f32 %v4310, 0.5
        %v5350 = vmul.f32 %v4767, 0.5
        %v5351 = vmul.f32 %v4769, 0.5
        %v5352 = vmul.f32 %v5226, 0.5
        %v5353 = vmul.f32 %v5228, 0.5
        %v5354 = vmul.f32 %v4314, 0.5
        %v5355 = vmul.f32 %v4316, 0.5
        %v5356 = vmul.f32 %v4773, 0.5
        %v5357 = vmul.f32 %v4775, 0.5
        %v5358 = vmul.f32 %v5232, 0.5
        %v5359 = vmul.f32 %v5234, 0.5
        %v5360 = vmul.f32 %v4318, 0.5
        %v5361 = vmul.f32 %v4320, 0.5
        %v5362 = vmul.f32 %v4777, 0.5
        %v5363 = vmul.f32 %v4779, 0.5
        %v5364 = vmul.f32 %v5236, 0.5
        %v5365 = vmul.f32 %v5238, 0.5
        %v5366 = vmul.f32 %v4324, 0.5
        %v5367 = vmul.f32 %v4326, 0.5
        %v5368 = vmul.f32 %v4783, 0.5
        %v5369 = vmul.f32 %v4785, 0.5
        %v5370 = vmul.f32 %v5242, 0.5
        %v5371 = vmul.f32 %v5244, 0.5
        %v5372 = vmul.f32 %v4328, 0.5
        %v5373 = vmul.f32 %v4330, 0.5
        %v5374 = vmul.f32 %v4787, 0.5
        %v5375 = vmul.f32 %v4789, 0.5
        %v5376 = vmul.f32 %v5246, 0.5
        %v5377 = vmul.f32 %v5248, 0.5
        %v5378 = vmul.f32 %v4334, 0.5
        %v5379 = vmul.f32 %v4336, 0.5
        %v5380 = vmul.f32 %v4793, 0.5
        %v5381 = vmul.f32 %v4795, 0.5
        %v5382 = vmul.f32 %v5252, 0.5
        %v5383 = vmul.f32 %v5254, 0.5
        %v5384 = vmul.f32 %v4338, 0.5
        %v5385 = vmul.f32 %v4340, 0.5
        %v5386 = vmul.f32 %v4797, 0.5
        %v5387 = vmul.f32 %v4799, 0.5
        %v5388 = vmul.f32 %v5256, 0.5
        %v5389 = vmul.f32 %v5258, 0.5
        %v5390 = vmul.f32 %v4344, 0.5
        %v5391 = vmul.f32 %v4346, 0.5
        %v5392 = vmul.f32 %v4803, 0.5
        %v5393 = vmul.f32 %v4805, 0.5
        %v5394 = vmul.f32 %v5262, 0.5
        %v5395 = vmul.f32 %v5264, 0.5
        %v5396 = vmul.f32 %v4348, 0.5
        %v5397 = vmul.f32 %v4350, 0.5
        %v5398 = vmul.f32 %v4807, 0.5
        %v5399 = vmul.f32 %v4809, 0.5
        %v5400 = vmul.f32 %v5266, 0.5
        %v5401 = vmul.f32 %v5268, 0.5
        %v5402 = vmul.f32 %v4354, 0.5
        %v5403 = vmul.f32 %v4356, 0.5
        %v5404 = vmul.f32 %v4813, 0.5
        %v5405 = vmul.f32 %v4815, 0.5
        %v5406 = vmul.f32 %v5272, 0.5
        %v5407 = vmul.f32 %v5274, 0.5
        %v5408 = vmul.f32 %v4358, 0.5
        %v5409 = vmul.f32 %v4360, 0.5
        %v5410 = vmul.f32 %v4817, 0.5
        %v5411 = vmul.f32 %v4819, 0.5
        %v5412 = vmul.f32 %v5276, 0.5
        %v5413 = vmul.f32 %v5278, 0.5
        %v5414 = vmul.f32 %v4364, 0.5
        %v5415 = vmul.f32 %v4366, 0.5
        %v5416 = vmul.f32 %v4823, 0.5
        %v5417 = vmul.f32 %v4825, 0.5
        %v5418 = vmul.f32 %v5282, 0.5
        %v5419 = vmul.f32 %v5284, 0.5
        %v5420 = vmul.f32 %v4368, 0.5
        %v5421 = vmul.f32 %v4370, 0.5
        %v5422 = vmul.f32 %v4827, 0.5
        %v5423 = vmul.f32 %v4829, 0.5
        %v5424 = vmul.f32 %v5286, 0.5
        %v5425 = vmul.f32 %v5288, 0.5
        %v5426 = vmul.f32 %v4374, 0.5
        %v5427 = vmul.f32 %v4376, 0.5
        %v5428 = vmul.f32 %v4833, 0.5
        %v5429 = vmul.f32 %v4835, 0.5
        %v5430 = vmul.f32 %v5292, 0.5
        %v5431 = vmul.f32 %v5294, 0.5
        %v5432 = vmul.f32 %v4378, 0.5
        %v5433 = vmul.f32 %v4380, 0.5
        %v5434 = vmul.f32 %v4837, 0.5
        %v5435 = vmul.f32 %v4839, 0.5
        %v5436 = vmul.f32 %v5296, 0.5
        %v5437 = vmul.f32 %v5298, 0.5
        %v5438 = vmul.f32 %v4384, 0.5
        %v5439 = vmul.f32 %v4386, 0.5
        %v5440 = vmul.f32 %v4843, 0.5
        %v5441 = vmul.f32 %v4845, 0.5
        %v5442 = vmul.f32 %v5302, 0.5
        %v5443 = vmul.f32 %v5304, 0.5
        %v5444 = vmul.f32 %v4388, 0.5
        %v5445 = vmul.f32 %v4390, 0.5
        %v5446 = vmul.f32 %v4847, 0.5
        %v5447 = vmul.f32 %v4849, 0.5
        %v5448 = vmul.f32 %v5306, 0.5
        %v5449 = vmul.f32 %v5308, 0.5
        %v5450 = vmul.f32 %v4394, 0.5
        %v5451 = vmul.f32 %v4396, 0.5
        %v5452 = vmul.f32 %v4853, 0.5
        %v5453 = vmul.f32 %v4855, 0.5
        %v5454 = vmul.f32 %v5312, 0.5
        %v5455 = vmul.f32 %v5314, 0.5
        %v5456 = vmul.f32 %v4398, 0.5
        %v5457 = vmul.f32 %v4400, 0.5
        %v5458 = vmul.f32 %v4857, 0.5
        %v5459 = vmul.f32 %v4859, 0.5
        %v5460 = vmul.f32 %v5316, 0.5
        %v5461 = vmul.f32 %v5318, 0.5
        %v5462 = vmul.f32 %v4404, 0.5
        %v5463 = vmul.f32 %v4406, 0.5
        %v5464 = vmul.f32 %v4863, 0.5
        %v5465 = vmul.f32 %v4865, 0.5
        %v5466 = vmul.f32 %v5322, 0.5
        %v5467 = vmul.f32 %v5324, 0.5
        %v5468 = vmul.f32 %v4408, 0.5
        %v5469 = vmul.f32 %v4410, 0.5
        %v5470 = vmul.f32 %v4867, 0.5
        %v5471 = vmul.f32 %v4869, 0.5
        %v5472 = vmul.f32 %v5326, 0.5
        %v5473 = vmul.f32 %v5328, 0.5
        %v5474 = vmul.f32 %v4294, 0.70710677
        %v5475 = vmul.f32 %v4296, 0.70710677
        %v5476 = vmul.f32 %v4753, 0.70710677
        %v5477 = vmul.f32 %v4755, 0.70710677
        %v5478 = vmul.f32 %v5212, 0.70710677
        %v5479 = vmul.f32 %v5214, 0.70710677
        %v5480 = vmul.f32 %v4298, 0.70710677
        %v5481 = vmul.f32 %v4300, 0.70710677
        %v5482 = vmul.f32 %v4757, 0.70710677
        %v5483 = vmul.f32 %v4759, 0.70710677
        %v5484 = vmul.f32 %v5216, 0.70710677
        %v5485 = vmul.f32 %v5218, 0.70710677
        %v5486 = vmul.f32 %v4304, 0.70710677
        %v5487 = vmul.f32 %v4306, 0.70710677
        %v5488 = vmul.f32 %v4763, 0.70710677
        %v5489 = vmul.f32 %v4765, 0.70710677
        %v5490 = vmul.f32 %v5222, 0.70710677
        %v5491 = vmul.f32 %v5224, 0.70710677
        %v5492 = vmul.f32 %v4308, 0.70710677
        %v5493 = vmul.f32 %v4310, 0.70710677
        %v5494 = vmul.f32 %v4767, 0.70710677
        %v5495 = vmul.f32 %v4769, 0.70710677
        %v5496 = vmul.f32 %v5226, 0.70710677
        %v5497 = vmul.f32 %v5228, 0.70710677
        %v5498 = vmul.f32 %v4314, 0.70710677
        %v5499 = vmul.f32 %v4316, 0.70710677
        %v5500 = vmul.f32 %v4773, 0.70710677
        %v5501 = vmul.f32 %v4775, 0.70710677
        %v5502 = vmul.f32 %v5232, 0.70710677
        %v5503 = vmul.f32 %v5234, 0.70710677
        %v5504 = vmul.f32 %v4318, 0.70710677
        %v5505 = vmul.f32 %v4320, 0.70710677
        %v5506 = vmul.f32 %v4777, 0.70710677
        %v5507 = vmul.f32 %v4779, 0.70710677
        %v5508 = vmul.f32 %v5236, 0.70710677
        %v5509 = vmul.f32 %v5238, 0.70710677
        %v5510 = vmul.f32 %v4324, 0.70710677
        %v5511 = vmul.f32 %v4326, 0.70710677
        %v5512 = vmul.f32 %v4783, 0.70710677
        %v5513 = vmul.f32 %v4785, 0.70710677
        %v5514 = vmul.f32 %v5242, 0.70710677
        %v5515 = vmul.f32 %v5244, 0.70710677
        %v5516 = vmul.f32 %v4328, 0.70710677
        %v5517 = vmul.f32 %v4330, 0.70710677
        %v5518 = vmul.f32 %v4787, 0.70710677
        %v5519 = vmul.f32 %v4789, 0.70710677
        %v5520 = vmul.f32 %v5246, 0.70710677
        %v5521 = vmul.f32 %v5248, 0.70710677
        %v5522 = vmul.f32 %v4334, 0.70710677
        %v5523 = vmul.f32 %v4336, 0.70710677
        %v5524 = vmul.f32 %v4793, 0.70710677
        %v5525 = vmul.f32 %v4795, 0.70710677
        %v5526 = vmul.f32 %v5252, 0.70710677
        %v5527 = vmul.f32 %v5254, 0.70710677
        %v5528 = vmul.f32 %v4338, 0.70710677
        %v5529 = vmul.f32 %v4340, 0.70710677
        %v5530 = vmul.f32 %v4797, 0.70710677
        %v5531 = vmul.f32 %v4799, 0.70710677
        %v5532 = vmul.f32 %v5256, 0.70710677
        %v5533 = vmul.f32 %v5258, 0.70710677
        %v5534 = vmul.f32 %v4344, 0.70710677
        %v5535 = vmul.f32 %v4346, 0.70710677
        %v5536 = vmul.f32 %v4803, 0.70710677
        %v5537 = vmul.f32 %v4805, 0.70710677
        %v5538 = vmul.f32 %v5262, 0.70710677
        %v5539 = vmul.f32 %v5264, 0.70710677
        %v5540 = vmul.f32 %v4348, 0.70710677
        %v5541 = vmul.f32 %v4350, 0.70710677
        %v5542 = vmul.f32 %v4807, 0.70710677
        %v5543 = vmul.f32 %v4809, 0.70710677
        %v5544 = vmul.f32 %v5266, 0.70710677
        %v5545 = vmul.f32 %v5268, 0.70710677
        %v5546 = vmul.f32 %v4354, 0.70710677
        %v5547 = vmul.f32 %v4356, 0.70710677
        %v5548 = vmul.f32 %v4813, 0.70710677
        %v5549 = vmul.f32 %v4815, 0.70710677
        %v5550 = vmul.f32 %v5272, 0.70710677
        %v5551 = vmul.f32 %v5274, 0.70710677
        %v5552 = vmul.f32 %v4358, 0.70710677
        %v5553 = vmul.f32 %v4360, 0.70710677
        %v5554 = vmul.f32 %v4817, 0.70710677
        %v5555 = vmul.f32 %v4819, 0.70710677
        %v5556 = vmul.f32 %v5276, 0.70710677
        %v5557 = vmul.f32 %v5278, 0.70710677
        %v5558 = vmul.f32 %v4364, 0.70710677
        %v5559 = vmul.f32 %v4366, 0.70710677
        %v5560 = vmul.f32 %v4823, 0.70710677
        %v5561 = vmul.f32 %v4825, 0.70710677
        %v5562 = vmul.f32 %v5282, 0.70710677
        %v5563 = vmul.f32 %v5284, 0.70710677
        %v5564 = vmul.f32 %v4368, 0.70710677
        %v5565 = vmul.f32 %v4370, 0.70710677
        %v5566 = vmul.f32 %v4827, 0.70710677
        %v5567 = vmul.f32 %v4829, 0.70710677
        %v5568 = vmul.f32 %v5286, 0.70710677
        %v5569 = vmul.f32 %v5288, 0.70710677
        %v5570 = vmul.f32 %v4374, 0.70710677
        %v5571 = vmul.f32 %v4376, 0.70710677
        %v5572 = vmul.f32 %v4833, 0.70710677
        %v5573 = vmul.f32 %v4835, 0.70710677
        %v5574 = vmul.f32 %v5292, 0.70710677
        %v5575 = vmul.f32 %v5294, 0.70710677
        %v5576 = vmul.f32 %v4378, 0.70710677
        %v5577 = vmul.f32 %v4380, 0.70710677
        %v5578 = vmul.f32 %v4837, 0.70710677
        %v5579 = vmul.f32 %v4839, 0.70710677
        %v5580 = vmul.f32 %v5296, 0.70710677
        %v5581 = vmul.f32 %v5298, 0.70710677
        %v5582 = vmul.f32 %v4384, 0.70710677
        %v5583 = vmul.f32 %v4386, 0.70710677
        %v5584 = vmul.f32 %v4843, 0.70710677
        %v5585 = vmul.f32 %v4845, 0.70710677
        %v5586 = vmul.f32 %v5302, 0.70710677
        %v5587 = vmul.f32 %v5304, 0.70710677
        %v5588 = vmul.f32 %v4388, 0.70710677
        %v5589 = vmul.f32 %v4390, 0.70710677
        %v5590 = vmul.f32 %v4847, 0.70710677
        %v5591 = vmul.f32 %v4849, 0.70710677
        %v5592 = vmul.f32 %v5306, 0.70710677
        %v5593 = vmul.f32 %v5308, 0.70710677
        %v5594 = vmul.f32 %v4394, 0.70710677
        %v5595 = vmul.f32 %v4396, 0.70710677
        %v5596 = vmul.f32 %v4853, 0.70710677
        %v5597 = vmul.f32 %v4855, 0.70710677
        %v5598 = vmul.f32 %v5312, 0.70710677
        %v5599 = vmul.f32 %v5314, 0.70710677
        %v5600 = vmul.f32 %v4398, 0.70710677
        %v5601 = vmul.f32 %v4400, 0.70710677
        %v5602 = vmul.f32 %v4857, 0.70710677
        %v5603 = vmul.f32 %v4859, 0.70710677
        %v5604 = vmul.f32 %v5316, 0.70710677
        %v5605 = vmul.f32 %v5318, 0.70710677
        %v5606 = vmul.f32 %v4404, 0.70710677
        %v5607 = vmul.f32 %v4406, 0.70710677
        %v5608 = vmul.f32 %v4863, 0.70710677
        %v5609 = vmul.f32 %v4865, 0.70710677
        %v5610 = vmul.f32 %v5322, 0.70710677
        %v5611 = vmul.f32 %v5324, 0.70710677
        %v5612 = vmul.f32 %v4408, 0.70710677
        %v5613 = vmul.f32 %v4410, 0.70710677
        %v5614 = vmul.f32 %v4867, 0.70710677
        %v5615 = vmul.f32 %v4869, 0.70710677
        %v5616 = vmul.f32 %v5326, 0.70710677
        %v5617 = vmul.f32 %v5328, 0.70710677
        %v5618 = verf.f32.pop %v5474
        %v5619 = verf.f32.pop %v5475
        %v5620 = verf.f32.pop %v5476
        %v5621 = verf.f32.pop %v5477
        %v5622 = verf.f32.pop %v5478
        %v5623 = verf.f32.pop %v5479
        %v5624 = verf.f32.pop %v5480
        %v5625 = verf.f32.pop %v5481
        %v5626 = verf.f32.pop %v5482
        %v5627 = verf.f32.pop %v5483
        %v5628 = verf.f32.pop %v5484
        %v5629 = verf.f32.pop %v5485
        %v5630 = verf.f32.pop %v5486
        %v5631 = verf.f32.pop %v5487
        %v5632 = verf.f32.pop %v5488
        %v5633 = verf.f32.pop %v5489
        %v5634 = verf.f32.pop %v5490
        %v5635 = verf.f32.pop %v5491
        %v5636 = verf.f32.pop %v5492
        %v5637 = verf.f32.pop %v5493
        %v5638 = verf.f32.pop %v5494
        %v5639 = verf.f32.pop %v5495
        %v5640 = verf.f32.pop %v5496
        %v5641 = verf.f32.pop %v5497
        %v5642 = verf.f32.pop %v5498
        %v5643 = verf.f32.pop %v5499
        %v5644 = verf.f32.pop %v5500
        %v5645 = verf.f32.pop %v5501
        %v5646 = verf.f32.pop %v5502
        %v5647 = verf.f32.pop %v5503
        %v5648 = verf.f32.pop %v5504
        %v5649 = verf.f32.pop %v5505
        %v5650 = verf.f32.pop %v5506
        %v5651 = verf.f32.pop %v5507
        %v5652 = verf.f32.pop %v5508
        %v5653 = verf.f32.pop %v5509
        %v5654 = verf.f32.pop %v5510
        %v5655 = verf.f32.pop %v5511
        %v5656 = verf.f32.pop %v5512
        %v5657 = verf.f32.pop %v5513
        %v5658 = verf.f32.pop %v5514
        %v5659 = verf.f32.pop %v5515
        %v5660 = verf.f32.pop %v5516
        %v5661 = verf.f32.pop %v5517
        %v5662 = verf.f32.pop %v5518
        %v5663 = verf.f32.pop %v5519
        %v5664 = verf.f32.pop %v5520
        %v5665 = verf.f32.pop %v5521
        %v5666 = verf.f32.pop %v5522
        %v5667 = verf.f32.pop %v5523
        %v5668 = verf.f32.pop %v5524
        %v5669 = verf.f32.pop %v5525
        %v5670 = verf.f32.pop %v5526
        %v5671 = verf.f32.pop %v5527
        %v5672 = verf.f32.pop %v5528
        %v5673 = verf.f32.pop %v5529
        %v5674 = verf.f32.pop %v5530
        %v5675 = verf.f32.pop %v5531
        %v5676 = verf.f32.pop %v5532
        %v5677 = verf.f32.pop %v5533
        %v5678 = verf.f32.pop %v5534
        %v5679 = verf.f32.pop %v5535
        %v5680 = verf.f32.pop %v5536
        %v5681 = verf.f32.pop %v5537
        %v5682 = verf.f32.pop %v5538
        %v5683 = verf.f32.pop %v5539
        %v5684 = verf.f32.pop %v5540
        %v5685 = verf.f32.pop %v5541
        %v5686 = verf.f32.pop %v5542
        %v5687 = verf.f32.pop %v5543
        %v5688 = verf.f32.pop %v5544
        %v5689 = verf.f32.pop %v5545
        %v5690 = verf.f32.pop %v5546
        %v5691 = verf.f32.pop %v5547
        %v5692 = verf.f32.pop %v5548
        %v5693 = verf.f32.pop %v5549
        %v5694 = verf.f32.pop %v5550
        %v5695 = verf.f32.pop %v5551
        %v5696 = verf.f32.pop %v5552
        %v5697 = verf.f32.pop %v5553
        %v5698 = verf.f32.pop %v5554
        %v5699 = verf.f32.pop %v5555
        %v5700 = verf.f32.pop %v5556
        %v5701 = verf.f32.pop %v5557
        %v5702 = verf.f32.pop %v5558
        %v5703 = verf.f32.pop %v5559
        %v5704 = verf.f32.pop %v5560
        %v5705 = verf.f32.pop %v5561
        %v5706 = verf.f32.pop %v5562
        %v5707 = verf.f32.pop %v5563
        %v5708 = verf.f32.pop %v5564
        %v5709 = verf.f32.pop %v5565
        %v5710 = verf.f32.pop %v5566
        %v5711 = verf.f32.pop %v5567
        %v5712 = verf.f32.pop %v5568
        %v5713 = verf.f32.pop %v5569
        %v5714 = verf.f32.pop %v5570
        %v5715 = verf.f32.pop %v5571
        %v5716 = verf.f32.pop %v5572
        %v5717 = verf.f32.pop %v5573
        %v5718 = verf.f32.pop %v5574
        %v5719 = verf.f32.pop %v5575
        %v5720 = verf.f32.pop %v5576
        %v5721 = verf.f32.pop %v5577
        %v5722 = verf.f32.pop %v5578
        %v5723 = verf.f32.pop %v5579
        %v5724 = verf.f32.pop %v5580
        %v5725 = verf.f32.pop %v5581
        %v5726 = verf.f32.pop %v5582
        %v5727 = verf.f32.pop %v5583
        %v5728 = verf.f32.pop %v5584
        %v5729 = verf.f32.pop %v5585
        %v5730 = verf.f32.pop %v5586
        %v5731 = verf.f32.pop %v5587
        %v5732 = verf.f32.pop %v5588
        %v5733 = verf.f32.pop %v5589
        %v5734 = verf.f32.pop %v5590
        %v5735 = verf.f32.pop %v5591
        %v5736 = verf.f32.pop %v5592
        %v5737 = verf.f32.pop %v5593
        %v5738 = verf.f32.pop %v5594
        %v5739 = verf.f32.pop %v5595
        %v5740 = verf.f32.pop %v5596
        %v5741 = verf.f32.pop %v5597
        %v5742 = verf.f32.pop %v5598
        %v5743 = verf.f32.pop %v5599
        %v5744 = verf.f32.pop %v5600
        %v5745 = verf.f32.pop %v5601
        %v5746 = verf.f32.pop %v5602
        %v5747 = verf.f32.pop %v5603
        %v5748 = verf.f32.pop %v5604
        %v5749 = verf.f32.pop %v5605
        %v5750 = verf.f32.pop %v5606
        %v5751 = verf.f32.pop %v5607
        %v5752 = verf.f32.pop %v5608
        %v5753 = verf.f32.pop %v5609
        %v5754 = verf.f32.pop %v5610
        %v5755 = verf.f32.pop %v5611
        %v5756 = verf.f32.pop %v5612
        %v5757 = verf.f32.pop %v5613
        %v5758 = verf.f32.pop %v5614
        %v5759 = verf.f32.pop %v5615
        %v5760 = verf.f32.pop %v5616
        %v5761 = verf.f32.pop %v5617
        %v5762 = vadd.f32 %v5618, 1.0
        %v5763 = vadd.f32 %v5619, 1.0
        %v5764 = vadd.f32 %v5620, 1.0
        %v5765 = vadd.f32 %v5621, 1.0
        %v5766 = vadd.f32 %v5622, 1.0
        %v5767 = vadd.f32 %v5623, 1.0
        %v5768 = vadd.f32 %v5624, 1.0
        %v5769 = vadd.f32 %v5625, 1.0
        %v5770 = vadd.f32 %v5626, 1.0
        %v5771 = vadd.f32 %v5627, 1.0
        %v5772 = vadd.f32 %v5628, 1.0
        %v5773 = vadd.f32 %v5629, 1.0
        %v5774 = vadd.f32 %v5630, 1.0
        %v5775 = vadd.f32 %v5631, 1.0
        %v5776 = vadd.f32 %v5632, 1.0
        %v5777 = vadd.f32 %v5633, 1.0
        %v5778 = vadd.f32 %v5634, 1.0
        %v5779 = vadd.f32 %v5635, 1.0
        %v5780 = vadd.f32 %v5636, 1.0
        %v5781 = vadd.f32 %v5637, 1.0
        %v5782 = vadd.f32 %v5638, 1.0
        %v5783 = vadd.f32 %v5639, 1.0
        %v5784 = vadd.f32 %v5640, 1.0
        %v5785 = vadd.f32 %v5641, 1.0
        %v5786 = vadd.f32 %v5642, 1.0
        %v5787 = vadd.f32 %v5643, 1.0
        %v5788 = vadd.f32 %v5644, 1.0
        %v5789 = vadd.f32 %v5645, 1.0
        %v5790 = vadd.f32 %v5646, 1.0
        %v5791 = vadd.f32 %v5647, 1.0
        %v5792 = vadd.f32 %v5648, 1.0
        %v5793 = vadd.f32 %v5649, 1.0
        %v5794 = vadd.f32 %v5650, 1.0
        %v5795 = vadd.f32 %v5651, 1.0
        %v5796 = vadd.f32 %v5652, 1.0
        %v5797 = vadd.f32 %v5653, 1.0
        %v5798 = vadd.f32 %v5654, 1.0
        %v5799 = vadd.f32 %v5655, 1.0
        %v5800 = vadd.f32 %v5656, 1.0
        %v5801 = vadd.f32 %v5657, 1.0
        %v5802 = vadd.f32 %v5658, 1.0
        %v5803 = vadd.f32 %v5659, 1.0
        %v5804 = vadd.f32 %v5660, 1.0
        %v5805 = vadd.f32 %v5661, 1.0
        %v5806 = vadd.f32 %v5662, 1.0
        %v5807 = vadd.f32 %v5663, 1.0
        %v5808 = vadd.f32 %v5664, 1.0
        %v5809 = vadd.f32 %v5665, 1.0
        %v5810 = vadd.f32 %v5666, 1.0
        %v5811 = vadd.f32 %v5667, 1.0
        %v5812 = vadd.f32 %v5668, 1.0
        %v5813 = vadd.f32 %v5669, 1.0
        %v5814 = vadd.f32 %v5670, 1.0
        %v5815 = vadd.f32 %v5671, 1.0
        %v5816 = vadd.f32 %v5672, 1.0
        %v5817 = vadd.f32 %v5673, 1.0
        %v5818 = vadd.f32 %v5674, 1.0
        %v5819 = vadd.f32 %v5675, 1.0
        %v5820 = vadd.f32 %v5676, 1.0
        %v5821 = vadd.f32 %v5677, 1.0
        %v5822 = vadd.f32 %v5678, 1.0
        %v5823 = vadd.f32 %v5679, 1.0
        %v5824 = vadd.f32 %v5680, 1.0
        %v5825 = vadd.f32 %v5681, 1.0
        %v5826 = vadd.f32 %v5682, 1.0
        %v5827 = vadd.f32 %v5683, 1.0
        %v5828 = vadd.f32 %v5684, 1.0
        %v5829 = vadd.f32 %v5685, 1.0
        %v5830 = vadd.f32 %v5686, 1.0
        %v5831 = vadd.f32 %v5687, 1.0
        %v5832 = vadd.f32 %v5688, 1.0
        %v5833 = vadd.f32 %v5689, 1.0
        %v5834 = vadd.f32 %v5690, 1.0
        %v5835 = vadd.f32 %v5691, 1.0
        %v5836 = vadd.f32 %v5692, 1.0
        %v5837 = vadd.f32 %v5693, 1.0
        %v5838 = vadd.f32 %v5694, 1.0
        %v5839 = vadd.f32 %v5695, 1.0
        %v5840 = vadd.f32 %v5696, 1.0
        %v5841 = vadd.f32 %v5697, 1.0
        %v5842 = vadd.f32 %v5698, 1.0
        %v5843 = vadd.f32 %v5699, 1.0
        %v5844 = vadd.f32 %v5700, 1.0
        %v5845 = vadd.f32 %v5701, 1.0
        %v5846 = vadd.f32 %v5702, 1.0
        %v5847 = vadd.f32 %v5703, 1.0
        %v5848 = vadd.f32 %v5704, 1.0
        %v5849 = vadd.f32 %v5705, 1.0
        %v5850 = vadd.f32 %v5706, 1.0
        %v5851 = vadd.f32 %v5707, 1.0
        %v5852 = vadd.f32 %v5708, 1.0
        %v5853 = vadd.f32 %v5709, 1.0
        %v5854 = vadd.f32 %v5710, 1.0
        %v5855 = vadd.f32 %v5711, 1.0
        %v5856 = vadd.f32 %v5712, 1.0
        %v5857 = vadd.f32 %v5713, 1.0
        %v5858 = vadd.f32 %v5714, 1.0
        %v5859 = vadd.f32 %v5715, 1.0
        %v5860 = vadd.f32 %v5716, 1.0
        %v5861 = vadd.f32 %v5717, 1.0
        %v5862 = vadd.f32 %v5718, 1.0
        %v5863 = vadd.f32 %v5719, 1.0
        %v5864 = vadd.f32 %v5720, 1.0
        %v5865 = vadd.f32 %v5721, 1.0
        %v5866 = vadd.f32 %v5722, 1.0
        %v5867 = vadd.f32 %v5723, 1.0
        %v5868 = vadd.f32 %v5724, 1.0
        %v5869 = vadd.f32 %v5725, 1.0
        %v5870 = vadd.f32 %v5726, 1.0
        %v5871 = vadd.f32 %v5727, 1.0
        %v5872 = vadd.f32 %v5728, 1.0
        %v5873 = vadd.f32 %v5729, 1.0
        %v5874 = vadd.f32 %v5730, 1.0
        %v5875 = vadd.f32 %v5731, 1.0
        %v5876 = vadd.f32 %v5732, 1.0
        %v5877 = vadd.f32 %v5733, 1.0
        %v5878 = vadd.f32 %v5734, 1.0
        %v5879 = vadd.f32 %v5735, 1.0
        %v5880 = vadd.f32 %v5736, 1.0
        %v5881 = vadd.f32 %v5737, 1.0
        %v5882 = vadd.f32 %v5738, 1.0
        %v5883 = vadd.f32 %v5739, 1.0
        %v5884 = vadd.f32 %v5740, 1.0
        %v5885 = vadd.f32 %v5741, 1.0
        %v5886 = vadd.f32 %v5742, 1.0
        %v5887 = vadd.f32 %v5743, 1.0
        %v5888 = vadd.f32 %v5744, 1.0
        %v5889 = vadd.f32 %v5745, 1.0
        %v5890 = vadd.f32 %v5746, 1.0
        %v5891 = vadd.f32 %v5747, 1.0
        %v5892 = vadd.f32 %v5748, 1.0
        %v5893 = vadd.f32 %v5749, 1.0
        %v5894 = vadd.f32 %v5750, 1.0
        %v5895 = vadd.f32 %v5751, 1.0
        %v5896 = vadd.f32 %v5752, 1.0
        %v5897 = vadd.f32 %v5753, 1.0
        %v5898 = vadd.f32 %v5754, 1.0
        %v5899 = vadd.f32 %v5755, 1.0
        %v5900 = vadd.f32 %v5756, 1.0
        %v5901 = vadd.f32 %v5757, 1.0
        %v5902 = vadd.f32 %v5758, 1.0
        %v5903 = vadd.f32 %v5759, 1.0
        %v5904 = vadd.f32 %v5760, 1.0
        %v5905 = vadd.f32 %v5761, 1.0
        %v5906 = vmul.f32 %v5330, %v5762
        %v5907 = vmul.f32 %v5331, %v5763
        %v5908 = vmul.f32 %v5332, %v5764
        %v5909 = vmul.f32 %v5333, %v5765
        %v5910 = vmul.f32 %v5334, %v5766
        %v5911 = vmul.f32 %v5335, %v5767
        %v5912 = vmul.f32 %v5336, %v5768
        %v5913 = vmul.f32 %v5337, %v5769
        %v5914 = vmul.f32 %v5338, %v5770
        %v5915 = vmul.f32 %v5339, %v5771
        %v5916 = vmul.f32 %v5340, %v5772
        %v5917 = vmul.f32 %v5341, %v5773
        %v5918 = vmul.f32 %v5342, %v5774
        %v5919 = vmul.f32 %v5343, %v5775
        %v5920 = vmul.f32 %v5344, %v5776
        %v5921 = vmul.f32 %v5345, %v5777
        %v5922 = vmul.f32 %v5346, %v5778
        %v5923 = vmul.f32 %v5347, %v5779
        %v5924 = vmul.f32 %v5348, %v5780
        %v5925 = vmul.f32 %v5349, %v5781
        %v5926 = vmul.f32 %v5350, %v5782
        %v5927 = vmul.f32 %v5351, %v5783
        %v5928 = vmul.f32 %v5352, %v5784
        %v5929 = vmul.f32 %v5353, %v5785
        %v5930 = vmul.f32 %v5354, %v5786
        %v5931 = vmul.f32 %v5355, %v5787
        %v5932 = vmul.f32 %v5356, %v5788
        %v5933 = vmul.f32 %v5357, %v5789
        %v5934 = vmul.f32 %v5358, %v5790
        %v5935 = vmul.f32 %v5359, %v5791
        %v5936 = vmul.f32 %v5360, %v5792
        %v5937 = vmul.f32 %v5361, %v5793
        %v5938 = vmul.f32 %v5362, %v5794
        %v5939 = vmul.f32 %v5363, %v5795
        %v5940 = vmul.f32 %v5364, %v5796
        %v5941 = vmul.f32 %v5365, %v5797
        %v5942 = vmul.f32 %v5366, %v5798
        %v5943 = vmul.f32 %v5367, %v5799
        %v5944 = vmul.f32 %v5368, %v5800
        %v5945 = vmul.f32 %v5369, %v5801
        %v5946 = vmul.f32 %v5370, %v5802
        %v5947 = vmul.f32 %v5371, %v5803
        %v5948 = vmul.f32 %v5372, %v5804
        %v5949 = vmul.f32 %v5373, %v5805
        %v5950 = vmul.f32 %v5374, %v5806
        %v5951 = vmul.f32 %v5375, %v5807
        %v5952 = vmul.f32 %v5376, %v5808
        %v5953 = vmul.f32 %v5377, %v5809
        %v5954 = vmul.f32 %v5378, %v5810
        %v5955 = vmul.f32 %v5379, %v5811
        %v5956 = vmul.f32 %v5380, %v5812
        %v5957 = vmul.f32 %v5381, %v5813
        %v5958 = vmul.f32 %v5382, %v5814
        %v5959 = vmul.f32 %v5383, %v5815
        %v5960 = vmul.f32 %v5384, %v5816
        %v5961 = vmul.f32 %v5385, %v5817
        %v5962 = vmul.f32 %v5386, %v5818
        %v5963 = vmul.f32 %v5387, %v5819
        %v5964 = vmul.f32 %v5388, %v5820
        %v5965 = vmul.f32 %v5389, %v5821
        %v5966 = vmul.f32 %v5390, %v5822
        %v5967 = vmul.f32 %v5391, %v5823
        %v5968 = vmul.f32 %v5392, %v5824
        %v5969 = vmul.f32 %v5393, %v5825
        %v5970 = vmul.f32 %v5394, %v5826
        %v5971 = vmul.f32 %v5395, %v5827
        %v5972 = vmul.f32 %v5396, %v5828
        %v5973 = vmul.f32 %v5397, %v5829
        %v5974 = vmul.f32 %v5398, %v5830
        %v5975 = vmul.f32 %v5399, %v5831
        %v5976 = vmul.f32 %v5400, %v5832
        %v5977 = vmul.f32 %v5401, %v5833
        %v5978 = vmul.f32 %v5402, %v5834
        %v5979 = vmul.f32 %v5403, %v5835
        %v5980 = vmul.f32 %v5404, %v5836
        %v5981 = vmul.f32 %v5405, %v5837
        %v5982 = vmul.f32 %v5406, %v5838
        %v5983 = vmul.f32 %v5407, %v5839
        %v5984 = vmul.f32 %v5408, %v5840
        %v5985 = vmul.f32 %v5409, %v5841
        %v5986 = vmul.f32 %v5410, %v5842
        %v5987 = vmul.f32 %v5411, %v5843
        %v5988 = vmul.f32 %v5412, %v5844
        %v5989 = vmul.f32 %v5413, %v5845
        %v5990 = vmul.f32 %v5414, %v5846
        %v5991 = vmul.f32 %v5415, %v5847
        %v5992 = vmul.f32 %v5416, %v5848
        %v5993 = vmul.f32 %v5417, %v5849
        %v5994 = vmul.f32 %v5418, %v5850
        %v5995 = vmul.f32 %v5419, %v5851
        %v5996 = vmul.f32 %v5420, %v5852
        %v5997 = vmul.f32 %v5421, %v5853
        %v5998 = vmul.f32 %v5422, %v5854
        %v5999 = vmul.f32 %v5423, %v5855
        %v6000 = vmul.f32 %v5424, %v5856
        %v6001 = vmul.f32 %v5425, %v5857
        %v6002 = vmul.f32 %v5426, %v5858
        %v6003 = vmul.f32 %v5427, %v5859
        %v6004 = vmul.f32 %v5428, %v5860
        %v6005 = vmul.f32 %v5429, %v5861
        %v6006 = vmul.f32 %v5430, %v5862
        %v6007 = vmul.f32 %v5431, %v5863
        %v6008 = vmul.f32 %v5432, %v5864
        %v6009 = vmul.f32 %v5433, %v5865
        %v6010 = vmul.f32 %v5434, %v5866
        %v6011 = vmul.f32 %v5435, %v5867
        %v6012 = vmul.f32 %v5436, %v5868
        %v6013 = vmul.f32 %v5437, %v5869
        %v6014 = vmul.f32 %v5438, %v5870
        %v6015 = vmul.f32 %v5439, %v5871
        %v6016 = vmul.f32 %v5440, %v5872
        %v6017 = vmul.f32 %v5441, %v5873
        %v6018 = vmul.f32 %v5442, %v5874
        %v6019 = vmul.f32 %v5443, %v5875
        %v6020 = vmul.f32 %v5444, %v5876
        %v6021 = vmul.f32 %v5445, %v5877
        %v6022 = vmul.f32 %v5446, %v5878
        %v6023 = vmul.f32 %v5447, %v5879
        %v6024 = vmul.f32 %v5448, %v5880
        %v6025 = vmul.f32 %v5449, %v5881
        %v6026 = vmul.f32 %v5450, %v5882
        %v6027 = vmul.f32 %v5451, %v5883
        %v6028 = vmul.f32 %v5452, %v5884
        %v6029 = vmul.f32 %v5453, %v5885
        %v6030 = vmul.f32 %v5454, %v5886
        %v6031 = vmul.f32 %v5455, %v5887
        %v6032 = vmul.f32 %v5456, %v5888
        %v6033 = vmul.f32 %v5457, %v5889
        %v6034 = vmul.f32 %v5458, %v5890
        %v6035 = vmul.f32 %v5459, %v5891
        %v6036 = vmul.f32 %v5460, %v5892
        %v6037 = vmul.f32 %v5461, %v5893
        %v6038 = vmul.f32 %v5462, %v5894
        %v6039 = vmul.f32 %v5463, %v5895
        %v6040 = vmul.f32 %v5464, %v5896
        %v6041 = vmul.f32 %v5465, %v5897
        %v6042 = vmul.f32 %v5466, %v5898
        %v6043 = vmul.f32 %v5467, %v5899
        %v6044 = vmul.f32 %v5468, %v5900
        %v6045 = vmul.f32 %v5469, %v5901
        %v6046 = vmul.f32 %v5470, %v5902
        %v6047 = vmul.f32 %v5471, %v5903
        %v6048 = vmul.f32 %v5472, %v5904
        %v6049 = vmul.f32 %v5473, %v5905
        %v6050 = vld [vmem:[#allocation3] sm:$0xff]
        %v6051 = vld [vmem:[#allocation3 + $0x8] sm:$0xff]
        %v6052 = vld [vmem:[#allocation3 + $0x10] sm:$0xff]
        %v6053 = vld [vmem:[#allocation3 + $0x18] sm:$0xff]
        %v6054 = vld [vmem:[#allocation3 + $0x20] sm:$0xff]
        %v6055 = vld [vmem:[#allocation3 + $0x28] sm:$0xff]
        %v6056 = vld [vmem:[#allocation3 + $0x30] sm:$0xff]
        %v6057 = vld [vmem:[#allocation3 + $0x38] sm:$0xff]
        %v6058 = vld [vmem:[#allocation3 + $0x40] sm:$0xff]
        %v6059 = vld [vmem:[#allocation3 + $0x48] sm:$0xff]
        %v6060 = vld [vmem:[#allocation3 + $0x50] sm:$0xff]
        %v6061 = vld [vmem:[#allocation3 + $0x58] sm:$0xff]
        %v6062 = vld [vmem:[#allocation3 + $0x60] sm:$0xff]
        %v6063 = vld [vmem:[#allocation3 + $0x68] sm:$0xff]
        %v6064 = vld [vmem:[#allocation3 + $0x70] sm:$0xff]
        %v6065 = vld [vmem:[#allocation3 + $0x78] sm:$0xff]
        %v6066 = vld [vmem:[#allocation3 + $0x80] sm:$0xff]
        %v6067 = vld [vmem:[#allocation3 + $0x88] sm:$0xff]
        %v6068 = vld [vmem:[#allocation3 + $0x90] sm:$0xff]
        %v6069 = vld [vmem:[#allocation3 + $0x98] sm:$0xff]
        %v6070 = vld [vmem:[#allocation3 + $0xa0] sm:$0xff]
        %v6071 = vld [vmem:[#allocation3 + $0xa8] sm:$0xff]
        %v6072 = vld [vmem:[#allocation3 + $0xb0] sm:$0xff]
        %v6073 = vld [vmem:[#allocation3 + $0xb8] sm:$0xff]
        %v6074 = vld [vmem:[#allocation3 + $0xc0] sm:$0xff]
        %v6075 = vld [vmem:[#allocation3 + $0xc8] sm:$0xff]
        %v6076 = vld [vmem:[#allocation3 + $0xd0] sm:$0xff]
        %v6077 = vld [vmem:[#allocation3 + $0xd8] sm:$0xff]
        %v6078 = vld [vmem:[#allocation3 + $0xe0] sm:$0xff]
        %v6079 = vld [vmem:[#allocation3 + $0xe8] sm:$0xff]
        %v6080 = vld [vmem:[#allocation3 + $0xf0] sm:$0xff]
        %v6081 = vld [vmem:[#allocation3 + $0xf8] sm:$0xff]
        %v6082 = vld [vmem:[#allocation3 + $0x100] sm:$0xff]
        %v6083 = vld [vmem:[#allocation3 + $0x108] sm:$0xff]
        %v6084 = vld [vmem:[#allocation3 + $0x110] sm:$0xff]
        %v6085 = vld [vmem:[#allocation3 + $0x118] sm:$0xff]
        %v6086 = vld [vmem:[#allocation3 + $0x120] sm:$0xff]
        %v6087 = vld [vmem:[#allocation3 + $0x128] sm:$0xff]
        %v6088 = vld [vmem:[#allocation3 + $0x130] sm:$0xff]
        %v6089 = vld [vmem:[#allocation3 + $0x138] sm:$0xff]
        %v6090 = vld [vmem:[#allocation3 + $0x140] sm:$0xff]
        %v6091 = vld [vmem:[#allocation3 + $0x148] sm:$0xff]
        %v6092 = vld [vmem:[#allocation3 + $0x150] sm:$0xff]
        %v6093 = vld [vmem:[#allocation3 + $0x158] sm:$0xff]
        %v6094 = vld [vmem:[#allocation3 + $0x160] sm:$0xff]
        %v6095 = vld [vmem:[#allocation3 + $0x168] sm:$0xff]
        %v6096 = vld [vmem:[#allocation3 + $0x170] sm:$0xff]
        %v6097 = vld [vmem:[#allocation3 + $0x178] sm:$0xff]
        %v6098 = vld [vmem:[#allocation3 + $0x180] sm:$0xff]
        %v6099 = vld [vmem:[#allocation3 + $0x188] sm:$0xff]
        %v6100 = vld [vmem:[#allocation3 + $0x190] sm:$0xff]
        %v6101 = vld [vmem:[#allocation3 + $0x198] sm:$0xff]
        %v6102 = vld [vmem:[#allocation3 + $0x1a0] sm:$0xff]
        %v6103 = vld [vmem:[#allocation3 + $0x1a8] sm:$0xff]
        %v6104 = vld [vmem:[#allocation3 + $0x1b0] sm:$0xff]
        %v6105 = vld [vmem:[#allocation3 + $0x1b8] sm:$0xff]
        %v6106 = vld [vmem:[#allocation3 + $0x1c0] sm:$0xff]
        %v6107 = vld [vmem:[#allocation3 + $0x1c8] sm:$0xff]
        %v6108 = vld [vmem:[#allocation3 + $0x1d0] sm:$0xff]
        %v6109 = vld [vmem:[#allocation3 + $0x1d8] sm:$0xff]
        %v6110 = vld [vmem:[#allocation3 + $0x1e0] sm:$0xff]
        %v6111 = vld [vmem:[#allocation3 + $0x1e8] sm:$0xff]
        %v6112 = vld [vmem:[#allocation3 + $0x1f0] sm:$0xff]
        %v6113 = vld [vmem:[#allocation3 + $0x1f8] sm:$0xff]
        %v6114 = vld [vmem:[#allocation3 + $0x200] sm:$0xff]
        %v6115 = vld [vmem:[#allocation3 + $0x208] sm:$0xff]
        %v6116 = vld [vmem:[#allocation3 + $0x210] sm:$0xff]
        %v6117 = vld [vmem:[#allocation3 + $0x218] sm:$0xff]
        %v6118 = vld [vmem:[#allocation3 + $0x220] sm:$0xff]
        %v6119 = vld [vmem:[#allocation3 + $0x228] sm:$0xff]
        %v6120 = vld [vmem:[#allocation3 + $0x230] sm:$0xff]
        %v6121 = vld [vmem:[#allocation3 + $0x238] sm:$0xff]
        %v6122 = vld [vmem:[#allocation3 + $0x240] sm:$0xff]
        %v6123 = vld [vmem:[#allocation3 + $0x248] sm:$0xff]
        %v6124 = vld [vmem:[#allocation3 + $0x250] sm:$0xff]
        %v6125 = vld [vmem:[#allocation3 + $0x258] sm:$0xff]
        %v6126 = vld [vmem:[#allocation3 + $0x260] sm:$0xff]
        %v6127 = vld [vmem:[#allocation3 + $0x268] sm:$0xff]
        %v6128 = vld [vmem:[#allocation3 + $0x270] sm:$0xff]
        %v6129 = vld [vmem:[#allocation3 + $0x278] sm:$0xff]
        %v6130 = vld [vmem:[#allocation3 + $0x280] sm:$0xff]
        %v6131 = vld [vmem:[#allocation3 + $0x288] sm:$0xff]
        %v6132 = vld [vmem:[#allocation3 + $0x290] sm:$0xff]
        %v6133 = vld [vmem:[#allocation3 + $0x298] sm:$0xff]
        %v6134 = vld [vmem:[#allocation3 + $0x2a0] sm:$0xff]
        %v6135 = vld [vmem:[#allocation3 + $0x2a8] sm:$0xff]
        %v6136 = vld [vmem:[#allocation3 + $0x2b0] sm:$0xff]
        %v6137 = vld [vmem:[#allocation3 + $0x2b8] sm:$0xff]
        %v6138 = vld [vmem:[#allocation3 + $0x2c0] sm:$0xff]
        %v6139 = vld [vmem:[#allocation3 + $0x2c8] sm:$0xff]
        %v6140 = vld [vmem:[#allocation3 + $0x2d0] sm:$0xff]
        %v6141 = vld [vmem:[#allocation3 + $0x2d8] sm:$0xff]
        %v6142 = vld [vmem:[#allocation3 + $0x2e0] sm:$0xff]
        %v6143 = vld [vmem:[#allocation3 + $0x2e8] sm:$0xff]
        %v6144 = vld [vmem:[#allocation3 + $0x2f0] sm:$0xff]
        %v6145 = vld [vmem:[#allocation3 + $0x2f8] sm:$0xff]
        %v6146 = vld [vmem:[#allocation3 + $0x300] sm:$0xff]
        %v6147 = vld [vmem:[#allocation3 + $0x308] sm:$0xff]
        %v6148 = vld [vmem:[#allocation3 + $0x310] sm:$0xff]
        %v6149 = vld [vmem:[#allocation3 + $0x318] sm:$0xff]
        %v6150 = vld [vmem:[#allocation3 + $0x320] sm:$0xff]
        %v6151 = vld [vmem:[#allocation3 + $0x328] sm:$0xff]
        %v6152 = vld [vmem:[#allocation3 + $0x330] sm:$0xff]
        %v6153 = vld [vmem:[#allocation3 + $0x338] sm:$0xff]
        %v6154 = vld [vmem:[#allocation3 + $0x340] sm:$0xff]
        %v6155 = vld [vmem:[#allocation3 + $0x348] sm:$0xff]
        %v6156 = vld [vmem:[#allocation3 + $0x350] sm:$0xff]
        %v6157 = vld [vmem:[#allocation3 + $0x358] sm:$0xff]
        %v6158 = vld [vmem:[#allocation3 + $0x360] sm:$0xff]
        %v6159 = vld [vmem:[#allocation3 + $0x368] sm:$0xff]
        %v6160 = vld [vmem:[#allocation3 + $0x370] sm:$0xff]
        %v6161 = vld [vmem:[#allocation3 + $0x378] sm:$0xff]
        %v6162 = vld [vmem:[#allocation3 + $0x380] sm:$0xff]
        %v6163 = vld [vmem:[#allocation3 + $0x388] sm:$0xff]
        %v6164 = vld [vmem:[#allocation3 + $0x390] sm:$0xff]
        %v6165 = vld [vmem:[#allocation3 + $0x398] sm:$0xff]
        %v6166 = vld [vmem:[#allocation3 + $0x3a0] sm:$0xff]
        %v6167 = vld [vmem:[#allocation3 + $0x3a8] sm:$0xff]
        %v6168 = vld [vmem:[#allocation3 + $0x3b0] sm:$0xff]
        %v6169 = vld [vmem:[#allocation3 + $0x3b8] sm:$0xff]
        %v6170 = vld [vmem:[#allocation3 + $0x3c0] sm:$0xff]
        %v6171 = vld [vmem:[#allocation3 + $0x3c8] sm:$0xff]
        %v6172 = vld [vmem:[#allocation3 + $0x3d0] sm:$0xff]
        %v6173 = vld [vmem:[#allocation3 + $0x3d8] sm:$0xff]
        %v6174 = vld [vmem:[#allocation3 + $0x3e0] sm:$0xff]
        %v6175 = vld [vmem:[#allocation3 + $0x3e8] sm:$0xff]
        %v6176 = vld [vmem:[#allocation3 + $0x3f0] sm:$0xff]
        %v6177 = vld [vmem:[#allocation3 + $0x3f8] sm:$0xff]
        %v6178 = vld [vmem:[#allocation3 + $0x400] sm:$0xff]
        %v6179 = vld [vmem:[#allocation3 + $0x408] sm:$0xff]
        %v6180 = vld [vmem:[#allocation3 + $0x410] sm:$0xff]
        %v6181 = vld [vmem:[#allocation3 + $0x418] sm:$0xff]
        %v6182 = vld [vmem:[#allocation3 + $0x420] sm:$0xff]
        %v6183 = vld [vmem:[#allocation3 + $0x428] sm:$0xff]
        %v6184 = vld [vmem:[#allocation3 + $0x430] sm:$0xff]
        %v6185 = vld [vmem:[#allocation3 + $0x438] sm:$0xff]
        %v6186 = vld [vmem:[#allocation3 + $0x440] sm:$0xff]
        %v6187 = vld [vmem:[#allocation3 + $0x448] sm:$0xff]
        %v6188 = vld [vmem:[#allocation3 + $0x450] sm:$0xff]
        %v6189 = vld [vmem:[#allocation3 + $0x458] sm:$0xff]
        %v6190 = vld [vmem:[#allocation3 + $0x460] sm:$0xff]
        %v6191 = vld [vmem:[#allocation3 + $0x468] sm:$0xff]
        %v6192 = vld [vmem:[#allocation3 + $0x470] sm:$0xff]
        %v6193 = vld [vmem:[#allocation3 + $0x478] sm:$0xff]
        %v6194 = vpack.c.bf16 %v5912, %v5906
        %v6195 = vpack.c.bf16 %v5913, %v5907
        %v6196 = vpack.c.bf16 %v5914, %v5908
        %v6197 = vpack.c.bf16 %v5915, %v5909
        %v6198 = vpack.c.bf16 %v5916, %v5910
        %v6199 = vpack.c.bf16 %v5917, %v5911
        %v6200 = vpack.c.bf16 %v5924, %v5918
        %v6201 = vpack.c.bf16 %v5925, %v5919
        %v6202 = vpack.c.bf16 %v5926, %v5920
        %v6203 = vpack.c.bf16 %v5927, %v5921
        %v6204 = vpack.c.bf16 %v5928, %v5922
        %v6205 = vpack.c.bf16 %v5929, %v5923
        %v6206 = vpack.c.bf16 %v5936, %v5930
        %v6207 = vpack.c.bf16 %v5937, %v5931
        %v6208 = vpack.c.bf16 %v5938, %v5932
        %v6209 = vpack.c.bf16 %v5939, %v5933
        %v6210 = vpack.c.bf16 %v5940, %v5934
        %v6211 = vpack.c.bf16 %v5941, %v5935
        %v6212 = vpack.c.bf16 %v5948, %v5942
        %v6213 = vpack.c.bf16 %v5949, %v5943
        %v6214 = vpack.c.bf16 %v5950, %v5944
        %v6215 = vpack.c.bf16 %v5951, %v5945
        %v6216 = vpack.c.bf16 %v5952, %v5946
        %v6217 = vpack.c.bf16 %v5953, %v5947
        %v6218 = vpack.c.bf16 %v5960, %v5954
        %v6219 = vpack.c.bf16 %v5961, %v5955
        %v6220 = vpack.c.bf16 %v5962, %v5956
        %v6221 = vpack.c.bf16 %v5963, %v5957
        %v6222 = vpack.c.bf16 %v5964, %v5958
        %v6223 = vpack.c.bf16 %v5965, %v5959
        %v6224 = vpack.c.bf16 %v5972, %v5966
        %v6225 = vpack.c.bf16 %v5973, %v5967
        %v6226 = vpack.c.bf16 %v5974, %v5968
        %v6227 = vpack.c.bf16 %v5975, %v5969
        %v6228 = vpack.c.bf16 %v5976, %v5970
        %v6229 = vpack.c.bf16 %v5977, %v5971
        %v6230 = vpack.c.bf16 %v5984, %v5978
        %v6231 = vpack.c.bf16 %v5985, %v5979
        %v6232 = vpack.c.bf16 %v5986, %v5980
        %v6233 = vpack.c.bf16 %v5987, %v5981
        %v6234 = vpack.c.bf16 %v5988, %v5982
        %v6235 = vpack.c.bf16 %v5989, %v5983
        %v6236 = vpack.c.bf16 %v5996, %v5990
        %v6237 = vpack.c.bf16 %v5997, %v5991
        %v6238 = vpack.c.bf16 %v5998, %v5992
        %v6239 = vpack.c.bf16 %v5999, %v5993
        %v6240 = vpack.c.bf16 %v6000, %v5994
        %v6241 = vpack.c.bf16 %v6001, %v5995
        %v6242 = vpack.c.bf16 %v6008, %v6002
        %v6243 = vpack.c.bf16 %v6009, %v6003
        %v6244 = vpack.c.bf16 %v6010, %v6004
        %v6245 = vpack.c.bf16 %v6011, %v6005
        %v6246 = vpack.c.bf16 %v6012, %v6006
        %v6247 = vpack.c.bf16 %v6013, %v6007
        %v6248 = vpack.c.bf16 %v6020, %v6014
        %v6249 = vpack.c.bf16 %v6021, %v6015
        %v6250 = vpack.c.bf16 %v6022, %v6016
        %v6251 = vpack.c.bf16 %v6023, %v6017
        %v6252 = vpack.c.bf16 %v6024, %v6018
        %v6253 = vpack.c.bf16 %v6025, %v6019
        %v6254 = vpack.c.bf16 %v6032, %v6026
        %v6255 = vpack.c.bf16 %v6033, %v6027
        %v6256 = vpack.c.bf16 %v6034, %v6028
        %v6257 = vpack.c.bf16 %v6035, %v6029
        %v6258 = vpack.c.bf16 %v6036, %v6030
        %v6259 = vpack.c.bf16 %v6037, %v6031
        %v6260 = vpack.c.bf16 %v6044, %v6038
        %v6261 = vpack.c.bf16 %v6045, %v6039
        %v6262 = vpack.c.bf16 %v6046, %v6040
        %v6263 = vpack.c.bf16 %v6047, %v6041
        %v6264 = vpack.c.bf16 %v6048, %v6042
        %v6265 = vpack.c.bf16 %v6049, %v6043
        %v6266 = vld [vmem:[%s413] sm:$0xff]
        %v6267 = vld [vmem:[%s413 + $0x8] sm:$0xff]
        %v6268 = vld [vmem:[%s413 + $0x10] sm:$0xff]
        %v6269 = vld [vmem:[%s413 + $0x18] sm:$0xff]
        %v6270 = vld [vmem:[%s413 + $0x20] sm:$0xff]
        %v6271 = vld [vmem:[%s413 + $0x28] sm:$0xff]
        %v6272 = vld [vmem:[%s413 + $0x30] sm:$0xff]
        %v6273 = vld [vmem:[%s413 + $0x38] sm:$0xff]
        %v6274 = vld [vmem:[%s413 + $0x40] sm:$0xff]
        %v6275 = vld [vmem:[%s413 + $0x48] sm:$0xff]
        %v6276 = vld [vmem:[%s413 + $0x50] sm:$0xff]
        %v6277 = vld [vmem:[%s413 + $0x58] sm:$0xff]
        %v6278 = vld [vmem:[%s413 + $0x60] sm:$0xff]
        %v6279 = vld [vmem:[%s413 + $0x68] sm:$0xff]
        %v6280 = vld [vmem:[%s413 + $0x70] sm:$0xff]
        %v6281 = vld [vmem:[%s413 + $0x78] sm:$0xff]
        %v6282 = vld [vmem:[%s413 + $0x80] sm:$0xff]
        %v6283 = vld [vmem:[%s413 + $0x88] sm:$0xff]
        %v6284 = vld [vmem:[%s413 + $0x90] sm:$0xff]
        %v6285 = vld [vmem:[%s413 + $0x98] sm:$0xff]
        %v6286 = vld [vmem:[%s413 + $0xa0] sm:$0xff]
        %v6287 = vld [vmem:[%s413 + $0xa8] sm:$0xff]
        %v6288 = vld [vmem:[%s413 + $0xb0] sm:$0xff]
        %v6289 = vld [vmem:[%s413 + $0xb8] sm:$0xff]
        %v6290 = vld [vmem:[%s413 + $0xc0] sm:$0xff]
        %v6291 = vld [vmem:[%s413 + $0xc8] sm:$0xff]
        %v6292 = vld [vmem:[%s413 + $0xd0] sm:$0xff]
        %v6293 = vld [vmem:[%s413 + $0xd8] sm:$0xff]
        %v6294 = vld [vmem:[%s413 + $0xe0] sm:$0xff]
        %v6295 = vld [vmem:[%s413 + $0xe8] sm:$0xff]
        %v6296 = vld [vmem:[%s413 + $0xf0] sm:$0xff]
        %v6297 = vld [vmem:[%s413 + $0xf8] sm:$0xff]
        %v6298 = vld [vmem:[%s413 + $0x100] sm:$0xff]
        %v6299 = vld [vmem:[%s413 + $0x108] sm:$0xff]
        %v6300 = vld [vmem:[%s413 + $0x110] sm:$0xff]
        %v6301 = vld [vmem:[%s413 + $0x118] sm:$0xff]
        %v6302 = vld [vmem:[%s413 + $0x120] sm:$0xff]
        %v6303 = vld [vmem:[%s413 + $0x128] sm:$0xff]
        %v6304 = vld [vmem:[%s413 + $0x130] sm:$0xff]
        %v6305 = vld [vmem:[%s413 + $0x138] sm:$0xff]
        %v6306 = vld [vmem:[%s413 + $0x140] sm:$0xff]
        %v6307 = vld [vmem:[%s413 + $0x148] sm:$0xff]
        %v6308 = vld [vmem:[%s413 + $0x150] sm:$0xff]
        %v6309 = vld [vmem:[%s413 + $0x158] sm:$0xff]
        %v6310 = vld [vmem:[%s413 + $0x160] sm:$0xff]
        %v6311 = vld [vmem:[%s413 + $0x168] sm:$0xff]
        %v6312 = vld [vmem:[%s413 + $0x170] sm:$0xff]
        %v6313 = vld [vmem:[%s413 + $0x178] sm:$0xff]
        %v6314 = vld [vmem:[%s413 + $0x180] sm:$0xff]
        %v6315 = vld [vmem:[%s413 + $0x188] sm:$0xff]
        %v6316 = vld [vmem:[%s413 + $0x190] sm:$0xff]
        %v6317 = vld [vmem:[%s413 + $0x198] sm:$0xff]
        %v6318 = vld [vmem:[%s413 + $0x1a0] sm:$0xff]
        %v6319 = vld [vmem:[%s413 + $0x1a8] sm:$0xff]
        %v6320 = vld [vmem:[%s413 + $0x1b0] sm:$0xff]
        %v6321 = vld [vmem:[%s413 + $0x1b8] sm:$0xff]
        %v6322 = vld [vmem:[%s413 + $0x1c0] sm:$0xff]
        %v6323 = vld [vmem:[%s413 + $0x1c8] sm:$0xff]
        %v6324 = vld [vmem:[%s413 + $0x1d0] sm:$0xff]
        %v6325 = vld [vmem:[%s413 + $0x1d8] sm:$0xff]
        %v6326 = vld [vmem:[%s413 + $0x1e0] sm:$0xff]
        %v6327 = vld [vmem:[%s413 + $0x1e8] sm:$0xff]
        %v6328 = vld [vmem:[%s413 + $0x1f0] sm:$0xff]
        %v6329 = vld [vmem:[%s413 + $0x1f8] sm:$0xff]
        %v6330 = vld [vmem:[%s413 + $0x200] sm:$0xff]
        %v6331 = vld [vmem:[%s413 + $0x208] sm:$0xff]
        %v6332 = vld [vmem:[%s413 + $0x210] sm:$0xff]
        %v6333 = vld [vmem:[%s413 + $0x218] sm:$0xff]
        %v6334 = vld [vmem:[%s413 + $0x220] sm:$0xff]
        %v6335 = vld [vmem:[%s413 + $0x228] sm:$0xff]
        %v6336 = vld [vmem:[%s413 + $0x230] sm:$0xff]
        %v6337 = vld [vmem:[%s413 + $0x238] sm:$0xff]
        %v6338 = vld [vmem:[%s413 + $0x240] sm:$0xff]
        %v6339 = vld [vmem:[%s413 + $0x248] sm:$0xff]
        %v6340 = vld [vmem:[%s413 + $0x250] sm:$0xff]
        %v6341 = vld [vmem:[%s413 + $0x258] sm:$0xff]
        %v6342 = vld [vmem:[%s413 + $0x260] sm:$0xff]
        %v6343 = vld [vmem:[%s413 + $0x268] sm:$0xff]
        %v6344 = vld [vmem:[%s413 + $0x270] sm:$0xff]
        %v6345 = vld [vmem:[%s413 + $0x278] sm:$0xff]
        %v6346 = vld [vmem:[%s413 + $0x280] sm:$0xff]
        %v6347 = vld [vmem:[%s413 + $0x288] sm:$0xff]
        %v6348 = vld [vmem:[%s413 + $0x290] sm:$0xff]
        %v6349 = vld [vmem:[%s413 + $0x298] sm:$0xff]
        %v6350 = vld [vmem:[%s413 + $0x2a0] sm:$0xff]
        %v6351 = vld [vmem:[%s413 + $0x2a8] sm:$0xff]
        %v6352 = vld [vmem:[%s413 + $0x2b0] sm:$0xff]
        %v6353 = vld [vmem:[%s413 + $0x2b8] sm:$0xff]
        %v6354 = vld [vmem:[%s413 + $0x2c0] sm:$0xff]
        %v6355 = vld [vmem:[%s413 + $0x2c8] sm:$0xff]
        %v6356 = vld [vmem:[%s413 + $0x2d0] sm:$0xff]
        %v6357 = vld [vmem:[%s413 + $0x2d8] sm:$0xff]
        %v6358 = vld [vmem:[%s413 + $0x2e0] sm:$0xff]
        %v6359 = vld [vmem:[%s413 + $0x2e8] sm:$0xff]
        %v6360 = vld [vmem:[%s413 + $0x2f0] sm:$0xff]
        %v6361 = vld [vmem:[%s413 + $0x2f8] sm:$0xff]
        %v6362 = vld [vmem:[%s413 + $0x300] sm:$0xff]
        %v6363 = vld [vmem:[%s413 + $0x308] sm:$0xff]
        %v6364 = vld [vmem:[%s413 + $0x310] sm:$0xff]
        %v6365 = vld [vmem:[%s413 + $0x318] sm:$0xff]
        %v6366 = vld [vmem:[%s413 + $0x320] sm:$0xff]
        %v6367 = vld [vmem:[%s413 + $0x328] sm:$0xff]
        %v6368 = vld [vmem:[%s413 + $0x330] sm:$0xff]
        %v6369 = vld [vmem:[%s413 + $0x338] sm:$0xff]
        %v6370 = vld [vmem:[%s413 + $0x340] sm:$0xff]
        %v6371 = vld [vmem:[%s413 + $0x348] sm:$0xff]
        %v6372 = vld [vmem:[%s413 + $0x350] sm:$0xff]
        %v6373 = vld [vmem:[%s413 + $0x358] sm:$0xff]
        %v6374 = vld [vmem:[%s413 + $0x360] sm:$0xff]
        %v6375 = vld [vmem:[%s413 + $0x368] sm:$0xff]
        %v6376 = vld [vmem:[%s413 + $0x370] sm:$0xff]
        %v6377 = vld [vmem:[%s413 + $0x378] sm:$0xff]
        %v6378 = vld [vmem:[%s413 + $0x380] sm:$0xff]
        %v6379 = vld [vmem:[%s413 + $0x388] sm:$0xff]
        %v6380 = vld [vmem:[%s413 + $0x390] sm:$0xff]
        %v6381 = vld [vmem:[%s413 + $0x398] sm:$0xff]
        %v6382 = vld [vmem:[%s413 + $0x3a0] sm:$0xff]
        %v6383 = vld [vmem:[%s413 + $0x3a8] sm:$0xff]
        %v6384 = vld [vmem:[%s413 + $0x3b0] sm:$0xff]
        %v6385 = vld [vmem:[%s413 + $0x3b8] sm:$0xff]
        %v6386 = vld [vmem:[%s413 + $0x3c0] sm:$0xff]
        %v6387 = vld [vmem:[%s413 + $0x3c8] sm:$0xff]
        %v6388 = vld [vmem:[%s413 + $0x3d0] sm:$0xff]
        %v6389 = vld [vmem:[%s413 + $0x3d8] sm:$0xff]
        %v6390 = vld [vmem:[%s413 + $0x3e0] sm:$0xff]
        %v6391 = vld [vmem:[%s413 + $0x3e8] sm:$0xff]
        %v6392 = vld [vmem:[%s413 + $0x3f0] sm:$0xff]
        %v6393 = vld [vmem:[%s413 + $0x3f8] sm:$0xff]
        %v6394 = vld [vmem:[%s413 + $0x400] sm:$0xff]
        %v6395 = vld [vmem:[%s413 + $0x408] sm:$0xff]
        %v6396 = vld [vmem:[%s413 + $0x410] sm:$0xff]
        %v6397 = vld [vmem:[%s413 + $0x418] sm:$0xff]
        %v6398 = vld [vmem:[%s413 + $0x420] sm:$0xff]
        %v6399 = vld [vmem:[%s413 + $0x428] sm:$0xff]
        %v6400 = vld [vmem:[%s413 + $0x430] sm:$0xff]
        %v6401 = vld [vmem:[%s413 + $0x438] sm:$0xff]
        %v6402 = vld [vmem:[%s413 + $0x440] sm:$0xff]
        %v6403 = vld [vmem:[%s413 + $0x448] sm:$0xff]
        %v6404 = vld [vmem:[%s413 + $0x450] sm:$0xff]
        %v6405 = vld [vmem:[%s413 + $0x458] sm:$0xff]
        %v6406 = vld [vmem:[%s413 + $0x460] sm:$0xff]
        %v6407 = vld [vmem:[%s413 + $0x468] sm:$0xff]
        %v6408 = vld [vmem:[%s413 + $0x470] sm:$0xff]
        %v6409 = vld [vmem:[%s413 + $0x478] sm:$0xff]
        %v6410 = vld [vmem:[%s413 + $0x480] sm:$0xff]
        %v6411 = vld [vmem:[%s413 + $0x488] sm:$0xff]
        %v6412 = vld [vmem:[%s413 + $0x490] sm:$0xff]
        %v6413 = vld [vmem:[%s413 + $0x498] sm:$0xff]
        %v6414 = vld [vmem:[%s413 + $0x4a0] sm:$0xff]
        %v6415 = vld [vmem:[%s413 + $0x4a8] sm:$0xff]
        %v6416 = vld [vmem:[%s413 + $0x4b0] sm:$0xff]
        %v6417 = vld [vmem:[%s413 + $0x4b8] sm:$0xff]
        %v6418 = vld [vmem:[%s413 + $0x4c0] sm:$0xff]
        %v6419 = vld [vmem:[%s413 + $0x4c8] sm:$0xff]
        %v6420 = vld [vmem:[%s413 + $0x4d0] sm:$0xff]
        %v6421 = vld [vmem:[%s413 + $0x4d8] sm:$0xff]
        %v6422 = vld [vmem:[%s413 + $0x4e0] sm:$0xff]
        %v6423 = vld [vmem:[%s413 + $0x4e8] sm:$0xff]
        %v6424 = vld [vmem:[%s413 + $0x4f0] sm:$0xff]
        %v6425 = vld [vmem:[%s413 + $0x4f8] sm:$0xff]
        %v6426 = vld [vmem:[%s413 + $0x500] sm:$0xff]
        %v6427 = vld [vmem:[%s413 + $0x508] sm:$0xff]
        %v6428 = vld [vmem:[%s413 + $0x510] sm:$0xff]
        %v6429 = vld [vmem:[%s413 + $0x518] sm:$0xff]
        %v6430 = vld [vmem:[%s413 + $0x520] sm:$0xff]
        %v6431 = vld [vmem:[%s413 + $0x528] sm:$0xff]
        %v6432 = vld [vmem:[%s413 + $0x530] sm:$0xff]
        %v6433 = vld [vmem:[%s413 + $0x538] sm:$0xff]
        %v6434 = vld [vmem:[%s413 + $0x540] sm:$0xff]
        %v6435 = vld [vmem:[%s413 + $0x548] sm:$0xff]
        %v6436 = vld [vmem:[%s413 + $0x550] sm:$0xff]
        %v6437 = vld [vmem:[%s413 + $0x558] sm:$0xff]
        %v6438 = vld [vmem:[%s413 + $0x560] sm:$0xff]
        %v6439 = vld [vmem:[%s413 + $0x568] sm:$0xff]
        %v6440 = vld [vmem:[%s413 + $0x570] sm:$0xff]
        %v6441 = vld [vmem:[%s413 + $0x578] sm:$0xff]
        %v6442 = vld [vmem:[%s413 + $0x580] sm:$0xff]
        %v6443 = vld [vmem:[%s413 + $0x588] sm:$0xff]
        %v6444 = vld [vmem:[%s413 + $0x590] sm:$0xff]
        %v6445 = vld [vmem:[%s413 + $0x598] sm:$0xff]
        %v6446 = vld [vmem:[%s413 + $0x5a0] sm:$0xff]
        %v6447 = vld [vmem:[%s413 + $0x5a8] sm:$0xff]
        %v6448 = vld [vmem:[%s413 + $0x5b0] sm:$0xff]
        %v6449 = vld [vmem:[%s413 + $0x5b8] sm:$0xff]
        %v6450 = vld [vmem:[%s413 + $0x5c0] sm:$0xff]
        %v6451 = vld [vmem:[%s413 + $0x5c8] sm:$0xff]
        %v6452 = vld [vmem:[%s413 + $0x5d0] sm:$0xff]
        %v6453 = vld [vmem:[%s413 + $0x5d8] sm:$0xff]
        %v6454 = vld [vmem:[%s413 + $0x5e0] sm:$0xff]
        %v6455 = vld [vmem:[%s413 + $0x5e8] sm:$0xff]
        %v6456 = vld [vmem:[%s413 + $0x5f0] sm:$0xff]
        %v6457 = vld [vmem:[%s413 + $0x5f8] sm:$0xff]
        %v6458 = vld [vmem:[%s413 + $0x600] sm:$0xff]
        %v6459 = vld [vmem:[%s413 + $0x608] sm:$0xff]
        %v6460 = vld [vmem:[%s413 + $0x610] sm:$0xff]
        %v6461 = vld [vmem:[%s413 + $0x618] sm:$0xff]
        %v6462 = vld [vmem:[%s413 + $0x620] sm:$0xff]
        %v6463 = vld [vmem:[%s413 + $0x628] sm:$0xff]
        %v6464 = vld [vmem:[%s413 + $0x630] sm:$0xff]
        %v6465 = vld [vmem:[%s413 + $0x638] sm:$0xff]
        %v6466 = vld [vmem:[%s413 + $0x640] sm:$0xff]
        %v6467 = vld [vmem:[%s413 + $0x648] sm:$0xff]
        %v6468 = vld [vmem:[%s413 + $0x650] sm:$0xff]
        %v6469 = vld [vmem:[%s413 + $0x658] sm:$0xff]
        %v6470 = vld [vmem:[%s413 + $0x660] sm:$0xff]
        %v6471 = vld [vmem:[%s413 + $0x668] sm:$0xff]
        %v6472 = vld [vmem:[%s413 + $0x670] sm:$0xff]
        %v6473 = vld [vmem:[%s413 + $0x678] sm:$0xff]
        %v6474 = vld [vmem:[%s413 + $0x680] sm:$0xff]
        %v6475 = vld [vmem:[%s413 + $0x688] sm:$0xff]
        %v6476 = vld [vmem:[%s413 + $0x690] sm:$0xff]
        %v6477 = vld [vmem:[%s413 + $0x698] sm:$0xff]
        %v6478 = vld [vmem:[%s413 + $0x6a0] sm:$0xff]
        %v6479 = vld [vmem:[%s413 + $0x6a8] sm:$0xff]
        %v6480 = vld [vmem:[%s413 + $0x6b0] sm:$0xff]
        %v6481 = vld [vmem:[%s413 + $0x6b8] sm:$0xff]
        %v6482 = vld [vmem:[%s413 + $0x6c0] sm:$0xff]
        %v6483 = vld [vmem:[%s413 + $0x6c8] sm:$0xff]
        %v6484 = vld [vmem:[%s413 + $0x6d0] sm:$0xff]
        %v6485 = vld [vmem:[%s413 + $0x6d8] sm:$0xff]
        %v6486 = vld [vmem:[%s413 + $0x6e0] sm:$0xff]
        %v6487 = vld [vmem:[%s413 + $0x6e8] sm:$0xff]
        %v6488 = vld [vmem:[%s413 + $0x6f0] sm:$0xff]
        %v6489 = vld [vmem:[%s413 + $0x6f8] sm:$0xff]
        %v6490 = vld [vmem:[%s413 + $0x700] sm:$0xff]
        %v6491 = vld [vmem:[%s413 + $0x708] sm:$0xff]
        %v6492 = vld [vmem:[%s413 + $0x710] sm:$0xff]
        %v6493 = vld [vmem:[%s413 + $0x718] sm:$0xff]
        %v6494 = vld [vmem:[%s413 + $0x720] sm:$0xff]
        %v6495 = vld [vmem:[%s413 + $0x728] sm:$0xff]
        %v6496 = vld [vmem:[%s413 + $0x730] sm:$0xff]
        %v6497 = vld [vmem:[%s413 + $0x738] sm:$0xff]
        %v6498 = vld [vmem:[%s413 + $0x740] sm:$0xff]
        %v6499 = vld [vmem:[%s413 + $0x748] sm:$0xff]
        %v6500 = vld [vmem:[%s413 + $0x750] sm:$0xff]
        %v6501 = vld [vmem:[%s413 + $0x758] sm:$0xff]
        %v6502 = vld [vmem:[%s413 + $0x760] sm:$0xff]
        %v6503 = vld [vmem:[%s413 + $0x768] sm:$0xff]
        %v6504 = vld [vmem:[%s413 + $0x770] sm:$0xff]
        %v6505 = vld [vmem:[%s413 + $0x778] sm:$0xff]
        %v6506 = vld [vmem:[%s413 + $0x780] sm:$0xff]
        %v6507 = vld [vmem:[%s413 + $0x788] sm:$0xff]
        %v6508 = vld [vmem:[%s413 + $0x790] sm:$0xff]
        %v6509 = vld [vmem:[%s413 + $0x798] sm:$0xff]
        %v6510 = vld [vmem:[%s413 + $0x7a0] sm:$0xff]
        %v6511 = vld [vmem:[%s413 + $0x7a8] sm:$0xff]
        %v6512 = vld [vmem:[%s413 + $0x7b0] sm:$0xff]
        %v6513 = vld [vmem:[%s413 + $0x7b8] sm:$0xff]
        %v6514 = vld [vmem:[%s413 + $0x7c0] sm:$0xff]
        %v6515 = vld [vmem:[%s413 + $0x7c8] sm:$0xff]
        %v6516 = vld [vmem:[%s413 + $0x7d0] sm:$0xff]
        %v6517 = vld [vmem:[%s413 + $0x7d8] sm:$0xff]
        %v6518 = vld [vmem:[%s413 + $0x7e0] sm:$0xff]
        %v6519 = vld [vmem:[%s413 + $0x7e8] sm:$0xff]
        %v6520 = vld [vmem:[%s413 + $0x7f0] sm:$0xff]
        %v6521 = vld [vmem:[%s413 + $0x7f8] sm:$0xff]
        %v6522 = vld [vmem:[%s413 + $0x800] sm:$0xff]
        %v6523 = vld [vmem:[%s413 + $0x808] sm:$0xff]
        %v6524 = vld [vmem:[%s413 + $0x810] sm:$0xff]
        %v6525 = vld [vmem:[%s413 + $0x818] sm:$0xff]
        %v6526 = vld [vmem:[%s413 + $0x820] sm:$0xff]
        %v6527 = vld [vmem:[%s413 + $0x828] sm:$0xff]
        %v6528 = vld [vmem:[%s413 + $0x830] sm:$0xff]
        %v6529 = vld [vmem:[%s413 + $0x838] sm:$0xff]
        %v6530 = vld [vmem:[%s413 + $0x840] sm:$0xff]
        %v6531 = vld [vmem:[%s413 + $0x848] sm:$0xff]
        %v6532 = vld [vmem:[%s413 + $0x850] sm:$0xff]
        %v6533 = vld [vmem:[%s413 + $0x858] sm:$0xff]
        %v6534 = vld [vmem:[%s413 + $0x860] sm:$0xff]
        %v6535 = vld [vmem:[%s413 + $0x868] sm:$0xff]
        %v6536 = vld [vmem:[%s413 + $0x870] sm:$0xff]
        %v6537 = vld [vmem:[%s413 + $0x878] sm:$0xff]
        %v6538 = vld [vmem:[%s413 + $0x880] sm:$0xff]
        %v6539 = vld [vmem:[%s413 + $0x888] sm:$0xff]
        %v6540 = vld [vmem:[%s413 + $0x890] sm:$0xff]
        %v6541 = vld [vmem:[%s413 + $0x898] sm:$0xff]
        %v6542 = vld [vmem:[%s413 + $0x8a0] sm:$0xff]
        %v6543 = vld [vmem:[%s413 + $0x8a8] sm:$0xff]
        %v6544 = vld [vmem:[%s413 + $0x8b0] sm:$0xff]
        %v6545 = vld [vmem:[%s413 + $0x8b8] sm:$0xff]
        %v6546 = vld [vmem:[%s413 + $0x8c0] sm:$0xff]
        %v6547 = vld [vmem:[%s413 + $0x8c8] sm:$0xff]
        %v6548 = vld [vmem:[%s413 + $0x8d0] sm:$0xff]
        %v6549 = vld [vmem:[%s413 + $0x8d8] sm:$0xff]
        %v6550 = vld [vmem:[%s413 + $0x8e0] sm:$0xff]
        %v6551 = vld [vmem:[%s413 + $0x8e8] sm:$0xff]
        %v6552 = vld [vmem:[%s413 + $0x8f0] sm:$0xff]
        %v6553 = vld [vmem:[%s413 + $0x8f8] sm:$0xff]
        %v6842 = vunpack.c.l.b16 %v6266
        %v6843 = vunpack.c.h.b16 %v6266
        %v6844 = vunpack.c.l.b16 %v6267
        %v6845 = vunpack.c.h.b16 %v6267
        %v6846 = vunpack.c.l.b16 %v6268
        %v6847 = vunpack.c.h.b16 %v6268
        %v6848 = vunpack.c.l.b16 %v6269
        %v6849 = vunpack.c.h.b16 %v6269
        %v6850 = vunpack.c.l.b16 %v6270
        %v6851 = vunpack.c.h.b16 %v6270
        %v6852 = vunpack.c.l.b16 %v6271
        %v6853 = vunpack.c.h.b16 %v6271
        %v6854 = vunpack.c.l.b16 %v6272
        %v6855 = vunpack.c.h.b16 %v6272
        %v6856 = vunpack.c.l.b16 %v6273
        %v6857 = vunpack.c.h.b16 %v6273
        %v6858 = vunpack.c.l.b16 %v6274
        %v6859 = vunpack.c.h.b16 %v6274
        %v6860 = vunpack.c.l.b16 %v6275
        %v6861 = vunpack.c.h.b16 %v6275
        %v6862 = vunpack.c.l.b16 %v6276
        %v6863 = vunpack.c.h.b16 %v6276
        %v6864 = vunpack.c.l.b16 %v6277
        %v6865 = vunpack.c.h.b16 %v6277
        %v6866 = vunpack.c.l.b16 %v6278
        %v6867 = vunpack.c.h.b16 %v6278
        %v6868 = vunpack.c.l.b16 %v6279
        %v6869 = vunpack.c.h.b16 %v6279
        %v6870 = vunpack.c.l.b16 %v6280
        %v6871 = vunpack.c.h.b16 %v6280
        %v6872 = vunpack.c.l.b16 %v6281
        %v6873 = vunpack.c.h.b16 %v6281
        %v6874 = vunpack.c.l.b16 %v6282
        %v6875 = vunpack.c.h.b16 %v6282
        %v6876 = vunpack.c.l.b16 %v6283
        %v6877 = vunpack.c.h.b16 %v6283
        %v6878 = vunpack.c.l.b16 %v6284
        %v6879 = vunpack.c.h.b16 %v6284
        %v6880 = vunpack.c.l.b16 %v6285
        %v6881 = vunpack.c.h.b16 %v6285
        %v6882 = vunpack.c.l.b16 %v6286
        %v6883 = vunpack.c.h.b16 %v6286
        %v6884 = vunpack.c.l.b16 %v6287
        %v6885 = vunpack.c.h.b16 %v6287
        %v6886 = vunpack.c.l.b16 %v6288
        %v6887 = vunpack.c.h.b16 %v6288
        %v6888 = vunpack.c.l.b16 %v6289
        %v6889 = vunpack.c.h.b16 %v6289
        %v6890 = vunpack.c.l.b16 %v6290
        %v6891 = vunpack.c.h.b16 %v6290
        %v6892 = vunpack.c.l.b16 %v6291
        %v6893 = vunpack.c.h.b16 %v6291
        %v6894 = vunpack.c.l.b16 %v6292
        %v6895 = vunpack.c.h.b16 %v6292
        %v6896 = vunpack.c.l.b16 %v6293
        %v6897 = vunpack.c.h.b16 %v6293
        %v6898 = vunpack.c.l.b16 %v6294
        %v6899 = vunpack.c.h.b16 %v6294
        %v6900 = vunpack.c.l.b16 %v6295
        %v6901 = vunpack.c.h.b16 %v6295
        %v6902 = vunpack.c.l.b16 %v6296
        %v6903 = vunpack.c.h.b16 %v6296
        %v6904 = vunpack.c.l.b16 %v6297
        %v6905 = vunpack.c.h.b16 %v6297
        %v6906 = vunpack.c.l.b16 %v6298
        %v6907 = vunpack.c.h.b16 %v6298
        %v6908 = vunpack.c.l.b16 %v6299
        %v6909 = vunpack.c.h.b16 %v6299
        %v6910 = vunpack.c.l.b16 %v6300
        %v6911 = vunpack.c.h.b16 %v6300
        %v6912 = vunpack.c.l.b16 %v6301
        %v6913 = vunpack.c.h.b16 %v6301
        %v6914 = vunpack.c.l.b16 %v6302
        %v6915 = vunpack.c.h.b16 %v6302
        %v6916 = vunpack.c.l.b16 %v6303
        %v6917 = vunpack.c.h.b16 %v6303
        %v6918 = vunpack.c.l.b16 %v6304
        %v6919 = vunpack.c.h.b16 %v6304
        %v6920 = vunpack.c.l.b16 %v6305
        %v6921 = vunpack.c.h.b16 %v6305
        %v6922 = vunpack.c.l.b16 %v6306
        %v6923 = vunpack.c.h.b16 %v6306
        %v6924 = vunpack.c.l.b16 %v6307
        %v6925 = vunpack.c.h.b16 %v6307
        %v6926 = vunpack.c.l.b16 %v6308
        %v6927 = vunpack.c.h.b16 %v6308
        %v6928 = vunpack.c.l.b16 %v6309
        %v6929 = vunpack.c.h.b16 %v6309
        %v6930 = vunpack.c.l.b16 %v6310
        %v6931 = vunpack.c.h.b16 %v6310
        %v6932 = vunpack.c.l.b16 %v6311
        %v6933 = vunpack.c.h.b16 %v6311
        %v6934 = vunpack.c.l.b16 %v6312
        %v6935 = vunpack.c.h.b16 %v6312
        %v6936 = vunpack.c.l.b16 %v6313
        %v6937 = vunpack.c.h.b16 %v6313
        %v6938 = vunpack.c.l.b16 %v6314
        %v6939 = vunpack.c.h.b16 %v6314
        %v6940 = vunpack.c.l.b16 %v6315
        %v6941 = vunpack.c.h.b16 %v6315
        %v6942 = vunpack.c.l.b16 %v6316
        %v6943 = vunpack.c.h.b16 %v6316
        %v6944 = vunpack.c.l.b16 %v6317
        %v6945 = vunpack.c.h.b16 %v6317
        %v6946 = vunpack.c.l.b16 %v6318
        %v6947 = vunpack.c.h.b16 %v6318
        %v6948 = vunpack.c.l.b16 %v6319
        %v6949 = vunpack.c.h.b16 %v6319
        %v6950 = vunpack.c.l.b16 %v6320
        %v6951 = vunpack.c.h.b16 %v6320
        %v6952 = vunpack.c.l.b16 %v6321
        %v6953 = vunpack.c.h.b16 %v6321
        %v6954 = vunpack.c.l.b16 %v6322
        %v6955 = vunpack.c.h.b16 %v6322
        %v6956 = vunpack.c.l.b16 %v6323
        %v6957 = vunpack.c.h.b16 %v6323
        %v6958 = vunpack.c.l.b16 %v6324
        %v6959 = vunpack.c.h.b16 %v6324
        %v6960 = vunpack.c.l.b16 %v6325
        %v6961 = vunpack.c.h.b16 %v6325
        %v6962 = vunpack.c.l.b16 %v6326
        %v6963 = vunpack.c.h.b16 %v6326
        %v6964 = vunpack.c.l.b16 %v6327
        %v6965 = vunpack.c.h.b16 %v6327
        %v6966 = vunpack.c.l.b16 %v6328
        %v6967 = vunpack.c.h.b16 %v6328
        %v6968 = vunpack.c.l.b16 %v6329
        %v6969 = vunpack.c.h.b16 %v6329
        %v6970 = vunpack.c.l.b16 %v6330
        %v6971 = vunpack.c.h.b16 %v6330
        %v6972 = vunpack.c.l.b16 %v6331
        %v6973 = vunpack.c.h.b16 %v6331
        %v6974 = vunpack.c.l.b16 %v6332
        %v6975 = vunpack.c.h.b16 %v6332
        %v6976 = vunpack.c.l.b16 %v6333
        %v6977 = vunpack.c.h.b16 %v6333
        %v6978 = vunpack.c.l.b16 %v6334
        %v6979 = vunpack.c.h.b16 %v6334
        %v6980 = vunpack.c.l.b16 %v6335
        %v6981 = vunpack.c.h.b16 %v6335
        %v6982 = vunpack.c.l.b16 %v6336
        %v6983 = vunpack.c.h.b16 %v6336
        %v6984 = vunpack.c.l.b16 %v6337
        %v6985 = vunpack.c.h.b16 %v6337
        %v6986 = vunpack.c.l.b16 %v6338
        %v6987 = vunpack.c.h.b16 %v6338
        %v6988 = vunpack.c.l.b16 %v6339
        %v6989 = vunpack.c.h.b16 %v6339
        %v6990 = vunpack.c.l.b16 %v6340
        %v6991 = vunpack.c.h.b16 %v6340
        %v6992 = vunpack.c.l.b16 %v6341
        %v6993 = vunpack.c.h.b16 %v6341
        %v6994 = vunpack.c.l.b16 %v6342
        %v6995 = vunpack.c.h.b16 %v6342
        %v6996 = vunpack.c.l.b16 %v6343
        %v6997 = vunpack.c.h.b16 %v6343
        %v6998 = vunpack.c.l.b16 %v6344
        %v6999 = vunpack.c.h.b16 %v6344
        %v7000 = vunpack.c.l.b16 %v6345
        %v7001 = vunpack.c.h.b16 %v6345
        %v7002 = vunpack.c.l.b16 %v6346
        %v7003 = vunpack.c.h.b16 %v6346
        %v7004 = vunpack.c.l.b16 %v6347
        %v7005 = vunpack.c.h.b16 %v6347
        %v7006 = vunpack.c.l.b16 %v6348
        %v7007 = vunpack.c.h.b16 %v6348
        %v7008 = vunpack.c.l.b16 %v6349
        %v7009 = vunpack.c.h.b16 %v6349
        %v7010 = vunpack.c.l.b16 %v6350
        %v7011 = vunpack.c.h.b16 %v6350
        %v7012 = vunpack.c.l.b16 %v6351
        %v7013 = vunpack.c.h.b16 %v6351
        %v7014 = vunpack.c.l.b16 %v6352
        %v7015 = vunpack.c.h.b16 %v6352
        %v7016 = vunpack.c.l.b16 %v6353
        %v7017 = vunpack.c.h.b16 %v6353
        %v7018 = vunpack.c.l.b16 %v6354
        %v7019 = vunpack.c.h.b16 %v6354
        %v7020 = vunpack.c.l.b16 %v6355
        %v7021 = vunpack.c.h.b16 %v6355
        %v7022 = vunpack.c.l.b16 %v6356
        %v7023 = vunpack.c.h.b16 %v6356
        %v7024 = vunpack.c.l.b16 %v6357
        %v7025 = vunpack.c.h.b16 %v6357
        %v7026 = vunpack.c.l.b16 %v6358
        %v7027 = vunpack.c.h.b16 %v6358
        %v7028 = vunpack.c.l.b16 %v6359
        %v7029 = vunpack.c.h.b16 %v6359
        %v7030 = vunpack.c.l.b16 %v6360
        %v7031 = vunpack.c.h.b16 %v6360
        %v7032 = vunpack.c.l.b16 %v6361
        %v7033 = vunpack.c.h.b16 %v6361
        %v7034 = vunpack.c.l.b16 %v6362
        %v7035 = vunpack.c.h.b16 %v6362
        %v7036 = vunpack.c.l.b16 %v6363
        %v7037 = vunpack.c.h.b16 %v6363
        %v7038 = vunpack.c.l.b16 %v6364
        %v7039 = vunpack.c.h.b16 %v6364
        %v7040 = vunpack.c.l.b16 %v6365
        %v7041 = vunpack.c.h.b16 %v6365
        %v7042 = vunpack.c.l.b16 %v6366
        %v7043 = vunpack.c.h.b16 %v6366
        %v7044 = vunpack.c.l.b16 %v6367
        %v7045 = vunpack.c.h.b16 %v6367
        %v7046 = vunpack.c.l.b16 %v6368
        %v7047 = vunpack.c.h.b16 %v6368
        %v7048 = vunpack.c.l.b16 %v6369
        %v7049 = vunpack.c.h.b16 %v6369
        %v7050 = vunpack.c.l.b16 %v6370
        %v7051 = vunpack.c.h.b16 %v6370
        %v7052 = vunpack.c.l.b16 %v6371
        %v7053 = vunpack.c.h.b16 %v6371
        %v7054 = vunpack.c.l.b16 %v6372
        %v7055 = vunpack.c.h.b16 %v6372
        %v7056 = vunpack.c.l.b16 %v6373
        %v7057 = vunpack.c.h.b16 %v6373
        %v7058 = vunpack.c.l.b16 %v6374
        %v7059 = vunpack.c.h.b16 %v6374
        %v7060 = vunpack.c.l.b16 %v6375
        %v7061 = vunpack.c.h.b16 %v6375
        %v7062 = vunpack.c.l.b16 %v6376
        %v7063 = vunpack.c.h.b16 %v6376
        %v7064 = vunpack.c.l.b16 %v6377
        %v7065 = vunpack.c.h.b16 %v6377
        %v7066 = vunpack.c.l.b16 %v6378
        %v7067 = vunpack.c.h.b16 %v6378
        %v7068 = vunpack.c.l.b16 %v6379
        %v7069 = vunpack.c.h.b16 %v6379
        %v7070 = vunpack.c.l.b16 %v6380
        %v7071 = vunpack.c.h.b16 %v6380
        %v7072 = vunpack.c.l.b16 %v6381
        %v7073 = vunpack.c.h.b16 %v6381
        %v7074 = vunpack.c.l.b16 %v6382
        %v7075 = vunpack.c.h.b16 %v6382
        %v7076 = vunpack.c.l.b16 %v6383
        %v7077 = vunpack.c.h.b16 %v6383
        %v7078 = vunpack.c.l.b16 %v6384
        %v7079 = vunpack.c.h.b16 %v6384
        %v7080 = vunpack.c.l.b16 %v6385
        %v7081 = vunpack.c.h.b16 %v6385
        %v7082 = vunpack.c.l.b16 %v6386
        %v7083 = vunpack.c.h.b16 %v6386
        %v7084 = vunpack.c.l.b16 %v6387
        %v7085 = vunpack.c.h.b16 %v6387
        %v7086 = vunpack.c.l.b16 %v6388
        %v7087 = vunpack.c.h.b16 %v6388
        %v7088 = vunpack.c.l.b16 %v6389
        %v7089 = vunpack.c.h.b16 %v6389
        %v7090 = vunpack.c.l.b16 %v6390
        %v7091 = vunpack.c.h.b16 %v6390
        %v7092 = vunpack.c.l.b16 %v6391
        %v7093 = vunpack.c.h.b16 %v6391
        %v7094 = vunpack.c.l.b16 %v6392
        %v7095 = vunpack.c.h.b16 %v6392
        %v7096 = vunpack.c.l.b16 %v6393
        %v7097 = vunpack.c.h.b16 %v6393
        %v7098 = vunpack.c.l.b16 %v6394
        %v7099 = vunpack.c.h.b16 %v6394
        %v7100 = vunpack.c.l.b16 %v6395
        %v7101 = vunpack.c.h.b16 %v6395
        %v7102 = vunpack.c.l.b16 %v6396
        %v7103 = vunpack.c.h.b16 %v6396
        %v7104 = vunpack.c.l.b16 %v6397
        %v7105 = vunpack.c.h.b16 %v6397
        %v7106 = vunpack.c.l.b16 %v6398
        %v7107 = vunpack.c.h.b16 %v6398
        %v7108 = vunpack.c.l.b16 %v6399
        %v7109 = vunpack.c.h.b16 %v6399
        %v7110 = vunpack.c.l.b16 %v6400
        %v7111 = vunpack.c.h.b16 %v6400
        %v7112 = vunpack.c.l.b16 %v6401
        %v7113 = vunpack.c.h.b16 %v6401
        %v7114 = vunpack.c.l.b16 %v6402
        %v7115 = vunpack.c.h.b16 %v6402
        %v7116 = vunpack.c.l.b16 %v6403
        %v7117 = vunpack.c.h.b16 %v6403
        %v7118 = vunpack.c.l.b16 %v6404
        %v7119 = vunpack.c.h.b16 %v6404
        %v7120 = vunpack.c.l.b16 %v6405
        %v7121 = vunpack.c.h.b16 %v6405
        %v7122 = vunpack.c.l.b16 %v6406
        %v7123 = vunpack.c.h.b16 %v6406
        %v7124 = vunpack.c.l.b16 %v6407
        %v7125 = vunpack.c.h.b16 %v6407
        %v7126 = vunpack.c.l.b16 %v6408
        %v7127 = vunpack.c.h.b16 %v6408
        %v7128 = vunpack.c.l.b16 %v6409
        %v7129 = vunpack.c.h.b16 %v6409
        %v7130 = vunpack.c.l.b16 %v6410
        %v7131 = vunpack.c.h.b16 %v6410
        %v7132 = vunpack.c.l.b16 %v6411
        %v7133 = vunpack.c.h.b16 %v6411
        %v7134 = vunpack.c.l.b16 %v6412
        %v7135 = vunpack.c.h.b16 %v6412
        %v7136 = vunpack.c.l.b16 %v6413
        %v7137 = vunpack.c.h.b16 %v6413
        %v7138 = vunpack.c.l.b16 %v6414
        %v7139 = vunpack.c.h.b16 %v6414
        %v7140 = vunpack.c.l.b16 %v6415
        %v7141 = vunpack.c.h.b16 %v6415
        %v7142 = vunpack.c.l.b16 %v6416
        %v7143 = vunpack.c.h.b16 %v6416
        %v7144 = vunpack.c.l.b16 %v6417
        %v7145 = vunpack.c.h.b16 %v6417
        %v7146 = vunpack.c.l.b16 %v6418
        %v7147 = vunpack.c.h.b16 %v6418
        %v7148 = vunpack.c.l.b16 %v6419
        %v7149 = vunpack.c.h.b16 %v6419
        %v7150 = vunpack.c.l.b16 %v6420
        %v7151 = vunpack.c.h.b16 %v6420
        %v7152 = vunpack.c.l.b16 %v6421
        %v7153 = vunpack.c.h.b16 %v6421
        %v7154 = vunpack.c.l.b16 %v6422
        %v7155 = vunpack.c.h.b16 %v6422
        %v7156 = vunpack.c.l.b16 %v6423
        %v7157 = vunpack.c.h.b16 %v6423
        %v7158 = vunpack.c.l.b16 %v6424
        %v7159 = vunpack.c.h.b16 %v6424
        %v7160 = vunpack.c.l.b16 %v6425
        %v7161 = vunpack.c.h.b16 %v6425
        %v7162 = vunpack.c.l.b16 %v6426
        %v7163 = vunpack.c.h.b16 %v6426
        %v7164 = vunpack.c.l.b16 %v6427
        %v7165 = vunpack.c.h.b16 %v6427
        %v7166 = vunpack.c.l.b16 %v6428
        %v7167 = vunpack.c.h.b16 %v6428
        %v7168 = vunpack.c.l.b16 %v6429
        %v7169 = vunpack.c.h.b16 %v6429
        %v7170 = vunpack.c.l.b16 %v6430
        %v7171 = vunpack.c.h.b16 %v6430
        %v7172 = vunpack.c.l.b16 %v6431
        %v7173 = vunpack.c.h.b16 %v6431
        %v7174 = vunpack.c.l.b16 %v6432
        %v7175 = vunpack.c.h.b16 %v6432
        %v7176 = vunpack.c.l.b16 %v6433
        %v7177 = vunpack.c.h.b16 %v6433
        %v7178 = vunpack.c.l.b16 %v6434
        %v7179 = vunpack.c.h.b16 %v6434
        %v7180 = vunpack.c.l.b16 %v6435
        %v7181 = vunpack.c.h.b16 %v6435
        %v7182 = vunpack.c.l.b16 %v6436
        %v7183 = vunpack.c.h.b16 %v6436
        %v7184 = vunpack.c.l.b16 %v6437
        %v7185 = vunpack.c.h.b16 %v6437
        %v7186 = vunpack.c.l.b16 %v6438
        %v7187 = vunpack.c.h.b16 %v6438
        %v7188 = vunpack.c.l.b16 %v6439
        %v7189 = vunpack.c.h.b16 %v6439
        %v7190 = vunpack.c.l.b16 %v6440
        %v7191 = vunpack.c.h.b16 %v6440
        %v7192 = vunpack.c.l.b16 %v6441
        %v7193 = vunpack.c.h.b16 %v6441
        %v7194 = vunpack.c.l.b16 %v6442
        %v7195 = vunpack.c.h.b16 %v6442
        %v7196 = vunpack.c.l.b16 %v6443
        %v7197 = vunpack.c.h.b16 %v6443
        %v7198 = vunpack.c.l.b16 %v6444
        %v7199 = vunpack.c.h.b16 %v6444
        %v7200 = vunpack.c.l.b16 %v6445
        %v7201 = vunpack.c.h.b16 %v6445
        %v7202 = vunpack.c.l.b16 %v6446
        %v7203 = vunpack.c.h.b16 %v6446
        %v7204 = vunpack.c.l.b16 %v6447
        %v7205 = vunpack.c.h.b16 %v6447
        %v7206 = vunpack.c.l.b16 %v6448
        %v7207 = vunpack.c.h.b16 %v6448
        %v7208 = vunpack.c.l.b16 %v6449
        %v7209 = vunpack.c.h.b16 %v6449
        %v7210 = vunpack.c.l.b16 %v6450
        %v7211 = vunpack.c.h.b16 %v6450
        %v7212 = vunpack.c.l.b16 %v6451
        %v7213 = vunpack.c.h.b16 %v6451
        %v7214 = vunpack.c.l.b16 %v6452
        %v7215 = vunpack.c.h.b16 %v6452
        %v7216 = vunpack.c.l.b16 %v6453
        %v7217 = vunpack.c.h.b16 %v6453
        %v7218 = vunpack.c.l.b16 %v6454
        %v7219 = vunpack.c.h.b16 %v6454
        %v7220 = vunpack.c.l.b16 %v6455
        %v7221 = vunpack.c.h.b16 %v6455
        %v7222 = vunpack.c.l.b16 %v6456
        %v7223 = vunpack.c.h.b16 %v6456
        %v7224 = vunpack.c.l.b16 %v6457
        %v7225 = vunpack.c.h.b16 %v6457
        %v7226 = vunpack.c.l.b16 %v6458
        %v7227 = vunpack.c.h.b16 %v6458
        %v7228 = vunpack.c.l.b16 %v6459
        %v7229 = vunpack.c.h.b16 %v6459
        %v7230 = vunpack.c.l.b16 %v6460
        %v7231 = vunpack.c.h.b16 %v6460
        %v7232 = vunpack.c.l.b16 %v6461
        %v7233 = vunpack.c.h.b16 %v6461
        %v7234 = vunpack.c.l.b16 %v6462
        %v7235 = vunpack.c.h.b16 %v6462
        %v7236 = vunpack.c.l.b16 %v6463
        %v7237 = vunpack.c.h.b16 %v6463
        %v7238 = vunpack.c.l.b16 %v6464
        %v7239 = vunpack.c.h.b16 %v6464
        %v7240 = vunpack.c.l.b16 %v6465
        %v7241 = vunpack.c.h.b16 %v6465
        %v7242 = vunpack.c.l.b16 %v6466
        %v7243 = vunpack.c.h.b16 %v6466
        %v7244 = vunpack.c.l.b16 %v6467
        %v7245 = vunpack.c.h.b16 %v6467
        %v7246 = vunpack.c.l.b16 %v6468
        %v7247 = vunpack.c.h.b16 %v6468
        %v7248 = vunpack.c.l.b16 %v6469
        %v7249 = vunpack.c.h.b16 %v6469
        %v7250 = vunpack.c.l.b16 %v6470
        %v7251 = vunpack.c.h.b16 %v6470
        %v7252 = vunpack.c.l.b16 %v6471
        %v7253 = vunpack.c.h.b16 %v6471
        %v7254 = vunpack.c.l.b16 %v6472
        %v7255 = vunpack.c.h.b16 %v6472
        %v7256 = vunpack.c.l.b16 %v6473
        %v7257 = vunpack.c.h.b16 %v6473
        %v7258 = vunpack.c.l.b16 %v6474
        %v7259 = vunpack.c.h.b16 %v6474
        %v7260 = vunpack.c.l.b16 %v6475
        %v7261 = vunpack.c.h.b16 %v6475
        %v7262 = vunpack.c.l.b16 %v6476
        %v7263 = vunpack.c.h.b16 %v6476
        %v7264 = vunpack.c.l.b16 %v6477
        %v7265 = vunpack.c.h.b16 %v6477
        %v7266 = vunpack.c.l.b16 %v6478
        %v7267 = vunpack.c.h.b16 %v6478
        %v7268 = vunpack.c.l.b16 %v6479
        %v7269 = vunpack.c.h.b16 %v6479
        %v7270 = vunpack.c.l.b16 %v6480
        %v7271 = vunpack.c.h.b16 %v6480
        %v7272 = vunpack.c.l.b16 %v6481
        %v7273 = vunpack.c.h.b16 %v6481
        %v7274 = vunpack.c.l.b16 %v6482
        %v7275 = vunpack.c.h.b16 %v6482
        %v7276 = vunpack.c.l.b16 %v6483
        %v7277 = vunpack.c.h.b16 %v6483
        %v7278 = vunpack.c.l.b16 %v6484
        %v7279 = vunpack.c.h.b16 %v6484
        %v7280 = vunpack.c.l.b16 %v6485
        %v7281 = vunpack.c.h.b16 %v6485
        %v7282 = vunpack.c.l.b16 %v6486
        %v7283 = vunpack.c.h.b16 %v6486
        %v7284 = vunpack.c.l.b16 %v6487
        %v7285 = vunpack.c.h.b16 %v6487
        %v7286 = vunpack.c.l.b16 %v6488
        %v7287 = vunpack.c.h.b16 %v6488
        %v7288 = vunpack.c.l.b16 %v6489
        %v7289 = vunpack.c.h.b16 %v6489
        %v7290 = vunpack.c.l.b16 %v6490
        %v7291 = vunpack.c.h.b16 %v6490
        %v7292 = vunpack.c.l.b16 %v6491
        %v7293 = vunpack.c.h.b16 %v6491
        %v7294 = vunpack.c.l.b16 %v6492
        %v7295 = vunpack.c.h.b16 %v6492
        %v7296 = vunpack.c.l.b16 %v6493
        %v7297 = vunpack.c.h.b16 %v6493
        %v7298 = vunpack.c.l.b16 %v6494
        %v7299 = vunpack.c.h.b16 %v6494
        %v7300 = vunpack.c.l.b16 %v6495
        %v7301 = vunpack.c.h.b16 %v6495
        %v7302 = vunpack.c.l.b16 %v6496
        %v7303 = vunpack.c.h.b16 %v6496
        %v7304 = vunpack.c.l.b16 %v6497
        %v7305 = vunpack.c.h.b16 %v6497
        %v7306 = vunpack.c.l.b16 %v6498
        %v7307 = vunpack.c.h.b16 %v6498
        %v7308 = vunpack.c.l.b16 %v6499
        %v7309 = vunpack.c.h.b16 %v6499
        %v7310 = vunpack.c.l.b16 %v6500
        %v7311 = vunpack.c.h.b16 %v6500
        %v7312 = vunpack.c.l.b16 %v6501
        %v7313 = vunpack.c.h.b16 %v6501
        %v7314 = vunpack.c.l.b16 %v6502
        %v7315 = vunpack.c.h.b16 %v6502
        %v7316 = vunpack.c.l.b16 %v6503
        %v7317 = vunpack.c.h.b16 %v6503
        %v7318 = vunpack.c.l.b16 %v6504
        %v7319 = vunpack.c.h.b16 %v6504
        %v7320 = vunpack.c.l.b16 %v6505
        %v7321 = vunpack.c.h.b16 %v6505
        %v7322 = vunpack.c.l.b16 %v6506
        %v7323 = vunpack.c.h.b16 %v6506
        %v7324 = vunpack.c.l.b16 %v6507
        %v7325 = vunpack.c.h.b16 %v6507
        %v7326 = vunpack.c.l.b16 %v6508
        %v7327 = vunpack.c.h.b16 %v6508
        %v7328 = vunpack.c.l.b16 %v6509
        %v7329 = vunpack.c.h.b16 %v6509
        %v7330 = vunpack.c.l.b16 %v6510
        %v7331 = vunpack.c.h.b16 %v6510
        %v7332 = vunpack.c.l.b16 %v6511
        %v7333 = vunpack.c.h.b16 %v6511
        %v7334 = vunpack.c.l.b16 %v6512
        %v7335 = vunpack.c.h.b16 %v6512
        %v7336 = vunpack.c.l.b16 %v6513
        %v7337 = vunpack.c.h.b16 %v6513
        %v7338 = vunpack.c.l.b16 %v6514
        %v7339 = vunpack.c.h.b16 %v6514
        %v7340 = vunpack.c.l.b16 %v6515
        %v7341 = vunpack.c.h.b16 %v6515
        %v7342 = vunpack.c.l.b16 %v6516
        %v7343 = vunpack.c.h.b16 %v6516
        %v7344 = vunpack.c.l.b16 %v6517
        %v7345 = vunpack.c.h.b16 %v6517
        %v7346 = vunpack.c.l.b16 %v6518
        %v7347 = vunpack.c.h.b16 %v6518
        %v7348 = vunpack.c.l.b16 %v6519
        %v7349 = vunpack.c.h.b16 %v6519
        %v7350 = vunpack.c.l.b16 %v6520
        %v7351 = vunpack.c.h.b16 %v6520
        %v7352 = vunpack.c.l.b16 %v6521
        %v7353 = vunpack.c.h.b16 %v6521
        %v7354 = vunpack.c.l.b16 %v6522
        %v7355 = vunpack.c.h.b16 %v6522
        %v7356 = vunpack.c.l.b16 %v6523
        %v7357 = vunpack.c.h.b16 %v6523
        %v7358 = vunpack.c.l.b16 %v6524
        %v7359 = vunpack.c.h.b16 %v6524
        %v7360 = vunpack.c.l.b16 %v6525
        %v7361 = vunpack.c.h.b16 %v6525
        %v7362 = vunpack.c.l.b16 %v6526
        %v7363 = vunpack.c.h.b16 %v6526
        %v7364 = vunpack.c.l.b16 %v6527
        %v7365 = vunpack.c.h.b16 %v6527
        %v7366 = vunpack.c.l.b16 %v6528
        %v7367 = vunpack.c.h.b16 %v6528
        %v7368 = vunpack.c.l.b16 %v6529
        %v7369 = vunpack.c.h.b16 %v6529
        %v7370 = vunpack.c.l.b16 %v6530
        %v7371 = vunpack.c.h.b16 %v6530
        %v7372 = vunpack.c.l.b16 %v6531
        %v7373 = vunpack.c.h.b16 %v6531
        %v7374 = vunpack.c.l.b16 %v6532
        %v7375 = vunpack.c.h.b16 %v6532
        %v7376 = vunpack.c.l.b16 %v6533
        %v7377 = vunpack.c.h.b16 %v6533
        %v7378 = vunpack.c.l.b16 %v6534
        %v7379 = vunpack.c.h.b16 %v6534
        %v7380 = vunpack.c.l.b16 %v6535
        %v7381 = vunpack.c.h.b16 %v6535
        %v7382 = vunpack.c.l.b16 %v6536
        %v7383 = vunpack.c.h.b16 %v6536
        %v7384 = vunpack.c.l.b16 %v6537
        %v7385 = vunpack.c.h.b16 %v6537
        %v7386 = vunpack.c.l.b16 %v6538
        %v7387 = vunpack.c.h.b16 %v6538
        %v7388 = vunpack.c.l.b16 %v6539
        %v7389 = vunpack.c.h.b16 %v6539
        %v7390 = vunpack.c.l.b16 %v6540
        %v7391 = vunpack.c.h.b16 %v6540
        %v7392 = vunpack.c.l.b16 %v6541
        %v7393 = vunpack.c.h.b16 %v6541
        %v7394 = vunpack.c.l.b16 %v6542
        %v7395 = vunpack.c.h.b16 %v6542
        %v7396 = vunpack.c.l.b16 %v6543
        %v7397 = vunpack.c.h.b16 %v6543
        %v7398 = vunpack.c.l.b16 %v6544
        %v7399 = vunpack.c.h.b16 %v6544
        %v7400 = vunpack.c.l.b16 %v6545
        %v7401 = vunpack.c.h.b16 %v6545
        %v7402 = vunpack.c.l.b16 %v6546
        %v7403 = vunpack.c.h.b16 %v6546
        %v7404 = vunpack.c.l.b16 %v6547
        %v7405 = vunpack.c.h.b16 %v6547
        %v7406 = vunpack.c.l.b16 %v6548
        %v7407 = vunpack.c.h.b16 %v6548
        %v7408 = vunpack.c.l.b16 %v6549
        %v7409 = vunpack.c.h.b16 %v6549
        %v7410 = vunpack.c.l.b16 %v6550
        %v7411 = vunpack.c.h.b16 %v6550
        %v7412 = vunpack.c.l.b16 %v6551
        %v7413 = vunpack.c.h.b16 %v6551
        %v7414 = vunpack.c.l.b16 %v6552
        %v7415 = vunpack.c.h.b16 %v6552
        %v7416 = vunpack.c.l.b16 %v6553
        %v7417 = vunpack.c.h.b16 %v6553
        %v7418 = vpack.c.b16 %v6848, %v6842
        %v7419 = vpack.c.b16 %v6849, %v6843
        %v7420 = vpack.c.b16 %v6850, %v6844
        %v7421 = vpack.c.b16 %v6851, %v6845
        %v7422 = vpack.c.b16 %v6852, %v6846
        %v7423 = vpack.c.b16 %v6853, %v6847
        %v7424 = vpack.c.b16 %v6860, %v6854
        %v7425 = vpack.c.b16 %v6861, %v6855
        %v7426 = vpack.c.b16 %v6862, %v6856
        %v7427 = vpack.c.b16 %v6863, %v6857
        %v7428 = vpack.c.b16 %v6864, %v6858
        %v7429 = vpack.c.b16 %v6865, %v6859
        %v7430 = vpack.c.b16 %v6872, %v6866
        %v7431 = vpack.c.b16 %v6873, %v6867
        %v7432 = vpack.c.b16 %v6874, %v6868
        %v7433 = vpack.c.b16 %v6875, %v6869
        %v7434 = vpack.c.b16 %v6876, %v6870
        %v7435 = vpack.c.b16 %v6877, %v6871
        %v7436 = vpack.c.b16 %v6884, %v6878
        %v7437 = vpack.c.b16 %v6885, %v6879
        %v7438 = vpack.c.b16 %v6886, %v6880
        %v7439 = vpack.c.b16 %v6887, %v6881
        %v7440 = vpack.c.b16 %v6888, %v6882
        %v7441 = vpack.c.b16 %v6889, %v6883
        %v7442 = vpack.c.b16 %v6896, %v6890
        %v7443 = vpack.c.b16 %v6897, %v6891
        %v7444 = vpack.c.b16 %v6898, %v6892
        %v7445 = vpack.c.b16 %v6899, %v6893
        %v7446 = vpack.c.b16 %v6900, %v6894
        %v7447 = vpack.c.b16 %v6901, %v6895
        %v7448 = vpack.c.b16 %v6908, %v6902
        %v7449 = vpack.c.b16 %v6909, %v6903
        %v7450 = vpack.c.b16 %v6910, %v6904
        %v7451 = vpack.c.b16 %v6911, %v6905
        %v7452 = vpack.c.b16 %v6912, %v6906
        %v7453 = vpack.c.b16 %v6913, %v6907
        %v7454 = vpack.c.b16 %v6920, %v6914
        %v7455 = vpack.c.b16 %v6921, %v6915
        %v7456 = vpack.c.b16 %v6922, %v6916
        %v7457 = vpack.c.b16 %v6923, %v6917
        %v7458 = vpack.c.b16 %v6924, %v6918
        %v7459 = vpack.c.b16 %v6925, %v6919
        %v7460 = vpack.c.b16 %v6932, %v6926
        %v7461 = vpack.c.b16 %v6933, %v6927
        %v7462 = vpack.c.b16 %v6934, %v6928
        %v7463 = vpack.c.b16 %v6935, %v6929
        %v7464 = vpack.c.b16 %v6936, %v6930
        %v7465 = vpack.c.b16 %v6937, %v6931
        %v7466 = vpack.c.b16 %v6944, %v6938
        %v7467 = vpack.c.b16 %v6945, %v6939
        %v7468 = vpack.c.b16 %v6946, %v6940
        %v7469 = vpack.c.b16 %v6947, %v6941
        %v7470 = vpack.c.b16 %v6948, %v6942
        %v7471 = vpack.c.b16 %v6949, %v6943
        %v7472 = vpack.c.b16 %v6956, %v6950
        %v7473 = vpack.c.b16 %v6957, %v6951
        %v7474 = vpack.c.b16 %v6958, %v6952
        %v7475 = vpack.c.b16 %v6959, %v6953
        %v7476 = vpack.c.b16 %v6960, %v6954
        %v7477 = vpack.c.b16 %v6961, %v6955
        %v7478 = vpack.c.b16 %v6968, %v6962
        %v7479 = vpack.c.b16 %v6969, %v6963
        %v7480 = vpack.c.b16 %v6970, %v6964
        %v7481 = vpack.c.b16 %v6971, %v6965
        %v7482 = vpack.c.b16 %v6972, %v6966
        %v7483 = vpack.c.b16 %v6973, %v6967
        %v7484 = vpack.c.b16 %v6980, %v6974
        %v7485 = vpack.c.b16 %v6981, %v6975
        %v7486 = vpack.c.b16 %v6982, %v6976
        %v7487 = vpack.c.b16 %v6983, %v6977
        %v7488 = vpack.c.b16 %v6984, %v6978
        %v7489 = vpack.c.b16 %v6985, %v6979
        %v7490 = vpack.c.b16 %v6992, %v6986
        %v7491 = vpack.c.b16 %v6993, %v6987
        %v7492 = vpack.c.b16 %v6994, %v6988
        %v7493 = vpack.c.b16 %v6995, %v6989
        %v7494 = vpack.c.b16 %v6996, %v6990
        %v7495 = vpack.c.b16 %v6997, %v6991
        %v7496 = vpack.c.b16 %v7004, %v6998
        %v7497 = vpack.c.b16 %v7005, %v6999
        %v7498 = vpack.c.b16 %v7006, %v7000
        %v7499 = vpack.c.b16 %v7007, %v7001
        %v7500 = vpack.c.b16 %v7008, %v7002
        %v7501 = vpack.c.b16 %v7009, %v7003
        %v7502 = vpack.c.b16 %v7016, %v7010
        %v7503 = vpack.c.b16 %v7017, %v7011
        %v7504 = vpack.c.b16 %v7018, %v7012
        %v7505 = vpack.c.b16 %v7019, %v7013
        %v7506 = vpack.c.b16 %v7020, %v7014
        %v7507 = vpack.c.b16 %v7021, %v7015
        %v7508 = vpack.c.b16 %v7028, %v7022
        %v7509 = vpack.c.b16 %v7029, %v7023
        %v7510 = vpack.c.b16 %v7030, %v7024
        %v7511 = vpack.c.b16 %v7031, %v7025
        %v7512 = vpack.c.b16 %v7032, %v7026
        %v7513 = vpack.c.b16 %v7033, %v7027
        %v7514 = vpack.c.b16 %v7040, %v7034
        %v7515 = vpack.c.b16 %v7041, %v7035
        %v7516 = vpack.c.b16 %v7042, %v7036
        %v7517 = vpack.c.b16 %v7043, %v7037
        %v7518 = vpack.c.b16 %v7044, %v7038
        %v7519 = vpack.c.b16 %v7045, %v7039
        %v7520 = vpack.c.b16 %v7052, %v7046
        %v7521 = vpack.c.b16 %v7053, %v7047
        %v7522 = vpack.c.b16 %v7054, %v7048
        %v7523 = vpack.c.b16 %v7055, %v7049
        %v7524 = vpack.c.b16 %v7056, %v7050
        %v7525 = vpack.c.b16 %v7057, %v7051
        %v7526 = vpack.c.b16 %v7064, %v7058
        %v7527 = vpack.c.b16 %v7065, %v7059
        %v7528 = vpack.c.b16 %v7066, %v7060
        %v7529 = vpack.c.b16 %v7067, %v7061
        %v7530 = vpack.c.b16 %v7068, %v7062
        %v7531 = vpack.c.b16 %v7069, %v7063
        %v7532 = vpack.c.b16 %v7076, %v7070
        %v7533 = vpack.c.b16 %v7077, %v7071
        %v7534 = vpack.c.b16 %v7078, %v7072
        %v7535 = vpack.c.b16 %v7079, %v7073
        %v7536 = vpack.c.b16 %v7080, %v7074
        %v7537 = vpack.c.b16 %v7081, %v7075
        %v7538 = vpack.c.b16 %v7088, %v7082
        %v7539 = vpack.c.b16 %v7089, %v7083
        %v7540 = vpack.c.b16 %v7090, %v7084
        %v7541 = vpack.c.b16 %v7091, %v7085
        %v7542 = vpack.c.b16 %v7092, %v7086
        %v7543 = vpack.c.b16 %v7093, %v7087
        %v7544 = vpack.c.b16 %v7100, %v7094
        %v7545 = vpack.c.b16 %v7101, %v7095
        %v7546 = vpack.c.b16 %v7102, %v7096
        %v7547 = vpack.c.b16 %v7103, %v7097
        %v7548 = vpack.c.b16 %v7104, %v7098
        %v7549 = vpack.c.b16 %v7105, %v7099
        %v7550 = vpack.c.b16 %v7112, %v7106
        %v7551 = vpack.c.b16 %v7113, %v7107
        %v7552 = vpack.c.b16 %v7114, %v7108
        %v7553 = vpack.c.b16 %v7115, %v7109
        %v7554 = vpack.c.b16 %v7116, %v7110
        %v7555 = vpack.c.b16 %v7117, %v7111
        %v7556 = vpack.c.b16 %v7124, %v7118
        %v7557 = vpack.c.b16 %v7125, %v7119
        %v7558 = vpack.c.b16 %v7126, %v7120
        %v7559 = vpack.c.b16 %v7127, %v7121
        %v7560 = vpack.c.b16 %v7128, %v7122
        %v7561 = vpack.c.b16 %v7129, %v7123
        %v7562 = vpack.c.b16 %v7136, %v7130
        %v7563 = vpack.c.b16 %v7137, %v7131
        %v7564 = vpack.c.b16 %v7138, %v7132
        %v7565 = vpack.c.b16 %v7139, %v7133
        %v7566 = vpack.c.b16 %v7140, %v7134
        %v7567 = vpack.c.b16 %v7141, %v7135
        %v7568 = vpack.c.b16 %v7148, %v7142
        %v7569 = vpack.c.b16 %v7149, %v7143
        %v7570 = vpack.c.b16 %v7150, %v7144
        %v7571 = vpack.c.b16 %v7151, %v7145
        %v7572 = vpack.c.b16 %v7152, %v7146
        %v7573 = vpack.c.b16 %v7153, %v7147
        %v7574 = vpack.c.b16 %v7160, %v7154
        %v7575 = vpack.c.b16 %v7161, %v7155
        %v7576 = vpack.c.b16 %v7162, %v7156
        %v7577 = vpack.c.b16 %v7163, %v7157
        %v7578 = vpack.c.b16 %v7164, %v7158
        %v7579 = vpack.c.b16 %v7165, %v7159
        %v7580 = vpack.c.b16 %v7172, %v7166
        %v7581 = vpack.c.b16 %v7173, %v7167
        %v7582 = vpack.c.b16 %v7174, %v7168
        %v7583 = vpack.c.b16 %v7175, %v7169
        %v7584 = vpack.c.b16 %v7176, %v7170
        %v7585 = vpack.c.b16 %v7177, %v7171
        %v7586 = vpack.c.b16 %v7184, %v7178
        %v7587 = vpack.c.b16 %v7185, %v7179
        %v7588 = vpack.c.b16 %v7186, %v7180
        %v7589 = vpack.c.b16 %v7187, %v7181
        %v7590 = vpack.c.b16 %v7188, %v7182
        %v7591 = vpack.c.b16 %v7189, %v7183
        %v7592 = vpack.c.b16 %v7196, %v7190
        %v7593 = vpack.c.b16 %v7197, %v7191
        %v7594 = vpack.c.b16 %v7198, %v7192
        %v7595 = vpack.c.b16 %v7199, %v7193
        %v7596 = vpack.c.b16 %v7200, %v7194
        %v7597 = vpack.c.b16 %v7201, %v7195
        %v7598 = vpack.c.b16 %v7208, %v7202
        %v7599 = vpack.c.b16 %v7209, %v7203
        %v7600 = vpack.c.b16 %v7210, %v7204
        %v7601 = vpack.c.b16 %v7211, %v7205
        %v7602 = vpack.c.b16 %v7212, %v7206
        %v7603 = vpack.c.b16 %v7213, %v7207
        %v7604 = vpack.c.b16 %v7220, %v7214
        %v7605 = vpack.c.b16 %v7221, %v7215
        %v7606 = vpack.c.b16 %v7222, %v7216
        %v7607 = vpack.c.b16 %v7223, %v7217
        %v7608 = vpack.c.b16 %v7224, %v7218
        %v7609 = vpack.c.b16 %v7225, %v7219
        %v7610 = vpack.c.b16 %v7232, %v7226
        %v7611 = vpack.c.b16 %v7233, %v7227
        %v7612 = vpack.c.b16 %v7234, %v7228
        %v7613 = vpack.c.b16 %v7235, %v7229
        %v7614 = vpack.c.b16 %v7236, %v7230
        %v7615 = vpack.c.b16 %v7237, %v7231
        %v7616 = vpack.c.b16 %v7244, %v7238
        %v7617 = vpack.c.b16 %v7245, %v7239
        %v7618 = vpack.c.b16 %v7246, %v7240
        %v7619 = vpack.c.b16 %v7247, %v7241
        %v7620 = vpack.c.b16 %v7248, %v7242
        %v7621 = vpack.c.b16 %v7249, %v7243
        %v7622 = vpack.c.b16 %v7256, %v7250
        %v7623 = vpack.c.b16 %v7257, %v7251
        %v7624 = vpack.c.b16 %v7258, %v7252
        %v7625 = vpack.c.b16 %v7259, %v7253
        %v7626 = vpack.c.b16 %v7260, %v7254
        %v7627 = vpack.c.b16 %v7261, %v7255
        %v7628 = vpack.c.b16 %v7268, %v7262
        %v7629 = vpack.c.b16 %v7269, %v7263
        %v7630 = vpack.c.b16 %v7270, %v7264
        %v7631 = vpack.c.b16 %v7271, %v7265
        %v7632 = vpack.c.b16 %v7272, %v7266
        %v7633 = vpack.c.b16 %v7273, %v7267
        %v7634 = vpack.c.b16 %v7280, %v7274
        %v7635 = vpack.c.b16 %v7281, %v7275
        %v7636 = vpack.c.b16 %v7282, %v7276
        %v7637 = vpack.c.b16 %v7283, %v7277
        %v7638 = vpack.c.b16 %v7284, %v7278
        %v7639 = vpack.c.b16 %v7285, %v7279
        %v7640 = vpack.c.b16 %v7292, %v7286
        %v7641 = vpack.c.b16 %v7293, %v7287
        %v7642 = vpack.c.b16 %v7294, %v7288
        %v7643 = vpack.c.b16 %v7295, %v7289
        %v7644 = vpack.c.b16 %v7296, %v7290
        %v7645 = vpack.c.b16 %v7297, %v7291
        %v7646 = vpack.c.b16 %v7304, %v7298
        %v7647 = vpack.c.b16 %v7305, %v7299
        %v7648 = vpack.c.b16 %v7306, %v7300
        %v7649 = vpack.c.b16 %v7307, %v7301
        %v7650 = vpack.c.b16 %v7308, %v7302
        %v7651 = vpack.c.b16 %v7309, %v7303
        %v7652 = vpack.c.b16 %v7316, %v7310
        %v7653 = vpack.c.b16 %v7317, %v7311
        %v7654 = vpack.c.b16 %v7318, %v7312
        %v7655 = vpack.c.b16 %v7319, %v7313
        %v7656 = vpack.c.b16 %v7320, %v7314
        %v7657 = vpack.c.b16 %v7321, %v7315
        %v7658 = vpack.c.b16 %v7328, %v7322
        %v7659 = vpack.c.b16 %v7329, %v7323
        %v7660 = vpack.c.b16 %v7330, %v7324
        %v7661 = vpack.c.b16 %v7331, %v7325
        %v7662 = vpack.c.b16 %v7332, %v7326
        %v7663 = vpack.c.b16 %v7333, %v7327
        %v7664 = vpack.c.b16 %v7340, %v7334
        %v7665 = vpack.c.b16 %v7341, %v7335
        %v7666 = vpack.c.b16 %v7342, %v7336
        %v7667 = vpack.c.b16 %v7343, %v7337
        %v7668 = vpack.c.b16 %v7344, %v7338
        %v7669 = vpack.c.b16 %v7345, %v7339
        %v7670 = vpack.c.b16 %v7352, %v7346
        %v7671 = vpack.c.b16 %v7353, %v7347
        %v7672 = vpack.c.b16 %v7354, %v7348
        %v7673 = vpack.c.b16 %v7355, %v7349
        %v7674 = vpack.c.b16 %v7356, %v7350
        %v7675 = vpack.c.b16 %v7357, %v7351
        %v7676 = vpack.c.b16 %v7364, %v7358
        %v7677 = vpack.c.b16 %v7365, %v7359
        %v7678 = vpack.c.b16 %v7366, %v7360
        %v7679 = vpack.c.b16 %v7367, %v7361
        %v7680 = vpack.c.b16 %v7368, %v7362
        %v7681 = vpack.c.b16 %v7369, %v7363
        %v7682 = vpack.c.b16 %v7376, %v7370
        %v7683 = vpack.c.b16 %v7377, %v7371
        %v7684 = vpack.c.b16 %v7378, %v7372
        %v7685 = vpack.c.b16 %v7379, %v7373
        %v7686 = vpack.c.b16 %v7380, %v7374
        %v7687 = vpack.c.b16 %v7381, %v7375
        %v7688 = vpack.c.b16 %v7388, %v7382
        %v7689 = vpack.c.b16 %v7389, %v7383
        %v7690 = vpack.c.b16 %v7390, %v7384
        %v7691 = vpack.c.b16 %v7391, %v7385
        %v7692 = vpack.c.b16 %v7392, %v7386
        %v7693 = vpack.c.b16 %v7393, %v7387
        %v7694 = vpack.c.b16 %v7400, %v7394
        %v7695 = vpack.c.b16 %v7401, %v7395
        %v7696 = vpack.c.b16 %v7402, %v7396
        %v7697 = vpack.c.b16 %v7403, %v7397
        %v7698 = vpack.c.b16 %v7404, %v7398
        %v7699 = vpack.c.b16 %v7405, %v7399
        %v7700 = vpack.c.b16 %v7412, %v7406
        %v7701 = vpack.c.b16 %v7413, %v7407
        %v7702 = vpack.c.b16 %v7414, %v7408
        %v7703 = vpack.c.b16 %v7415, %v7409
        %v7704 = vpack.c.b16 %v7416, %v7410
        %v7705 = vpack.c.b16 %v7417, %v7411
        %7994 = vmatprep.subr.bf16.mxu0 %v7419
        %7995 = vmatpush1.bf16.msra.mxu0 %v7418
        %7996 = vmatprep.subr.bf16.mxu0 %v7425
        %7997 = vmatpush1.bf16.msra.mxu0 %v7424
        %7998 = vmatprep.subr.bf16.mxu0 %v7431
        %7999 = vmatpush1.bf16.msra.mxu0 %v7430
        %8000 = vmatprep.subr.bf16.mxu0 %v7437
        %8001 = vmatpush1.bf16.msra.mxu0 %v7436
        %8002 = vmatprep.subr.bf16.mxu0 %v7443
        %8003 = vmatpush1.bf16.msra.mxu0 %v7442
        %8004 = vmatprep.subr.bf16.mxu0 %v7449
        %8005 = vmatpush1.bf16.msra.mxu0 %v7448
        %8006 = vmatprep.subr.bf16.mxu0 %v7455
        %8007 = vmatpush1.bf16.msra.mxu0 %v7454
        %8008 = vmatprep.subr.bf16.mxu0 %v7461
        %8009 = vmatpush1.bf16.msra.mxu0 %v7460
        %8010 = vmatprep.subr.bf16.mxu0 %v7467
        %8011 = vmatpush1.bf16.msra.mxu0 %v7466
        %8012 = vmatprep.subr.bf16.mxu0 %v7473
        %8013 = vmatpush1.bf16.msra.mxu0 %v7472
        %8014 = vmatprep.subr.bf16.mxu0 %v7479
        %8015 = vmatpush1.bf16.msra.mxu0 %v7478
        %8016 = vmatprep.subr.bf16.mxu0 %v7485
        %8017 = vmatpush1.bf16.msra.mxu0 %v7484
        %8018 = vmatprep.subr.bf16.mxu0 %v7491
        %8019 = vmatpush1.bf16.msra.mxu0 %v7490
        %8020 = vmatprep.subr.bf16.mxu0 %v7497
        %8021 = vmatpush1.bf16.msra.mxu0 %v7496
        %8022 = vmatprep.subr.bf16.mxu0 %v7503
        %8023 = vmatpush1.bf16.msra.mxu0 %v7502
        %8024 = vmatprep.subr.bf16.mxu0 %v7509
        %8025 = vmatpush1.bf16.msra.mxu0 %v7508
        %8026 = vmatprep.mubr.bf16.mxu0 %v6195
        %8027 = vmatmul.mubr.bf16.gmra.mrb[0].mxu0 %v6194
        %v8028 = vpop.f32.mrb[0].mxu0
        %v8029 = vadd.f32 0.0, %v8028
        %v8030 = vpop.f32.mrb[0].mxu0
        %v8031 = vadd.f32 0.0, %v8030
        %v8032 = vpop.f32.mrb[0].mxu0
        %v8033 = vadd.f32 0.0, %v8032
        %v8034 = vpop.f32.mrb[0].mxu0
        %v8035 = vadd.f32 0.0, %v8034
        %8036 = vmatprep.mubr.bf16.mxu0 %v6201
        %8037 = vmatmul.mubr.bf16.gmra.mrb[0].mxu0 %v6200
        %v8038 = vpop.f32.mrb[0].mxu0
        %v8039 = vadd.f32 0.0, %v8038
        %v8040 = vpop.f32.mrb[0].mxu0
        %v8041 = vadd.f32 0.0, %v8040
        %v8042 = vpop.f32.mrb[0].mxu0
        %v8043 = vadd.f32 0.0, %v8042
        %v8044 = vpop.f32.mrb[0].mxu0
        %v8045 = vadd.f32 0.0, %v8044
        %8046 = vmatprep.mubr.bf16.mxu0 %v6207
        %8047 = vmatmul.mubr.bf16.gmra.mrb[0].mxu0 %v6206
        %v8048 = vpop.f32.mrb[0].mxu0
        %v8049 = vadd.f32 0.0, %v8048
        %v8050 = vpop.f32.mrb[0].mxu0
        %v8051 = vadd.f32 0.0, %v8050
        %v8052 = vpop.f32.mrb[0].mxu0
        %v8053 = vadd.f32 0.0, %v8052
        %v8054 = vpop.f32.mrb[0].mxu0
        %v8055 = vadd.f32 0.0, %v8054
        %8056 = vmatprep.mubr.bf16.mxu0 %v6213
        %8057 = vmatmul.mubr.bf16.gmra.mrb[0].mxu0 %v6212
        %v8058 = vpop.f32.mrb[0].mxu0
        %v8059 = vadd.f32 0.0, %v8058
        %v8060 = vpop.f32.mrb[0].mxu0
        %v8061 = vadd.f32 0.0, %v8060
        %v8062 = vpop.f32.mrb[0].mxu0
        %v8063 = vadd.f32 0.0, %v8062
        %v8064 = vpop.f32.mrb[0].mxu0
        %v8065 = vadd.f32 0.0, %v8064
        %8066 = vmatprep.mubr.bf16.mxu0 %v6219
        %8067 = vmatmul.mubr.bf16.gmra.mrb[0].mxu0 %v6218
        %v8068 = vpop.f32.mrb[0].mxu0
        %v8069 = vadd.f32 0.0, %v8068
        %v8070 = vpop.f32.mrb[0].mxu0
        %v8071 = vadd.f32 0.0, %v8070
        %v8072 = vpop.f32.mrb[0].mxu0
        %v8073 = vadd.f32 0.0, %v8072
        %v8074 = vpop.f32.mrb[0].mxu0
        %v8075 = vadd.f32 0.0, %v8074
        %8076 = vmatprep.mubr.bf16.mxu0 %v6225
        %8077 = vmatmul.mubr.bf16.gmra.mrb[0].mxu0 %v6224
        %v8078 = vpop.f32.mrb[0].mxu0
        %v8079 = vadd.f32 0.0, %v8078
        %v8080 = vpop.f32.mrb[0].mxu0
        %v8081 = vadd.f32 0.0, %v8080
        %v8082 = vpop.f32.mrb[0].mxu0
        %v8083 = vadd.f32 0.0, %v8082
        %v8084 = vpop.f32.mrb[0].mxu0
        %v8085 = vadd.f32 0.0, %v8084
        %8086 = vmatprep.mubr.bf16.mxu0 %v6231
        %8087 = vmatmul.mubr.bf16.gmra.mrb[0].mxu0 %v6230
        %v8088 = vpop.f32.mrb[0].mxu0
        %v8089 = vadd.f32 0.0, %v8088
        %v8090 = vpop.f32.mrb[0].mxu0
        %v8091 = vadd.f32 0.0, %v8090
        %v8092 = vpop.f32.mrb[0].mxu0
        %v8093 = vadd.f32 0.0, %v8092
        %v8094 = vpop.f32.mrb[0].mxu0
        %v8095 = vadd.f32 0.0, %v8094
        %8096 = vmatprep.mubr.bf16.mxu0 %v6237
        %8097 = vmatmul.mubr.bf16.gmra.mrb[0].mxu0 %v6236
        %v8098 = vpop.f32.mrb[0].mxu0
        %v8099 = vadd.f32 0.0, %v8098
        %v8100 = vpop.f32.mrb[0].mxu0
        %v8101 = vadd.f32 0.0, %v8100
        %v8102 = vpop.f32.mrb[0].mxu0
        %v8103 = vadd.f32 0.0, %v8102
        %v8104 = vpop.f32.mrb[0].mxu0
        %v8105 = vadd.f32 0.0, %v8104
        %8106 = vmatprep.mubr.bf16.mxu0 %v6243
        %8107 = vmatmul.mubr.bf16.gmra.mrb[0].mxu0 %v6242
        %v8108 = vpop.f32.mrb[0].mxu0
        %v8109 = vadd.f32 0.0, %v8108
        %v8110 = vpop.f32.mrb[0].mxu0
        %v8111 = vadd.f32 0.0, %v8110
        %v8112 = vpop.f32.mrb[0].mxu0
        %v8113 = vadd.f32 0.0, %v8112
        %v8114 = vpop.f32.mrb[0].mxu0
        %v8115 = vadd.f32 0.0, %v8114
        %8116 = vmatprep.mubr.bf16.mxu0 %v6249
        %8117 = vmatmul.mubr.bf16.gmra.mrb[0].mxu0 %v6248
        %v8118 = vpop.f32.mrb[0].mxu0
        %v8119 = vadd.f32 0.0, %v8118
        %v8120 = vpop.f32.mrb[0].mxu0
        %v8121 = vadd.f32 0.0, %v8120
        %v8122 = vpop.f32.mrb[0].mxu0
        %v8123 = vadd.f32 0.0, %v8122
        %v8124 = vpop.f32.mrb[0].mxu0
        %v8125 = vadd.f32 0.0, %v8124
        %8126 = vmatprep.mubr.bf16.mxu0 %v6255
        %8127 = vmatmul.mubr.bf16.gmra.mrb[0].mxu0 %v6254
        %v8128 = vpop.f32.mrb[0].mxu0
        %v8129 = vadd.f32 0.0, %v8128
        %v8130 = vpop.f32.mrb[0].mxu0
        %v8131 = vadd.f32 0.0, %v8130
        %v8132 = vpop.f32.mrb[0].mxu0
        %v8133 = vadd.f32 0.0, %v8132
        %v8134 = vpop.f32.mrb[0].mxu0
        %v8135 = vadd.f32 0.0, %v8134
        %8136 = vmatprep.mubr.bf16.mxu0 %v6261
        %8137 = vmatmul.mubr.bf16.gmra.mrb[0].mxu0 %v6260
        %v8138 = vpop.f32.mrb[0].mxu0
        %v8139 = vadd.f32 0.0, %v8138
        %v8140 = vpop.f32.mrb[0].mxu0
        %v8141 = vadd.f32 0.0, %v8140
        %v8142 = vpop.f32.mrb[0].mxu0
        %v8143 = vadd.f32 0.0, %v8142
        %v8144 = vpop.f32.mrb[0].mxu0
        %v8145 = vadd.f32 0.0, %v8144
        %8146 = vdwg.mxu0
        %8147 = vmatprep.subr.bf16.mxu0 %v7515
        %8148 = vmatpush1.bf16.msra.mxu0 %v7514
        %8149 = vmatprep.subr.bf16.mxu0 %v7521
        %8150 = vmatpush1.bf16.msra.mxu0 %v7520
        %8151 = vmatprep.subr.bf16.mxu0 %v7527
        %8152 = vmatpush1.bf16.msra.mxu0 %v7526
        %8153 = vmatprep.subr.bf16.mxu0 %v7533
        %8154 = vmatpush1.bf16.msra.mxu0 %v7532
        %8155 = vmatprep.subr.bf16.mxu0 %v7539
        %8156 = vmatpush1.bf16.msra.mxu0 %v7538
        %8157 = vmatprep.subr.bf16.mxu0 %v7545
        %8158 = vmatpush1.bf16.msra.mxu0 %v7544
        %8159 = vmatprep.subr.bf16.mxu0 %v7551
        %8160 = vmatpush1.bf16.msra.mxu0 %v7550
        %8161 = vmatprep.subr.bf16.mxu0 %v7557
        %8162 = vmatpush1.bf16.msra.mxu0 %v7556
        %8163 = vmatprep.subr.bf16.mxu0 %v7563
        %8164 = vmatpush1.bf16.msra.mxu0 %v7562
        %8165 = vmatprep.subr.bf16.mxu0 %v7569
        %8166 = vmatpush1.bf16.msra.mxu0 %v7568
        %8167 = vmatprep.subr.bf16.mxu0 %v7575
        %8168 = vmatpush1.bf16.msra.mxu0 %v7574
        %8169 = vmatprep.subr.bf16.mxu0 %v7581
        %8170 = vmatpush1.bf16.msra.mxu0 %v7580
        %8171 = vmatprep.subr.bf16.mxu0 %v7587
        %8172 = vmatpush1.bf16.msra.mxu0 %v7586
        %8173 = vmatprep.subr.bf16.mxu0 %v7593
        %8174 = vmatpush1.bf16.msra.mxu0 %v7592
        %8175 = vmatprep.subr.bf16.mxu0 %v7599
        %8176 = vmatpush1.bf16.msra.mxu0 %v7598
        %8177 = vmatprep.subr.bf16.mxu0 %v7605
        %8178 = vmatpush1.bf16.msra.mxu0 %v7604
        %8179 = vmatprep.mubr.bf16.mxu0 %v6197
        %8180 = vmatmul.mubr.bf16.gmra.mrb[0].mxu0 %v6196
        %v8181 = vpop.f32.mrb[0].mxu0
        %v8182 = vadd.f32 %v8029, %v8181
        %v8183 = vpop.f32.mrb[0].mxu0
        %v8184 = vadd.f32 %v8031, %v8183
        %v8185 = vpop.f32.mrb[0].mxu0
        %v8186 = vadd.f32 %v8033, %v8185
        %v8187 = vpop.f32.mrb[0].mxu0
        %v8188 = vadd.f32 %v8035, %v8187
        %8189 = vmatprep.mubr.bf16.mxu0 %v6203
        %8190 = vmatmul.mubr.bf16.gmra.mrb[0].mxu0 %v6202
        %v8191 = vpop.f32.mrb[0].mxu0
        %v8192 = vadd.f32 %v8039, %v8191
        %v8193 = vpop.f32.mrb[0].mxu0
        %v8194 = vadd.f32 %v8041, %v8193
        %v8195 = vpop.f32.mrb[0].mxu0
        %v8196 = vadd.f32 %v8043, %v8195
        %v8197 = vpop.f32.mrb[0].mxu0
        %v8198 = vadd.f32 %v8045, %v8197
        %8199 = vmatprep.mubr.bf16.mxu0 %v6209
        %8200 = vmatmul.mubr.bf16.gmra.mrb[0].mxu0 %v6208
        %v8201 = vpop.f32.mrb[0].mxu0
        %v8202 = vadd.f32 %v8049, %v8201
        %v8203 = vpop.f32.mrb[0].mxu0
        %v8204 = vadd.f32 %v8051, %v8203
        %v8205 = vpop.f32.mrb[0].mxu0
        %v8206 = vadd.f32 %v8053, %v8205
        %v8207 = vpop.f32.mrb[0].mxu0
        %v8208 = vadd.f32 %v8055, %v8207
        %8209 = vmatprep.mubr.bf16.mxu0 %v6215
        %8210 = vmatmul.mubr.bf16.gmra.mrb[0].mxu0 %v6214
        %v8211 = vpop.f32.mrb[0].mxu0
        %v8212 = vadd.f32 %v8059, %v8211
        %v8213 = vpop.f32.mrb[0].mxu0
        %v8214 = vadd.f32 %v8061, %v8213
        %v8215 = vpop.f32.mrb[0].mxu0
        %v8216 = vadd.f32 %v8063, %v8215
        %v8217 = vpop.f32.mrb[0].mxu0
        %v8218 = vadd.f32 %v8065, %v8217
        %8219 = vmatprep.mubr.bf16.mxu0 %v6221
        %8220 = vmatmul.mubr.bf16.gmra.mrb[0].mxu0 %v6220
        %v8221 = vpop.f32.mrb[0].mxu0
        %v8222 = vadd.f32 %v8069, %v8221
        %v8223 = vpop.f32.mrb[0].mxu0
        %v8224 = vadd.f32 %v8071, %v8223
        %v8225 = vpop.f32.mrb[0].mxu0
        %v8226 = vadd.f32 %v8073, %v8225
        %v8227 = vpop.f32.mrb[0].mxu0
        %v8228 = vadd.f32 %v8075, %v8227
        %8229 = vmatprep.mubr.bf16.mxu0 %v6227
        %8230 = vmatmul.mubr.bf16.gmra.mrb[0].mxu0 %v6226
        %v8231 = vpop.f32.mrb[0].mxu0
        %v8232 = vadd.f32 %v8079, %v8231
        %v8233 = vpop.f32.mrb[0].mxu0
        %v8234 = vadd.f32 %v8081, %v8233
        %v8235 = vpop.f32.mrb[0].mxu0
        %v8236 = vadd.f32 %v8083, %v8235
        %v8237 = vpop.f32.mrb[0].mxu0
        %v8238 = vadd.f32 %v8085, %v8237
        %8239 = vmatprep.mubr.bf16.mxu0 %v6233
        %8240 = vmatmul.mubr.bf16.gmra.mrb[0].mxu0 %v6232
        %v8241 = vpop.f32.mrb[0].mxu0
        %v8242 = vadd.f32 %v8089, %v8241
        %v8243 = vpop.f32.mrb[0].mxu0
        %v8244 = vadd.f32 %v8091, %v8243
        %v8245 = vpop.f32.mrb[0].mxu0
        %v8246 = vadd.f32 %v8093, %v8245
        %v8247 = vpop.f32.mrb[0].mxu0
        %v8248 = vadd.f32 %v8095, %v8247
        %8249 = vmatprep.mubr.bf16.mxu0 %v6239
        %8250 = vmatmul.mubr.bf16.gmra.mrb[0].mxu0 %v6238
        %v8251 = vpop.f32.mrb[0].mxu0
        %v8252 = vadd.f32 %v8099, %v8251
        %v8253 = vpop.f32.mrb[0].mxu0
        %v8254 = vadd.f32 %v8101, %v8253
        %v8255 = vpop.f32.mrb[0].mxu0
        %v8256 = vadd.f32 %v8103, %v8255
        %v8257 = vpop.f32.mrb[0].mxu0
        %v8258 = vadd.f32 %v8105, %v8257
        %8259 = vmatprep.mubr.bf16.mxu0 %v6245
        %8260 = vmatmul.mubr.bf16.gmra.mrb[0].mxu0 %v6244
        %v8261 = vpop.f32.mrb[0].mxu0
        %v8262 = vadd.f32 %v8109, %v8261
        %v8263 = vpop.f32.mrb[0].mxu0
        %v8264 = vadd.f32 %v8111, %v8263
        %v8265 = vpop.f32.mrb[0].mxu0
        %v8266 = vadd.f32 %v8113, %v8265
        %v8267 = vpop.f32.mrb[0].mxu0
        %v8268 = vadd.f32 %v8115, %v8267
        %8269 = vmatprep.mubr.bf16.mxu0 %v6251
        %8270 = vmatmul.mubr.bf16.gmra.mrb[0].mxu0 %v6250
        %v8271 = vpop.f32.mrb[0].mxu0
        %v8272 = vadd.f32 %v8119, %v8271
        %v8273 = vpop.f32.mrb[0].mxu0
        %v8274 = vadd.f32 %v8121, %v8273
        %v8275 = vpop.f32.mrb[0].mxu0
        %v8276 = vadd.f32 %v8123, %v8275
        %v8277 = vpop.f32.mrb[0].mxu0
        %v8278 = vadd.f32 %v8125, %v8277
        %8279 = vmatprep.mubr.bf16.mxu0 %v6257
        %8280 = vmatmul.mubr.bf16.gmra.mrb[0].mxu0 %v6256
        %v8281 = vpop.f32.mrb[0].mxu0
        %v8282 = vadd.f32 %v8129, %v8281
        %v8283 = vpop.f32.mrb[0].mxu0
        %v8284 = vadd.f32 %v8131, %v8283
        %v8285 = vpop.f32.mrb[0].mxu0
        %v8286 = vadd.f32 %v8133, %v8285
        %v8287 = vpop.f32.mrb[0].mxu0
        %v8288 = vadd.f32 %v8135, %v8287
        %8289 = vmatprep.mubr.bf16.mxu0 %v6263
        %8290 = vmatmul.mubr.bf16.gmra.mrb[0].mxu0 %v6262
        %v8291 = vpop.f32.mrb[0].mxu0
        %v8292 = vadd.f32 %v8139, %v8291
        %v8293 = vpop.f32.mrb[0].mxu0
        %v8294 = vadd.f32 %v8141, %v8293
        %v8295 = vpop.f32.mrb[0].mxu0
        %v8296 = vadd.f32 %v8143, %v8295
        %v8297 = vpop.f32.mrb[0].mxu0
        %v8298 = vadd.f32 %v8145, %v8297
        %8299 = vdwg.mxu0
        %8300 = vmatprep.subr.bf16.mxu0 %v7611
        %8301 = vmatpush1.bf16.msra.mxu0 %v7610
        %8302 = vmatprep.subr.bf16.mxu0 %v7617
        %8303 = vmatpush1.bf16.msra.mxu0 %v7616
        %8304 = vmatprep.subr.bf16.mxu0 %v7623
        %8305 = vmatpush1.bf16.msra.mxu0 %v7622
        %8306 = vmatprep.subr.bf16.mxu0 %v7629
        %8307 = vmatpush1.bf16.msra.mxu0 %v7628
        %8308 = vmatprep.subr.bf16.mxu0 %v7635
        %8309 = vmatpush1.bf16.msra.mxu0 %v7634
        %8310 = vmatprep.subr.bf16.mxu0 %v7641
        %8311 = vmatpush1.bf16.msra.mxu0 %v7640
        %8312 = vmatprep.subr.bf16.mxu0 %v7647
        %8313 = vmatpush1.bf16.msra.mxu0 %v7646
        %8314 = vmatprep.subr.bf16.mxu0 %v7653
        %8315 = vmatpush1.bf16.msra.mxu0 %v7652
        %8316 = vmatprep.subr.bf16.mxu0 %v7659
        %8317 = vmatpush1.bf16.msra.mxu0 %v7658
        %8318 = vmatprep.subr.bf16.mxu0 %v7665
        %8319 = vmatpush1.bf16.msra.mxu0 %v7664
        %8320 = vmatprep.subr.bf16.mxu0 %v7671
        %8321 = vmatpush1.bf16.msra.mxu0 %v7670
        %8322 = vmatprep.subr.bf16.mxu0 %v7677
        %8323 = vmatpush1.bf16.msra.mxu0 %v7676
        %8324 = vmatprep.subr.bf16.mxu0 %v7683
        %8325 = vmatpush1.bf16.msra.mxu0 %v7682
        %8326 = vmatprep.subr.bf16.mxu0 %v7689
        %8327 = vmatpush1.bf16.msra.mxu0 %v7688
        %8328 = vmatprep.subr.bf16.mxu0 %v7695
        %8329 = vmatpush1.bf16.msra.mxu0 %v7694
        %8330 = vmatprep.subr.bf16.mxu0 %v7701
        %8331 = vmatpush1.bf16.msra.mxu0 %v7700
        %8332 = vmatprep.mubr.bf16.mxu0 %v6199
        %8333 = vmatmul.mubr.bf16.gmra.mrb[0].mxu0 %v6198
        %v8334 = vpop.f32.mrb[0].mxu0
        %v8335 = vadd.f32 %v8182, %v8334
        %v8336 = vpop.f32.mrb[0].mxu0
        %v8337 = vadd.f32 %v8184, %v8336
        %v8338 = vpop.f32.mrb[0].mxu0
        %v8339 = vadd.f32 %v8186, %v8338
        %v8340 = vpop.f32.mrb[0].mxu0
        %v8341 = vadd.f32 %v8188, %v8340
        %8342 = vmatprep.mubr.bf16.mxu0 %v6205
        %8343 = vmatmul.mubr.bf16.gmra.mrb[0].mxu0 %v6204
        %v8344 = vpop.f32.mrb[0].mxu0
        %v8345 = vadd.f32 %v8192, %v8344
        %v8346 = vpop.f32.mrb[0].mxu0
        %v8347 = vadd.f32 %v8194, %v8346
        %v8348 = vpop.f32.mrb[0].mxu0
        %v8349 = vadd.f32 %v8196, %v8348
        %v8350 = vpop.f32.mrb[0].mxu0
        %v8351 = vadd.f32 %v8198, %v8350
        %8352 = vmatprep.mubr.bf16.mxu0 %v6211
        %8353 = vmatmul.mubr.bf16.gmra.mrb[0].mxu0 %v6210
        %v8354 = vpop.f32.mrb[0].mxu0
        %v8355 = vadd.f32 %v8202, %v8354
        %v8356 = vpop.f32.mrb[0].mxu0
        %v8357 = vadd.f32 %v8204, %v8356
        %v8358 = vpop.f32.mrb[0].mxu0
        %v8359 = vadd.f32 %v8206, %v8358
        %v8360 = vpop.f32.mrb[0].mxu0
        %v8361 = vadd.f32 %v8208, %v8360
        %8362 = vmatprep.mubr.bf16.mxu0 %v6217
        %8363 = vmatmul.mubr.bf16.gmra.mrb[0].mxu0 %v6216
        %v8364 = vpop.f32.mrb[0].mxu0
        %v8365 = vadd.f32 %v8212, %v8364
        %v8366 = vpop.f32.mrb[0].mxu0
        %v8367 = vadd.f32 %v8214, %v8366
        %v8368 = vpop.f32.mrb[0].mxu0
        %v8369 = vadd.f32 %v8216, %v8368
        %v8370 = vpop.f32.mrb[0].mxu0
        %v8371 = vadd.f32 %v8218, %v8370
        %8372 = vmatprep.mubr.bf16.mxu0 %v6223
        %8373 = vmatmul.mubr.bf16.gmra.mrb[0].mxu0 %v6222
        %v8374 = vpop.f32.mrb[0].mxu0
        %v8375 = vadd.f32 %v8222, %v8374
        %v8376 = vpop.f32.mrb[0].mxu0
        %v8377 = vadd.f32 %v8224, %v8376
        %v8378 = vpop.f32.mrb[0].mxu0
        %v8379 = vadd.f32 %v8226, %v8378
        %v8380 = vpop.f32.mrb[0].mxu0
        %v8381 = vadd.f32 %v8228, %v8380
        %8382 = vmatprep.mubr.bf16.mxu0 %v6229
        %8383 = vmatmul.mubr.bf16.gmra.mrb[0].mxu0 %v6228
        %v8384 = vpop.f32.mrb[0].mxu0
        %v8385 = vadd.f32 %v8232, %v8384
        %v8386 = vpop.f32.mrb[0].mxu0
        %v8387 = vadd.f32 %v8234, %v8386
        %v8388 = vpop.f32.mrb[0].mxu0
        %v8389 = vadd.f32 %v8236, %v8388
        %v8390 = vpop.f32.mrb[0].mxu0
        %v8391 = vadd.f32 %v8238, %v8390
        %8392 = vmatprep.mubr.bf16.mxu0 %v6235
        %8393 = vmatmul.mubr.bf16.gmra.mrb[0].mxu0 %v6234
        %v8394 = vpop.f32.mrb[0].mxu0
        %v8395 = vadd.f32 %v8242, %v8394
        %v8396 = vpop.f32.mrb[0].mxu0
        %v8397 = vadd.f32 %v8244, %v8396
        %v8398 = vpop.f32.mrb[0].mxu0
        %v8399 = vadd.f32 %v8246, %v8398
        %v8400 = vpop.f32.mrb[0].mxu0
        %v8401 = vadd.f32 %v8248, %v8400
        %8402 = vmatprep.mubr.bf16.mxu0 %v6241
        %8403 = vmatmul.mubr.bf16.gmra.mrb[0].mxu0 %v6240
        %v8404 = vpop.f32.mrb[0].mxu0
        %v8405 = vadd.f32 %v8252, %v8404
        %v8406 = vpop.f32.mrb[0].mxu0
        %v8407 = vadd.f32 %v8254, %v8406
        %v8408 = vpop.f32.mrb[0].mxu0
        %v8409 = vadd.f32 %v8256, %v8408
        %v8410 = vpop.f32.mrb[0].mxu0
        %v8411 = vadd.f32 %v8258, %v8410
        %8412 = vmatprep.mubr.bf16.mxu0 %v6247
        %8413 = vmatmul.mubr.bf16.gmra.mrb[0].mxu0 %v6246
        %v8414 = vpop.f32.mrb[0].mxu0
        %v8415 = vadd.f32 %v8262, %v8414
        %v8416 = vpop.f32.mrb[0].mxu0
        %v8417 = vadd.f32 %v8264, %v8416
        %v8418 = vpop.f32.mrb[0].mxu0
        %v8419 = vadd.f32 %v8266, %v8418
        %v8420 = vpop.f32.mrb[0].mxu0
        %v8421 = vadd.f32 %v8268, %v8420
        %8422 = vmatprep.mubr.bf16.mxu0 %v6253
        %8423 = vmatmul.mubr.bf16.gmra.mrb[0].mxu0 %v6252
        %v8424 = vpop.f32.mrb[0].mxu0
        %v8425 = vadd.f32 %v8272, %v8424
        %v8426 = vpop.f32.mrb[0].mxu0
        %v8427 = vadd.f32 %v8274, %v8426
        %v8428 = vpop.f32.mrb[0].mxu0
        %v8429 = vadd.f32 %v8276, %v8428
        %v8430 = vpop.f32.mrb[0].mxu0
        %v8431 = vadd.f32 %v8278, %v8430
        %8432 = vmatprep.mubr.bf16.mxu0 %v6259
        %8433 = vmatmul.mubr.bf16.gmra.mrb[0].mxu0 %v6258
        %v8434 = vpop.f32.mrb[0].mxu0
        %v8435 = vadd.f32 %v8282, %v8434
        %v8436 = vpop.f32.mrb[0].mxu0
        %v8437 = vadd.f32 %v8284, %v8436
        %v8438 = vpop.f32.mrb[0].mxu0
        %v8439 = vadd.f32 %v8286, %v8438
        %v8440 = vpop.f32.mrb[0].mxu0
        %v8441 = vadd.f32 %v8288, %v8440
        %8442 = vmatprep.mubr.bf16.mxu0 %v6265
        %8443 = vmatmul.mubr.bf16.gmra.mrb[0].mxu0 %v6264
        %v8444 = vpop.f32.mrb[0].mxu0
        %v8445 = vadd.f32 %v8292, %v8444
        %v8446 = vpop.f32.mrb[0].mxu0
        %v8447 = vadd.f32 %v8294, %v8446
        %v8448 = vpop.f32.mrb[0].mxu0
        %v8449 = vadd.f32 %v8296, %v8448
        %v8450 = vpop.f32.mrb[0].mxu0
        %v8451 = vadd.f32 %v8298, %v8450
        %8452 = vdwg.mxu0
        %8453 = vmatprep.subr.bf16.mxu0 %v7421
        %8454 = vmatpush1.bf16.msra.mxu0 %v7420
        %8455 = vmatprep.subr.bf16.mxu0 %v7427
        %8456 = vmatpush1.bf16.msra.mxu0 %v7426
        %8457 = vmatprep.subr.bf16.mxu0 %v7433
        %8458 = vmatpush1.bf16.msra.mxu0 %v7432
        %8459 = vmatprep.subr.bf16.mxu0 %v7439
        %8460 = vmatpush1.bf16.msra.mxu0 %v7438
        %8461 = vmatprep.subr.bf16.mxu0 %v7445
        %8462 = vmatpush1.bf16.msra.mxu0 %v7444
        %8463 = vmatprep.subr.bf16.mxu0 %v7451
        %8464 = vmatpush1.bf16.msra.mxu0 %v7450
        %8465 = vmatprep.subr.bf16.mxu0 %v7457
        %8466 = vmatpush1.bf16.msra.mxu0 %v7456
        %8467 = vmatprep.subr.bf16.mxu0 %v7463
        %8468 = vmatpush1.bf16.msra.mxu0 %v7462
        %8469 = vmatprep.subr.bf16.mxu0 %v7469
        %8470 = vmatpush1.bf16.msra.mxu0 %v7468
        %8471 = vmatprep.subr.bf16.mxu0 %v7475
        %8472 = vmatpush1.bf16.msra.mxu0 %v7474
        %8473 = vmatprep.subr.bf16.mxu0 %v7481
        %8474 = vmatpush1.bf16.msra.mxu0 %v7480
        %8475 = vmatprep.subr.bf16.mxu0 %v7487
        %8476 = vmatpush1.bf16.msra.mxu0 %v7486
        %8477 = vmatprep.subr.bf16.mxu0 %v7493
        %8478 = vmatpush1.bf16.msra.mxu0 %v7492
        %8479 = vmatprep.subr.bf16.mxu0 %v7499
        %8480 = vmatpush1.bf16.msra.mxu0 %v7498
        %8481 = vmatprep.subr.bf16.mxu0 %v7505
        %8482 = vmatpush1.bf16.msra.mxu0 %v7504
        %8483 = vmatprep.subr.bf16.mxu0 %v7511
        %8484 = vmatpush1.bf16.msra.mxu0 %v7510
        %8485 = vmatprep.mubr.bf16.mxu0 %v6195
        %8486 = vmatmul.mubr.bf16.gmra.mrb[0].mxu0 %v6194
        %v8487 = vpop.f32.mrb[0].mxu0
        %v8488 = vadd.f32 0.0, %v8487
        %v8489 = vpop.f32.mrb[0].mxu0
        %v8490 = vadd.f32 0.0, %v8489
        %v8491 = vpop.f32.mrb[0].mxu0
        %v8492 = vadd.f32 0.0, %v8491
        %v8493 = vpop.f32.mrb[0].mxu0
        %v8494 = vadd.f32 0.0, %v8493
        %8495 = vmatprep.mubr.bf16.mxu0 %v6201
        %8496 = vmatmul.mubr.bf16.gmra.mrb[0].mxu0 %v6200
        %v8497 = vpop.f32.mrb[0].mxu0
        %v8498 = vadd.f32 0.0, %v8497
        %v8499 = vpop.f32.mrb[0].mxu0
        %v8500 = vadd.f32 0.0, %v8499
        %v8501 = vpop.f32.mrb[0].mxu0
        %v8502 = vadd.f32 0.0, %v8501
        %v8503 = vpop.f32.mrb[0].mxu0
        %v8504 = vadd.f32 0.0, %v8503
        %8505 = vmatprep.mubr.bf16.mxu0 %v6207
        %8506 = vmatmul.mubr.bf16.gmra.mrb[0].mxu0 %v6206
        %v8507 = vpop.f32.mrb[0].mxu0
        %v8508 = vadd.f32 0.0, %v8507
        %v8509 = vpop.f32.mrb[0].mxu0
        %v8510 = vadd.f32 0.0, %v8509
        %v8511 = vpop.f32.mrb[0].mxu0
        %v8512 = vadd.f32 0.0, %v8511
        %v8513 = vpop.f32.mrb[0].mxu0
        %v8514 = vadd.f32 0.0, %v8513
        %8515 = vmatprep.mubr.bf16.mxu0 %v6213
        %8516 = vmatmul.mubr.bf16.gmra.mrb[0].mxu0 %v6212
        %v8517 = vpop.f32.mrb[0].mxu0
        %v8518 = vadd.f32 0.0, %v8517
        %v8519 = vpop.f32.mrb[0].mxu0
        %v8520 = vadd.f32 0.0, %v8519
        %v8521 = vpop.f32.mrb[0].mxu0
        %v8522 = vadd.f32 0.0, %v8521
        %v8523 = vpop.f32.mrb[0].mxu0
        %v8524 = vadd.f32 0.0, %v8523
        %8525 = vmatprep.mubr.bf16.mxu0 %v6219
        %8526 = vmatmul.mubr.bf16.gmra.mrb[0].mxu0 %v6218
        %v8527 = vpop.f32.mrb[0].mxu0
        %v8528 = vadd.f32 0.0, %v8527
        %v8529 = vpop.f32.mrb[0].mxu0
        %v8530 = vadd.f32 0.0, %v8529
        %v8531 = vpop.f32.mrb[0].mxu0
        %v8532 = vadd.f32 0.0, %v8531
        %v8533 = vpop.f32.mrb[0].mxu0
        %v8534 = vadd.f32 0.0, %v8533
        %8535 = vmatprep.mubr.bf16.mxu0 %v6225
        %8536 = vmatmul.mubr.bf16.gmra.mrb[0].mxu0 %v6224
        %v8537 = vpop.f32.mrb[0].mxu0
        %v8538 = vadd.f32 0.0, %v8537
        %v8539 = vpop.f32.mrb[0].mxu0
        %v8540 = vadd.f32 0.0, %v8539
        %v8541 = vpop.f32.mrb[0].mxu0
        %v8542 = vadd.f32 0.0, %v8541
        %v8543 = vpop.f32.mrb[0].mxu0
        %v8544 = vadd.f32 0.0, %v8543
        %8545 = vmatprep.mubr.bf16.mxu0 %v6231
        %8546 = vmatmul.mubr.bf16.gmra.mrb[0].mxu0 %v6230
        %v8547 = vpop.f32.mrb[0].mxu0
        %v8548 = vadd.f32 0.0, %v8547
        %v8549 = vpop.f32.mrb[0].mxu0
        %v8550 = vadd.f32 0.0, %v8549
        %v8551 = vpop.f32.mrb[0].mxu0
        %v8552 = vadd.f32 0.0, %v8551
        %v8553 = vpop.f32.mrb[0].mxu0
        %v8554 = vadd.f32 0.0, %v8553
        %8555 = vmatprep.mubr.bf16.mxu0 %v6237
        %8556 = vmatmul.mubr.bf16.gmra.mrb[0].mxu0 %v6236
        %v8557 = vpop.f32.mrb[0].mxu0
        %v8558 = vadd.f32 0.0, %v8557
        %v8559 = vpop.f32.mrb[0].mxu0
        %v8560 = vadd.f32 0.0, %v8559
        %v8561 = vpop.f32.mrb[0].mxu0
        %v8562 = vadd.f32 0.0, %v8561
        %v8563 = vpop.f32.mrb[0].mxu0
        %v8564 = vadd.f32 0.0, %v8563
        %8565 = vmatprep.mubr.bf16.mxu0 %v6243
        %8566 = vmatmul.mubr.bf16.gmra.mrb[0].mxu0 %v6242
        %v8567 = vpop.f32.mrb[0].mxu0
        %v8568 = vadd.f32 0.0, %v8567
        %v8569 = vpop.f32.mrb[0].mxu0
        %v8570 = vadd.f32 0.0, %v8569
        %v8571 = vpop.f32.mrb[0].mxu0
        %v8572 = vadd.f32 0.0, %v8571
        %v8573 = vpop.f32.mrb[0].mxu0
        %v8574 = vadd.f32 0.0, %v8573
        %8575 = vmatprep.mubr.bf16.mxu0 %v6249
        %8576 = vmatmul.mubr.bf16.gmra.mrb[0].mxu0 %v6248
        %v8577 = vpop.f32.mrb[0].mxu0
        %v8578 = vadd.f32 0.0, %v8577
        %v8579 = vpop.f32.mrb[0].mxu0
        %v8580 = vadd.f32 0.0, %v8579
        %v8581 = vpop.f32.mrb[0].mxu0
        %v8582 = vadd.f32 0.0, %v8581
        %v8583 = vpop.f32.mrb[0].mxu0
        %v8584 = vadd.f32 0.0, %v8583
        %8585 = vmatprep.mubr.bf16.mxu0 %v6255
        %8586 = vmatmul.mubr.bf16.gmra.mrb[0].mxu0 %v6254
        %v8587 = vpop.f32.mrb[0].mxu0
        %v8588 = vadd.f32 0.0, %v8587
        %v8589 = vpop.f32.mrb[0].mxu0
        %v8590 = vadd.f32 0.0, %v8589
        %v8591 = vpop.f32.mrb[0].mxu0
        %v8592 = vadd.f32 0.0, %v8591
        %v8593 = vpop.f32.mrb[0].mxu0
        %v8594 = vadd.f32 0.0, %v8593
        %8595 = vmatprep.mubr.bf16.mxu0 %v6261
        %8596 = vmatmul.mubr.bf16.gmra.mrb[0].mxu0 %v6260
        %v8597 = vpop.f32.mrb[0].mxu0
        %v8598 = vadd.f32 0.0, %v8597
        %v8599 = vpop.f32.mrb[0].mxu0
        %v8600 = vadd.f32 0.0, %v8599
        %v8601 = vpop.f32.mrb[0].mxu0
        %v8602 = vadd.f32 0.0, %v8601
        %v8603 = vpop.f32.mrb[0].mxu0
        %v8604 = vadd.f32 0.0, %v8603
        %8605 = vdwg.mxu0
        %8606 = vmatprep.subr.bf16.mxu0 %v7517
        %8607 = vmatpush1.bf16.msra.mxu0 %v7516
        %8608 = vmatprep.subr.bf16.mxu0 %v7523
        %8609 = vmatpush1.bf16.msra.mxu0 %v7522
        %8610 = vmatprep.subr.bf16.mxu0 %v7529
        %8611 = vmatpush1.bf16.msra.mxu0 %v7528
        %8612 = vmatprep.subr.bf16.mxu0 %v7535
        %8613 = vmatpush1.bf16.msra.mxu0 %v7534
        %8614 = vmatprep.subr.bf16.mxu0 %v7541
        %8615 = vmatpush1.bf16.msra.mxu0 %v7540
        %8616 = vmatprep.subr.bf16.mxu0 %v7547
        %8617 = vmatpush1.bf16.msra.mxu0 %v7546
        %8618 = vmatprep.subr.bf16.mxu0 %v7553
        %8619 = vmatpush1.bf16.msra.mxu0 %v7552
        %8620 = vmatprep.subr.bf16.mxu0 %v7559
        %8621 = vmatpush1.bf16.msra.mxu0 %v7558
        %8622 = vmatprep.subr.bf16.mxu0 %v7565
        %8623 = vmatpush1.bf16.msra.mxu0 %v7564
        %8624 = vmatprep.subr.bf16.mxu0 %v7571
        %8625 = vmatpush1.bf16.msra.mxu0 %v7570
        %8626 = vmatprep.subr.bf16.mxu0 %v7577
        %8627 = vmatpush1.bf16.msra.mxu0 %v7576
        %8628 = vmatprep.subr.bf16.mxu0 %v7583
        %8629 = vmatpush1.bf16.msra.mxu0 %v7582
        %8630 = vmatprep.subr.bf16.mxu0 %v7589
        %8631 = vmatpush1.bf16.msra.mxu0 %v7588
        %8632 = vmatprep.subr.bf16.mxu0 %v7595
        %8633 = vmatpush1.bf16.msra.mxu0 %v7594
        %8634 = vmatprep.subr.bf16.mxu0 %v7601
        %8635 = vmatpush1.bf16.msra.mxu0 %v7600
        %8636 = vmatprep.subr.bf16.mxu0 %v7607
        %8637 = vmatpush1.bf16.msra.mxu0 %v7606
        %8638 = vmatprep.mubr.bf16.mxu0 %v6197
        %8639 = vmatmul.mubr.bf16.gmra.mrb[0].mxu0 %v6196
        %v8640 = vpop.f32.mrb[0].mxu0
        %v8641 = vadd.f32 %v8488, %v8640
        %v8642 = vpop.f32.mrb[0].mxu0
        %v8643 = vadd.f32 %v8490, %v8642
        %v8644 = vpop.f32.mrb[0].mxu0
        %v8645 = vadd.f32 %v8492, %v8644
        %v8646 = vpop.f32.mrb[0].mxu0
        %v8647 = vadd.f32 %v8494, %v8646
        %8648 = vmatprep.mubr.bf16.mxu0 %v6203
        %8649 = vmatmul.mubr.bf16.gmra.mrb[0].mxu0 %v6202
        %v8650 = vpop.f32.mrb[0].mxu0
        %v8651 = vadd.f32 %v8498, %v8650
        %v8652 = vpop.f32.mrb[0].mxu0
        %v8653 = vadd.f32 %v8500, %v8652
        %v8654 = vpop.f32.mrb[0].mxu0
        %v8655 = vadd.f32 %v8502, %v8654
        %v8656 = vpop.f32.mrb[0].mxu0
        %v8657 = vadd.f32 %v8504, %v8656
        %8658 = vmatprep.mubr.bf16.mxu0 %v6209
        %8659 = vmatmul.mubr.bf16.gmra.mrb[0].mxu0 %v6208
        %v8660 = vpop.f32.mrb[0].mxu0
        %v8661 = vadd.f32 %v8508, %v8660
        %v8662 = vpop.f32.mrb[0].mxu0
        %v8663 = vadd.f32 %v8510, %v8662
        %v8664 = vpop.f32.mrb[0].mxu0
        %v8665 = vadd.f32 %v8512, %v8664
        %v8666 = vpop.f32.mrb[0].mxu0
        %v8667 = vadd.f32 %v8514, %v8666
        %8668 = vmatprep.mubr.bf16.mxu0 %v6215
        %8669 = vmatmul.mubr.bf16.gmra.mrb[0].mxu0 %v6214
        %v8670 = vpop.f32.mrb[0].mxu0
        %v8671 = vadd.f32 %v8518, %v8670
        %v8672 = vpop.f32.mrb[0].mxu0
        %v8673 = vadd.f32 %v8520, %v8672
        %v8674 = vpop.f32.mrb[0].mxu0
        %v8675 = vadd.f32 %v8522, %v8674
        %v8676 = vpop.f32.mrb[0].mxu0
        %v8677 = vadd.f32 %v8524, %v8676
        %8678 = vmatprep.mubr.bf16.mxu0 %v6221
        %8679 = vmatmul.mubr.bf16.gmra.mrb[0].mxu0 %v6220
        %v8680 = vpop.f32.mrb[0].mxu0
        %v8681 = vadd.f32 %v8528, %v8680
        %v8682 = vpop.f32.mrb[0].mxu0
        %v8683 = vadd.f32 %v8530, %v8682
        %v8684 = vpop.f32.mrb[0].mxu0
        %v8685 = vadd.f32 %v8532, %v8684
        %v8686 = vpop.f32.mrb[0].mxu0
        %v8687 = vadd.f32 %v8534, %v8686
        %8688 = vmatprep.mubr.bf16.mxu0 %v6227
        %8689 = vmatmul.mubr.bf16.gmra.mrb[0].mxu0 %v6226
        %v8690 = vpop.f32.mrb[0].mxu0
        %v8691 = vadd.f32 %v8538, %v8690
        %v8692 = vpop.f32.mrb[0].mxu0
        %v8693 = vadd.f32 %v8540, %v8692
        %v8694 = vpop.f32.mrb[0].mxu0
        %v8695 = vadd.f32 %v8542, %v8694
        %v8696 = vpop.f32.mrb[0].mxu0
        %v8697 = vadd.f32 %v8544, %v8696
        %8698 = vmatprep.mubr.bf16.mxu0 %v6233
        %8699 = vmatmul.mubr.bf16.gmra.mrb[0].mxu0 %v6232
        %v8700 = vpop.f32.mrb[0].mxu0
        %v8701 = vadd.f32 %v8548, %v8700
        %v8702 = vpop.f32.mrb[0].mxu0
        %v8703 = vadd.f32 %v8550, %v8702
        %v8704 = vpop.f32.mrb[0].mxu0
        %v8705 = vadd.f32 %v8552, %v8704
        %v8706 = vpop.f32.mrb[0].mxu0
        %v8707 = vadd.f32 %v8554, %v8706
        %8708 = vmatprep.mubr.bf16.mxu0 %v6239
        %8709 = vmatmul.mubr.bf16.gmra.mrb[0].mxu0 %v6238
        %v8710 = vpop.f32.mrb[0].mxu0
        %v8711 = vadd.f32 %v8558, %v8710
        %v8712 = vpop.f32.mrb[0].mxu0
        %v8713 = vadd.f32 %v8560, %v8712
        %v8714 = vpop.f32.mrb[0].mxu0
        %v8715 = vadd.f32 %v8562, %v8714
        %v8716 = vpop.f32.mrb[0].mxu0
        %v8717 = vadd.f32 %v8564, %v8716
        %8718 = vmatprep.mubr.bf16.mxu0 %v6245
        %8719 = vmatmul.mubr.bf16.gmra.mrb[0].mxu0 %v6244
        %v8720 = vpop.f32.mrb[0].mxu0
        %v8721 = vadd.f32 %v8568, %v8720
        %v8722 = vpop.f32.mrb[0].mxu0
        %v8723 = vadd.f32 %v8570, %v8722
        %v8724 = vpop.f32.mrb[0].mxu0
        %v8725 = vadd.f32 %v8572, %v8724
        %v8726 = vpop.f32.mrb[0].mxu0
        %v8727 = vadd.f32 %v8574, %v8726
        %8728 = vmatprep.mubr.bf16.mxu0 %v6251
        %8729 = vmatmul.mubr.bf16.gmra.mrb[0].mxu0 %v6250
        %v8730 = vpop.f32.mrb[0].mxu0
        %v8731 = vadd.f32 %v8578, %v8730
        %v8732 = vpop.f32.mrb[0].mxu0
        %v8733 = vadd.f32 %v8580, %v8732
        %v8734 = vpop.f32.mrb[0].mxu0
        %v8735 = vadd.f32 %v8582, %v8734
        %v8736 = vpop.f32.mrb[0].mxu0
        %v8737 = vadd.f32 %v8584, %v8736
        %8738 = vmatprep.mubr.bf16.mxu0 %v6257
        %8739 = vmatmul.mubr.bf16.gmra.mrb[0].mxu0 %v6256
        %v8740 = vpop.f32.mrb[0].mxu0
        %v8741 = vadd.f32 %v8588, %v8740
        %v8742 = vpop.f32.mrb[0].mxu0
        %v8743 = vadd.f32 %v8590, %v8742
        %v8744 = vpop.f32.mrb[0].mxu0
        %v8745 = vadd.f32 %v8592, %v8744
        %v8746 = vpop.f32.mrb[0].mxu0
        %v8747 = vadd.f32 %v8594, %v8746
        %8748 = vmatprep.mubr.bf16.mxu0 %v6263
        %8749 = vmatmul.mubr.bf16.gmra.mrb[0].mxu0 %v6262
        %v8750 = vpop.f32.mrb[0].mxu0
        %v8751 = vadd.f32 %v8598, %v8750
        %v8752 = vpop.f32.mrb[0].mxu0
        %v8753 = vadd.f32 %v8600, %v8752
        %v8754 = vpop.f32.mrb[0].mxu0
        %v8755 = vadd.f32 %v8602, %v8754
        %v8756 = vpop.f32.mrb[0].mxu0
        %v8757 = vadd.f32 %v8604, %v8756
        %8758 = vdwg.mxu0
        %8759 = vmatprep.subr.bf16.mxu0 %v7613
        %8760 = vmatpush1.bf16.msra.mxu0 %v7612
        %8761 = vmatprep.subr.bf16.mxu0 %v7619
        %8762 = vmatpush1.bf16.msra.mxu0 %v7618
        %8763 = vmatprep.subr.bf16.mxu0 %v7625
        %8764 = vmatpush1.bf16.msra.mxu0 %v7624
        %8765 = vmatprep.subr.bf16.mxu0 %v7631
        %8766 = vmatpush1.bf16.msra.mxu0 %v7630
        %8767 = vmatprep.subr.bf16.mxu0 %v7637
        %8768 = vmatpush1.bf16.msra.mxu0 %v7636
        %8769 = vmatprep.subr.bf16.mxu0 %v7643
        %8770 = vmatpush1.bf16.msra.mxu0 %v7642
        %8771 = vmatprep.subr.bf16.mxu0 %v7649
        %8772 = vmatpush1.bf16.msra.mxu0 %v7648
        %8773 = vmatprep.subr.bf16.mxu0 %v7655
        %8774 = vmatpush1.bf16.msra.mxu0 %v7654
        %8775 = vmatprep.subr.bf16.mxu0 %v7661
        %8776 = vmatpush1.bf16.msra.mxu0 %v7660
        %8777 = vmatprep.subr.bf16.mxu0 %v7667
        %8778 = vmatpush1.bf16.msra.mxu0 %v7666
        %8779 = vmatprep.subr.bf16.mxu0 %v7673
        %8780 = vmatpush1.bf16.msra.mxu0 %v7672
        %8781 = vmatprep.subr.bf16.mxu0 %v7679
        %8782 = vmatpush1.bf16.msra.mxu0 %v7678
        %8783 = vmatprep.subr.bf16.mxu0 %v7685
        %8784 = vmatpush1.bf16.msra.mxu0 %v7684
        %8785 = vmatprep.subr.bf16.mxu0 %v7691
        %8786 = vmatpush1.bf16.msra.mxu0 %v7690
        %8787 = vmatprep.subr.bf16.mxu0 %v7697
        %8788 = vmatpush1.bf16.msra.mxu0 %v7696
        %8789 = vmatprep.subr.bf16.mxu0 %v7703
        %8790 = vmatpush1.bf16.msra.mxu0 %v7702
        %8791 = vmatprep.mubr.bf16.mxu0 %v6199
        %8792 = vmatmul.mubr.bf16.gmra.mrb[0].mxu0 %v6198
        %v8793 = vpop.f32.mrb[0].mxu0
        %v8794 = vadd.f32 %v8641, %v8793
        %v8795 = vpop.f32.mrb[0].mxu0
        %v8796 = vadd.f32 %v8643, %v8795
        %v8797 = vpop.f32.mrb[0].mxu0
        %v8798 = vadd.f32 %v8645, %v8797
        %v8799 = vpop.f32.mrb[0].mxu0
        %v8800 = vadd.f32 %v8647, %v8799
        %8801 = vmatprep.mubr.bf16.mxu0 %v6205
        %8802 = vmatmul.mubr.bf16.gmra.mrb[0].mxu0 %v6204
        %v8803 = vpop.f32.mrb[0].mxu0
        %v8804 = vadd.f32 %v8651, %v8803
        %v8805 = vpop.f32.mrb[0].mxu0
        %v8806 = vadd.f32 %v8653, %v8805
        %v8807 = vpop.f32.mrb[0].mxu0
        %v8808 = vadd.f32 %v8655, %v8807
        %v8809 = vpop.f32.mrb[0].mxu0
        %v8810 = vadd.f32 %v8657, %v8809
        %8811 = vmatprep.mubr.bf16.mxu0 %v6211
        %8812 = vmatmul.mubr.bf16.gmra.mrb[0].mxu0 %v6210
        %v8813 = vpop.f32.mrb[0].mxu0
        %v8814 = vadd.f32 %v8661, %v8813
        %v8815 = vpop.f32.mrb[0].mxu0
        %v8816 = vadd.f32 %v8663, %v8815
        %v8817 = vpop.f32.mrb[0].mxu0
        %v8818 = vadd.f32 %v8665, %v8817
        %v8819 = vpop.f32.mrb[0].mxu0
        %v8820 = vadd.f32 %v8667, %v8819
        %8821 = vmatprep.mubr.bf16.mxu0 %v6217
        %8822 = vmatmul.mubr.bf16.gmra.mrb[0].mxu0 %v6216
        %v8823 = vpop.f32.mrb[0].mxu0
        %v8824 = vadd.f32 %v8671, %v8823
        %v8825 = vpop.f32.mrb[0].mxu0
        %v8826 = vadd.f32 %v8673, %v8825
        %v8827 = vpop.f32.mrb[0].mxu0
        %v8828 = vadd.f32 %v8675, %v8827
        %v8829 = vpop.f32.mrb[0].mxu0
        %v8830 = vadd.f32 %v8677, %v8829
        %8831 = vmatprep.mubr.bf16.mxu0 %v6223
        %8832 = vmatmul.mubr.bf16.gmra.mrb[0].mxu0 %v6222
        %v8833 = vpop.f32.mrb[0].mxu0
        %v8834 = vadd.f32 %v8681, %v8833
        %v8835 = vpop.f32.mrb[0].mxu0
        %v8836 = vadd.f32 %v8683, %v8835
        %v8837 = vpop.f32.mrb[0].mxu0
        %v8838 = vadd.f32 %v8685, %v8837
        %v8839 = vpop.f32.mrb[0].mxu0
        %v8840 = vadd.f32 %v8687, %v8839
        %8841 = vmatprep.mubr.bf16.mxu0 %v6229
        %8842 = vmatmul.mubr.bf16.gmra.mrb[0].mxu0 %v6228
        %v8843 = vpop.f32.mrb[0].mxu0
        %v8844 = vadd.f32 %v8691, %v8843
        %v8845 = vpop.f32.mrb[0].mxu0
        %v8846 = vadd.f32 %v8693, %v8845
        %v8847 = vpop.f32.mrb[0].mxu0
        %v8848 = vadd.f32 %v8695, %v8847
        %v8849 = vpop.f32.mrb[0].mxu0
        %v8850 = vadd.f32 %v8697, %v8849
        %8851 = vmatprep.mubr.bf16.mxu0 %v6235
        %8852 = vmatmul.mubr.bf16.gmra.mrb[0].mxu0 %v6234
        %v8853 = vpop.f32.mrb[0].mxu0
        %v8854 = vadd.f32 %v8701, %v8853
        %v8855 = vpop.f32.mrb[0].mxu0
        %v8856 = vadd.f32 %v8703, %v8855
        %v8857 = vpop.f32.mrb[0].mxu0
        %v8858 = vadd.f32 %v8705, %v8857
        %v8859 = vpop.f32.mrb[0].mxu0
        %v8860 = vadd.f32 %v8707, %v8859
        %8861 = vmatprep.mubr.bf16.mxu0 %v6241
        %8862 = vmatmul.mubr.bf16.gmra.mrb[0].mxu0 %v6240
        %v8863 = vpop.f32.mrb[0].mxu0
        %v8864 = vadd.f32 %v8711, %v8863
        %v8865 = vpop.f32.mrb[0].mxu0
        %v8866 = vadd.f32 %v8713, %v8865
        %v8867 = vpop.f32.mrb[0].mxu0
        %v8868 = vadd.f32 %v8715, %v8867
        %v8869 = vpop.f32.mrb[0].mxu0
        %v8870 = vadd.f32 %v8717, %v8869
        %8871 = vmatprep.mubr.bf16.mxu0 %v6247
        %8872 = vmatmul.mubr.bf16.gmra.mrb[0].mxu0 %v6246
        %v8873 = vpop.f32.mrb[0].mxu0
        %v8874 = vadd.f32 %v8721, %v8873
        %v8875 = vpop.f32.mrb[0].mxu0
        %v8876 = vadd.f32 %v8723, %v8875
        %v8877 = vpop.f32.mrb[0].mxu0
        %v8878 = vadd.f32 %v8725, %v8877
        %v8879 = vpop.f32.mrb[0].mxu0
        %v8880 = vadd.f32 %v8727, %v8879
        %8881 = vmatprep.mubr.bf16.mxu0 %v6253
        %8882 = vmatmul.mubr.bf16.gmra.mrb[0].mxu0 %v6252
        %v8883 = vpop.f32.mrb[0].mxu0
        %v8884 = vadd.f32 %v8731, %v8883
        %v8885 = vpop.f32.mrb[0].mxu0
        %v8886 = vadd.f32 %v8733, %v8885
        %v8887 = vpop.f32.mrb[0].mxu0
        %v8888 = vadd.f32 %v8735, %v8887
        %v8889 = vpop.f32.mrb[0].mxu0
        %v8890 = vadd.f32 %v8737, %v8889
        %8891 = vmatprep.mubr.bf16.mxu0 %v6259
        %8892 = vmatmul.mubr.bf16.gmra.mrb[0].mxu0 %v6258
        %v8893 = vpop.f32.mrb[0].mxu0
        %v8894 = vadd.f32 %v8741, %v8893
        %v8895 = vpop.f32.mrb[0].mxu0
        %v8896 = vadd.f32 %v8743, %v8895
        %v8897 = vpop.f32.mrb[0].mxu0
        %v8898 = vadd.f32 %v8745, %v8897
        %v8899 = vpop.f32.mrb[0].mxu0
        %v8900 = vadd.f32 %v8747, %v8899
        %8901 = vmatprep.mubr.bf16.mxu0 %v6265
        %8902 = vmatmul.mubr.bf16.gmra.mrb[0].mxu0 %v6264
        %v8903 = vpop.f32.mrb[0].mxu0
        %v8904 = vadd.f32 %v8751, %v8903
        %v8905 = vpop.f32.mrb[0].mxu0
        %v8906 = vadd.f32 %v8753, %v8905
        %v8907 = vpop.f32.mrb[0].mxu0
        %v8908 = vadd.f32 %v8755, %v8907
        %v8909 = vpop.f32.mrb[0].mxu0
        %v8910 = vadd.f32 %v8757, %v8909
        %8911 = vdwg.mxu0
        %8912 = vmatprep.subr.bf16.mxu0 %v7423
        %8913 = vmatpush1.bf16.msra.mxu0 %v7422
        %8914 = vmatprep.subr.bf16.mxu0 %v7429
        %8915 = vmatpush1.bf16.msra.mxu0 %v7428
        %8916 = vmatprep.subr.bf16.mxu0 %v7435
        %8917 = vmatpush1.bf16.msra.mxu0 %v7434
        %8918 = vmatprep.subr.bf16.mxu0 %v7441
        %8919 = vmatpush1.bf16.msra.mxu0 %v7440
        %8920 = vmatprep.subr.bf16.mxu0 %v7447
        %8921 = vmatpush1.bf16.msra.mxu0 %v7446
        %8922 = vmatprep.subr.bf16.mxu0 %v7453
        %8923 = vmatpush1.bf16.msra.mxu0 %v7452
        %8924 = vmatprep.subr.bf16.mxu0 %v7459
        %8925 = vmatpush1.bf16.msra.mxu0 %v7458
        %8926 = vmatprep.subr.bf16.mxu0 %v7465
        %8927 = vmatpush1.bf16.msra.mxu0 %v7464
        %8928 = vmatprep.subr.bf16.mxu0 %v7471
        %8929 = vmatpush1.bf16.msra.mxu0 %v7470
        %8930 = vmatprep.subr.bf16.mxu0 %v7477
        %8931 = vmatpush1.bf16.msra.mxu0 %v7476
        %8932 = vmatprep.subr.bf16.mxu0 %v7483
        %8933 = vmatpush1.bf16.msra.mxu0 %v7482
        %8934 = vmatprep.subr.bf16.mxu0 %v7489
        %8935 = vmatpush1.bf16.msra.mxu0 %v7488
        %8936 = vmatprep.subr.bf16.mxu0 %v7495
        %8937 = vmatpush1.bf16.msra.mxu0 %v7494
        %8938 = vmatprep.subr.bf16.mxu0 %v7501
        %8939 = vmatpush1.bf16.msra.mxu0 %v7500
        %8940 = vmatprep.subr.bf16.mxu0 %v7507
        %8941 = vmatpush1.bf16.msra.mxu0 %v7506
        %8942 = vmatprep.subr.bf16.mxu0 %v7513
        %8943 = vmatpush1.bf16.msra.mxu0 %v7512
        %8944 = vmatprep.mubr.bf16.mxu0 %v6195
        %8945 = vmatmul.mubr.bf16.gmra.mrb[0].mxu0 %v6194
        %v8946 = vpop.f32.mrb[0].mxu0
        %v8947 = vadd.f32 0.0, %v8946
        %v8948 = vpop.f32.mrb[0].mxu0
        %v8949 = vadd.f32 0.0, %v8948
        %v8950 = vpop.f32.mrb[0].mxu0
        %v8951 = vadd.f32 0.0, %v8950
        %v8952 = vpop.f32.mrb[0].mxu0
        %v8953 = vadd.f32 0.0, %v8952
        %8954 = vmatprep.mubr.bf16.mxu0 %v6201
        %8955 = vmatmul.mubr.bf16.gmra.mrb[0].mxu0 %v6200
        %v8956 = vpop.f32.mrb[0].mxu0
        %v8957 = vadd.f32 0.0, %v8956
        %v8958 = vpop.f32.mrb[0].mxu0
        %v8959 = vadd.f32 0.0, %v8958
        %v8960 = vpop.f32.mrb[0].mxu0
        %v8961 = vadd.f32 0.0, %v8960
        %v8962 = vpop.f32.mrb[0].mxu0
        %v8963 = vadd.f32 0.0, %v8962
        %8964 = vmatprep.mubr.bf16.mxu0 %v6207
        %8965 = vmatmul.mubr.bf16.gmra.mrb[0].mxu0 %v6206
        %v8966 = vpop.f32.mrb[0].mxu0
        %v8967 = vadd.f32 0.0, %v8966
        %v8968 = vpop.f32.mrb[0].mxu0
        %v8969 = vadd.f32 0.0, %v8968
        %v8970 = vpop.f32.mrb[0].mxu0
        %v8971 = vadd.f32 0.0, %v8970
        %v8972 = vpop.f32.mrb[0].mxu0
        %v8973 = vadd.f32 0.0, %v8972
        %8974 = vmatprep.mubr.bf16.mxu0 %v6213
        %8975 = vmatmul.mubr.bf16.gmra.mrb[0].mxu0 %v6212
        %v8976 = vpop.f32.mrb[0].mxu0
        %v8977 = vadd.f32 0.0, %v8976
        %v8978 = vpop.f32.mrb[0].mxu0
        %v8979 = vadd.f32 0.0, %v8978
        %v8980 = vpop.f32.mrb[0].mxu0
        %v8981 = vadd.f32 0.0, %v8980
        %v8982 = vpop.f32.mrb[0].mxu0
        %v8983 = vadd.f32 0.0, %v8982
        %8984 = vmatprep.mubr.bf16.mxu0 %v6219
        %8985 = vmatmul.mubr.bf16.gmra.mrb[0].mxu0 %v6218
        %v8986 = vpop.f32.mrb[0].mxu0
        %v8987 = vadd.f32 0.0, %v8986
        %v8988 = vpop.f32.mrb[0].mxu0
        %v8989 = vadd.f32 0.0, %v8988
        %v8990 = vpop.f32.mrb[0].mxu0
        %v8991 = vadd.f32 0.0, %v8990
        %v8992 = vpop.f32.mrb[0].mxu0
        %v8993 = vadd.f32 0.0, %v8992
        %8994 = vmatprep.mubr.bf16.mxu0 %v6225
        %8995 = vmatmul.mubr.bf16.gmra.mrb[0].mxu0 %v6224
        %v8996 = vpop.f32.mrb[0].mxu0
        %v8997 = vadd.f32 0.0, %v8996
        %v8998 = vpop.f32.mrb[0].mxu0
        %v8999 = vadd.f32 0.0, %v8998
        %v9000 = vpop.f32.mrb[0].mxu0
        %v9001 = vadd.f32 0.0, %v9000
        %v9002 = vpop.f32.mrb[0].mxu0
        %v9003 = vadd.f32 0.0, %v9002
        %9004 = vmatprep.mubr.bf16.mxu0 %v6231
        %9005 = vmatmul.mubr.bf16.gmra.mrb[0].mxu0 %v6230
        %v9006 = vpop.f32.mrb[0].mxu0
        %v9007 = vadd.f32 0.0, %v9006
        %v9008 = vpop.f32.mrb[0].mxu0
        %v9009 = vadd.f32 0.0, %v9008
        %v9010 = vpop.f32.mrb[0].mxu0
        %v9011 = vadd.f32 0.0, %v9010
        %v9012 = vpop.f32.mrb[0].mxu0
        %v9013 = vadd.f32 0.0, %v9012
        %9014 = vmatprep.mubr.bf16.mxu0 %v6237
        %9015 = vmatmul.mubr.bf16.gmra.mrb[0].mxu0 %v6236
        %v9016 = vpop.f32.mrb[0].mxu0
        %v9017 = vadd.f32 0.0, %v9016
        %v9018 = vpop.f32.mrb[0].mxu0
        %v9019 = vadd.f32 0.0, %v9018
        %v9020 = vpop.f32.mrb[0].mxu0
        %v9021 = vadd.f32 0.0, %v9020
        %v9022 = vpop.f32.mrb[0].mxu0
        %v9023 = vadd.f32 0.0, %v9022
        %9024 = vmatprep.mubr.bf16.mxu0 %v6243
        %9025 = vmatmul.mubr.bf16.gmra.mrb[0].mxu0 %v6242
        %v9026 = vpop.f32.mrb[0].mxu0
        %v9027 = vadd.f32 0.0, %v9026
        %v9028 = vpop.f32.mrb[0].mxu0
        %v9029 = vadd.f32 0.0, %v9028
        %v9030 = vpop.f32.mrb[0].mxu0
        %v9031 = vadd.f32 0.0, %v9030
        %v9032 = vpop.f32.mrb[0].mxu0
        %v9033 = vadd.f32 0.0, %v9032
        %9034 = vmatprep.mubr.bf16.mxu0 %v6249
        %9035 = vmatmul.mubr.bf16.gmra.mrb[0].mxu0 %v6248
        %v9036 = vpop.f32.mrb[0].mxu0
        %v9037 = vadd.f32 0.0, %v9036
        %v9038 = vpop.f32.mrb[0].mxu0
        %v9039 = vadd.f32 0.0, %v9038
        %v9040 = vpop.f32.mrb[0].mxu0
        %v9041 = vadd.f32 0.0, %v9040
        %v9042 = vpop.f32.mrb[0].mxu0
        %v9043 = vadd.f32 0.0, %v9042
        %9044 = vmatprep.mubr.bf16.mxu0 %v6255
        %9045 = vmatmul.mubr.bf16.gmra.mrb[0].mxu0 %v6254
        %v9046 = vpop.f32.mrb[0].mxu0
        %v9047 = vadd.f32 0.0, %v9046
        %v9048 = vpop.f32.mrb[0].mxu0
        %v9049 = vadd.f32 0.0, %v9048
        %v9050 = vpop.f32.mrb[0].mxu0
        %v9051 = vadd.f32 0.0, %v9050
        %v9052 = vpop.f32.mrb[0].mxu0
        %v9053 = vadd.f32 0.0, %v9052
        %9054 = vmatprep.mubr.bf16.mxu0 %v6261
        %9055 = vmatmul.mubr.bf16.gmra.mrb[0].mxu0 %v6260
        %v9056 = vpop.f32.mrb[0].mxu0
        %v9057 = vadd.f32 0.0, %v9056
        %v9058 = vpop.f32.mrb[0].mxu0
        %v9059 = vadd.f32 0.0, %v9058
        %v9060 = vpop.f32.mrb[0].mxu0
        %v9061 = vadd.f32 0.0, %v9060
        %v9062 = vpop.f32.mrb[0].mxu0
        %v9063 = vadd.f32 0.0, %v9062
        %9064 = vdwg.mxu0
        %9065 = vmatprep.subr.bf16.mxu0 %v7519
        %9066 = vmatpush1.bf16.msra.mxu0 %v7518
        %9067 = vmatprep.subr.bf16.mxu0 %v7525
        %9068 = vmatpush1.bf16.msra.mxu0 %v7524
        %9069 = vmatprep.subr.bf16.mxu0 %v7531
        %9070 = vmatpush1.bf16.msra.mxu0 %v7530
        %9071 = vmatprep.subr.bf16.mxu0 %v7537
        %9072 = vmatpush1.bf16.msra.mxu0 %v7536
        %9073 = vmatprep.subr.bf16.mxu0 %v7543
        %9074 = vmatpush1.bf16.msra.mxu0 %v7542
        %9075 = vmatprep.subr.bf16.mxu0 %v7549
        %9076 = vmatpush1.bf16.msra.mxu0 %v7548
        %9077 = vmatprep.subr.bf16.mxu0 %v7555
        %9078 = vmatpush1.bf16.msra.mxu0 %v7554
        %9079 = vmatprep.subr.bf16.mxu0 %v7561
        %9080 = vmatpush1.bf16.msra.mxu0 %v7560
        %9081 = vmatprep.subr.bf16.mxu0 %v7567
        %9082 = vmatpush1.bf16.msra.mxu0 %v7566
        %9083 = vmatprep.subr.bf16.mxu0 %v7573
        %9084 = vmatpush1.bf16.msra.mxu0 %v7572
        %9085 = vmatprep.subr.bf16.mxu0 %v7579
        %9086 = vmatpush1.bf16.msra.mxu0 %v7578
        %9087 = vmatprep.subr.bf16.mxu0 %v7585
        %9088 = vmatpush1.bf16.msra.mxu0 %v7584
        %9089 = vmatprep.subr.bf16.mxu0 %v7591
        %9090 = vmatpush1.bf16.msra.mxu0 %v7590
        %9091 = vmatprep.subr.bf16.mxu0 %v7597
        %9092 = vmatpush1.bf16.msra.mxu0 %v7596
        %9093 = vmatprep.subr.bf16.mxu0 %v7603
        %9094 = vmatpush1.bf16.msra.mxu0 %v7602
        %9095 = vmatprep.subr.bf16.mxu0 %v7609
        %9096 = vmatpush1.bf16.msra.mxu0 %v7608
        %9097 = vmatprep.mubr.bf16.mxu0 %v6197
        %9098 = vmatmul.mubr.bf16.gmra.mrb[0].mxu0 %v6196
        %v9099 = vpop.f32.mrb[0].mxu0
        %v9100 = vadd.f32 %v8947, %v9099
        %v9101 = vpop.f32.mrb[0].mxu0
        %v9102 = vadd.f32 %v8949, %v9101
        %v9103 = vpop.f32.mrb[0].mxu0
        %v9104 = vadd.f32 %v8951, %v9103
        %v9105 = vpop.f32.mrb[0].mxu0
        %v9106 = vadd.f32 %v8953, %v9105
        %9107 = vmatprep.mubr.bf16.mxu0 %v6203
        %9108 = vmatmul.mubr.bf16.gmra.mrb[0].mxu0 %v6202
        %v9109 = vpop.f32.mrb[0].mxu0
        %v9110 = vadd.f32 %v8957, %v9109
        %v9111 = vpop.f32.mrb[0].mxu0
        %v9112 = vadd.f32 %v8959, %v9111
        %v9113 = vpop.f32.mrb[0].mxu0
        %v9114 = vadd.f32 %v8961, %v9113
        %v9115 = vpop.f32.mrb[0].mxu0
        %v9116 = vadd.f32 %v8963, %v9115
        %9117 = vmatprep.mubr.bf16.mxu0 %v6209
        %9118 = vmatmul.mubr.bf16.gmra.mrb[0].mxu0 %v6208
        %v9119 = vpop.f32.mrb[0].mxu0
        %v9120 = vadd.f32 %v8967, %v9119
        %v9121 = vpop.f32.mrb[0].mxu0
        %v9122 = vadd.f32 %v8969, %v9121
        %v9123 = vpop.f32.mrb[0].mxu0
        %v9124 = vadd.f32 %v8971, %v9123
        %v9125 = vpop.f32.mrb[0].mxu0
        %v9126 = vadd.f32 %v8973, %v9125
        %9127 = vmatprep.mubr.bf16.mxu0 %v6215
        %9128 = vmatmul.mubr.bf16.gmra.mrb[0].mxu0 %v6214
        %v9129 = vpop.f32.mrb[0].mxu0
        %v9130 = vadd.f32 %v8977, %v9129
        %v9131 = vpop.f32.mrb[0].mxu0
        %v9132 = vadd.f32 %v8979, %v9131
        %v9133 = vpop.f32.mrb[0].mxu0
        %v9134 = vadd.f32 %v8981, %v9133
        %v9135 = vpop.f32.mrb[0].mxu0
        %v9136 = vadd.f32 %v8983, %v9135
        %9137 = vmatprep.mubr.bf16.mxu0 %v6221
        %9138 = vmatmul.mubr.bf16.gmra.mrb[0].mxu0 %v6220
        %v9139 = vpop.f32.mrb[0].mxu0
        %v9140 = vadd.f32 %v8987, %v9139
        %v9141 = vpop.f32.mrb[0].mxu0
        %v9142 = vadd.f32 %v8989, %v9141
        %v9143 = vpop.f32.mrb[0].mxu0
        %v9144 = vadd.f32 %v8991, %v9143
        %v9145 = vpop.f32.mrb[0].mxu0
        %v9146 = vadd.f32 %v8993, %v9145
        %9147 = vmatprep.mubr.bf16.mxu0 %v6227
        %9148 = vmatmul.mubr.bf16.gmra.mrb[0].mxu0 %v6226
        %v9149 = vpop.f32.mrb[0].mxu0
        %v9150 = vadd.f32 %v8997, %v9149
        %v9151 = vpop.f32.mrb[0].mxu0
        %v9152 = vadd.f32 %v8999, %v9151
        %v9153 = vpop.f32.mrb[0].mxu0
        %v9154 = vadd.f32 %v9001, %v9153
        %v9155 = vpop.f32.mrb[0].mxu0
        %v9156 = vadd.f32 %v9003, %v9155
        %9157 = vmatprep.mubr.bf16.mxu0 %v6233
        %9158 = vmatmul.mubr.bf16.gmra.mrb[0].mxu0 %v6232
        %v9159 = vpop.f32.mrb[0].mxu0
        %v9160 = vadd.f32 %v9007, %v9159
        %v9161 = vpop.f32.mrb[0].mxu0
        %v9162 = vadd.f32 %v9009, %v9161
        %v9163 = vpop.f32.mrb[0].mxu0
        %v9164 = vadd.f32 %v9011, %v9163
        %v9165 = vpop.f32.mrb[0].mxu0
        %v9166 = vadd.f32 %v9013, %v9165
        %9167 = vmatprep.mubr.bf16.mxu0 %v6239
        %9168 = vmatmul.mubr.bf16.gmra.mrb[0].mxu0 %v6238
        %v9169 = vpop.f32.mrb[0].mxu0
        %v9170 = vadd.f32 %v9017, %v9169
        %v9171 = vpop.f32.mrb[0].mxu0
        %v9172 = vadd.f32 %v9019, %v9171
        %v9173 = vpop.f32.mrb[0].mxu0
        %v9174 = vadd.f32 %v9021, %v9173
        %v9175 = vpop.f32.mrb[0].mxu0
        %v9176 = vadd.f32 %v9023, %v9175
        %9177 = vmatprep.mubr.bf16.mxu0 %v6245
        %9178 = vmatmul.mubr.bf16.gmra.mrb[0].mxu0 %v6244
        %v9179 = vpop.f32.mrb[0].mxu0
        %v9180 = vadd.f32 %v9027, %v9179
        %v9181 = vpop.f32.mrb[0].mxu0
        %v9182 = vadd.f32 %v9029, %v9181
        %v9183 = vpop.f32.mrb[0].mxu0
        %v9184 = vadd.f32 %v9031, %v9183
        %v9185 = vpop.f32.mrb[0].mxu0
        %v9186 = vadd.f32 %v9033, %v9185
        %9187 = vmatprep.mubr.bf16.mxu0 %v6251
        %9188 = vmatmul.mubr.bf16.gmra.mrb[0].mxu0 %v6250
        %v9189 = vpop.f32.mrb[0].mxu0
        %v9190 = vadd.f32 %v9037, %v9189
        %v9191 = vpop.f32.mrb[0].mxu0
        %v9192 = vadd.f32 %v9039, %v9191
        %v9193 = vpop.f32.mrb[0].mxu0
        %v9194 = vadd.f32 %v9041, %v9193
        %v9195 = vpop.f32.mrb[0].mxu0
        %v9196 = vadd.f32 %v9043, %v9195
        %9197 = vmatprep.mubr.bf16.mxu0 %v6257
        %9198 = vmatmul.mubr.bf16.gmra.mrb[0].mxu0 %v6256
        %v9199 = vpop.f32.mrb[0].mxu0
        %v9200 = vadd.f32 %v9047, %v9199
        %v9201 = vpop.f32.mrb[0].mxu0
        %v9202 = vadd.f32 %v9049, %v9201
        %v9203 = vpop.f32.mrb[0].mxu0
        %v9204 = vadd.f32 %v9051, %v9203
        %v9205 = vpop.f32.mrb[0].mxu0
        %v9206 = vadd.f32 %v9053, %v9205
        %9207 = vmatprep.mubr.bf16.mxu0 %v6263
        %9208 = vmatmul.mubr.bf16.gmra.mrb[0].mxu0 %v6262
        %v9209 = vpop.f32.mrb[0].mxu0
        %v9210 = vadd.f32 %v9057, %v9209
        %v9211 = vpop.f32.mrb[0].mxu0
        %v9212 = vadd.f32 %v9059, %v9211
        %v9213 = vpop.f32.mrb[0].mxu0
        %v9214 = vadd.f32 %v9061, %v9213
        %v9215 = vpop.f32.mrb[0].mxu0
        %v9216 = vadd.f32 %v9063, %v9215
        %9217 = vdwg.mxu0
        %9218 = vmatprep.subr.bf16.mxu0 %v7615
        %9219 = vmatpush1.bf16.msra.mxu0 %v7614
        %9220 = vmatprep.subr.bf16.mxu0 %v7621
        %9221 = vmatpush1.bf16.msra.mxu0 %v7620
        %9222 = vmatprep.subr.bf16.mxu0 %v7627
        %9223 = vmatpush1.bf16.msra.mxu0 %v7626
        %9224 = vmatprep.subr.bf16.mxu0 %v7633
        %9225 = vmatpush1.bf16.msra.mxu0 %v7632
        %9226 = vmatprep.subr.bf16.mxu0 %v7639
        %9227 = vmatpush1.bf16.msra.mxu0 %v7638
        %9228 = vmatprep.subr.bf16.mxu0 %v7645
        %9229 = vmatpush1.bf16.msra.mxu0 %v7644
        %9230 = vmatprep.subr.bf16.mxu0 %v7651
        %9231 = vmatpush1.bf16.msra.mxu0 %v7650
        %9232 = vmatprep.subr.bf16.mxu0 %v7657
        %9233 = vmatpush1.bf16.msra.mxu0 %v7656
        %9234 = vmatprep.subr.bf16.mxu0 %v7663
        %9235 = vmatpush1.bf16.msra.mxu0 %v7662
        %9236 = vmatprep.subr.bf16.mxu0 %v7669
        %9237 = vmatpush1.bf16.msra.mxu0 %v7668
        %9238 = vmatprep.subr.bf16.mxu0 %v7675
        %9239 = vmatpush1.bf16.msra.mxu0 %v7674
        %9240 = vmatprep.subr.bf16.mxu0 %v7681
        %9241 = vmatpush1.bf16.msra.mxu0 %v7680
        %9242 = vmatprep.subr.bf16.mxu0 %v7687
        %9243 = vmatpush1.bf16.msra.mxu0 %v7686
        %9244 = vmatprep.subr.bf16.mxu0 %v7693
        %9245 = vmatpush1.bf16.msra.mxu0 %v7692
        %9246 = vmatprep.subr.bf16.mxu0 %v7699
        %9247 = vmatpush1.bf16.msra.mxu0 %v7698
        %9248 = vmatprep.subr.bf16.mxu0 %v7705
        %9249 = vmatpush1.bf16.msra.mxu0 %v7704
        %9250 = vmatprep.mubr.bf16.mxu0 %v6199
        %9251 = vmatmul.mubr.bf16.gmra.mrb[0].mxu0 %v6198
        %v9252 = vpop.f32.mrb[0].mxu0
        %v9253 = vadd.f32 %v9100, %v9252
        %v9254 = vpop.f32.mrb[0].mxu0
        %v9255 = vadd.f32 %v9102, %v9254
        %v9256 = vpop.f32.mrb[0].mxu0
        %v9257 = vadd.f32 %v9104, %v9256
        %v9258 = vpop.f32.mrb[0].mxu0
        %v9259 = vadd.f32 %v9106, %v9258
        %9260 = vmatprep.mubr.bf16.mxu0 %v6205
        %9261 = vmatmul.mubr.bf16.gmra.mrb[0].mxu0 %v6204
        %v9262 = vpop.f32.mrb[0].mxu0
        %v9263 = vadd.f32 %v9110, %v9262
        %v9264 = vpop.f32.mrb[0].mxu0
        %v9265 = vadd.f32 %v9112, %v9264
        %v9266 = vpop.f32.mrb[0].mxu0
        %v9267 = vadd.f32 %v9114, %v9266
        %v9268 = vpop.f32.mrb[0].mxu0
        %v9269 = vadd.f32 %v9116, %v9268
        %9270 = vmatprep.mubr.bf16.mxu0 %v6211
        %9271 = vmatmul.mubr.bf16.gmra.mrb[0].mxu0 %v6210
        %v9272 = vpop.f32.mrb[0].mxu0
        %v9273 = vadd.f32 %v9120, %v9272
        %v9274 = vpop.f32.mrb[0].mxu0
        %v9275 = vadd.f32 %v9122, %v9274
        %v9276 = vpop.f32.mrb[0].mxu0
        %v9277 = vadd.f32 %v9124, %v9276
        %v9278 = vpop.f32.mrb[0].mxu0
        %v9279 = vadd.f32 %v9126, %v9278
        %9280 = vmatprep.mubr.bf16.mxu0 %v6217
        %9281 = vmatmul.mubr.bf16.gmra.mrb[0].mxu0 %v6216
        %v9282 = vpop.f32.mrb[0].mxu0
        %v9283 = vadd.f32 %v9130, %v9282
        %v9284 = vpop.f32.mrb[0].mxu0
        %v9285 = vadd.f32 %v9132, %v9284
        %v9286 = vpop.f32.mrb[0].mxu0
        %v9287 = vadd.f32 %v9134, %v9286
        %v9288 = vpop.f32.mrb[0].mxu0
        %v9289 = vadd.f32 %v9136, %v9288
        %9290 = vmatprep.mubr.bf16.mxu0 %v6223
        %9291 = vmatmul.mubr.bf16.gmra.mrb[0].mxu0 %v6222
        %v9292 = vpop.f32.mrb[0].mxu0
        %v9293 = vadd.f32 %v9140, %v9292
        %v9294 = vpop.f32.mrb[0].mxu0
        %v9295 = vadd.f32 %v9142, %v9294
        %v9296 = vpop.f32.mrb[0].mxu0
        %v9297 = vadd.f32 %v9144, %v9296
        %v9298 = vpop.f32.mrb[0].mxu0
        %v9299 = vadd.f32 %v9146, %v9298
        %9300 = vmatprep.mubr.bf16.mxu0 %v6229
        %9301 = vmatmul.mubr.bf16.gmra.mrb[0].mxu0 %v6228
        %v9302 = vpop.f32.mrb[0].mxu0
        %v9303 = vadd.f32 %v9150, %v9302
        %v9304 = vpop.f32.mrb[0].mxu0
        %v9305 = vadd.f32 %v9152, %v9304
        %v9306 = vpop.f32.mrb[0].mxu0
        %v9307 = vadd.f32 %v9154, %v9306
        %v9308 = vpop.f32.mrb[0].mxu0
        %v9309 = vadd.f32 %v9156, %v9308
        %9310 = vmatprep.mubr.bf16.mxu0 %v6235
        %9311 = vmatmul.mubr.bf16.gmra.mrb[0].mxu0 %v6234
        %v9312 = vpop.f32.mrb[0].mxu0
        %v9313 = vadd.f32 %v9160, %v9312
        %v9314 = vpop.f32.mrb[0].mxu0
        %v9315 = vadd.f32 %v9162, %v9314
        %v9316 = vpop.f32.mrb[0].mxu0
        %v9317 = vadd.f32 %v9164, %v9316
        %v9318 = vpop.f32.mrb[0].mxu0
        %v9319 = vadd.f32 %v9166, %v9318
        %9320 = vmatprep.mubr.bf16.mxu0 %v6241
        %9321 = vmatmul.mubr.bf16.gmra.mrb[0].mxu0 %v6240
        %v9322 = vpop.f32.mrb[0].mxu0
        %v9323 = vadd.f32 %v9170, %v9322
        %v9324 = vpop.f32.mrb[0].mxu0
        %v9325 = vadd.f32 %v9172, %v9324
        %v9326 = vpop.f32.mrb[0].mxu0
        %v9327 = vadd.f32 %v9174, %v9326
        %v9328 = vpop.f32.mrb[0].mxu0
        %v9329 = vadd.f32 %v9176, %v9328
        %9330 = vmatprep.mubr.bf16.mxu0 %v6247
        %9331 = vmatmul.mubr.bf16.gmra.mrb[0].mxu0 %v6246
        %v9332 = vpop.f32.mrb[0].mxu0
        %v9333 = vadd.f32 %v9180, %v9332
        %v9334 = vpop.f32.mrb[0].mxu0
        %v9335 = vadd.f32 %v9182, %v9334
        %v9336 = vpop.f32.mrb[0].mxu0
        %v9337 = vadd.f32 %v9184, %v9336
        %v9338 = vpop.f32.mrb[0].mxu0
        %v9339 = vadd.f32 %v9186, %v9338
        %9340 = vmatprep.mubr.bf16.mxu0 %v6253
        %9341 = vmatmul.mubr.bf16.gmra.mrb[0].mxu0 %v6252
        %v9342 = vpop.f32.mrb[0].mxu0
        %v9343 = vadd.f32 %v9190, %v9342
        %v9344 = vpop.f32.mrb[0].mxu0
        %v9345 = vadd.f32 %v9192, %v9344
        %v9346 = vpop.f32.mrb[0].mxu0
        %v9347 = vadd.f32 %v9194, %v9346
        %v9348 = vpop.f32.mrb[0].mxu0
        %v9349 = vadd.f32 %v9196, %v9348
        %9350 = vmatprep.mubr.bf16.mxu0 %v6259
        %9351 = vmatmul.mubr.bf16.gmra.mrb[0].mxu0 %v6258
        %v9352 = vpop.f32.mrb[0].mxu0
        %v9353 = vadd.f32 %v9200, %v9352
        %v9354 = vpop.f32.mrb[0].mxu0
        %v9355 = vadd.f32 %v9202, %v9354
        %v9356 = vpop.f32.mrb[0].mxu0
        %v9357 = vadd.f32 %v9204, %v9356
        %v9358 = vpop.f32.mrb[0].mxu0
        %v9359 = vadd.f32 %v9206, %v9358
        %9360 = vmatprep.mubr.bf16.mxu0 %v6265
        %9361 = vmatmul.mubr.bf16.gmra.mrb[0].mxu0 %v6264
        %v9362 = vpop.f32.mrb[0].mxu0
        %v9363 = vadd.f32 %v9210, %v9362
        %v9364 = vpop.f32.mrb[0].mxu0
        %v9365 = vadd.f32 %v9212, %v9364
        %v9366 = vpop.f32.mrb[0].mxu0
        %v9367 = vadd.f32 %v9214, %v9366
        %v9368 = vpop.f32.mrb[0].mxu0
        %v9369 = vadd.f32 %v9216, %v9368
        %9370 = vdwg.mxu0
        %v9371 = vadd.f32 %v6050, %v8335
        %v9372 = vadd.f32 %v6051, %v8337
        %v9373 = vadd.f32 %v6052, %v8794
        %v9374 = vadd.f32 %v6053, %v8796
        %v9375 = vadd.f32 %v6054, %v9253
        %v9376 = vadd.f32 %v6055, %v9255
        %v9377 = vadd.f32 %v6056, %v8339
        %v9378 = vadd.f32 %v6057, %v8341
        %v9379 = vadd.f32 %v6058, %v8798
        %v9380 = vadd.f32 %v6059, %v8800
        %v9381 = vadd.f32 %v6060, %v9257
        %v9382 = vadd.f32 %v6061, %v9259
        %v9383 = vadd.f32 %v6062, %v8345
        %v9384 = vadd.f32 %v6063, %v8347
        %v9385 = vadd.f32 %v6064, %v8804
        %v9386 = vadd.f32 %v6065, %v8806
        %v9387 = vadd.f32 %v6066, %v9263
        %v9388 = vadd.f32 %v6067, %v9265
        %v9389 = vadd.f32 %v6068, %v8349
        %v9390 = vadd.f32 %v6069, %v8351
        %v9391 = vadd.f32 %v6070, %v8808
        %v9392 = vadd.f32 %v6071, %v8810
        %v9393 = vadd.f32 %v6072, %v9267
        %v9394 = vadd.f32 %v6073, %v9269
        %v9395 = vadd.f32 %v6074, %v8355
        %v9396 = vadd.f32 %v6075, %v8357
        %v9397 = vadd.f32 %v6076, %v8814
        %v9398 = vadd.f32 %v6077, %v8816
        %v9399 = vadd.f32 %v6078, %v9273
        %v9400 = vadd.f32 %v6079, %v9275
        %v9401 = vadd.f32 %v6080, %v8359
        %v9402 = vadd.f32 %v6081, %v8361
        %v9403 = vadd.f32 %v6082, %v8818
        %v9404 = vadd.f32 %v6083, %v8820
        %v9405 = vadd.f32 %v6084, %v9277
        %v9406 = vadd.f32 %v6085, %v9279
        %v9407 = vadd.f32 %v6086, %v8365
        %v9408 = vadd.f32 %v6087, %v8367
        %v9409 = vadd.f32 %v6088, %v8824
        %v9410 = vadd.f32 %v6089, %v8826
        %v9411 = vadd.f32 %v6090, %v9283
        %v9412 = vadd.f32 %v6091, %v9285
        %v9413 = vadd.f32 %v6092, %v8369
        %v9414 = vadd.f32 %v6093, %v8371
        %v9415 = vadd.f32 %v6094, %v8828
        %v9416 = vadd.f32 %v6095, %v8830
        %v9417 = vadd.f32 %v6096, %v9287
        %v9418 = vadd.f32 %v6097, %v9289
        %v9419 = vadd.f32 %v6098, %v8375
        %v9420 = vadd.f32 %v6099, %v8377
        %v9421 = vadd.f32 %v6100, %v8834
        %v9422 = vadd.f32 %v6101, %v8836
        %v9423 = vadd.f32 %v6102, %v9293
        %v9424 = vadd.f32 %v6103, %v9295
        %v9425 = vadd.f32 %v6104, %v8379
        %v9426 = vadd.f32 %v6105, %v8381
        %v9427 = vadd.f32 %v6106, %v8838
        %v9428 = vadd.f32 %v6107, %v8840
        %v9429 = vadd.f32 %v6108, %v9297
        %v9430 = vadd.f32 %v6109, %v9299
        %v9431 = vadd.f32 %v6110, %v8385
        %v9432 = vadd.f32 %v6111, %v8387
        %v9433 = vadd.f32 %v6112, %v8844
        %v9434 = vadd.f32 %v6113, %v8846
        %v9435 = vadd.f32 %v6114, %v9303
        %v9436 = vadd.f32 %v6115, %v9305
        %v9437 = vadd.f32 %v6116, %v8389
        %v9438 = vadd.f32 %v6117, %v8391
        %v9439 = vadd.f32 %v6118, %v8848
        %v9440 = vadd.f32 %v6119, %v8850
        %v9441 = vadd.f32 %v6120, %v9307
        %v9442 = vadd.f32 %v6121, %v9309
        %v9443 = vadd.f32 %v6122, %v8395
        %v9444 = vadd.f32 %v6123, %v8397
        %v9445 = vadd.f32 %v6124, %v8854
        %v9446 = vadd.f32 %v6125, %v8856
        %v9447 = vadd.f32 %v6126, %v9313
        %v9448 = vadd.f32 %v6127, %v9315
        %v9449 = vadd.f32 %v6128, %v8399
        %v9450 = vadd.f32 %v6129, %v8401
        %v9451 = vadd.f32 %v6130, %v8858
        %v9452 = vadd.f32 %v6131, %v8860
        %v9453 = vadd.f32 %v6132, %v9317
        %v9454 = vadd.f32 %v6133, %v9319
        %v9455 = vadd.f32 %v6134, %v8405
        %v9456 = vadd.f32 %v6135, %v8407
        %v9457 = vadd.f32 %v6136, %v8864
        %v9458 = vadd.f32 %v6137, %v8866
        %v9459 = vadd.f32 %v6138, %v9323
        %v9460 = vadd.f32 %v6139, %v9325
        %v9461 = vadd.f32 %v6140, %v8409
        %v9462 = vadd.f32 %v6141, %v8411
        %v9463 = vadd.f32 %v6142, %v8868
        %v9464 = vadd.f32 %v6143, %v8870
        %v9465 = vadd.f32 %v6144, %v9327
        %v9466 = vadd.f32 %v6145, %v9329
        %v9467 = vadd.f32 %v6146, %v8415
        %v9468 = vadd.f32 %v6147, %v8417
        %v9469 = vadd.f32 %v6148, %v8874
        %v9470 = vadd.f32 %v6149, %v8876
        %v9471 = vadd.f32 %v6150, %v9333
        %v9472 = vadd.f32 %v6151, %v9335
        %v9473 = vadd.f32 %v6152, %v8419
        %v9474 = vadd.f32 %v6153, %v8421
        %v9475 = vadd.f32 %v6154, %v8878
        %v9476 = vadd.f32 %v6155, %v8880
        %v9477 = vadd.f32 %v6156, %v9337
        %v9478 = vadd.f32 %v6157, %v9339
        %v9479 = vadd.f32 %v6158, %v8425
        %v9480 = vadd.f32 %v6159, %v8427
        %v9481 = vadd.f32 %v6160, %v8884
        %v9482 = vadd.f32 %v6161, %v8886
        %v9483 = vadd.f32 %v6162, %v9343
        %v9484 = vadd.f32 %v6163, %v9345
        %v9485 = vadd.f32 %v6164, %v8429
        %v9486 = vadd.f32 %v6165, %v8431
        %v9487 = vadd.f32 %v6166, %v8888
        %v9488 = vadd.f32 %v6167, %v8890
        %v9489 = vadd.f32 %v6168, %v9347
        %v9490 = vadd.f32 %v6169, %v9349
        %v9491 = vadd.f32 %v6170, %v8435
        %v9492 = vadd.f32 %v6171, %v8437
        %v9493 = vadd.f32 %v6172, %v8894
        %v9494 = vadd.f32 %v6173, %v8896
        %v9495 = vadd.f32 %v6174, %v9353
        %v9496 = vadd.f32 %v6175, %v9355
        %v9497 = vadd.f32 %v6176, %v8439
        %v9498 = vadd.f32 %v6177, %v8441
        %v9499 = vadd.f32 %v6178, %v8898
        %v9500 = vadd.f32 %v6179, %v8900
        %v9501 = vadd.f32 %v6180, %v9357
        %v9502 = vadd.f32 %v6181, %v9359
        %v9503 = vadd.f32 %v6182, %v8445
        %v9504 = vadd.f32 %v6183, %v8447
        %v9505 = vadd.f32 %v6184, %v8904
        %v9506 = vadd.f32 %v6185, %v8906
        %v9507 = vadd.f32 %v6186, %v9363
        %v9508 = vadd.f32 %v6187, %v9365
        %v9509 = vadd.f32 %v6188, %v8449
        %v9510 = vadd.f32 %v6189, %v8451
        %v9511 = vadd.f32 %v6190, %v8908
        %v9512 = vadd.f32 %v6191, %v8910
        %v9513 = vadd.f32 %v6192, %v9367
        %v9514 = vadd.f32 %v6193, %v9369
        %9515 = vst [vmem:[#allocation3] sm:$0xff] %v9371
        %9516 = vst [vmem:[#allocation3 + $0x8] sm:$0xff] %v9372
        %9517 = vst [vmem:[#allocation3 + $0x10] sm:$0xff] %v9373
        %9518 = vst [vmem:[#allocation3 + $0x18] sm:$0xff] %v9374
        %9519 = vst [vmem:[#allocation3 + $0x20] sm:$0xff] %v9375
        %9520 = vst [vmem:[#allocation3 + $0x28] sm:$0xff] %v9376
        %9521 = vst [vmem:[#allocation3 + $0x30] sm:$0xff] %v9377
        %9522 = vst [vmem:[#allocation3 + $0x38] sm:$0xff] %v9378
        %9523 = vst [vmem:[#allocation3 + $0x40] sm:$0xff] %v9379
        %9524 = vst [vmem:[#allocation3 + $0x48] sm:$0xff] %v9380
        %9525 = vst [vmem:[#allocation3 + $0x50] sm:$0xff] %v9381
        %9526 = vst [vmem:[#allocation3 + $0x58] sm:$0xff] %v9382
        %9527 = vst [vmem:[#allocation3 + $0x60] sm:$0xff] %v9383
        %9528 = vst [vmem:[#allocation3 + $0x68] sm:$0xff] %v9384
        %9529 = vst [vmem:[#allocation3 + $0x70] sm:$0xff] %v9385
        %9530 = vst [vmem:[#allocation3 + $0x78] sm:$0xff] %v9386
        %9531 = vst [vmem:[#allocation3 + $0x80] sm:$0xff] %v9387
        %9532 = vst [vmem:[#allocation3 + $0x88] sm:$0xff] %v9388
        %9533 = vst [vmem:[#allocation3 + $0x90] sm:$0xff] %v9389
        %9534 = vst [vmem:[#allocation3 + $0x98] sm:$0xff] %v9390
        %9535 = vst [vmem:[#allocation3 + $0xa0] sm:$0xff] %v9391
        %9536 = vst [vmem:[#allocation3 + $0xa8] sm:$0xff] %v9392
        %9537 = vst [vmem:[#allocation3 + $0xb0] sm:$0xff] %v9393
        %9538 = vst [vmem:[#allocation3 + $0xb8] sm:$0xff] %v9394
        %9539 = vst [vmem:[#allocation3 + $0xc0] sm:$0xff] %v9395
        %9540 = vst [vmem:[#allocation3 + $0xc8] sm:$0xff] %v9396
        %9541 = vst [vmem:[#allocation3 + $0xd0] sm:$0xff] %v9397
        %9542 = vst [vmem:[#allocation3 + $0xd8] sm:$0xff] %v9398
        %9543 = vst [vmem:[#allocation3 + $0xe0] sm:$0xff] %v9399
        %9544 = vst [vmem:[#allocation3 + $0xe8] sm:$0xff] %v9400
        %9545 = vst [vmem:[#allocation3 + $0xf0] sm:$0xff] %v9401
        %9546 = vst [vmem:[#allocation3 + $0xf8] sm:$0xff] %v9402
        %9547 = vst [vmem:[#allocation3 + $0x100] sm:$0xff] %v9403
        %9548 = vst [vmem:[#allocation3 + $0x108] sm:$0xff] %v9404
        %9549 = vst [vmem:[#allocation3 + $0x110] sm:$0xff] %v9405
        %9550 = vst [vmem:[#allocation3 + $0x118] sm:$0xff] %v9406
        %9551 = vst [vmem:[#allocation3 + $0x120] sm:$0xff] %v9407
        %9552 = vst [vmem:[#allocation3 + $0x128] sm:$0xff] %v9408
        %9553 = vst [vmem:[#allocation3 + $0x130] sm:$0xff] %v9409
        %9554 = vst [vmem:[#allocation3 + $0x138] sm:$0xff] %v9410
        %9555 = vst [vmem:[#allocation3 + $0x140] sm:$0xff] %v9411
        %9556 = vst [vmem:[#allocation3 + $0x148] sm:$0xff] %v9412
        %9557 = vst [vmem:[#allocation3 + $0x150] sm:$0xff] %v9413
        %9558 = vst [vmem:[#allocation3 + $0x158] sm:$0xff] %v9414
        %9559 = vst [vmem:[#allocation3 + $0x160] sm:$0xff] %v9415
        %9560 = vst [vmem:[#allocation3 + $0x168] sm:$0xff] %v9416
        %9561 = vst [vmem:[#allocation3 + $0x170] sm:$0xff] %v9417
        %9562 = vst [vmem:[#allocation3 + $0x178] sm:$0xff] %v9418
        %9563 = vst [vmem:[#allocation3 + $0x180] sm:$0xff] %v9419
        %9564 = vst [vmem:[#allocation3 + $0x188] sm:$0xff] %v9420
        %9565 = vst [vmem:[#allocation3 + $0x190] sm:$0xff] %v9421
        %9566 = vst [vmem:[#allocation3 + $0x198] sm:$0xff] %v9422
        %9567 = vst [vmem:[#allocation3 + $0x1a0] sm:$0xff] %v9423
        %9568 = vst [vmem:[#allocation3 + $0x1a8] sm:$0xff] %v9424
        %9569 = vst [vmem:[#allocation3 + $0x1b0] sm:$0xff] %v9425
        %9570 = vst [vmem:[#allocation3 + $0x1b8] sm:$0xff] %v9426
        %9571 = vst [vmem:[#allocation3 + $0x1c0] sm:$0xff] %v9427
        %9572 = vst [vmem:[#allocation3 + $0x1c8] sm:$0xff] %v9428
        %9573 = vst [vmem:[#allocation3 + $0x1d0] sm:$0xff] %v9429
        %9574 = vst [vmem:[#allocation3 + $0x1d8] sm:$0xff] %v9430
        %9575 = vst [vmem:[#allocation3 + $0x1e0] sm:$0xff] %v9431
        %9576 = vst [vmem:[#allocation3 + $0x1e8] sm:$0xff] %v9432
        %9577 = vst [vmem:[#allocation3 + $0x1f0] sm:$0xff] %v9433
        %9578 = vst [vmem:[#allocation3 + $0x1f8] sm:$0xff] %v9434
        %9579 = vst [vmem:[#allocation3 + $0x200] sm:$0xff] %v9435
        %9580 = vst [vmem:[#allocation3 + $0x208] sm:$0xff] %v9436
        %9581 = vst [vmem:[#allocation3 + $0x210] sm:$0xff] %v9437
        %9582 = vst [vmem:[#allocation3 + $0x218] sm:$0xff] %v9438
        %9583 = vst [vmem:[#allocation3 + $0x220] sm:$0xff] %v9439
        %9584 = vst [vmem:[#allocation3 + $0x228] sm:$0xff] %v9440
        %9585 = vst [vmem:[#allocation3 + $0x230] sm:$0xff] %v9441
        %9586 = vst [vmem:[#allocation3 + $0x238] sm:$0xff] %v9442
        %9587 = vst [vmem:[#allocation3 + $0x240] sm:$0xff] %v9443
        %9588 = vst [vmem:[#allocation3 + $0x248] sm:$0xff] %v9444
        %9589 = vst [vmem:[#allocation3 + $0x250] sm:$0xff] %v9445
        %9590 = vst [vmem:[#allocation3 + $0x258] sm:$0xff] %v9446
        %9591 = vst [vmem:[#allocation3 + $0x260] sm:$0xff] %v9447
        %9592 = vst [vmem:[#allocation3 + $0x268] sm:$0xff] %v9448
        %9593 = vst [vmem:[#allocation3 + $0x270] sm:$0xff] %v9449
        %9594 = vst [vmem:[#allocation3 + $0x278] sm:$0xff] %v9450
        %9595 = vst [vmem:[#allocation3 + $0x280] sm:$0xff] %v9451
        %9596 = vst [vmem:[#allocation3 + $0x288] sm:$0xff] %v9452
        %9597 = vst [vmem:[#allocation3 + $0x290] sm:$0xff] %v9453
        %9598 = vst [vmem:[#allocation3 + $0x298] sm:$0xff] %v9454
        %9599 = vst [vmem:[#allocation3 + $0x2a0] sm:$0xff] %v9455
        %9600 = vst [vmem:[#allocation3 + $0x2a8] sm:$0xff] %v9456
        %9601 = vst [vmem:[#allocation3 + $0x2b0] sm:$0xff] %v9457
        %9602 = vst [vmem:[#allocation3 + $0x2b8] sm:$0xff] %v9458
        %9603 = vst [vmem:[#allocation3 + $0x2c0] sm:$0xff] %v9459
        %9604 = vst [vmem:[#allocation3 + $0x2c8] sm:$0xff] %v9460
        %9605 = vst [vmem:[#allocation3 + $0x2d0] sm:$0xff] %v9461
        %9606 = vst [vmem:[#allocation3 + $0x2d8] sm:$0xff] %v9462
        %9607 = vst [vmem:[#allocation3 + $0x2e0] sm:$0xff] %v9463
        %9608 = vst [vmem:[#allocation3 + $0x2e8] sm:$0xff] %v9464
        %9609 = vst [vmem:[#allocation3 + $0x2f0] sm:$0xff] %v9465
        %9610 = vst [vmem:[#allocation3 + $0x2f8] sm:$0xff] %v9466
        %9611 = vst [vmem:[#allocation3 + $0x300] sm:$0xff] %v9467
        %9612 = vst [vmem:[#allocation3 + $0x308] sm:$0xff] %v9468
        %9613 = vst [vmem:[#allocation3 + $0x310] sm:$0xff] %v9469
        %9614 = vst [vmem:[#allocation3 + $0x318] sm:$0xff] %v9470
        %9615 = vst [vmem:[#allocation3 + $0x320] sm:$0xff] %v9471
        %9616 = vst [vmem:[#allocation3 + $0x328] sm:$0xff] %v9472
        %9617 = vst [vmem:[#allocation3 + $0x330] sm:$0xff] %v9473
        %9618 = vst [vmem:[#allocation3 + $0x338] sm:$0xff] %v9474
        %9619 = vst [vmem:[#allocation3 + $0x340] sm:$0xff] %v9475
        %9620 = vst [vmem:[#allocation3 + $0x348] sm:$0xff] %v9476
        %9621 = vst [vmem:[#allocation3 + $0x350] sm:$0xff] %v9477
        %9622 = vst [vmem:[#allocation3 + $0x358] sm:$0xff] %v9478
        %9623 = vst [vmem:[#allocation3 + $0x360] sm:$0xff] %v9479
        %9624 = vst [vmem:[#allocation3 + $0x368] sm:$0xff] %v9480
        %9625 = vst [vmem:[#allocation3 + $0x370] sm:$0xff] %v9481
        %9626 = vst [vmem:[#allocation3 + $0x378] sm:$0xff] %v9482
        %9627 = vst [vmem:[#allocation3 + $0x380] sm:$0xff] %v9483
        %9628 = vst [vmem:[#allocation3 + $0x388] sm:$0xff] %v9484
        %9629 = vst [vmem:[#allocation3 + $0x390] sm:$0xff] %v9485
        %9630 = vst [vmem:[#allocation3 + $0x398] sm:$0xff] %v9486
        %9631 = vst [vmem:[#allocation3 + $0x3a0] sm:$0xff] %v9487
        %9632 = vst [vmem:[#allocation3 + $0x3a8] sm:$0xff] %v9488
        %9633 = vst [vmem:[#allocation3 + $0x3b0] sm:$0xff] %v9489
        %9634 = vst [vmem:[#allocation3 + $0x3b8] sm:$0xff] %v9490
        %9635 = vst [vmem:[#allocation3 + $0x3c0] sm:$0xff] %v9491
        %9636 = vst [vmem:[#allocation3 + $0x3c8] sm:$0xff] %v9492
        %9637 = vst [vmem:[#allocation3 + $0x3d0] sm:$0xff] %v9493
        %9638 = vst [vmem:[#allocation3 + $0x3d8] sm:$0xff] %v9494
        %9639 = vst [vmem:[#allocation3 + $0x3e0] sm:$0xff] %v9495
        %9640 = vst [vmem:[#allocation3 + $0x3e8] sm:$0xff] %v9496
        %9641 = vst [vmem:[#allocation3 + $0x3f0] sm:$0xff] %v9497
        %9642 = vst [vmem:[#allocation3 + $0x3f8] sm:$0xff] %v9498
        %9643 = vst [vmem:[#allocation3 + $0x400] sm:$0xff] %v9499
        %9644 = vst [vmem:[#allocation3 + $0x408] sm:$0xff] %v9500
        %9645 = vst [vmem:[#allocation3 + $0x410] sm:$0xff] %v9501
        %9646 = vst [vmem:[#allocation3 + $0x418] sm:$0xff] %v9502
        %9647 = vst [vmem:[#allocation3 + $0x420] sm:$0xff] %v9503
        %9648 = vst [vmem:[#allocation3 + $0x428] sm:$0xff] %v9504
        %9649 = vst [vmem:[#allocation3 + $0x430] sm:$0xff] %v9505
        %9650 = vst [vmem:[#allocation3 + $0x438] sm:$0xff] %v9506
        %9651 = vst [vmem:[#allocation3 + $0x440] sm:$0xff] %v9507
        %9652 = vst [vmem:[#allocation3 + $0x448] sm:$0xff] %v9508
        %9653 = vst [vmem:[#allocation3 + $0x450] sm:$0xff] %v9509
        %9654 = vst [vmem:[#allocation3 + $0x458] sm:$0xff] %v9510
        %9655 = vst [vmem:[#allocation3 + $0x460] sm:$0xff] %v9511
        %9656 = vst [vmem:[#allocation3 + $0x468] sm:$0xff] %v9512
        %9657 = vst [vmem:[#allocation3 + $0x470] sm:$0xff] %v9513
        %9658 = vst [vmem:[#allocation3 + $0x478] sm:$0xff] %v9514
        %p9659 = scmp.eq.s32.totalorder %s36, 3
        // Predicated region
        $region81: #{tpu_custom_call.1} parent=47 // pred_check
          %p9660 = pneg %p9659
        $region82: #{tpu_custom_call.1} parent=47 // pred_check_branch
          %9662 = sbr.rel (%p9660) target = $region84
        $region83: #{tpu_custom_call.1} parent=47 // pred_region
          %v9663 = vld [vmem:[#allocation3] sm:$0xff]
          %v9664 = vld [vmem:[#allocation3 + $0x8] sm:$0xff]
          %v9665 = vld [vmem:[#allocation3 + $0x10] sm:$0xff]
          %v9666 = vld [vmem:[#allocation3 + $0x18] sm:$0xff]
          %v9667 = vld [vmem:[#allocation3 + $0x20] sm:$0xff]
          %v9668 = vld [vmem:[#allocation3 + $0x28] sm:$0xff]
          %v9669 = vld [vmem:[#allocation3 + $0x30] sm:$0xff]
          %v9670 = vld [vmem:[#allocation3 + $0x38] sm:$0xff]
          %v9671 = vld [vmem:[#allocation3 + $0x40] sm:$0xff]
          %v9672 = vld [vmem:[#allocation3 + $0x48] sm:$0xff]
          %v9673 = vld [vmem:[#allocation3 + $0x50] sm:$0xff]
          %v9674 = vld [vmem:[#allocation3 + $0x58] sm:$0xff]
          %v9675 = vld [vmem:[#allocation3 + $0x60] sm:$0xff]
          %v9676 = vld [vmem:[#allocation3 + $0x68] sm:$0xff]
          %v9677 = vld [vmem:[#allocation3 + $0x70] sm:$0xff]
          %v9678 = vld [vmem:[#allocation3 + $0x78] sm:$0xff]
          %v9679 = vld [vmem:[#allocation3 + $0x80] sm:$0xff]
          %v9680 = vld [vmem:[#allocation3 + $0x88] sm:$0xff]
          %v9681 = vld [vmem:[#allocation3 + $0x90] sm:$0xff]
          %v9682 = vld [vmem:[#allocation3 + $0x98] sm:$0xff]
          %v9683 = vld [vmem:[#allocation3 + $0xa0] sm:$0xff]
          %v9684 = vld [vmem:[#allocation3 + $0xa8] sm:$0xff]
          %v9685 = vld [vmem:[#allocation3 + $0xb0] sm:$0xff]
          %v9686 = vld [vmem:[#allocation3 + $0xb8] sm:$0xff]
          %v9687 = vld [vmem:[#allocation3 + $0xc0] sm:$0xff]
          %v9688 = vld [vmem:[#allocation3 + $0xc8] sm:$0xff]
          %v9689 = vld [vmem:[#allocation3 + $0xd0] sm:$0xff]
          %v9690 = vld [vmem:[#allocation3 + $0xd8] sm:$0xff]
          %v9691 = vld [vmem:[#allocation3 + $0xe0] sm:$0xff]
          %v9692 = vld [vmem:[#allocation3 + $0xe8] sm:$0xff]
          %v9693 = vld [vmem:[#allocation3 + $0xf0] sm:$0xff]
          %v9694 = vld [vmem:[#allocation3 + $0xf8] sm:$0xff]
          %v9695 = vld [vmem:[#allocation3 + $0x100] sm:$0xff]
          %v9696 = vld [vmem:[#allocation3 + $0x108] sm:$0xff]
          %v9697 = vld [vmem:[#allocation3 + $0x110] sm:$0xff]
          %v9698 = vld [vmem:[#allocation3 + $0x118] sm:$0xff]
          %v9699 = vld [vmem:[#allocation3 + $0x120] sm:$0xff]
          %v9700 = vld [vmem:[#allocation3 + $0x128] sm:$0xff]
          %v9701 = vld [vmem:[#allocation3 + $0x130] sm:$0xff]
          %v9702 = vld [vmem:[#allocation3 + $0x138] sm:$0xff]
          %v9703 = vld [vmem:[#allocation3 + $0x140] sm:$0xff]
          %v9704 = vld [vmem:[#allocation3 + $0x148] sm:$0xff]
          %v9705 = vld [vmem:[#allocation3 + $0x150] sm:$0xff]
          %v9706 = vld [vmem:[#allocation3 + $0x158] sm:$0xff]
          %v9707 = vld [vmem:[#allocation3 + $0x160] sm:$0xff]
          %v9708 = vld [vmem:[#allocation3 + $0x168] sm:$0xff]
          %v9709 = vld [vmem:[#allocation3 + $0x170] sm:$0xff]
          %v9710 = vld [vmem:[#allocation3 + $0x178] sm:$0xff]
          %v9711 = vld [vmem:[#allocation3 + $0x180] sm:$0xff]
          %v9712 = vld [vmem:[#allocation3 + $0x188] sm:$0xff]
          %v9713 = vld [vmem:[#allocation3 + $0x190] sm:$0xff]
          %v9714 = vld [vmem:[#allocation3 + $0x198] sm:$0xff]
          %v9715 = vld [vmem:[#allocation3 + $0x1a0] sm:$0xff]
          %v9716 = vld [vmem:[#allocation3 + $0x1a8] sm:$0xff]
          %v9717 = vld [vmem:[#allocation3 + $0x1b0] sm:$0xff]
          %v9718 = vld [vmem:[#allocation3 + $0x1b8] sm:$0xff]
          %v9719 = vld [vmem:[#allocation3 + $0x1c0] sm:$0xff]
          %v9720 = vld [vmem:[#allocation3 + $0x1c8] sm:$0xff]
          %v9721 = vld [vmem:[#allocation3 + $0x1d0] sm:$0xff]
          %v9722 = vld [vmem:[#allocation3 + $0x1d8] sm:$0xff]
          %v9723 = vld [vmem:[#allocation3 + $0x1e0] sm:$0xff]
          %v9724 = vld [vmem:[#allocation3 + $0x1e8] sm:$0xff]
          %v9725 = vld [vmem:[#allocation3 + $0x1f0] sm:$0xff]
          %v9726 = vld [vmem:[#allocation3 + $0x1f8] sm:$0xff]
          %v9727 = vld [vmem:[#allocation3 + $0x200] sm:$0xff]
          %v9728 = vld [vmem:[#allocation3 + $0x208] sm:$0xff]
          %v9729 = vld [vmem:[#allocation3 + $0x210] sm:$0xff]
          %v9730 = vld [vmem:[#allocation3 + $0x218] sm:$0xff]
          %v9731 = vld [vmem:[#allocation3 + $0x220] sm:$0xff]
          %v9732 = vld [vmem:[#allocation3 + $0x228] sm:$0xff]
          %v9733 = vld [vmem:[#allocation3 + $0x230] sm:$0xff]
          %v9734 = vld [vmem:[#allocation3 + $0x238] sm:$0xff]
          %v9735 = vld [vmem:[#allocation3 + $0x240] sm:$0xff]
          %v9736 = vld [vmem:[#allocation3 + $0x248] sm:$0xff]
          %v9737 = vld [vmem:[#allocation3 + $0x250] sm:$0xff]
          %v9738 = vld [vmem:[#allocation3 + $0x258] sm:$0xff]
          %v9739 = vld [vmem:[#allocation3 + $0x260] sm:$0xff]
          %v9740 = vld [vmem:[#allocation3 + $0x268] sm:$0xff]
          %v9741 = vld [vmem:[#allocation3 + $0x270] sm:$0xff]
          %v9742 = vld [vmem:[#allocation3 + $0x278] sm:$0xff]
          %v9743 = vld [vmem:[#allocation3 + $0x280] sm:$0xff]
          %v9744 = vld [vmem:[#allocation3 + $0x288] sm:$0xff]
          %v9745 = vld [vmem:[#allocation3 + $0x290] sm:$0xff]
          %v9746 = vld [vmem:[#allocation3 + $0x298] sm:$0xff]
          %v9747 = vld [vmem:[#allocation3 + $0x2a0] sm:$0xff]
          %v9748 = vld [vmem:[#allocation3 + $0x2a8] sm:$0xff]
          %v9749 = vld [vmem:[#allocation3 + $0x2b0] sm:$0xff]
          %v9750 = vld [vmem:[#allocation3 + $0x2b8] sm:$0xff]
          %v9751 = vld [vmem:[#allocation3 + $0x2c0] sm:$0xff]
          %v9752 = vld [vmem:[#allocation3 + $0x2c8] sm:$0xff]
          %v9753 = vld [vmem:[#allocation3 + $0x2d0] sm:$0xff]
          %v9754 = vld [vmem:[#allocation3 + $0x2d8] sm:$0xff]
          %v9755 = vld [vmem:[#allocation3 + $0x2e0] sm:$0xff]
          %v9756 = vld [vmem:[#allocation3 + $0x2e8] sm:$0xff]
          %v9757 = vld [vmem:[#allocation3 + $0x2f0] sm:$0xff]
          %v9758 = vld [vmem:[#allocation3 + $0x2f8] sm:$0xff]
          %v9759 = vld [vmem:[#allocation3 + $0x300] sm:$0xff]
          %v9760 = vld [vmem:[#allocation3 + $0x308] sm:$0xff]
          %v9761 = vld [vmem:[#allocation3 + $0x310] sm:$0xff]
          %v9762 = vld [vmem:[#allocation3 + $0x318] sm:$0xff]
          %v9763 = vld [vmem:[#allocation3 + $0x320] sm:$0xff]
          %v9764 = vld [vmem:[#allocation3 + $0x328] sm:$0xff]
          %v9765 = vld [vmem:[#allocation3 + $0x330] sm:$0xff]
          %v9766 = vld [vmem:[#allocation3 + $0x338] sm:$0xff]
          %v9767 = vld [vmem:[#allocation3 + $0x340] sm:$0xff]
          %v9768 = vld [vmem:[#allocation3 + $0x348] sm:$0xff]
          %v9769 = vld [vmem:[#allocation3 + $0x350] sm:$0xff]
          %v9770 = vld [vmem:[#allocation3 + $0x358] sm:$0xff]
          %v9771 = vld [vmem:[#allocation3 + $0x360] sm:$0xff]
          %v9772 = vld [vmem:[#allocation3 + $0x368] sm:$0xff]
          %v9773 = vld [vmem:[#allocation3 + $0x370] sm:$0xff]
          %v9774 = vld [vmem:[#allocation3 + $0x378] sm:$0xff]
          %v9775 = vld [vmem:[#allocation3 + $0x380] sm:$0xff]
          %v9776 = vld [vmem:[#allocation3 + $0x388] sm:$0xff]
          %v9777 = vld [vmem:[#allocation3 + $0x390] sm:$0xff]
          %v9778 = vld [vmem:[#allocation3 + $0x398] sm:$0xff]
          %v9779 = vld [vmem:[#allocation3 + $0x3a0] sm:$0xff]
          %v9780 = vld [vmem:[#allocation3 + $0x3a8] sm:$0xff]
          %v9781 = vld [vmem:[#allocation3 + $0x3b0] sm:$0xff]
          %v9782 = vld [vmem:[#allocation3 + $0x3b8] sm:$0xff]
          %v9783 = vld [vmem:[#allocation3 + $0x3c0] sm:$0xff]
          %v9784 = vld [vmem:[#allocation3 + $0x3c8] sm:$0xff]
          %v9785 = vld [vmem:[#allocation3 + $0x3d0] sm:$0xff]
          %v9786 = vld [vmem:[#allocation3 + $0x3d8] sm:$0xff]
          %v9787 = vld [vmem:[#allocation3 + $0x3e0] sm:$0xff]
          %v9788 = vld [vmem:[#allocation3 + $0x3e8] sm:$0xff]
          %v9789 = vld [vmem:[#allocation3 + $0x3f0] sm:$0xff]
          %v9790 = vld [vmem:[#allocation3 + $0x3f8] sm:$0xff]
          %v9791 = vld [vmem:[#allocation3 + $0x400] sm:$0xff]
          %v9792 = vld [vmem:[#allocation3 + $0x408] sm:$0xff]
          %v9793 = vld [vmem:[#allocation3 + $0x410] sm:$0xff]
          %v9794 = vld [vmem:[#allocation3 + $0x418] sm:$0xff]
          %v9795 = vld [vmem:[#allocation3 + $0x420] sm:$0xff]
          %v9796 = vld [vmem:[#allocation3 + $0x428] sm:$0xff]
          %v9797 = vld [vmem:[#allocation3 + $0x430] sm:$0xff]
          %v9798 = vld [vmem:[#allocation3 + $0x438] sm:$0xff]
          %v9799 = vld [vmem:[#allocation3 + $0x440] sm:$0xff]
          %v9800 = vld [vmem:[#allocation3 + $0x448] sm:$0xff]
          %v9801 = vld [vmem:[#allocation3 + $0x450] sm:$0xff]
          %v9802 = vld [vmem:[#allocation3 + $0x458] sm:$0xff]
          %v9803 = vld [vmem:[#allocation3 + $0x460] sm:$0xff]
          %v9804 = vld [vmem:[#allocation3 + $0x468] sm:$0xff]
          %v9805 = vld [vmem:[#allocation3 + $0x470] sm:$0xff]
          %v9806 = vld [vmem:[#allocation3 + $0x478] sm:$0xff]
          %v9807 = vld [vmem:[#allocation15] sm:$0x3f]
          %v9809 = vlaneseq
          %v9810 = vshrl.u32 %v9809, 7
          %v9811 = vsub.s32 0, %v9810
          %v9812 = vrot.slane %v9807, %v9811
          %v9813 = vlaneseq
          %v9814 = vshrl.u32 %v9813, 7
          %v9815 = vsub.s32 1, %v9814
          %v9816 = vrot.slane %v9807, %v9815
          %v9817 = vlaneseq
          %v9818 = vshrl.u32 %v9817, 7
          %v9819 = vsub.s32 2, %v9818
          %v9820 = vrot.slane %v9807, %v9819
          %v9821 = vlaneseq
          %v9822 = vshrl.u32 %v9821, 7
          %v9823 = vsub.s32 3, %v9822
          %v9824 = vrot.slane %v9807, %v9823
          %v9825 = vlaneseq
          %v9826 = vshrl.u32 %v9825, 7
          %v9827 = vsub.s32 4, %v9826
          %v9828 = vrot.slane %v9807, %v9827
          %v9829 = vlaneseq
          %v9830 = vshrl.u32 %v9829, 7
          %v9831 = vsub.s32 5, %v9830
          %v9832 = vrot.slane %v9807, %v9831
          %v9839 = vadd.f32 %v9663, %v9812
          %v9840 = vadd.f32 %v9664, %v9816
          %v9841 = vadd.f32 %v9665, %v9820
          %v9842 = vadd.f32 %v9666, %v9824
          %v9843 = vadd.f32 %v9667, %v9828
          %v9844 = vadd.f32 %v9668, %v9832
          %v9845 = vadd.f32 %v9669, %v9812
          %v9846 = vadd.f32 %v9670, %v9816
          %v9847 = vadd.f32 %v9671, %v9820
          %v9848 = vadd.f32 %v9672, %v9824
          %v9849 = vadd.f32 %v9673, %v9828
          %v9850 = vadd.f32 %v9674, %v9832
          %v9851 = vadd.f32 %v9675, %v9812
          %v9852 = vadd.f32 %v9676, %v9816
          %v9853 = vadd.f32 %v9677, %v9820
          %v9854 = vadd.f32 %v9678, %v9824
          %v9855 = vadd.f32 %v9679, %v9828
          %v9856 = vadd.f32 %v9680, %v9832
          %v9857 = vadd.f32 %v9681, %v9812
          %v9858 = vadd.f32 %v9682, %v9816
          %v9859 = vadd.f32 %v9683, %v9820
          %v9860 = vadd.f32 %v9684, %v9824
          %v9861 = vadd.f32 %v9685, %v9828
          %v9862 = vadd.f32 %v9686, %v9832
          %v9863 = vadd.f32 %v9687, %v9812
          %v9864 = vadd.f32 %v9688, %v9816
          %v9865 = vadd.f32 %v9689, %v9820
          %v9866 = vadd.f32 %v9690, %v9824
          %v9867 = vadd.f32 %v9691, %v9828
          %v9868 = vadd.f32 %v9692, %v9832
          %v9869 = vadd.f32 %v9693, %v9812
          %v9870 = vadd.f32 %v9694, %v9816
          %v9871 = vadd.f32 %v9695, %v9820
          %v9872 = vadd.f32 %v9696, %v9824
          %v9873 = vadd.f32 %v9697, %v9828
          %v9874 = vadd.f32 %v9698, %v9832
          %v9875 = vadd.f32 %v9699, %v9812
          %v9876 = vadd.f32 %v9700, %v9816
          %v9877 = vadd.f32 %v9701, %v9820
          %v9878 = vadd.f32 %v9702, %v9824
          %v9879 = vadd.f32 %v9703, %v9828
          %v9880 = vadd.f32 %v9704, %v9832
          %v9881 = vadd.f32 %v9705, %v9812
          %v9882 = vadd.f32 %v9706, %v9816
          %v9883 = vadd.f32 %v9707, %v9820
          %v9884 = vadd.f32 %v9708, %v9824
          %v9885 = vadd.f32 %v9709, %v9828
          %v9886 = vadd.f32 %v9710, %v9832
          %v9887 = vadd.f32 %v9711, %v9812
          %v9888 = vadd.f32 %v9712, %v9816
          %v9889 = vadd.f32 %v9713, %v9820
          %v9890 = vadd.f32 %v9714, %v9824
          %v9891 = vadd.f32 %v9715, %v9828
          %v9892 = vadd.f32 %v9716, %v9832
          %v9893 = vadd.f32 %v9717, %v9812
          %v9894 = vadd.f32 %v9718, %v9816
          %v9895 = vadd.f32 %v9719, %v9820
          %v9896 = vadd.f32 %v9720, %v9824
          %v9897 = vadd.f32 %v9721, %v9828
          %v9898 = vadd.f32 %v9722, %v9832
          %v9899 = vadd.f32 %v9723, %v9812
          %v9900 = vadd.f32 %v9724, %v9816
          %v9901 = vadd.f32 %v9725, %v9820
          %v9902 = vadd.f32 %v9726, %v9824
          %v9903 = vadd.f32 %v9727, %v9828
          %v9904 = vadd.f32 %v9728, %v9832
          %v9905 = vadd.f32 %v9729, %v9812
          %v9906 = vadd.f32 %v9730, %v9816
          %v9907 = vadd.f32 %v9731, %v9820
          %v9908 = vadd.f32 %v9732, %v9824
          %v9909 = vadd.f32 %v9733, %v9828
          %v9910 = vadd.f32 %v9734, %v9832
          %v9911 = vadd.f32 %v9735, %v9812
          %v9912 = vadd.f32 %v9736, %v9816
          %v9913 = vadd.f32 %v9737, %v9820
          %v9914 = vadd.f32 %v9738, %v9824
          %v9915 = vadd.f32 %v9739, %v9828
          %v9916 = vadd.f32 %v9740, %v9832
          %v9917 = vadd.f32 %v9741, %v9812
          %v9918 = vadd.f32 %v9742, %v9816
          %v9919 = vadd.f32 %v9743, %v9820
          %v9920 = vadd.f32 %v9744, %v9824
          %v9921 = vadd.f32 %v9745, %v9828
          %v9922 = vadd.f32 %v9746, %v9832
          %v9923 = vadd.f32 %v9747, %v9812
          %v9924 = vadd.f32 %v9748, %v9816
          %v9925 = vadd.f32 %v9749, %v9820
          %v9926 = vadd.f32 %v9750, %v9824
          %v9927 = vadd.f32 %v9751, %v9828
          %v9928 = vadd.f32 %v9752, %v9832
          %v9929 = vadd.f32 %v9753, %v9812
          %v9930 = vadd.f32 %v9754, %v9816
          %v9931 = vadd.f32 %v9755, %v9820
          %v9932 = vadd.f32 %v9756, %v9824
          %v9933 = vadd.f32 %v9757, %v9828
          %v9934 = vadd.f32 %v9758, %v9832
          %v9935 = vadd.f32 %v9759, %v9812
          %v9936 = vadd.f32 %v9760, %v9816
          %v9937 = vadd.f32 %v9761, %v9820
          %v9938 = vadd.f32 %v9762, %v9824
          %v9939 = vadd.f32 %v9763, %v9828
          %v9940 = vadd.f32 %v9764, %v9832
          %v9941 = vadd.f32 %v9765, %v9812
          %v9942 = vadd.f32 %v9766, %v9816
          %v9943 = vadd.f32 %v9767, %v9820
          %v9944 = vadd.f32 %v9768, %v9824
          %v9945 = vadd.f32 %v9769, %v9828
          %v9946 = vadd.f32 %v9770, %v9832
          %v9947 = vadd.f32 %v9771, %v9812
          %v9948 = vadd.f32 %v9772, %v9816
          %v9949 = vadd.f32 %v9773, %v9820
          %v9950 = vadd.f32 %v9774, %v9824
          %v9951 = vadd.f32 %v9775, %v9828
          %v9952 = vadd.f32 %v9776, %v9832
          %v9953 = vadd.f32 %v9777, %v9812
          %v9954 = vadd.f32 %v9778, %v9816
          %v9955 = vadd.f32 %v9779, %v9820
          %v9956 = vadd.f32 %v9780, %v9824
          %v9957 = vadd.f32 %v9781, %v9828
          %v9958 = vadd.f32 %v9782, %v9832
          %v9959 = vadd.f32 %v9783, %v9812
          %v9960 = vadd.f32 %v9784, %v9816
          %v9961 = vadd.f32 %v9785, %v9820
          %v9962 = vadd.f32 %v9786, %v9824
          %v9963 = vadd.f32 %v9787, %v9828
          %v9964 = vadd.f32 %v9788, %v9832
          %v9965 = vadd.f32 %v9789, %v9812
          %v9966 = vadd.f32 %v9790, %v9816
          %v9967 = vadd.f32 %v9791, %v9820
          %v9968 = vadd.f32 %v9792, %v9824
          %v9969 = vadd.f32 %v9793, %v9828
          %v9970 = vadd.f32 %v9794, %v9832
          %v9971 = vadd.f32 %v9795, %v9812
          %v9972 = vadd.f32 %v9796, %v9816
          %v9973 = vadd.f32 %v9797, %v9820
          %v9974 = vadd.f32 %v9798, %v9824
          %v9975 = vadd.f32 %v9799, %v9828
          %v9976 = vadd.f32 %v9800, %v9832
          %v9977 = vadd.f32 %v9801, %v9812
          %v9978 = vadd.f32 %v9802, %v9816
          %v9979 = vadd.f32 %v9803, %v9820
          %v9980 = vadd.f32 %v9804, %v9824
          %v9981 = vadd.f32 %v9805, %v9828
          %v9982 = vadd.f32 %v9806, %v9832
          %9983 = vst [vmem:[%s462] sm:$0xff] %v9839
          %9984 = vst [vmem:[%s462 + $0x8] sm:$0xff] %v9840
          %9985 = vst [vmem:[%s462 + $0x10] sm:$0xff] %v9841
          %9986 = vst [vmem:[%s462 + $0x18] sm:$0xff] %v9842
          %9987 = vst [vmem:[%s462 + $0x20] sm:$0xff] %v9843
          %9988 = vst [vmem:[%s462 + $0x28] sm:$0xff] %v9844
          %9989 = vst [vmem:[%s462 + $0x30] sm:$0xff] %v9845
          %9990 = vst [vmem:[%s462 + $0x38] sm:$0xff] %v9846
          %9991 = vst [vmem:[%s462 + $0x40] sm:$0xff] %v9847
          %9992 = vst [vmem:[%s462 + $0x48] sm:$0xff] %v9848
          %9993 = vst [vmem:[%s462 + $0x50] sm:$0xff] %v9849
          %9994 = vst [vmem:[%s462 + $0x58] sm:$0xff] %v9850
          %9995 = vst [vmem:[%s462 + $0x60] sm:$0xff] %v9851
          %9996 = vst [vmem:[%s462 + $0x68] sm:$0xff] %v9852
          %9997 = vst [vmem:[%s462 + $0x70] sm:$0xff] %v9853
          %9998 = vst [vmem:[%s462 + $0x78] sm:$0xff] %v9854
          %9999 = vst [vmem:[%s462 + $0x80] sm:$0xff] %v9855
          %10000 = vst [vmem:[%s462 + $0x88] sm:$0xff] %v9856
          %10001 = vst [vmem:[%s462 + $0x90] sm:$0xff] %v9857
          %10002 = vst [vmem:[%s462 + $0x98] sm:$0xff] %v9858
          %10003 = vst [vmem:[%s462 + $0xa0] sm:$0xff] %v9859
          %10004 = vst [vmem:[%s462 + $0xa8] sm:$0xff] %v9860
          %10005 = vst [vmem:[%s462 + $0xb0] sm:$0xff] %v9861
          %10006 = vst [vmem:[%s462 + $0xb8] sm:$0xff] %v9862
          %10007 = vst [vmem:[%s462 + $0xc0] sm:$0xff] %v9863
          %10008 = vst [vmem:[%s462 + $0xc8] sm:$0xff] %v9864
          %10009 = vst [vmem:[%s462 + $0xd0] sm:$0xff] %v9865
          %10010 = vst [vmem:[%s462 + $0xd8] sm:$0xff] %v9866
          %10011 = vst [vmem:[%s462 + $0xe0] sm:$0xff] %v9867
          %10012 = vst [vmem:[%s462 + $0xe8] sm:$0xff] %v9868
          %10013 = vst [vmem:[%s462 + $0xf0] sm:$0xff] %v9869
          %10014 = vst [vmem:[%s462 + $0xf8] sm:$0xff] %v9870
          %10015 = vst [vmem:[%s462 + $0x100] sm:$0xff] %v9871
          %10016 = vst [vmem:[%s462 + $0x108] sm:$0xff] %v9872
          %10017 = vst [vmem:[%s462 + $0x110] sm:$0xff] %v9873
          %10018 = vst [vmem:[%s462 + $0x118] sm:$0xff] %v9874
          %10019 = vst [vmem:[%s462 + $0x120] sm:$0xff] %v9875
          %10020 = vst [vmem:[%s462 + $0x128] sm:$0xff] %v9876
          %10021 = vst [vmem:[%s462 + $0x130] sm:$0xff] %v9877
          %10022 = vst [vmem:[%s462 + $0x138] sm:$0xff] %v9878
          %10023 = vst [vmem:[%s462 + $0x140] sm:$0xff] %v9879
          %10024 = vst [vmem:[%s462 + $0x148] sm:$0xff] %v9880
          %10025 = vst [vmem:[%s462 + $0x150] sm:$0xff] %v9881
          %10026 = vst [vmem:[%s462 + $0x158] sm:$0xff] %v9882
          %10027 = vst [vmem:[%s462 + $0x160] sm:$0xff] %v9883
          %10028 = vst [vmem:[%s462 + $0x168] sm:$0xff] %v9884
          %10029 = vst [vmem:[%s462 + $0x170] sm:$0xff] %v9885
          %10030 = vst [vmem:[%s462 + $0x178] sm:$0xff] %v9886
          %10031 = vst [vmem:[%s462 + $0x180] sm:$0xff] %v9887
          %10032 = vst [vmem:[%s462 + $0x188] sm:$0xff] %v9888
          %10033 = vst [vmem:[%s462 + $0x190] sm:$0xff] %v9889
          %10034 = vst [vmem:[%s462 + $0x198] sm:$0xff] %v9890
          %10035 = vst [vmem:[%s462 + $0x1a0] sm:$0xff] %v9891
          %10036 = vst [vmem:[%s462 + $0x1a8] sm:$0xff] %v9892
          %10037 = vst [vmem:[%s462 + $0x1b0] sm:$0xff] %v9893
          %10038 = vst [vmem:[%s462 + $0x1b8] sm:$0xff] %v9894
          %10039 = vst [vmem:[%s462 + $0x1c0] sm:$0xff] %v9895
          %10040 = vst [vmem:[%s462 + $0x1c8] sm:$0xff] %v9896
          %10041 = vst [vmem:[%s462 + $0x1d0] sm:$0xff] %v9897
          %10042 = vst [vmem:[%s462 + $0x1d8] sm:$0xff] %v9898
          %10043 = vst [vmem:[%s462 + $0x1e0] sm:$0xff] %v9899
          %10044 = vst [vmem:[%s462 + $0x1e8] sm:$0xff] %v9900
          %10045 = vst [vmem:[%s462 + $0x1f0] sm:$0xff] %v9901
          %10046 = vst [vmem:[%s462 + $0x1f8] sm:$0xff] %v9902
          %10047 = vst [vmem:[%s462 + $0x200] sm:$0xff] %v9903
          %10048 = vst [vmem:[%s462 + $0x208] sm:$0xff] %v9904
          %10049 = vst [vmem:[%s462 + $0x210] sm:$0xff] %v9905
          %10050 = vst [vmem:[%s462 + $0x218] sm:$0xff] %v9906
          %10051 = vst [vmem:[%s462 + $0x220] sm:$0xff] %v9907
          %10052 = vst [vmem:[%s462 + $0x228] sm:$0xff] %v9908
          %10053 = vst [vmem:[%s462 + $0x230] sm:$0xff] %v9909
          %10054 = vst [vmem:[%s462 + $0x238] sm:$0xff] %v9910
          %10055 = vst [vmem:[%s462 + $0x240] sm:$0xff] %v9911
          %10056 = vst [vmem:[%s462 + $0x248] sm:$0xff] %v9912
          %10057 = vst [vmem:[%s462 + $0x250] sm:$0xff] %v9913
          %10058 = vst [vmem:[%s462 + $0x258] sm:$0xff] %v9914
          %10059 = vst [vmem:[%s462 + $0x260] sm:$0xff] %v9915
          %10060 = vst [vmem:[%s462 + $0x268] sm:$0xff] %v9916
          %10061 = vst [vmem:[%s462 + $0x270] sm:$0xff] %v9917
          %10062 = vst [vmem:[%s462 + $0x278] sm:$0xff] %v9918
          %10063 = vst [vmem:[%s462 + $0x280] sm:$0xff] %v9919
          %10064 = vst [vmem:[%s462 + $0x288] sm:$0xff] %v9920
          %10065 = vst [vmem:[%s462 + $0x290] sm:$0xff] %v9921
          %10066 = vst [vmem:[%s462 + $0x298] sm:$0xff] %v9922
          %10067 = vst [vmem:[%s462 + $0x2a0] sm:$0xff] %v9923
          %10068 = vst [vmem:[%s462 + $0x2a8] sm:$0xff] %v9924
          %10069 = vst [vmem:[%s462 + $0x2b0] sm:$0xff] %v9925
          %10070 = vst [vmem:[%s462 + $0x2b8] sm:$0xff] %v9926
          %10071 = vst [vmem:[%s462 + $0x2c0] sm:$0xff] %v9927
          %10072 = vst [vmem:[%s462 + $0x2c8] sm:$0xff] %v9928
          %10073 = vst [vmem:[%s462 + $0x2d0] sm:$0xff] %v9929
          %10074 = vst [vmem:[%s462 + $0x2d8] sm:$0xff] %v9930
          %10075 = vst [vmem:[%s462 + $0x2e0] sm:$0xff] %v9931
          %10076 = vst [vmem:[%s462 + $0x2e8] sm:$0xff] %v9932
          %10077 = vst [vmem:[%s462 + $0x2f0] sm:$0xff] %v9933
          %10078 = vst [vmem:[%s462 + $0x2f8] sm:$0xff] %v9934
          %10079 = vst [vmem:[%s462 + $0x300] sm:$0xff] %v9935
          %10080 = vst [vmem:[%s462 + $0x308] sm:$0xff] %v9936
          %10081 = vst [vmem:[%s462 + $0x310] sm:$0xff] %v9937
          %10082 = vst [vmem:[%s462 + $0x318] sm:$0xff] %v9938
          %10083 = vst [vmem:[%s462 + $0x320] sm:$0xff] %v9939
          %10084 = vst [vmem:[%s462 + $0x328] sm:$0xff] %v9940
          %10085 = vst [vmem:[%s462 + $0x330] sm:$0xff] %v9941
          %10086 = vst [vmem:[%s462 + $0x338] sm:$0xff] %v9942
          %10087 = vst [vmem:[%s462 + $0x340] sm:$0xff] %v9943
          %10088 = vst [vmem:[%s462 + $0x348] sm:$0xff] %v9944
          %10089 = vst [vmem:[%s462 + $0x350] sm:$0xff] %v9945
          %10090 = vst [vmem:[%s462 + $0x358] sm:$0xff] %v9946
          %10091 = vst [vmem:[%s462 + $0x360] sm:$0xff] %v9947
          %10092 = vst [vmem:[%s462 + $0x368] sm:$0xff] %v9948
          %10093 = vst [vmem:[%s462 + $0x370] sm:$0xff] %v9949
          %10094 = vst [vmem:[%s462 + $0x378] sm:$0xff] %v9950
          %10095 = vst [vmem:[%s462 + $0x380] sm:$0xff] %v9951
          %10096 = vst [vmem:[%s462 + $0x388] sm:$0xff] %v9952
          %10097 = vst [vmem:[%s462 + $0x390] sm:$0xff] %v9953
          %10098 = vst [vmem:[%s462 + $0x398] sm:$0xff] %v9954
          %10099 = vst [vmem:[%s462 + $0x3a0] sm:$0xff] %v9955
          %10100 = vst [vmem:[%s462 + $0x3a8] sm:$0xff] %v9956
          %10101 = vst [vmem:[%s462 + $0x3b0] sm:$0xff] %v9957
          %10102 = vst [vmem:[%s462 + $0x3b8] sm:$0xff] %v9958
          %10103 = vst [vmem:[%s462 + $0x3c0] sm:$0xff] %v9959
          %10104 = vst [vmem:[%s462 + $0x3c8] sm:$0xff] %v9960
          %10105 = vst [vmem:[%s462 + $0x3d0] sm:$0xff] %v9961
          %10106 = vst [vmem:[%s462 + $0x3d8] sm:$0xff] %v9962
          %10107 = vst [vmem:[%s462 + $0x3e0] sm:$0xff] %v9963
          %10108 = vst [vmem:[%s462 + $0x3e8] sm:$0xff] %v9964
          %10109 = vst [vmem:[%s462 + $0x3f0] sm:$0xff] %v9965
          %10110 = vst [vmem:[%s462 + $0x3f8] sm:$0xff] %v9966
          %10111 = vst [vmem:[%s462 + $0x400] sm:$0xff] %v9967
          %10112 = vst [vmem:[%s462 + $0x408] sm:$0xff] %v9968
          %10113 = vst [vmem:[%s462 + $0x410] sm:$0xff] %v9969
          %10114 = vst [vmem:[%s462 + $0x418] sm:$0xff] %v9970
          %10115 = vst [vmem:[%s462 + $0x420] sm:$0xff] %v9971
          %10116 = vst [vmem:[%s462 + $0x428] sm:$0xff] %v9972
          %10117 = vst [vmem:[%s462 + $0x430] sm:$0xff] %v9973
          %10118 = vst [vmem:[%s462 + $0x438] sm:$0xff] %v9974
          %10119 = vst [vmem:[%s462 + $0x440] sm:$0xff] %v9975
          %10120 = vst [vmem:[%s462 + $0x448] sm:$0xff] %v9976
          %10121 = vst [vmem:[%s462 + $0x450] sm:$0xff] %v9977
          %10122 = vst [vmem:[%s462 + $0x458] sm:$0xff] %v9978
          %10123 = vst [vmem:[%s462 + $0x460] sm:$0xff] %v9979
          %10124 = vst [vmem:[%s462 + $0x468] sm:$0xff] %v9980
          %10125 = vst [vmem:[%s462 + $0x470] sm:$0xff] %v9981
          %10126 = vst [vmem:[%s462 + $0x478] sm:$0xff] %v9982
        $region84: #{tpu_custom_call.1} parent=47 // pred_fallthru
          _
        %s10127 = sand.u32 %s218, 1
        %s10128 = scalar_lea.sflag [#allocation6], %s10127
        %s10129 = sand.u32 %s218, 1
        %s10130 = smul.addr %s10129, 1152
        %s10131 = scalar_lea.vmem [#allocation16], %s10130
        // Predicated region
        $region85: #{tpu_custom_call.1} parent=47 // pred_check
          %p10132 = pneg %p228
        $region86: #{tpu_custom_call.1} parent=47 // pred_check_branch
          %10134 = sbr.rel (%p10132) target = $region88
        $region87: #{tpu_custom_call.1} parent=47 // pred_region
          %s10135 = smul.u32 24, %s35
          %s10137 = ssub.s32 18432, 18432
          %10138 = vsyncadd %s10128, %s10137
          %s10139 = smul.addr %s10135, 6
          %s10140 = smul.addr %s10139, 128
          %s10141 = scalar_lea.hbm %s7, %s10140
          %s10142 = sshll.u32 %s10131, 4
          %s10143 = int_to_ptr.vmem [resolvable:$true] %s10142
          %10148 = dma.vmem_to_hbm [thread:$0]  %s10143, 18432, %s10141, %s10128, 768, 768, 48
        $region88: #{tpu_custom_call.1} parent=47 // pred_fallthru
          _
      $region48: #{tpu_custom_call.1} parent=5 // pred_fallthru
        _
      %p10149 = scmp.le.s32.totalorder 2, %s26
      // Predicated region
      $region89: #{tpu_custom_call.1} parent=5 // pred_check
        %p10150 = pneg %p10149
      $region90: #{tpu_custom_call.1} parent=5 // pred_check_branch
        %10152 = sbr.rel (%p10150) target = $region92
      $region91: #{tpu_custom_call.1} parent=5 // pred_region
        %s10153 = ssub.s32 %s26, 2
        // Predicated region
        $region93: #{tpu_custom_call.1} parent=91 // pred_check
          %p10154 = pneg %p234
        $region94: #{tpu_custom_call.1} parent=91 // pred_check_branch
          %10156 = sbr.rel (%p10154) target = $region96
        $region95: #{tpu_custom_call.1} parent=91 // pred_region
          %s10157 = sand.u32 %s219, 1
          %s10158 = scalar_lea.sflag [#allocation6], %s10157
          %s10159 = sand.u32 %s219, 1
          %s10160 = smul.addr %s10159, 1152
          %s10161 = scalar_lea.vmem [#allocation16], %s10160
          %10162 = dma.done %s10158, 18432
        $region96: #{tpu_custom_call.1} parent=91 // pred_fallthru
          _
      $region92: #{tpu_custom_call.1} parent=5 // pred_fallthru
        _
    $region6: #{tpu_custom_call.1} parent=1 // loop_footer
      %s30 = sadd.s32 1, %s26
    $region7: #{tpu_custom_call.1} parent=1 // loop_footer_branch
      %25 = sbr.rel target = $region3
    $region8: #{tpu_custom_call.1} parent=1 // loop_exit
      _
    %10163 = vsyncpa [#allocation5], 1
    %s10164 = scalar_lea.sflag [#allocation5], 1
    %10165 = vsyncpa %s10164, 1
    %10166 = vsyncpa [#allocation8], 1
    %10167 = vsyncpa [#allocation11], 1
    %s10168 = scalar_lea.sflag [#allocation11], 1
    %10169 = vsyncpa %s10168, 1
    %10170 = vsyncpa [#allocation14], 1
    %s10171 = scalar_lea.sflag [#allocation14], 1
    %10172 = vsyncpa %s10171, 1
    %10173 = vsyncpa [#allocation6], 1
    %s10174 = scalar_lea.sflag [#allocation6], 1
    %10175 = vsyncpa %s10174, 1

</llo_original>
